<compile_context>
chip_gen: v6e
topology: v6e:2x2x1
jax: 0.10.0
libtpu: 0.0.40
codegen_flags: <defaults>
</compile_context>

<pallas_src>
import jax
import jax.numpy as jnp
from jax import lax
from jax.experimental import pallas as pl
from jax.experimental.pallas import tpu as pltpu


# ----------------------------- Pallas kernel ------------------------------- #
def _self_attention_kernel(x_ref, xt_ref, wft_ref, wg_ref, wh_ref,
                           bf_ref, bg_ref, bh_ref, gamma_ref, out_ref):
    # Shapes (per grid step / batch element):
    #   x_ref  : (1, C, HW)   xt_ref : (1, HW, C)
    #   wft_ref: (C, Ck)      wg_ref : (Ck, C)      wh_ref: (C, C)
    #   bf_ref : (1, Ck)      bg_ref : (Ck, 1)      bh_ref: (C, 1)
    #   gamma_ref: (1, 1) in SMEM     out_ref: (1, C, HW)
    x = x_ref[0]            # (C, HW)  -- HW on the 128-lane axis
    xt = xt_ref[0]          # (HW, C)
    gamma = gamma_ref[0, 0]

    def mm(a, b):
        return jnp.dot(a, b,
                       preferred_element_type=jnp.float32,
                       precision=lax.Precision.HIGHEST)

    # 1x1 convolutions == channel contractions on the MXU.
    f_t = mm(xt, wft_ref[...]) + bf_ref[...]     # (HW, Ck)  == f^T
    g = mm(wg_ref[...], x) + bg_ref[...]         # (Ck, HW)
    h = mm(wh_ref[...], x) + bh_ref[...]         # (C, HW)

    # Attention logits: logits[i, j] = f[:, i] . g[:, j]   -> (HW, HW)
    logits = mm(f_t, g)

    # softmax over dim=-2 (the "i" / f axis), independently per column j.
    m = jnp.max(logits, axis=0, keepdims=True)   # (1, HW)
    e = jnp.exp(logits - m)
    attn = e / jnp.sum(e, axis=0, keepdims=True)  # (HW, HW)

    # out[c, j] = sum_i h[c, i] * attn[i, j]
    out = mm(h, attn)                             # (C, HW)

    out_ref[0] = gamma * out + x


# ------------------------------- JAX glue ----------------------------------- #
def self_attention(x_nchw, wf, bf, wg, bg, wh, bh, gamma):
    """SAGAN SelfAttention forward.

    x_nchw : (B, C, H, W)
    wf, wg : (C//8, C)   spectral-normalized 1x1 conv weights (OI layout)
    wh     : (C, C)
    bf, bg : (C//8,)     conv biases
    bh     : (C,)
    gamma  : scalar
    """
    B, C, H, W = x_nchw.shape
    HW = H * W
    Ck = wf.shape[0]

    x = x_nchw.reshape(B, C, HW).astype(jnp.float32)   # C on sublanes, HW on lanes
    xt = jnp.transpose(x, (0, 2, 1))                   # (B, HW, C) for the f projection

    out = pl.pallas_call(
        _self_attention_kernel,
        out_shape=jax.ShapeDtypeStruct((B, C, HW), jnp.float32),
        grid=(B,),
        in_specs=[
            pl.BlockSpec((1, C, HW), lambda b: (b, 0, 0)),     # x
            pl.BlockSpec((1, HW, C), lambda b: (b, 0, 0)),     # x^T
            pl.BlockSpec((C, Ck), lambda b: (0, 0)),           # wf^T
            pl.BlockSpec((Ck, C), lambda b: (0, 0)),           # wg
            pl.BlockSpec((C, C), lambda b: (0, 0)),            # wh
            pl.BlockSpec((1, Ck), lambda b: (0, 0)),           # bf
            pl.BlockSpec((Ck, 1), lambda b: (0, 0)),           # bg
            pl.BlockSpec((C, 1), lambda b: (0, 0)),            # bh
            pl.BlockSpec(memory_space=pltpu.MemorySpace.SMEM),  # gamma (scalar)
        ],
        out_specs=pl.BlockSpec((1, C, HW), lambda b: (b, 0, 0)),
        compiler_params=pltpu.CompilerParams(
            dimension_semantics=("parallel",)),
    )(x, xt,
      jnp.transpose(wf, (1, 0)).astype(jnp.float32),
      wg.astype(jnp.float32),
      wh.astype(jnp.float32),
      bf.reshape(1, Ck).astype(jnp.float32),
      bg.reshape(Ck, 1).astype(jnp.float32),
      bh.reshape(C, 1).astype(jnp.float32),
      jnp.asarray(gamma, jnp.float32).reshape(1, 1))

    return out.reshape(B, C, H, W)


def _spectral_normalize(w, n_iters=50):
    # TODO(synk): PyTorch spectral_norm keeps a stateful u vector and performs a
    # single power-iteration step per forward; with synthetic weights we use a
    # converged sigma estimate instead.
    m = w.reshape(w.shape[0], -1)
    v = jnp.ones((m.shape[1],), jnp.float32)
    v = v / jnp.linalg.norm(v)
    u = m @ v
    u = u / (jnp.linalg.norm(u) + 1e-12)
    for _ in range(n_iters):
        v = m.T @ u
        v = v / (jnp.linalg.norm(v) + 1e-12)
        u = m @ v
        u = u / (jnp.linalg.norm(u) + 1e-12)
    sigma = u @ (m @ v)
    return w / sigma


def _reference_forward(x_nchw, wf, bf, wg, bg, wh, bh, gamma):
    # Pure-JAX (XLA) reference, written to mirror the PyTorch forward exactly.
    B, C, H, W = x_nchw.shape
    HW = H * W
    hi = lax.Precision.HIGHEST
    xf = x_nchw.reshape(B, C, HW).astype(jnp.float32)

    f = jnp.einsum('kc,bcn->bkn', wf, xf, precision=hi) + bf[None, :, None]  # (B,Ck,HW)
    g = jnp.einsum('kc,bcn->bkn', wg, xf, precision=hi) + bg[None, :, None]  # (B,Ck,HW)
    h = jnp.einsum('oc,bcn->bon', wh, xf, precision=hi) + bh[None, :, None]  # (B,C, HW)

    logits = jnp.einsum('bki,bkj->bij', f, g, precision=hi)                  # (B,HW,HW)
    m = jnp.max(logits, axis=-2, keepdims=True)
    e = jnp.exp(logits - m)
    attn = e / jnp.sum(e, axis=-2, keepdims=True)                            # softmax dim=-2

    out = jnp.einsum('bci,bij->bcj', h, attn, precision=hi)                  # (B,C,HW)
    return (gamma * out + xf).reshape(B, C, H, W)


# --------------------------------- main ------------------------------------- #
if __name__ == "__main__":
    key = jax.random.PRNGKey(0)
    kx, kf, kg, kh, kbf, kbg, kbh = jax.random.split(key, 7)

    B, C, H, W = 2, 32, 16, 16          # in_channel=32 -> key/query channels = 4
    Ck = C // 8

    x = jax.random.normal(kx, (B, C, H, W), jnp.float32)

    def make_w(k, cout, cin):
        bound = 1.0 / float(cin ** 0.5)   # PyTorch kaiming-uniform-like bound for 1x1 conv
        w = jax.random.uniform(k, (cout, cin), jnp.float32, -bound, bound)
        return _spectral_normalize(w)

    bbound = 1.0 / float(C ** 0.5)
    wf = make_w(kf, Ck, C)
    wg = make_w(kg, Ck, C)
    wh = make_w(kh, C, C)
    bf = jax.random.uniform(kbf, (Ck,), jnp.float32, -bbound, bbound)
    bg = jax.random.uniform(kbg, (Ck,), jnp.float32, -bbound, bbound)
    bh = jax.random.uniform(kbh, (C,), jnp.float32, -bbound, bbound)

    # PyTorch initializes gamma to 0 (which would make out == x); use a nonzero
    # value so the attention path is actually exercised by the check.
    gamma = jnp.float32(0.75)

    out = jax.block_until_ready(self_attention(x, wf, bf, wg, bg, wh, bh, gamma))
    ref = jax.block_until_ready(_reference_forward(x, wf, bf, wg, bg, wh, bh, gamma))

    assert out.shape == (B, C, H, W), out.shape
    max_err = float(jnp.max(jnp.abs(out - ref)))
    assert jnp.allclose(out, ref, atol=1e-3, rtol=1e-3), max_err
    print("KERNEL_OK")
</pallas_src>

<mosaic_0001>
module attributes {stable_mosaic.version = 11 : i64} {
  func.func @_self_attention_kernel(%arg0: i32, %arg1: memref<1x32x256xf32, #tpu.memory_space<vmem>>, %arg2: memref<1x256x32xf32, #tpu.memory_space<vmem>>, %arg3: memref<32x4xf32, #tpu.memory_space<vmem>>, %arg4: memref<4x32xf32, #tpu.memory_space<vmem>>, %arg5: memref<32x32xf32, #tpu.memory_space<vmem>>, %arg6: memref<1x4xf32, #tpu.memory_space<vmem>>, %arg7: memref<4x1xf32, #tpu.memory_space<vmem>>, %arg8: memref<32x1xf32, #tpu.memory_space<vmem>>, %arg9: memref<1x1xf32, #tpu.memory_space<smem>>, %arg10: memref<1x32x256xf32, #tpu.memory_space<vmem>>) attributes {dimension_semantics = [#tpu.dimension_semantics<parallel>], iteration_bounds = array<i64: 2>, scalar_prefetch = 0 : i64, scratch_operands = 0 : i64, tpu.core_type = #tpu.core_type<tc>, window_params = [{transform_indices = @transform_0, window_bounds = array<i64: 1, 32, 256>}, {transform_indices = @transform_1, window_bounds = array<i64: 1, 256, 32>}, {pipeline_mode = #tpu.pipeline_mode<synchronous>, transform_indices = @transform_2, window_bounds = array<i64: 32, 4>}, {pipeline_mode = #tpu.pipeline_mode<synchronous>, transform_indices = @transform_3, window_bounds = array<i64: 4, 32>}, {pipeline_mode = #tpu.pipeline_mode<synchronous>, transform_indices = @transform_4, window_bounds = array<i64: 32, 32>}, {pipeline_mode = #tpu.pipeline_mode<synchronous>, transform_indices = @transform_5, window_bounds = array<i64: 1, 4>}, {pipeline_mode = #tpu.pipeline_mode<synchronous>, transform_indices = @transform_6, window_bounds = array<i64: 4, 1>}, {pipeline_mode = #tpu.pipeline_mode<synchronous>, transform_indices = @transform_7, window_bounds = array<i64: 32, 1>}, {transform_indices = @transform_8, window_bounds = array<i64: 1, 1>}, {transform_indices = @transform_9, window_bounds = array<i64: 1, 32, 256>}]} {
    %c0 = arith.constant 0 : index
    %c0_0 = arith.constant 0 : index
    %c0_1 = arith.constant 0 : index
    %0 = vector.load %arg1[%c0, %c0_0, %c0_1] : memref<1x32x256xf32, #tpu.memory_space<vmem>>, vector<1x32x256xf32>
    %1 = vector.shape_cast %0 : vector<1x32x256xf32> to vector<32x256xf32>
    %c0_2 = arith.constant 0 : index
    %c0_3 = arith.constant 0 : index
    %c0_4 = arith.constant 0 : index
    %2 = vector.load %arg2[%c0_2, %c0_3, %c0_4] : memref<1x256x32xf32, #tpu.memory_space<vmem>>, vector<1x256x32xf32>
    %3 = vector.shape_cast %2 : vector<1x256x32xf32> to vector<256x32xf32>
    %c0_5 = arith.constant 0 : index
    %c0_6 = arith.constant 0 : index
    %4 = memref.load %arg9[%c0_5, %c0_6] : memref<1x1xf32, #tpu.memory_space<smem>>
    %c0_7 = arith.constant 0 : index
    %c0_8 = arith.constant 0 : index
    %5 = vector.load %arg3[%c0_7, %c0_8] : memref<32x4xf32, #tpu.memory_space<vmem>>, vector<32x4xf32>
    %cst = arith.constant dense<0.000000e+00> : vector<256x4xf32>
    %6 = tpu.matmul %3, %5, %cst {dimension_numbers = #tpu.dot_dimension_numbers<[1], [0], [0], [1], [0, 0, 1, 1], [], []>, precision = #tpu.contract_precision<fp32>} : vector<256x32xf32>, vector<32x4xf32>, vector<256x4xf32> -> vector<256x4xf32>
    %c0_9 = arith.constant 0 : index
    %c0_10 = arith.constant 0 : index
    %7 = vector.load %arg6[%c0_9, %c0_10] : memref<1x4xf32, #tpu.memory_space<vmem>>, vector<1x4xf32>
    %8 = vector.broadcast %7 : vector<1x4xf32> to vector<256x4xf32>
    %9 = arith.addf %6, %8 : vector<256x4xf32>
    %c0_11 = arith.constant 0 : index
    %c0_12 = arith.constant 0 : index
    %10 = vector.load %arg4[%c0_11, %c0_12] : memref<4x32xf32, #tpu.memory_space<vmem>>, vector<4x32xf32>
    %cst_13 = arith.constant dense<0.000000e+00> : vector<4x256xf32>
    %11 = tpu.matmul %10, %1, %cst_13 {dimension_numbers = #tpu.dot_dimension_numbers<[1], [0], [0], [1], [0, 0, 1, 1], [], []>, precision = #tpu.contract_precision<fp32>} : vector<4x32xf32>, vector<32x256xf32>, vector<4x256xf32> -> vector<4x256xf32>
    %c0_14 = arith.constant 0 : index
    %c0_15 = arith.constant 0 : index
    %12 = vector.load %arg7[%c0_14, %c0_15] : memref<4x1xf32, #tpu.memory_space<vmem>>, vector<4x1xf32>
    %13 = vector.broadcast %12 : vector<4x1xf32> to vector<4x256xf32>
    %14 = arith.addf %11, %13 : vector<4x256xf32>
    %c0_16 = arith.constant 0 : index
    %c0_17 = arith.constant 0 : index
    %15 = vector.load %arg5[%c0_16, %c0_17] : memref<32x32xf32, #tpu.memory_space<vmem>>, vector<32x32xf32>
    %cst_18 = arith.constant dense<0.000000e+00> : vector<32x256xf32>
    %16 = tpu.matmul %15, %1, %cst_18 {dimension_numbers = #tpu.dot_dimension_numbers<[1], [0], [0], [1], [0, 0, 1, 1], [], []>, precision = #tpu.contract_precision<fp32>} : vector<32x32xf32>, vector<32x256xf32>, vector<32x256xf32> -> vector<32x256xf32>
    %c0_19 = arith.constant 0 : index
    %c0_20 = arith.constant 0 : index
    %17 = vector.load %arg8[%c0_19, %c0_20] : memref<32x1xf32, #tpu.memory_space<vmem>>, vector<32x1xf32>
    %18 = vector.broadcast %17 : vector<32x1xf32> to vector<32x256xf32>
    %19 = arith.addf %16, %18 : vector<32x256xf32>
    %cst_21 = arith.constant dense<0.000000e+00> : vector<256x256xf32>
    %20 = tpu.matmul %9, %14, %cst_21 {dimension_numbers = #tpu.dot_dimension_numbers<[1], [0], [0], [1], [0, 0, 1, 1], [], []>, precision = #tpu.contract_precision<fp32>} : vector<256x4xf32>, vector<4x256xf32>, vector<256x256xf32> -> vector<256x256xf32>
    %cst_22 = arith.constant dense<0xFF800000> : vector<256xf32>
    %21 = vector.multi_reduction <maximumf>, %20, %cst_22 [0] : vector<256x256xf32> to vector<256xf32>
    %22 = vector.shape_cast %21 : vector<256xf32> to vector<1x256xf32>
    %23 = vector.broadcast %22 : vector<1x256xf32> to vector<256x256xf32>
    %24 = arith.subf %20, %23 : vector<256x256xf32>
    %25 = math.exp %24 : vector<256x256xf32>
    %cst_23 = arith.constant dense<0.000000e+00> : vector<256xf32>
    %26 = vector.multi_reduction <add>, %25, %cst_23 [0] : vector<256x256xf32> to vector<256xf32>
    %27 = vector.shape_cast %26 : vector<256xf32> to vector<1x256xf32>
    %28 = vector.broadcast %27 : vector<1x256xf32> to vector<256x256xf32>
    %29 = arith.divf %25, %28 : vector<256x256xf32>
    %cst_24 = arith.constant dense<0.000000e+00> : vector<32x256xf32>
    %30 = tpu.matmul %19, %29, %cst_24 {dimension_numbers = #tpu.dot_dimension_numbers<[1], [0], [0], [1], [0, 0, 1, 1], [], []>, precision = #tpu.contract_precision<fp32>} : vector<32x256xf32>, vector<256x256xf32>, vector<32x256xf32> -> vector<32x256xf32>
    %31 = vector.broadcast %4 : f32 to vector<32x256xf32>
    %32 = arith.mulf %31, %30 : vector<32x256xf32>
    %33 = arith.addf %32, %1 : vector<32x256xf32>
    %c0_25 = arith.constant 0 : index
    %c0_26 = arith.constant 0 : index
    %c0_27 = arith.constant 0 : index
    %34 = vector.load %arg10[%c0_25, %c0_26, %c0_27] : memref<1x32x256xf32, #tpu.memory_space<vmem>>, vector<1x32x256xf32>
    %35 = vector.shape_cast %34 : vector<1x32x256xf32> to vector<32x256xf32>
    %36 = vector.shape_cast %33 : vector<32x256xf32> to vector<1x32x256xf32>
    tpu.vector_store %arg10[%c0_25, %c0_26, %c0_27], %36 {strides = array<i32>} : memref<1x32x256xf32, #tpu.memory_space<vmem>>, vector<1x32x256xf32>,
    return
  }
  func.func @transform_0(%arg0: i32) -> (i32, i32, i32) {
    %c0_i32 = arith.constant 0 : i32
    %c0_i32_0 = arith.constant 0 : i32
    %c0_i32_1 = arith.constant 0 : i32
    return %arg0, %c0_i32, %c0_i32_0 : i32, i32, i32
  }
  func.func @transform_1(%arg0: i32) -> (i32, i32, i32) {
    %c0_i32 = arith.constant 0 : i32
    %c0_i32_0 = arith.constant 0 : i32
    %c0_i32_1 = arith.constant 0 : i32
    return %arg0, %c0_i32, %c0_i32_0 : i32, i32, i32
  }
  func.func @transform_2(%arg0: i32) -> (i32, i32) {
    %c0_i32 = arith.constant 0 : i32
    %c0_i32_0 = arith.constant 0 : i32
    %c0_i32_1 = arith.constant 0 : i32
    return %c0_i32, %c0_i32_0 : i32, i32
  }
  func.func @transform_3(%arg0: i32) -> (i32, i32) {
    %c0_i32 = arith.constant 0 : i32
    %c0_i32_0 = arith.constant 0 : i32
    %c0_i32_1 = arith.constant 0 : i32
    return %c0_i32, %c0_i32_0 : i32, i32
  }
  func.func @transform_4(%arg0: i32) -> (i32, i32) {
    %c0_i32 = arith.constant 0 : i32
    %c0_i32_0 = arith.constant 0 : i32
    %c0_i32_1 = arith.constant 0 : i32
    return %c0_i32, %c0_i32_0 : i32, i32
  }
  func.func @transform_5(%arg0: i32) -> (i32, i32) {
    %c0_i32 = arith.constant 0 : i32
    %c0_i32_0 = arith.constant 0 : i32
    %c0_i32_1 = arith.constant 0 : i32
    return %c0_i32, %c0_i32_0 : i32, i32
  }
  func.func @transform_6(%arg0: i32) -> (i32, i32) {
    %c0_i32 = arith.constant 0 : i32
    %c0_i32_0 = arith.constant 0 : i32
    %c0_i32_1 = arith.constant 0 : i32
    return %c0_i32, %c0_i32_0 : i32, i32
  }
  func.func @transform_7(%arg0: i32) -> (i32, i32) {
    %c0_i32 = arith.constant 0 : i32
    %c0_i32_0 = arith.constant 0 : i32
    %c0_i32_1 = arith.constant 0 : i32
    return %c0_i32, %c0_i32_0 : i32, i32
  }
  func.func @transform_8(%arg0: i32) -> (i32, i32) {
    %c0_i32 = arith.constant 0 : i32
    %c0_i32_0 = arith.constant 0 : i32
    %c0_i32_1 = arith.constant 0 : i32
    return %c0_i32, %c0_i32_0 : i32, i32
  }
  func.func @transform_9(%arg0: i32) -> (i32, i32, i32) {
    %c0_i32 = arith.constant 0 : i32
    %c0_i32_0 = arith.constant 0 : i32
    %c0_i32_1 = arith.constant 0 : i32
    return %arg0, %c0_i32, %c0_i32_0 : i32, i32, i32
  }
}

</mosaic_0001>

<llo_original>
// kernel: tpu_custom_call.1
$region0: #{tpu_custom_call.1}
  #allocation0 [shape = 'u32[]', space=smem, size = 0x4, offset = 0x4, fixed_abs, tag = 'smem constant byte address 0x4 - core index']
  #allocation1 [shape = 'u32[144,128]{1,0:T(1,128)}', space=vmem, size = 0x12000, scoped, tag = 'internal scratch']
  #allocation2 [shape = 'f32[1,1]{1,0:T(1,128)S(6)}', space=smem, size = 0x200, scoped, tag = 'scoped memory for tpu_custom_call.1']
  %s0 = inlined_call_operand.vmem [shape: f32[2,32,256], index: 0, kind: input, shape index: {}]
  %s1 = inlined_call_operand.vmem [shape: f32[2,256,32], index: 1, kind: input, shape index: {}]
  %s2 = inlined_call_operand.vmem [shape: f32[32,4], index: 2, kind: input, shape index: {}]
  %s3 = inlined_call_operand.vmem [shape: f32[4,32], index: 3, kind: input, shape index: {}]
  %s4 = inlined_call_operand.vmem [shape: f32[32,32], index: 4, kind: input, shape index: {}]
  %s5 = inlined_call_operand.vmem [shape: f32[1,4], index: 5, kind: input, shape index: {}]
  %s6 = inlined_call_operand.vmem [shape: f32[4,1], index: 6, kind: input, shape index: {}]
  %s7 = inlined_call_operand.vmem [shape: f32[32,1], index: 7, kind: input, shape index: {}]
  %s8 = inlined_call_operand.<no memory space> [shape: f32[1,1], index: 8, kind: input, shape index: {}]
  %s9 = inlined_call_operand.hbm [shape: f32[2,32,256], index: 9, kind: output, shape index: {}]
  %s10 = sld [smem:[#allocation0]]
  $region69: #{tpu_custom_call.1} parent=0
    _
  %s12 = ssub.s32 1, %s10
  %s13 = scalar_select 0, %s12, %s10
  %14 = sst [smem:[#allocation2]] %s8
  $region1: #{tpu_custom_call.1} parent=0
    #allocation3 [shape = 'u8[65536]{0}', space=vmem, size = 0x10000, scoped, tag = 'output window, operand 0']
    #allocation4 [shape = 's32[2]{0}', space=sflag, size = 0x8, scoped, tag = 'scoped memory for tpu_custom_call.1']
    %15 = vsyncpa [#allocation4], 0
    %s16 = scalar_lea.sflag [#allocation4], 1
    %17 = vsyncpa %s16, 0
    loop: start=0, step=1, limit=4
    $region2: #{tpu_custom_call.1} parent=1 // loop_pre_header
      _
    $region3: #{tpu_custom_call.1} parent=1 // loop_header
      %s19 = sphi 0, %s23
      %p20 = scmp.ge.s32.totalorder %s19, 4
      %s29 = sphi 0, %s31
      %s32 = sphi 0, %s29
      %s33 = sphi 0, %s32
      %s49 = sphi 0, %s33
      %s55 = sphi 0, %s57
      %s58 = sphi 0, %s55
      %s59 = sphi 0, %s58
      %s75 = sphi 0, %s59
      %s79 = sphi 0, %s79
      %s81 = sphi 0, %s79
      %s82 = sphi 0, %s81
      %s96 = sphi 0, %s82
      %s100 = sphi 0, %s100
      %s102 = sphi 0, %s100
      %s103 = sphi 0, %s102
      %s117 = sphi 0, %s103
      %s121 = sphi 0, %s121
      %s123 = sphi 0, %s121
      %s124 = sphi 0, %s123
      %s138 = sphi 0, %s124
      %s142 = sphi 0, %s142
      %s144 = sphi 0, %s142
      %s145 = sphi 0, %s144
      %s159 = sphi 0, %s145
      %s163 = sphi 0, %s163
      %s165 = sphi 0, %s163
      %s166 = sphi 0, %s165
      %s180 = sphi 0, %s166
      %s184 = sphi 0, %s184
      %s186 = sphi 0, %s184
      %s187 = sphi 0, %s186
      %s201 = sphi 0, %s187
      %s205 = sphi 0, %s205
      %s207 = sphi 0, %s205
      %s208 = sphi 0, %s207
      %s222 = sphi 0, %s208
      %s228 = sphi 0, %s230
      %s231 = sphi 0, %s228
      %s232 = sphi 0, %s231
      %s248 = sphi 0, %s232
    $region4: #{tpu_custom_call.1} parent=1 // loop_header_branch
      %22 = sbr.rel (%p20) target = $region8
    $region5: #{tpu_custom_call.1} parent=1 // loop_body
      %s24 = ssub.s32 %s19, 1
      %s25 = ssub.s32 %s19, 2
      %s26 = sadd.s32 %s19, 1
      %s27 = ssub.s32 %s19, %s26
      %p28 = scmp.eq.s32.totalorder %s27, 0
      %s30 = sadd.s32 %s29, 1
      %s31 = scalar_select %p28, %s29, %s30
      %p34 = pneg %p28
      %p35 = scmp.eq.s32.totalorder %s19, 1
      %p36 = por %p34, %p35
      %p37 = scmp.ne.s32.totalorder %s29, %s32
      %p38 = scmp.eq.s32.totalorder %s19, 0
      %p39 = por %p37, %p38
      %p40 = scmp.ne.s32.totalorder %s29, %s32
      %p41 = scmp.eq.s32.totalorder %s24, 1
      %p42 = por %p40, %p41
      %p43 = scmp.ne.s32.totalorder %s32, %s33
      %p44 = scmp.eq.s32.totalorder %s24, 0
      %p45 = por %p43, %p44
      %p46 = scmp.ne.s32.totalorder %s32, %s33
      %p47 = scmp.eq.s32.totalorder %s25, 1
      %p48 = por %p46, %p47
      %p50 = scmp.ne.s32.totalorder %s33, %s49
      %p51 = scmp.eq.s32.totalorder %s25, 0
      %p52 = por %p50, %p51
      %s53 = ssub.s32 %s19, %s26
      %p54 = scmp.eq.s32.totalorder %s53, 0
      %s56 = sadd.s32 %s55, 1
      %s57 = scalar_select %p54, %s55, %s56
      %p60 = pneg %p54
      %p61 = scmp.eq.s32.totalorder %s19, 1
      %p62 = por %p60, %p61
      %p63 = scmp.ne.s32.totalorder %s55, %s58
      %p64 = scmp.eq.s32.totalorder %s19, 0
      %p65 = por %p63, %p64
      %p66 = scmp.ne.s32.totalorder %s55, %s58
      %p67 = scmp.eq.s32.totalorder %s24, 1
      %p68 = por %p66, %p67
      %p69 = scmp.ne.s32.totalorder %s58, %s59
      %p70 = scmp.eq.s32.totalorder %s24, 0
      %p71 = por %p69, %p70
      %p72 = scmp.ne.s32.totalorder %s58, %s59
      %p73 = scmp.eq.s32.totalorder %s25, 1
      %p74 = por %p72, %p73
      %p76 = scmp.ne.s32.totalorder %s59, %s75
      %p77 = scmp.eq.s32.totalorder %s25, 0
      %p78 = por %p76, %p77
      %s80 = sadd.s32 %s79, 1
      %p83 = scmp.eq.s32.totalorder %s19, 1
      %p84 = scmp.ne.s32.totalorder %s79, %s81
      %p85 = scmp.eq.s32.totalorder %s19, 0
      %p86 = por %p84, %p85
      %p87 = scmp.ne.s32.totalorder %s79, %s81
      %p88 = scmp.eq.s32.totalorder %s24, 1
      %p89 = por %p87, %p88
      %p90 = scmp.ne.s32.totalorder %s81, %s82
      %p91 = scmp.eq.s32.totalorder %s24, 0
      %p92 = por %p90, %p91
      %p93 = scmp.ne.s32.totalorder %s81, %s82
      %p94 = scmp.eq.s32.totalorder %s25, 1
      %p95 = por %p93, %p94
      %p97 = scmp.ne.s32.totalorder %s82, %s96
      %p98 = scmp.eq.s32.totalorder %s25, 0
      %p99 = por %p97, %p98
      %s101 = sadd.s32 %s100, 1
      %p104 = scmp.eq.s32.totalorder %s19, 1
      %p105 = scmp.ne.s32.totalorder %s100, %s102
      %p106 = scmp.eq.s32.totalorder %s19, 0
      %p107 = por %p105, %p106
      %p108 = scmp.ne.s32.totalorder %s100, %s102
      %p109 = scmp.eq.s32.totalorder %s24, 1
      %p110 = por %p108, %p109
      %p111 = scmp.ne.s32.totalorder %s102, %s103
      %p112 = scmp.eq.s32.totalorder %s24, 0
      %p113 = por %p111, %p112
      %p114 = scmp.ne.s32.totalorder %s102, %s103
      %p115 = scmp.eq.s32.totalorder %s25, 1
      %p116 = por %p114, %p115
      %p118 = scmp.ne.s32.totalorder %s103, %s117
      %p119 = scmp.eq.s32.totalorder %s25, 0
      %p120 = por %p118, %p119
      %s122 = sadd.s32 %s121, 1
      %p125 = scmp.eq.s32.totalorder %s19, 1
      %p126 = scmp.ne.s32.totalorder %s121, %s123
      %p127 = scmp.eq.s32.totalorder %s19, 0
      %p128 = por %p126, %p127
      %p129 = scmp.ne.s32.totalorder %s121, %s123
      %p130 = scmp.eq.s32.totalorder %s24, 1
      %p131 = por %p129, %p130
      %p132 = scmp.ne.s32.totalorder %s123, %s124
      %p133 = scmp.eq.s32.totalorder %s24, 0
      %p134 = por %p132, %p133
      %p135 = scmp.ne.s32.totalorder %s123, %s124
      %p136 = scmp.eq.s32.totalorder %s25, 1
      %p137 = por %p135, %p136
      %p139 = scmp.ne.s32.totalorder %s124, %s138
      %p140 = scmp.eq.s32.totalorder %s25, 0
      %p141 = por %p139, %p140
      %s143 = sadd.s32 %s142, 1
      %p146 = scmp.eq.s32.totalorder %s19, 1
      %p147 = scmp.ne.s32.totalorder %s142, %s144
      %p148 = scmp.eq.s32.totalorder %s19, 0
      %p149 = por %p147, %p148
      %p150 = scmp.ne.s32.totalorder %s142, %s144
      %p151 = scmp.eq.s32.totalorder %s24, 1
      %p152 = por %p150, %p151
      %p153 = scmp.ne.s32.totalorder %s144, %s145
      %p154 = scmp.eq.s32.totalorder %s24, 0
      %p155 = por %p153, %p154
      %p156 = scmp.ne.s32.totalorder %s144, %s145
      %p157 = scmp.eq.s32.totalorder %s25, 1
      %p158 = por %p156, %p157
      %p160 = scmp.ne.s32.totalorder %s145, %s159
      %p161 = scmp.eq.s32.totalorder %s25, 0
      %p162 = por %p160, %p161
      %s164 = sadd.s32 %s163, 1
      %p167 = scmp.eq.s32.totalorder %s19, 1
      %p168 = scmp.ne.s32.totalorder %s163, %s165
      %p169 = scmp.eq.s32.totalorder %s19, 0
      %p170 = por %p168, %p169
      %p171 = scmp.ne.s32.totalorder %s163, %s165
      %p172 = scmp.eq.s32.totalorder %s24, 1
      %p173 = por %p171, %p172
      %p174 = scmp.ne.s32.totalorder %s165, %s166
      %p175 = scmp.eq.s32.totalorder %s24, 0
      %p176 = por %p174, %p175
      %p177 = scmp.ne.s32.totalorder %s165, %s166
      %p178 = scmp.eq.s32.totalorder %s25, 1
      %p179 = por %p177, %p178
      %p181 = scmp.ne.s32.totalorder %s166, %s180
      %p182 = scmp.eq.s32.totalorder %s25, 0
      %p183 = por %p181, %p182
      %s185 = sadd.s32 %s184, 1
      %p188 = scmp.eq.s32.totalorder %s19, 1
      %p189 = scmp.ne.s32.totalorder %s184, %s186
      %p190 = scmp.eq.s32.totalorder %s19, 0
      %p191 = por %p189, %p190
      %p192 = scmp.ne.s32.totalorder %s184, %s186
      %p193 = scmp.eq.s32.totalorder %s24, 1
      %p194 = por %p192, %p193
      %p195 = scmp.ne.s32.totalorder %s186, %s187
      %p196 = scmp.eq.s32.totalorder %s24, 0
      %p197 = por %p195, %p196
      %p198 = scmp.ne.s32.totalorder %s186, %s187
      %p199 = scmp.eq.s32.totalorder %s25, 1
      %p200 = por %p198, %p199
      %p202 = scmp.ne.s32.totalorder %s187, %s201
      %p203 = scmp.eq.s32.totalorder %s25, 0
      %p204 = por %p202, %p203
      %s206 = sadd.s32 %s205, 1
      %p209 = scmp.eq.s32.totalorder %s19, 1
      %p210 = scmp.ne.s32.totalorder %s205, %s207
      %p211 = scmp.eq.s32.totalorder %s19, 0
      %p212 = por %p210, %p211
      %p213 = scmp.ne.s32.totalorder %s205, %s207
      %p214 = scmp.eq.s32.totalorder %s24, 1
      %p215 = por %p213, %p214
      %p216 = scmp.ne.s32.totalorder %s207, %s208
      %p217 = scmp.eq.s32.totalorder %s24, 0
      %p218 = por %p216, %p217
      %p219 = scmp.ne.s32.totalorder %s207, %s208
      %p220 = scmp.eq.s32.totalorder %s25, 1
      %p221 = por %p219, %p220
      %p223 = scmp.ne.s32.totalorder %s208, %s222
      %p224 = scmp.eq.s32.totalorder %s25, 0
      %p225 = por %p223, %p224
      %s226 = ssub.s32 %s19, %s26
      %p227 = scmp.eq.s32.totalorder %s226, 0
      %s229 = sadd.s32 %s228, 1
      %s230 = scalar_select %p227, %s228, %s229
      %p233 = pneg %p227
      %p234 = scmp.eq.s32.totalorder %s19, 1
      %p235 = por %p233, %p234
      %p236 = scmp.ne.s32.totalorder %s228, %s231
      %p237 = scmp.eq.s32.totalorder %s19, 0
      %p238 = por %p236, %p237
      %p239 = scmp.ne.s32.totalorder %s228, %s231
      %p240 = scmp.eq.s32.totalorder %s24, 1
      %p241 = por %p239, %p240
      %p242 = scmp.ne.s32.totalorder %s231, %s232
      %p243 = scmp.eq.s32.totalorder %s24, 0
      %p244 = por %p242, %p243
      %p245 = scmp.ne.s32.totalorder %s231, %s232
      %p246 = scmp.eq.s32.totalorder %s25, 1
      %p247 = por %p245, %p246
      %p249 = scmp.ne.s32.totalorder %s232, %s248
      %p250 = scmp.eq.s32.totalorder %s25, 0
      %p251 = por %p249, %p250
      %p252 = scmp.le.s32.totalorder 1, %s19
      %p253 = scmp.lt.s32.totalorder %s19, 3
      %p254 = pnand %p252, %p253
      %p255 = pneg %p254
      // Predicated region
      $region9: #{tpu_custom_call.1} parent=5 // pred_check
        _
      $region10: #{tpu_custom_call.1} parent=5 // pred_check_branch
        %257 = sbr.rel (%p254) target = $region12
      $region11: #{tpu_custom_call.1} parent=5 // pred_region
        %s258 = ssub.s32 %s19, 1
        // Predicated region
        $region13: #{tpu_custom_call.1} parent=11 // pred_check
          %p259 = pneg %p92
        $region14: #{tpu_custom_call.1} parent=11 // pred_check_branch
          %261 = sbr.rel (%p259) target = $region16
        $region15: #{tpu_custom_call.1} parent=11 // pred_region
          _
        $region16: #{tpu_custom_call.1} parent=11 // pred_fallthru
          _
        // Predicated region
        $region17: #{tpu_custom_call.1} parent=11 // pred_check
          %p262 = pneg %p113
        $region18: #{tpu_custom_call.1} parent=11 // pred_check_branch
          %264 = sbr.rel (%p262) target = $region20
        $region19: #{tpu_custom_call.1} parent=11 // pred_region
          _
        $region20: #{tpu_custom_call.1} parent=11 // pred_fallthru
          _
        // Predicated region
        $region21: #{tpu_custom_call.1} parent=11 // pred_check
          %p265 = pneg %p134
        $region22: #{tpu_custom_call.1} parent=11 // pred_check_branch
          %267 = sbr.rel (%p265) target = $region24
        $region23: #{tpu_custom_call.1} parent=11 // pred_region
          _
        $region24: #{tpu_custom_call.1} parent=11 // pred_fallthru
          _
        // Predicated region
        $region25: #{tpu_custom_call.1} parent=11 // pred_check
          %p268 = pneg %p155
        $region26: #{tpu_custom_call.1} parent=11 // pred_check_branch
          %270 = sbr.rel (%p268) target = $region28
        $region27: #{tpu_custom_call.1} parent=11 // pred_region
          _
        $region28: #{tpu_custom_call.1} parent=11 // pred_fallthru
          _
        // Predicated region
        $region29: #{tpu_custom_call.1} parent=11 // pred_check
          %p271 = pneg %p176
        $region30: #{tpu_custom_call.1} parent=11 // pred_check_branch
          %273 = sbr.rel (%p271) target = $region32
        $region31: #{tpu_custom_call.1} parent=11 // pred_region
          _
        $region32: #{tpu_custom_call.1} parent=11 // pred_fallthru
          _
        // Predicated region
        $region33: #{tpu_custom_call.1} parent=11 // pred_check
          %p274 = pneg %p197
        $region34: #{tpu_custom_call.1} parent=11 // pred_check_branch
          %276 = sbr.rel (%p274) target = $region36
        $region35: #{tpu_custom_call.1} parent=11 // pred_region
          _
        $region36: #{tpu_custom_call.1} parent=11 // pred_fallthru
          _
        // Predicated region
        $region37: #{tpu_custom_call.1} parent=11 // pred_check
          %p277 = pneg %p218
        $region38: #{tpu_custom_call.1} parent=11 // pred_check_branch
          %279 = sbr.rel (%p277) target = $region40
        $region39: #{tpu_custom_call.1} parent=11 // pred_region
          _
        $region40: #{tpu_custom_call.1} parent=11 // pred_fallthru
          _
      $region12: #{tpu_custom_call.1} parent=5 // pred_fallthru
        _
      %p280 = scmp.lt.s32.totalorder %s19, 2
      // Predicated region
      $region41: #{tpu_custom_call.1} parent=5 // pred_check
        %p281 = pneg %p280
      $region42: #{tpu_custom_call.1} parent=5 // pred_check_branch
        %283 = sbr.rel (%p281) target = $region44
      $region43: #{tpu_custom_call.1} parent=5 // pred_region
        // Predicated region
        $region45: #{tpu_custom_call.1} parent=43 // pred_check
          %p284 = pneg %p39
        $region46: #{tpu_custom_call.1} parent=43 // pred_check_branch
          %286 = sbr.rel (%p284) target = $region48
        $region47: #{tpu_custom_call.1} parent=43 // pred_region
          %p287 = scmp.lt.s32.totalorder %s19, 1
          %s288 = scalar_select %p287, %s19, 1
          %s289 = smul.addr %s288, 8
          %s290 = smul.addr %s289, 8
          %s291 = scalar_lea.vmem %s0, %s290
        $region48: #{tpu_custom_call.1} parent=43 // pred_fallthru
          _
        // Predicated region
        $region49: #{tpu_custom_call.1} parent=43 // pred_check
          %p292 = pneg %p65
        $region50: #{tpu_custom_call.1} parent=43 // pred_check_branch
          %294 = sbr.rel (%p292) target = $region52
        $region51: #{tpu_custom_call.1} parent=43 // pred_region
          %p295 = scmp.lt.s32.totalorder %s19, 1
          %s296 = scalar_select %p295, %s19, 1
          %s297 = smul.addr %s296, 32
          %s298 = smul.addr %s297, 8
          %s299 = scalar_lea.vmem %s1, %s298
        $region52: #{tpu_custom_call.1} parent=43 // pred_fallthru
          _
      $region44: #{tpu_custom_call.1} parent=5 // pred_fallthru
        _
      %p300 = scmp.le.s32.totalorder 1, %s19
      %p301 = scmp.lt.s32.totalorder %s19, 3
      %p302 = pnand %p300, %p301
      %p303 = pneg %p302
      // Predicated region
      $region53: #{tpu_custom_call.1} parent=5 // pred_check
        _
      $region54: #{tpu_custom_call.1} parent=5 // pred_check_branch
        %305 = sbr.rel (%p302) target = $region56
      $region55: #{tpu_custom_call.1} parent=5 // pred_region
        %s306 = ssub.s32 %s19, 1
        %p307 = scmp.lt.s32.totalorder %s24, 1
        %s308 = scalar_select %p307, %s24, 1
        %s309 = smul.addr %s308, 8
        %s310 = smul.addr %s309, 8
        %s311 = scalar_lea.vmem %s0, %s310
        %p312 = pneg %p45
        %p313 = pneg %p42
        %p314 = scmp.lt.s32.totalorder %s24, 1
        %s315 = scalar_select %p314, %s24, 1
        %s316 = smul.addr %s315, 32
        %s317 = smul.addr %s316, 8
        %s318 = scalar_lea.vmem %s1, %s317
        %p319 = pneg %p71
        %p320 = pneg %p68
        %p321 = pneg %p92
        %p322 = pneg %p89
        %p323 = pneg %p113
        %p324 = pneg %p110
        %p325 = pneg %p134
        %p326 = pneg %p131
        %p327 = pneg %p155
        %p328 = pneg %p152
        %p329 = pneg %p176
        %p330 = pneg %p173
        %p331 = pneg %p197
        %p332 = pneg %p194
        %p333 = pneg %p218
        %p334 = pneg %p215
        %p335 = pneg %p244
        %p336 = pneg %p241
        %s337 = sand.u32 %s231, 1
        %s338 = scalar_lea.sflag [#allocation4], %s337
        %s339 = sand.u32 %s231, 1
        %s340 = smul.addr %s339, 64
        %s341 = scalar_lea.vmem [#allocation3], %s340
        %p342 = scmp.lt.s32.totalorder %s24, 1
        %s343 = scalar_select %p342, %s24, 1
        %s344 = smul.addr %s343, 8
        %s345 = smul.addr %s344, 8
        %s346 = scalar_lea.vmem %s0, %s345
        %p347 = scmp.lt.s32.totalorder %s24, 1
        %s348 = scalar_select %p347, %s24, 1
        %s349 = smul.addr %s348, 32
        %s350 = smul.addr %s349, 8
        %s351 = scalar_lea.vmem %s1, %s350
        %v352 = vld [vmem:[%s346] sm:$0xff]
        %v353 = vld [vmem:[%s346 + $0x8] sm:$0xff]
        %v354 = vld [vmem:[%s346 + $0x10] sm:$0xff]
        %v355 = vld [vmem:[%s346 + $0x18] sm:$0xff]
        %v356 = vld [vmem:[%s346 + $0x20] sm:$0xff]
        %v357 = vld [vmem:[%s346 + $0x28] sm:$0xff]
        %v358 = vld [vmem:[%s346 + $0x30] sm:$0xff]
        %v359 = vld [vmem:[%s346 + $0x38] sm:$0xff]
        %v360 = vld [vmem:[%s351] sm:$0xff]
        %v361 = vld [vmem:[%s351 + $0x8] sm:$0xff]
        %v362 = vld [vmem:[%s351 + $0x10] sm:$0xff]
        %v363 = vld [vmem:[%s351 + $0x18] sm:$0xff]
        %v364 = vld [vmem:[%s351 + $0x20] sm:$0xff]
        %v365 = vld [vmem:[%s351 + $0x28] sm:$0xff]
        %v366 = vld [vmem:[%s351 + $0x30] sm:$0xff]
        %v367 = vld [vmem:[%s351 + $0x38] sm:$0xff]
        %v368 = vld [vmem:[%s351 + $0x40] sm:$0xff]
        %v369 = vld [vmem:[%s351 + $0x48] sm:$0xff]
        %v370 = vld [vmem:[%s351 + $0x50] sm:$0xff]
        %v371 = vld [vmem:[%s351 + $0x58] sm:$0xff]
        %v372 = vld [vmem:[%s351 + $0x60] sm:$0xff]
        %v373 = vld [vmem:[%s351 + $0x68] sm:$0xff]
        %v374 = vld [vmem:[%s351 + $0x70] sm:$0xff]
        %v375 = vld [vmem:[%s351 + $0x78] sm:$0xff]
        %v376 = vld [vmem:[%s351 + $0x80] sm:$0xff]
        %v377 = vld [vmem:[%s351 + $0x88] sm:$0xff]
        %v378 = vld [vmem:[%s351 + $0x90] sm:$0xff]
        %v379 = vld [vmem:[%s351 + $0x98] sm:$0xff]
        %v380 = vld [vmem:[%s351 + $0xa0] sm:$0xff]
        %v381 = vld [vmem:[%s351 + $0xa8] sm:$0xff]
        %v382 = vld [vmem:[%s351 + $0xb0] sm:$0xff]
        %v383 = vld [vmem:[%s351 + $0xb8] sm:$0xff]
        %v384 = vld [vmem:[%s351 + $0xc0] sm:$0xff]
        %v385 = vld [vmem:[%s351 + $0xc8] sm:$0xff]
        %v386 = vld [vmem:[%s351 + $0xd0] sm:$0xff]
        %v387 = vld [vmem:[%s351 + $0xd8] sm:$0xff]
        %v388 = vld [vmem:[%s351 + $0xe0] sm:$0xff]
        %v389 = vld [vmem:[%s351 + $0xe8] sm:$0xff]
        %v390 = vld [vmem:[%s351 + $0xf0] sm:$0xff]
        %v391 = vld [vmem:[%s351 + $0xf8] sm:$0xff]
        %s392 = sld [smem:[#allocation2]]
        %v393 = vld [vmem:[%s2] sm:$0xff]
        %v394 = vld [vmem:[%s2 + $0x8] sm:$0xff]
        %v395 = vld [vmem:[%s2 + $0x10] sm:$0xff]
        %v396 = vld [vmem:[%s2 + $0x18] sm:$0xff]
        %v397 = vld [vmem:[%s5] sm:$0x1]
        %v399 = vlaneseq
        %v400 = vshrl.u32 %v399, 7
        %v401 = vsub.s32 0, %v400
        %v402 = vrot.slane %v397, %v401
        %vm404 = vcmask 261120
        %v406 = vsel %vm404, %v360, 0
        %v409 = vsel %vm404, %v361, 0
        %v412 = vsel %vm404, %v362, 0
        %v415 = vsel %vm404, %v363, 0
        %v418 = vsel %vm404, %v364, 0
        %v421 = vsel %vm404, %v365, 0
        %v424 = vsel %vm404, %v366, 0
        %v427 = vsel %vm404, %v367, 0
        %v430 = vsel %vm404, %v368, 0
        %v433 = vsel %vm404, %v369, 0
        %v436 = vsel %vm404, %v370, 0
        %v439 = vsel %vm404, %v371, 0
        %v442 = vsel %vm404, %v372, 0
        %v445 = vsel %vm404, %v373, 0
        %v448 = vsel %vm404, %v374, 0
        %v451 = vsel %vm404, %v375, 0
        %v454 = vsel %vm404, %v376, 0
        %v457 = vsel %vm404, %v377, 0
        %v460 = vsel %vm404, %v378, 0
        %v463 = vsel %vm404, %v379, 0
        %v466 = vsel %vm404, %v380, 0
        %v469 = vsel %vm404, %v381, 0
        %v472 = vsel %vm404, %v382, 0
        %v475 = vsel %vm404, %v383, 0
        %v478 = vsel %vm404, %v384, 0
        %v481 = vsel %vm404, %v385, 0
        %v484 = vsel %vm404, %v386, 0
        %v487 = vsel %vm404, %v387, 0
        %v490 = vsel %vm404, %v388, 0
        %v493 = vsel %vm404, %v389, 0
        %v496 = vsel %vm404, %v390, 0
        %v499 = vsel %vm404, %v391, 0
        %501 = vmatprep.subr.mxu0 0.0
        %502 = vmatpush1.msra.mxu0 0.0
        %503 = vmatprep.subr.mxu0 0.0
        %504 = vmatpush1.msra.mxu0 0.0
        %505 = vmatprep.subr.mxu0 0.0
        %506 = vmatpush1.msra.mxu0 0.0
        %507 = vmatprep.subr.mxu0 0.0
        %508 = vmatpush1.msra.mxu0 0.0
        %509 = vmatprep.subr.mxu0 0.0
        %510 = vmatpush1.msra.mxu0 0.0
        %511 = vmatprep.subr.mxu0 0.0
        %512 = vmatpush1.msra.mxu0 0.0
        %513 = vmatprep.subr.mxu0 0.0
        %514 = vmatpush1.msra.mxu0 0.0
        %515 = vmatprep.subr.mxu0 0.0
        %516 = vmatpush1.msra.mxu0 0.0
        %517 = vmatprep.subr.mxu0 0.0
        %518 = vmatpush1.msra.mxu0 0.0
        %519 = vmatprep.subr.mxu0 0.0
        %520 = vmatpush1.msra.mxu0 0.0
        %521 = vmatprep.subr.mxu0 0.0
        %522 = vmatpush1.msra.mxu0 0.0
        %523 = vmatprep.subr.mxu0 0.0
        %524 = vmatpush1.msra.mxu0 0.0
        %525 = vmatprep.subr.mxu0 0.0
        %v526 = vand.u32 %v396, 4294901760
        %527 = vmatpush1.msra.mxu0 %v526
        %528 = vmatprep.subr.mxu0 0.0
        %v529 = vand.u32 %v395, 4294901760
        %530 = vmatpush1.msra.mxu0 %v529
        %531 = vmatprep.subr.mxu0 0.0
        %v532 = vand.u32 %v394, 4294901760
        %533 = vmatpush1.msra.mxu0 %v532
        %534 = vmatprep.subr.mxu0 0.0
        %v535 = vand.u32 %v393, 4294901760
        %536 = vmatpush1.msra.mxu0 %v535
        %537 = vmatprep.subr.mxu0 0.0
        %538 = vmatpush2.msra.mxu0 0.0
        %539 = vmatprep.subr.mxu0 0.0
        %540 = vmatpush2.msra.mxu0 0.0
        %541 = vmatprep.subr.mxu0 0.0
        %542 = vmatpush2.msra.mxu0 0.0
        %543 = vmatprep.subr.mxu0 0.0
        %544 = vmatpush2.msra.mxu0 0.0
        %545 = vmatprep.subr.mxu0 0.0
        %546 = vmatpush2.msra.mxu0 0.0
        %547 = vmatprep.subr.mxu0 0.0
        %548 = vmatpush2.msra.mxu0 0.0
        %549 = vmatprep.subr.mxu0 0.0
        %550 = vmatpush2.msra.mxu0 0.0
        %551 = vmatprep.subr.mxu0 0.0
        %552 = vmatpush2.msra.mxu0 0.0
        %553 = vmatprep.subr.mxu0 0.0
        %554 = vmatpush2.msra.mxu0 0.0
        %555 = vmatprep.subr.mxu0 0.0
        %556 = vmatpush2.msra.mxu0 0.0
        %557 = vmatprep.subr.mxu0 0.0
        %558 = vmatpush2.msra.mxu0 0.0
        %559 = vmatprep.subr.mxu0 0.0
        %560 = vmatpush2.msra.mxu0 0.0
        %561 = vmatprep.subr.mxu0 0.0
        %562 = vmatpush2.msra.mxu0 0.0
        %563 = vmatprep.subr.mxu0 0.0
        %564 = vmatpush2.msra.mxu0 0.0
        %565 = vmatprep.subr.mxu0 0.0
        %566 = vmatpush2.msra.mxu0 0.0
        %567 = vmatprep.subr.mxu0 0.0
        %568 = vmatpush2.msra.mxu0 0.0
        %569 = vmatprep.mubr.f32.mxu0 0.0
        %v570 = vand.u32 %v406, 4294901760
        %v571 = vsub.f32 %v406, %v570
        %v572 = vand.u32 %v571, 4294901760
        %v573 = vsub.f32 %v571, %v572
        %v574 = vand.u32 %v573, 4294901760
        %575 = vmatmul.mubr.f32.gmra.mxu0 %v574
        %v576 = vpop.f32.mrf.mxu0
        %v577 = vadd.f32 %v402, %v576
        %v578 = vpop.f32.mrf.mxu0
        %579 = vmatprep.mubr.f32.mxu0 0.0
        %v580 = vand.u32 %v409, 4294901760
        %v581 = vsub.f32 %v409, %v580
        %v582 = vand.u32 %v581, 4294901760
        %v583 = vsub.f32 %v581, %v582
        %v584 = vand.u32 %v583, 4294901760
        %585 = vmatmul.mubr.f32.gmra.mxu0 %v584
        %v586 = vpop.f32.mrf.mxu0
        %v587 = vadd.f32 %v402, %v586
        %v588 = vpop.f32.mrf.mxu0
        %589 = vmatprep.mubr.f32.mxu0 0.0
        %v590 = vand.u32 %v412, 4294901760
        %v591 = vsub.f32 %v412, %v590
        %v592 = vand.u32 %v591, 4294901760
        %v593 = vsub.f32 %v591, %v592
        %v594 = vand.u32 %v593, 4294901760
        %595 = vmatmul.mubr.f32.gmra.mxu0 %v594
        %v596 = vpop.f32.mrf.mxu0
        %v597 = vadd.f32 %v402, %v596
        %v598 = vpop.f32.mrf.mxu0
        %599 = vmatprep.mubr.f32.mxu0 0.0
        %v600 = vand.u32 %v415, 4294901760
        %v601 = vsub.f32 %v415, %v600
        %v602 = vand.u32 %v601, 4294901760
        %v603 = vsub.f32 %v601, %v602
        %v604 = vand.u32 %v603, 4294901760
        %605 = vmatmul.mubr.f32.gmra.mxu0 %v604
        %v606 = vpop.f32.mrf.mxu0
        %v607 = vadd.f32 %v402, %v606
        %v608 = vpop.f32.mrf.mxu0
        %609 = vmatprep.mubr.f32.mxu0 0.0
        %v610 = vand.u32 %v418, 4294901760
        %v611 = vsub.f32 %v418, %v610
        %v612 = vand.u32 %v611, 4294901760
        %v613 = vsub.f32 %v611, %v612
        %v614 = vand.u32 %v613, 4294901760
        %615 = vmatmul.mubr.f32.gmra.mxu0 %v614
        %v616 = vpop.f32.mrf.mxu0
        %v617 = vadd.f32 %v402, %v616
        %v618 = vpop.f32.mrf.mxu0
        %619 = vmatprep.mubr.f32.mxu0 0.0
        %v620 = vand.u32 %v421, 4294901760
        %v621 = vsub.f32 %v421, %v620
        %v622 = vand.u32 %v621, 4294901760
        %v623 = vsub.f32 %v621, %v622
        %v624 = vand.u32 %v623, 4294901760
        %625 = vmatmul.mubr.f32.gmra.mxu0 %v624
        %v626 = vpop.f32.mrf.mxu0
        %v627 = vadd.f32 %v402, %v626
        %v628 = vpop.f32.mrf.mxu0
        %629 = vmatprep.mubr.f32.mxu0 0.0
        %v630 = vand.u32 %v424, 4294901760
        %v631 = vsub.f32 %v424, %v630
        %v632 = vand.u32 %v631, 4294901760
        %v633 = vsub.f32 %v631, %v632
        %v634 = vand.u32 %v633, 4294901760
        %635 = vmatmul.mubr.f32.gmra.mxu0 %v634
        %v636 = vpop.f32.mrf.mxu0
        %v637 = vadd.f32 %v402, %v636
        %v638 = vpop.f32.mrf.mxu0
        %639 = vmatprep.mubr.f32.mxu0 0.0
        %v640 = vand.u32 %v427, 4294901760
        %v641 = vsub.f32 %v427, %v640
        %v642 = vand.u32 %v641, 4294901760
        %v643 = vsub.f32 %v641, %v642
        %v644 = vand.u32 %v643, 4294901760
        %645 = vmatmul.mubr.f32.gmra.mxu0 %v644
        %v646 = vpop.f32.mrf.mxu0
        %v647 = vadd.f32 %v402, %v646
        %v648 = vpop.f32.mrf.mxu0
        %649 = vmatprep.mubr.f32.mxu0 0.0
        %v650 = vand.u32 %v430, 4294901760
        %v651 = vsub.f32 %v430, %v650
        %v652 = vand.u32 %v651, 4294901760
        %v653 = vsub.f32 %v651, %v652
        %v654 = vand.u32 %v653, 4294901760
        %655 = vmatmul.mubr.f32.gmra.mxu0 %v654
        %v656 = vpop.f32.mrf.mxu0
        %v657 = vadd.f32 %v402, %v656
        %v658 = vpop.f32.mrf.mxu0
        %659 = vmatprep.mubr.f32.mxu0 0.0
        %v660 = vand.u32 %v433, 4294901760
        %v661 = vsub.f32 %v433, %v660
        %v662 = vand.u32 %v661, 4294901760
        %v663 = vsub.f32 %v661, %v662
        %v664 = vand.u32 %v663, 4294901760
        %665 = vmatmul.mubr.f32.gmra.mxu0 %v664
        %v666 = vpop.f32.mrf.mxu0
        %v667 = vadd.f32 %v402, %v666
        %v668 = vpop.f32.mrf.mxu0
        %669 = vmatprep.mubr.f32.mxu0 0.0
        %v670 = vand.u32 %v436, 4294901760
        %v671 = vsub.f32 %v436, %v670
        %v672 = vand.u32 %v671, 4294901760
        %v673 = vsub.f32 %v671, %v672
        %v674 = vand.u32 %v673, 4294901760
        %675 = vmatmul.mubr.f32.gmra.mxu0 %v674
        %v676 = vpop.f32.mrf.mxu0
        %v677 = vadd.f32 %v402, %v676
        %v678 = vpop.f32.mrf.mxu0
        %679 = vmatprep.mubr.f32.mxu0 0.0
        %v680 = vand.u32 %v439, 4294901760
        %v681 = vsub.f32 %v439, %v680
        %v682 = vand.u32 %v681, 4294901760
        %v683 = vsub.f32 %v681, %v682
        %v684 = vand.u32 %v683, 4294901760
        %685 = vmatmul.mubr.f32.gmra.mxu0 %v684
        %v686 = vpop.f32.mrf.mxu0
        %v687 = vadd.f32 %v402, %v686
        %v688 = vpop.f32.mrf.mxu0
        %689 = vmatprep.mubr.f32.mxu0 0.0
        %v690 = vand.u32 %v442, 4294901760
        %v691 = vsub.f32 %v442, %v690
        %v692 = vand.u32 %v691, 4294901760
        %v693 = vsub.f32 %v691, %v692
        %v694 = vand.u32 %v693, 4294901760
        %695 = vmatmul.mubr.f32.gmra.mxu0 %v694
        %v696 = vpop.f32.mrf.mxu0
        %v697 = vadd.f32 %v402, %v696
        %v698 = vpop.f32.mrf.mxu0
        %699 = vmatprep.mubr.f32.mxu0 0.0
        %v700 = vand.u32 %v445, 4294901760
        %v701 = vsub.f32 %v445, %v700
        %v702 = vand.u32 %v701, 4294901760
        %v703 = vsub.f32 %v701, %v702
        %v704 = vand.u32 %v703, 4294901760
        %705 = vmatmul.mubr.f32.gmra.mxu0 %v704
        %v706 = vpop.f32.mrf.mxu0
        %v707 = vadd.f32 %v402, %v706
        %v708 = vpop.f32.mrf.mxu0
        %709 = vmatprep.mubr.f32.mxu0 0.0
        %v710 = vand.u32 %v448, 4294901760
        %v711 = vsub.f32 %v448, %v710
        %v712 = vand.u32 %v711, 4294901760
        %v713 = vsub.f32 %v711, %v712
        %v714 = vand.u32 %v713, 4294901760
        %715 = vmatmul.mubr.f32.gmra.mxu0 %v714
        %v716 = vpop.f32.mrf.mxu0
        %v717 = vadd.f32 %v402, %v716
        %v718 = vpop.f32.mrf.mxu0
        %719 = vmatprep.mubr.f32.mxu0 0.0
        %v720 = vand.u32 %v451, 4294901760
        %v721 = vsub.f32 %v451, %v720
        %v722 = vand.u32 %v721, 4294901760
        %v723 = vsub.f32 %v721, %v722
        %v724 = vand.u32 %v723, 4294901760
        %725 = vmatmul.mubr.f32.gmra.mxu0 %v724
        %v726 = vpop.f32.mrf.mxu0
        %v727 = vadd.f32 %v402, %v726
        %v728 = vpop.f32.mrf.mxu0
        %729 = vmatprep.mubr.f32.mxu0 0.0
        %v730 = vand.u32 %v454, 4294901760
        %v731 = vsub.f32 %v454, %v730
        %v732 = vand.u32 %v731, 4294901760
        %v733 = vsub.f32 %v731, %v732
        %v734 = vand.u32 %v733, 4294901760
        %735 = vmatmul.mubr.f32.gmra.mxu0 %v734
        %v736 = vpop.f32.mrf.mxu0
        %v737 = vadd.f32 %v402, %v736
        %v738 = vpop.f32.mrf.mxu0
        %739 = vmatprep.mubr.f32.mxu0 0.0
        %v740 = vand.u32 %v457, 4294901760
        %v741 = vsub.f32 %v457, %v740
        %v742 = vand.u32 %v741, 4294901760
        %v743 = vsub.f32 %v741, %v742
        %v744 = vand.u32 %v743, 4294901760
        %745 = vmatmul.mubr.f32.gmra.mxu0 %v744
        %v746 = vpop.f32.mrf.mxu0
        %v747 = vadd.f32 %v402, %v746
        %v748 = vpop.f32.mrf.mxu0
        %749 = vmatprep.mubr.f32.mxu0 0.0
        %v750 = vand.u32 %v460, 4294901760
        %v751 = vsub.f32 %v460, %v750
        %v752 = vand.u32 %v751, 4294901760
        %v753 = vsub.f32 %v751, %v752
        %v754 = vand.u32 %v753, 4294901760
        %755 = vmatmul.mubr.f32.gmra.mxu0 %v754
        %v756 = vpop.f32.mrf.mxu0
        %v757 = vadd.f32 %v402, %v756
        %v758 = vpop.f32.mrf.mxu0
        %759 = vmatprep.mubr.f32.mxu0 0.0
        %v760 = vand.u32 %v463, 4294901760
        %v761 = vsub.f32 %v463, %v760
        %v762 = vand.u32 %v761, 4294901760
        %v763 = vsub.f32 %v761, %v762
        %v764 = vand.u32 %v763, 4294901760
        %765 = vmatmul.mubr.f32.gmra.mxu0 %v764
        %v766 = vpop.f32.mrf.mxu0
        %v767 = vadd.f32 %v402, %v766
        %v768 = vpop.f32.mrf.mxu0
        %769 = vmatprep.mubr.f32.mxu0 0.0
        %v770 = vand.u32 %v466, 4294901760
        %v771 = vsub.f32 %v466, %v770
        %v772 = vand.u32 %v771, 4294901760
        %v773 = vsub.f32 %v771, %v772
        %v774 = vand.u32 %v773, 4294901760
        %775 = vmatmul.mubr.f32.gmra.mxu0 %v774
        %v776 = vpop.f32.mrf.mxu0
        %v777 = vadd.f32 %v402, %v776
        %v778 = vpop.f32.mrf.mxu0
        %779 = vmatprep.mubr.f32.mxu0 0.0
        %v780 = vand.u32 %v469, 4294901760
        %v781 = vsub.f32 %v469, %v780
        %v782 = vand.u32 %v781, 4294901760
        %v783 = vsub.f32 %v781, %v782
        %v784 = vand.u32 %v783, 4294901760
        %785 = vmatmul.mubr.f32.gmra.mxu0 %v784
        %v786 = vpop.f32.mrf.mxu0
        %v787 = vadd.f32 %v402, %v786
        %v788 = vpop.f32.mrf.mxu0
        %789 = vmatprep.mubr.f32.mxu0 0.0
        %v790 = vand.u32 %v472, 4294901760
        %v791 = vsub.f32 %v472, %v790
        %v792 = vand.u32 %v791, 4294901760
        %v793 = vsub.f32 %v791, %v792
        %v794 = vand.u32 %v793, 4294901760
        %795 = vmatmul.mubr.f32.gmra.mxu0 %v794
        %v796 = vpop.f32.mrf.mxu0
        %v797 = vadd.f32 %v402, %v796
        %v798 = vpop.f32.mrf.mxu0
        %799 = vmatprep.mubr.f32.mxu0 0.0
        %v800 = vand.u32 %v475, 4294901760
        %v801 = vsub.f32 %v475, %v800
        %v802 = vand.u32 %v801, 4294901760
        %v803 = vsub.f32 %v801, %v802
        %v804 = vand.u32 %v803, 4294901760
        %805 = vmatmul.mubr.f32.gmra.mxu0 %v804
        %v806 = vpop.f32.mrf.mxu0
        %v807 = vadd.f32 %v402, %v806
        %v808 = vpop.f32.mrf.mxu0
        %809 = vmatprep.mubr.f32.mxu0 0.0
        %v810 = vand.u32 %v478, 4294901760
        %v811 = vsub.f32 %v478, %v810
        %v812 = vand.u32 %v811, 4294901760
        %v813 = vsub.f32 %v811, %v812
        %v814 = vand.u32 %v813, 4294901760
        %815 = vmatmul.mubr.f32.gmra.mxu0 %v814
        %v816 = vpop.f32.mrf.mxu0
        %v817 = vadd.f32 %v402, %v816
        %v818 = vpop.f32.mrf.mxu0
        %819 = vmatprep.mubr.f32.mxu0 0.0
        %v820 = vand.u32 %v481, 4294901760
        %v821 = vsub.f32 %v481, %v820
        %v822 = vand.u32 %v821, 4294901760
        %v823 = vsub.f32 %v821, %v822
        %v824 = vand.u32 %v823, 4294901760
        %825 = vmatmul.mubr.f32.gmra.mxu0 %v824
        %v826 = vpop.f32.mrf.mxu0
        %v827 = vadd.f32 %v402, %v826
        %v828 = vpop.f32.mrf.mxu0
        %829 = vmatprep.mubr.f32.mxu0 0.0
        %v830 = vand.u32 %v484, 4294901760
        %v831 = vsub.f32 %v484, %v830
        %v832 = vand.u32 %v831, 4294901760
        %v833 = vsub.f32 %v831, %v832
        %v834 = vand.u32 %v833, 4294901760
        %835 = vmatmul.mubr.f32.gmra.mxu0 %v834
        %v836 = vpop.f32.mrf.mxu0
        %v837 = vadd.f32 %v402, %v836
        %v838 = vpop.f32.mrf.mxu0
        %839 = vmatprep.mubr.f32.mxu0 0.0
        %v840 = vand.u32 %v487, 4294901760
        %v841 = vsub.f32 %v487, %v840
        %v842 = vand.u32 %v841, 4294901760
        %v843 = vsub.f32 %v841, %v842
        %v844 = vand.u32 %v843, 4294901760
        %845 = vmatmul.mubr.f32.gmra.mxu0 %v844
        %v846 = vpop.f32.mrf.mxu0
        %v847 = vadd.f32 %v402, %v846
        %v848 = vpop.f32.mrf.mxu0
        %849 = vmatprep.mubr.f32.mxu0 0.0
        %v850 = vand.u32 %v490, 4294901760
        %v851 = vsub.f32 %v490, %v850
        %v852 = vand.u32 %v851, 4294901760
        %v853 = vsub.f32 %v851, %v852
        %v854 = vand.u32 %v853, 4294901760
        %855 = vmatmul.mubr.f32.gmra.mxu0 %v854
        %v856 = vpop.f32.mrf.mxu0
        %v857 = vadd.f32 %v402, %v856
        %v858 = vpop.f32.mrf.mxu0
        %859 = vmatprep.mubr.f32.mxu0 0.0
        %v860 = vand.u32 %v493, 4294901760
        %v861 = vsub.f32 %v493, %v860
        %v862 = vand.u32 %v861, 4294901760
        %v863 = vsub.f32 %v861, %v862
        %v864 = vand.u32 %v863, 4294901760
        %865 = vmatmul.mubr.f32.gmra.mxu0 %v864
        %v866 = vpop.f32.mrf.mxu0
        %v867 = vadd.f32 %v402, %v866
        %v868 = vpop.f32.mrf.mxu0
        %869 = vmatprep.mubr.f32.mxu0 0.0
        %v870 = vand.u32 %v496, 4294901760
        %v871 = vsub.f32 %v496, %v870
        %v872 = vand.u32 %v871, 4294901760
        %v873 = vsub.f32 %v871, %v872
        %v874 = vand.u32 %v873, 4294901760
        %875 = vmatmul.mubr.f32.gmra.mxu0 %v874
        %v876 = vpop.f32.mrf.mxu0
        %v877 = vadd.f32 %v402, %v876
        %v878 = vpop.f32.mrf.mxu0
        %879 = vmatprep.mubr.f32.mxu0 0.0
        %v880 = vand.u32 %v499, 4294901760
        %v881 = vsub.f32 %v499, %v880
        %v882 = vand.u32 %v881, 4294901760
        %v883 = vsub.f32 %v881, %v882
        %v884 = vand.u32 %v883, 4294901760
        %885 = vmatmul.mubr.f32.gmra.mxu0 %v884
        %v886 = vpop.f32.mrf.mxu0
        %v887 = vadd.f32 %v402, %v886
        %v888 = vpop.f32.mrf.mxu0
        %889 = vdwg.mxu0
        %890 = vmatprep.subr.mxu0 0.0
        %891 = vmatpush1.msra.mxu0 0.0
        %892 = vmatprep.subr.mxu0 0.0
        %893 = vmatpush1.msra.mxu0 0.0
        %894 = vmatprep.subr.mxu0 0.0
        %895 = vmatpush1.msra.mxu0 0.0
        %896 = vmatprep.subr.mxu0 0.0
        %897 = vmatpush1.msra.mxu0 0.0
        %898 = vmatprep.subr.mxu0 0.0
        %899 = vmatpush1.msra.mxu0 0.0
        %900 = vmatprep.subr.mxu0 0.0
        %901 = vmatpush1.msra.mxu0 0.0
        %902 = vmatprep.subr.mxu0 0.0
        %903 = vmatpush1.msra.mxu0 0.0
        %904 = vmatprep.subr.mxu0 0.0
        %905 = vmatpush1.msra.mxu0 0.0
        %906 = vmatprep.subr.mxu0 0.0
        %907 = vmatpush1.msra.mxu0 0.0
        %908 = vmatprep.subr.mxu0 0.0
        %909 = vmatpush1.msra.mxu0 0.0
        %910 = vmatprep.subr.mxu0 0.0
        %911 = vmatpush1.msra.mxu0 0.0
        %912 = vmatprep.subr.mxu0 0.0
        %913 = vmatpush1.msra.mxu0 0.0
        %914 = vmatprep.subr.mxu0 0.0
        %v915 = vand.u32 %v396, 4294901760
        %v916 = vsub.f32 %v396, %v915
        %v917 = vand.u32 %v916, 4294901760
        %v918 = vsub.f32 %v916, %v917
        %v919 = vand.u32 %v918, 4294901760
        %920 = vmatpush1.msra.mxu0 %v919
        %921 = vmatprep.subr.mxu0 0.0
        %v922 = vand.u32 %v395, 4294901760
        %v923 = vsub.f32 %v395, %v922
        %v924 = vand.u32 %v923, 4294901760
        %v925 = vsub.f32 %v923, %v924
        %v926 = vand.u32 %v925, 4294901760
        %927 = vmatpush1.msra.mxu0 %v926
        %928 = vmatprep.subr.mxu0 0.0
        %v929 = vand.u32 %v394, 4294901760
        %v930 = vsub.f32 %v394, %v929
        %v931 = vand.u32 %v930, 4294901760
        %v932 = vsub.f32 %v930, %v931
        %v933 = vand.u32 %v932, 4294901760
        %934 = vmatpush1.msra.mxu0 %v933
        %935 = vmatprep.subr.mxu0 0.0
        %v936 = vand.u32 %v393, 4294901760
        %v937 = vsub.f32 %v393, %v936
        %v938 = vand.u32 %v937, 4294901760
        %v939 = vsub.f32 %v937, %v938
        %v940 = vand.u32 %v939, 4294901760
        %941 = vmatpush1.msra.mxu0 %v940
        %942 = vmatprep.subr.mxu0 0.0
        %943 = vmatpush2.msra.mxu0 0.0
        %944 = vmatprep.subr.mxu0 0.0
        %945 = vmatpush2.msra.mxu0 0.0
        %946 = vmatprep.subr.mxu0 0.0
        %947 = vmatpush2.msra.mxu0 0.0
        %948 = vmatprep.subr.mxu0 0.0
        %949 = vmatpush2.msra.mxu0 0.0
        %950 = vmatprep.subr.mxu0 0.0
        %951 = vmatpush2.msra.mxu0 0.0
        %952 = vmatprep.subr.mxu0 0.0
        %953 = vmatpush2.msra.mxu0 0.0
        %954 = vmatprep.subr.mxu0 0.0
        %955 = vmatpush2.msra.mxu0 0.0
        %956 = vmatprep.subr.mxu0 0.0
        %957 = vmatpush2.msra.mxu0 0.0
        %958 = vmatprep.subr.mxu0 0.0
        %959 = vmatpush2.msra.mxu0 0.0
        %960 = vmatprep.subr.mxu0 0.0
        %961 = vmatpush2.msra.mxu0 0.0
        %962 = vmatprep.subr.mxu0 0.0
        %963 = vmatpush2.msra.mxu0 0.0
        %964 = vmatprep.subr.mxu0 0.0
        %965 = vmatpush2.msra.mxu0 0.0
        %966 = vmatprep.subr.mxu0 0.0
        %967 = vmatpush2.msra.mxu0 0.0
        %968 = vmatprep.subr.mxu0 0.0
        %969 = vmatpush2.msra.mxu0 0.0
        %970 = vmatprep.subr.mxu0 0.0
        %971 = vmatpush2.msra.mxu0 0.0
        %972 = vmatprep.subr.mxu0 0.0
        %973 = vmatpush2.msra.mxu0 0.0
        %974 = vmatprep.mubr.f32.mxu0 0.0
        %v975 = vand.u32 %v406, 4294901760
        %976 = vmatmul.mubr.f32.gmra.mxu0 %v975
        %v977 = vpop.f32.mrf.mxu0
        %v978 = vadd.f32 %v577, %v977
        %v979 = vpop.f32.mrf.mxu0
        %980 = vmatprep.mubr.f32.mxu0 0.0
        %v981 = vand.u32 %v409, 4294901760
        %982 = vmatmul.mubr.f32.gmra.mxu0 %v981
        %v983 = vpop.f32.mrf.mxu0
        %v984 = vadd.f32 %v587, %v983
        %v985 = vpop.f32.mrf.mxu0
        %986 = vmatprep.mubr.f32.mxu0 0.0
        %v987 = vand.u32 %v412, 4294901760
        %988 = vmatmul.mubr.f32.gmra.mxu0 %v987
        %v989 = vpop.f32.mrf.mxu0
        %v990 = vadd.f32 %v597, %v989
        %v991 = vpop.f32.mrf.mxu0
        %992 = vmatprep.mubr.f32.mxu0 0.0
        %v993 = vand.u32 %v415, 4294901760
        %994 = vmatmul.mubr.f32.gmra.mxu0 %v993
        %v995 = vpop.f32.mrf.mxu0
        %v996 = vadd.f32 %v607, %v995
        %v997 = vpop.f32.mrf.mxu0
        %998 = vmatprep.mubr.f32.mxu0 0.0
        %v999 = vand.u32 %v418, 4294901760
        %1000 = vmatmul.mubr.f32.gmra.mxu0 %v999
        %v1001 = vpop.f32.mrf.mxu0
        %v1002 = vadd.f32 %v617, %v1001
        %v1003 = vpop.f32.mrf.mxu0
        %1004 = vmatprep.mubr.f32.mxu0 0.0
        %v1005 = vand.u32 %v421, 4294901760
        %1006 = vmatmul.mubr.f32.gmra.mxu0 %v1005
        %v1007 = vpop.f32.mrf.mxu0
        %v1008 = vadd.f32 %v627, %v1007
        %v1009 = vpop.f32.mrf.mxu0
        %1010 = vmatprep.mubr.f32.mxu0 0.0
        %v1011 = vand.u32 %v424, 4294901760
        %1012 = vmatmul.mubr.f32.gmra.mxu0 %v1011
        %v1013 = vpop.f32.mrf.mxu0
        %v1014 = vadd.f32 %v637, %v1013
        %v1015 = vpop.f32.mrf.mxu0
        %1016 = vmatprep.mubr.f32.mxu0 0.0
        %v1017 = vand.u32 %v427, 4294901760
        %1018 = vmatmul.mubr.f32.gmra.mxu0 %v1017
        %v1019 = vpop.f32.mrf.mxu0
        %v1020 = vadd.f32 %v647, %v1019
        %v1021 = vpop.f32.mrf.mxu0
        %1022 = vmatprep.mubr.f32.mxu0 0.0
        %v1023 = vand.u32 %v430, 4294901760
        %1024 = vmatmul.mubr.f32.gmra.mxu0 %v1023
        %v1025 = vpop.f32.mrf.mxu0
        %v1026 = vadd.f32 %v657, %v1025
        %v1027 = vpop.f32.mrf.mxu0
        %1028 = vmatprep.mubr.f32.mxu0 0.0
        %v1029 = vand.u32 %v433, 4294901760
        %1030 = vmatmul.mubr.f32.gmra.mxu0 %v1029
        %v1031 = vpop.f32.mrf.mxu0
        %v1032 = vadd.f32 %v667, %v1031
        %v1033 = vpop.f32.mrf.mxu0
        %1034 = vmatprep.mubr.f32.mxu0 0.0
        %v1035 = vand.u32 %v436, 4294901760
        %1036 = vmatmul.mubr.f32.gmra.mxu0 %v1035
        %v1037 = vpop.f32.mrf.mxu0
        %v1038 = vadd.f32 %v677, %v1037
        %v1039 = vpop.f32.mrf.mxu0
        %1040 = vmatprep.mubr.f32.mxu0 0.0
        %v1041 = vand.u32 %v439, 4294901760
        %1042 = vmatmul.mubr.f32.gmra.mxu0 %v1041
        %v1043 = vpop.f32.mrf.mxu0
        %v1044 = vadd.f32 %v687, %v1043
        %v1045 = vpop.f32.mrf.mxu0
        %1046 = vmatprep.mubr.f32.mxu0 0.0
        %v1047 = vand.u32 %v442, 4294901760
        %1048 = vmatmul.mubr.f32.gmra.mxu0 %v1047
        %v1049 = vpop.f32.mrf.mxu0
        %v1050 = vadd.f32 %v697, %v1049
        %v1051 = vpop.f32.mrf.mxu0
        %1052 = vmatprep.mubr.f32.mxu0 0.0
        %v1053 = vand.u32 %v445, 4294901760
        %1054 = vmatmul.mubr.f32.gmra.mxu0 %v1053
        %v1055 = vpop.f32.mrf.mxu0
        %v1056 = vadd.f32 %v707, %v1055
        %v1057 = vpop.f32.mrf.mxu0
        %1058 = vmatprep.mubr.f32.mxu0 0.0
        %v1059 = vand.u32 %v448, 4294901760
        %1060 = vmatmul.mubr.f32.gmra.mxu0 %v1059
        %v1061 = vpop.f32.mrf.mxu0
        %v1062 = vadd.f32 %v717, %v1061
        %v1063 = vpop.f32.mrf.mxu0
        %1064 = vmatprep.mubr.f32.mxu0 0.0
        %v1065 = vand.u32 %v451, 4294901760
        %1066 = vmatmul.mubr.f32.gmra.mxu0 %v1065
        %v1067 = vpop.f32.mrf.mxu0
        %v1068 = vadd.f32 %v727, %v1067
        %v1069 = vpop.f32.mrf.mxu0
        %1070 = vmatprep.mubr.f32.mxu0 0.0
        %v1071 = vand.u32 %v454, 4294901760
        %1072 = vmatmul.mubr.f32.gmra.mxu0 %v1071
        %v1073 = vpop.f32.mrf.mxu0
        %v1074 = vadd.f32 %v737, %v1073
        %v1075 = vpop.f32.mrf.mxu0
        %1076 = vmatprep.mubr.f32.mxu0 0.0
        %v1077 = vand.u32 %v457, 4294901760
        %1078 = vmatmul.mubr.f32.gmra.mxu0 %v1077
        %v1079 = vpop.f32.mrf.mxu0
        %v1080 = vadd.f32 %v747, %v1079
        %v1081 = vpop.f32.mrf.mxu0
        %1082 = vmatprep.mubr.f32.mxu0 0.0
        %v1083 = vand.u32 %v460, 4294901760
        %1084 = vmatmul.mubr.f32.gmra.mxu0 %v1083
        %v1085 = vpop.f32.mrf.mxu0
        %v1086 = vadd.f32 %v757, %v1085
        %v1087 = vpop.f32.mrf.mxu0
        %1088 = vmatprep.mubr.f32.mxu0 0.0
        %v1089 = vand.u32 %v463, 4294901760
        %1090 = vmatmul.mubr.f32.gmra.mxu0 %v1089
        %v1091 = vpop.f32.mrf.mxu0
        %v1092 = vadd.f32 %v767, %v1091
        %v1093 = vpop.f32.mrf.mxu0
        %1094 = vmatprep.mubr.f32.mxu0 0.0
        %v1095 = vand.u32 %v466, 4294901760
        %1096 = vmatmul.mubr.f32.gmra.mxu0 %v1095
        %v1097 = vpop.f32.mrf.mxu0
        %v1098 = vadd.f32 %v777, %v1097
        %v1099 = vpop.f32.mrf.mxu0
        %1100 = vmatprep.mubr.f32.mxu0 0.0
        %v1101 = vand.u32 %v469, 4294901760
        %1102 = vmatmul.mubr.f32.gmra.mxu0 %v1101
        %v1103 = vpop.f32.mrf.mxu0
        %v1104 = vadd.f32 %v787, %v1103
        %v1105 = vpop.f32.mrf.mxu0
        %1106 = vmatprep.mubr.f32.mxu0 0.0
        %v1107 = vand.u32 %v472, 4294901760
        %1108 = vmatmul.mubr.f32.gmra.mxu0 %v1107
        %v1109 = vpop.f32.mrf.mxu0
        %v1110 = vadd.f32 %v797, %v1109
        %v1111 = vpop.f32.mrf.mxu0
        %1112 = vmatprep.mubr.f32.mxu0 0.0
        %v1113 = vand.u32 %v475, 4294901760
        %1114 = vmatmul.mubr.f32.gmra.mxu0 %v1113
        %v1115 = vpop.f32.mrf.mxu0
        %v1116 = vadd.f32 %v807, %v1115
        %v1117 = vpop.f32.mrf.mxu0
        %1118 = vmatprep.mubr.f32.mxu0 0.0
        %v1119 = vand.u32 %v478, 4294901760
        %1120 = vmatmul.mubr.f32.gmra.mxu0 %v1119
        %v1121 = vpop.f32.mrf.mxu0
        %v1122 = vadd.f32 %v817, %v1121
        %v1123 = vpop.f32.mrf.mxu0
        %1124 = vmatprep.mubr.f32.mxu0 0.0
        %v1125 = vand.u32 %v481, 4294901760
        %1126 = vmatmul.mubr.f32.gmra.mxu0 %v1125
        %v1127 = vpop.f32.mrf.mxu0
        %v1128 = vadd.f32 %v827, %v1127
        %v1129 = vpop.f32.mrf.mxu0
        %1130 = vmatprep.mubr.f32.mxu0 0.0
        %v1131 = vand.u32 %v484, 4294901760
        %1132 = vmatmul.mubr.f32.gmra.mxu0 %v1131
        %v1133 = vpop.f32.mrf.mxu0
        %v1134 = vadd.f32 %v837, %v1133
        %v1135 = vpop.f32.mrf.mxu0
        %1136 = vmatprep.mubr.f32.mxu0 0.0
        %v1137 = vand.u32 %v487, 4294901760
        %1138 = vmatmul.mubr.f32.gmra.mxu0 %v1137
        %v1139 = vpop.f32.mrf.mxu0
        %v1140 = vadd.f32 %v847, %v1139
        %v1141 = vpop.f32.mrf.mxu0
        %1142 = vmatprep.mubr.f32.mxu0 0.0
        %v1143 = vand.u32 %v490, 4294901760
        %1144 = vmatmul.mubr.f32.gmra.mxu0 %v1143
        %v1145 = vpop.f32.mrf.mxu0
        %v1146 = vadd.f32 %v857, %v1145
        %v1147 = vpop.f32.mrf.mxu0
        %1148 = vmatprep.mubr.f32.mxu0 0.0
        %v1149 = vand.u32 %v493, 4294901760
        %1150 = vmatmul.mubr.f32.gmra.mxu0 %v1149
        %v1151 = vpop.f32.mrf.mxu0
        %v1152 = vadd.f32 %v867, %v1151
        %v1153 = vpop.f32.mrf.mxu0
        %1154 = vmatprep.mubr.f32.mxu0 0.0
        %v1155 = vand.u32 %v496, 4294901760
        %1156 = vmatmul.mubr.f32.gmra.mxu0 %v1155
        %v1157 = vpop.f32.mrf.mxu0
        %v1158 = vadd.f32 %v877, %v1157
        %v1159 = vpop.f32.mrf.mxu0
        %1160 = vmatprep.mubr.f32.mxu0 0.0
        %v1161 = vand.u32 %v499, 4294901760
        %1162 = vmatmul.mubr.f32.gmra.mxu0 %v1161
        %v1163 = vpop.f32.mrf.mxu0
        %v1164 = vadd.f32 %v887, %v1163
        %v1165 = vpop.f32.mrf.mxu0
        %1166 = vdwg.mxu0
        %1167 = vmatprep.subr.mxu0 0.0
        %1168 = vmatpush1.msra.mxu0 0.0
        %1169 = vmatprep.subr.mxu0 0.0
        %1170 = vmatpush1.msra.mxu0 0.0
        %1171 = vmatprep.subr.mxu0 0.0
        %1172 = vmatpush1.msra.mxu0 0.0
        %1173 = vmatprep.subr.mxu0 0.0
        %1174 = vmatpush1.msra.mxu0 0.0
        %1175 = vmatprep.subr.mxu0 0.0
        %1176 = vmatpush1.msra.mxu0 0.0
        %1177 = vmatprep.subr.mxu0 0.0
        %1178 = vmatpush1.msra.mxu0 0.0
        %1179 = vmatprep.subr.mxu0 0.0
        %1180 = vmatpush1.msra.mxu0 0.0
        %1181 = vmatprep.subr.mxu0 0.0
        %1182 = vmatpush1.msra.mxu0 0.0
        %1183 = vmatprep.subr.mxu0 0.0
        %1184 = vmatpush1.msra.mxu0 0.0
        %1185 = vmatprep.subr.mxu0 0.0
        %1186 = vmatpush1.msra.mxu0 0.0
        %1187 = vmatprep.subr.mxu0 0.0
        %1188 = vmatpush1.msra.mxu0 0.0
        %1189 = vmatprep.subr.mxu0 0.0
        %1190 = vmatpush1.msra.mxu0 0.0
        %1191 = vmatprep.subr.mxu0 0.0
        %v1192 = vand.u32 %v396, 4294901760
        %v1193 = vsub.f32 %v396, %v1192
        %1194 = vmatpush1.msra.mxu0 %v1193
        %1195 = vmatprep.subr.mxu0 0.0
        %v1196 = vand.u32 %v395, 4294901760
        %v1197 = vsub.f32 %v395, %v1196
        %1198 = vmatpush1.msra.mxu0 %v1197
        %1199 = vmatprep.subr.mxu0 0.0
        %v1200 = vand.u32 %v394, 4294901760
        %v1201 = vsub.f32 %v394, %v1200
        %1202 = vmatpush1.msra.mxu0 %v1201
        %1203 = vmatprep.subr.mxu0 0.0
        %v1204 = vand.u32 %v393, 4294901760
        %v1205 = vsub.f32 %v393, %v1204
        %1206 = vmatpush1.msra.mxu0 %v1205
        %1207 = vmatprep.subr.mxu0 0.0
        %1208 = vmatpush2.msra.mxu0 0.0
        %1209 = vmatprep.subr.mxu0 0.0
        %1210 = vmatpush2.msra.mxu0 0.0
        %1211 = vmatprep.subr.mxu0 0.0
        %1212 = vmatpush2.msra.mxu0 0.0
        %1213 = vmatprep.subr.mxu0 0.0
        %1214 = vmatpush2.msra.mxu0 0.0
        %1215 = vmatprep.subr.mxu0 0.0
        %1216 = vmatpush2.msra.mxu0 0.0
        %1217 = vmatprep.subr.mxu0 0.0
        %1218 = vmatpush2.msra.mxu0 0.0
        %1219 = vmatprep.subr.mxu0 0.0
        %1220 = vmatpush2.msra.mxu0 0.0
        %1221 = vmatprep.subr.mxu0 0.0
        %1222 = vmatpush2.msra.mxu0 0.0
        %1223 = vmatprep.subr.mxu0 0.0
        %1224 = vmatpush2.msra.mxu0 0.0
        %1225 = vmatprep.subr.mxu0 0.0
        %1226 = vmatpush2.msra.mxu0 0.0
        %1227 = vmatprep.subr.mxu0 0.0
        %1228 = vmatpush2.msra.mxu0 0.0
        %1229 = vmatprep.subr.mxu0 0.0
        %1230 = vmatpush2.msra.mxu0 0.0
        %1231 = vmatprep.subr.mxu0 0.0
        %1232 = vmatpush2.msra.mxu0 0.0
        %1233 = vmatprep.subr.mxu0 0.0
        %1234 = vmatpush2.msra.mxu0 0.0
        %1235 = vmatprep.subr.mxu0 0.0
        %1236 = vmatpush2.msra.mxu0 0.0
        %1237 = vmatprep.subr.mxu0 0.0
        %1238 = vmatpush2.msra.mxu0 0.0
        %1239 = vmatprep.mubr.f32.mxu0 0.0
        %v1240 = vand.u32 %v406, 4294901760
        %v1241 = vsub.f32 %v406, %v1240
        %1242 = vmatmul.mubr.f32.gmra.mxu0 %v1241
        %v1243 = vpop.f32.mrf.mxu0
        %v1244 = vadd.f32 %v978, %v1243
        %v1245 = vpop.f32.mrf.mxu0
        %1246 = vmatprep.mubr.f32.mxu0 0.0
        %v1247 = vand.u32 %v409, 4294901760
        %v1248 = vsub.f32 %v409, %v1247
        %1249 = vmatmul.mubr.f32.gmra.mxu0 %v1248
        %v1250 = vpop.f32.mrf.mxu0
        %v1251 = vadd.f32 %v984, %v1250
        %v1252 = vpop.f32.mrf.mxu0
        %1253 = vmatprep.mubr.f32.mxu0 0.0
        %v1254 = vand.u32 %v412, 4294901760
        %v1255 = vsub.f32 %v412, %v1254
        %1256 = vmatmul.mubr.f32.gmra.mxu0 %v1255
        %v1257 = vpop.f32.mrf.mxu0
        %v1258 = vadd.f32 %v990, %v1257
        %v1259 = vpop.f32.mrf.mxu0
        %1260 = vmatprep.mubr.f32.mxu0 0.0
        %v1261 = vand.u32 %v415, 4294901760
        %v1262 = vsub.f32 %v415, %v1261
        %1263 = vmatmul.mubr.f32.gmra.mxu0 %v1262
        %v1264 = vpop.f32.mrf.mxu0
        %v1265 = vadd.f32 %v996, %v1264
        %v1266 = vpop.f32.mrf.mxu0
        %1267 = vmatprep.mubr.f32.mxu0 0.0
        %v1268 = vand.u32 %v418, 4294901760
        %v1269 = vsub.f32 %v418, %v1268
        %1270 = vmatmul.mubr.f32.gmra.mxu0 %v1269
        %v1271 = vpop.f32.mrf.mxu0
        %v1272 = vadd.f32 %v1002, %v1271
        %v1273 = vpop.f32.mrf.mxu0
        %1274 = vmatprep.mubr.f32.mxu0 0.0
        %v1275 = vand.u32 %v421, 4294901760
        %v1276 = vsub.f32 %v421, %v1275
        %1277 = vmatmul.mubr.f32.gmra.mxu0 %v1276
        %v1278 = vpop.f32.mrf.mxu0
        %v1279 = vadd.f32 %v1008, %v1278
        %v1280 = vpop.f32.mrf.mxu0
        %1281 = vmatprep.mubr.f32.mxu0 0.0
        %v1282 = vand.u32 %v424, 4294901760
        %v1283 = vsub.f32 %v424, %v1282
        %1284 = vmatmul.mubr.f32.gmra.mxu0 %v1283
        %v1285 = vpop.f32.mrf.mxu0
        %v1286 = vadd.f32 %v1014, %v1285
        %v1287 = vpop.f32.mrf.mxu0
        %1288 = vmatprep.mubr.f32.mxu0 0.0
        %v1289 = vand.u32 %v427, 4294901760
        %v1290 = vsub.f32 %v427, %v1289
        %1291 = vmatmul.mubr.f32.gmra.mxu0 %v1290
        %v1292 = vpop.f32.mrf.mxu0
        %v1293 = vadd.f32 %v1020, %v1292
        %v1294 = vpop.f32.mrf.mxu0
        %1295 = vmatprep.mubr.f32.mxu0 0.0
        %v1296 = vand.u32 %v430, 4294901760
        %v1297 = vsub.f32 %v430, %v1296
        %1298 = vmatmul.mubr.f32.gmra.mxu0 %v1297
        %v1299 = vpop.f32.mrf.mxu0
        %v1300 = vadd.f32 %v1026, %v1299
        %v1301 = vpop.f32.mrf.mxu0
        %1302 = vmatprep.mubr.f32.mxu0 0.0
        %v1303 = vand.u32 %v433, 4294901760
        %v1304 = vsub.f32 %v433, %v1303
        %1305 = vmatmul.mubr.f32.gmra.mxu0 %v1304
        %v1306 = vpop.f32.mrf.mxu0
        %v1307 = vadd.f32 %v1032, %v1306
        %v1308 = vpop.f32.mrf.mxu0
        %1309 = vmatprep.mubr.f32.mxu0 0.0
        %v1310 = vand.u32 %v436, 4294901760
        %v1311 = vsub.f32 %v436, %v1310
        %1312 = vmatmul.mubr.f32.gmra.mxu0 %v1311
        %v1313 = vpop.f32.mrf.mxu0
        %v1314 = vadd.f32 %v1038, %v1313
        %v1315 = vpop.f32.mrf.mxu0
        %1316 = vmatprep.mubr.f32.mxu0 0.0
        %v1317 = vand.u32 %v439, 4294901760
        %v1318 = vsub.f32 %v439, %v1317
        %1319 = vmatmul.mubr.f32.gmra.mxu0 %v1318
        %v1320 = vpop.f32.mrf.mxu0
        %v1321 = vadd.f32 %v1044, %v1320
        %v1322 = vpop.f32.mrf.mxu0
        %1323 = vmatprep.mubr.f32.mxu0 0.0
        %v1324 = vand.u32 %v442, 4294901760
        %v1325 = vsub.f32 %v442, %v1324
        %1326 = vmatmul.mubr.f32.gmra.mxu0 %v1325
        %v1327 = vpop.f32.mrf.mxu0
        %v1328 = vadd.f32 %v1050, %v1327
        %v1329 = vpop.f32.mrf.mxu0
        %1330 = vmatprep.mubr.f32.mxu0 0.0
        %v1331 = vand.u32 %v445, 4294901760
        %v1332 = vsub.f32 %v445, %v1331
        %1333 = vmatmul.mubr.f32.gmra.mxu0 %v1332
        %v1334 = vpop.f32.mrf.mxu0
        %v1335 = vadd.f32 %v1056, %v1334
        %v1336 = vpop.f32.mrf.mxu0
        %1337 = vmatprep.mubr.f32.mxu0 0.0
        %v1338 = vand.u32 %v448, 4294901760
        %v1339 = vsub.f32 %v448, %v1338
        %1340 = vmatmul.mubr.f32.gmra.mxu0 %v1339
        %v1341 = vpop.f32.mrf.mxu0
        %v1342 = vadd.f32 %v1062, %v1341
        %v1343 = vpop.f32.mrf.mxu0
        %1344 = vmatprep.mubr.f32.mxu0 0.0
        %v1345 = vand.u32 %v451, 4294901760
        %v1346 = vsub.f32 %v451, %v1345
        %1347 = vmatmul.mubr.f32.gmra.mxu0 %v1346
        %v1348 = vpop.f32.mrf.mxu0
        %v1349 = vadd.f32 %v1068, %v1348
        %v1350 = vpop.f32.mrf.mxu0
        %1351 = vmatprep.mubr.f32.mxu0 0.0
        %v1352 = vand.u32 %v454, 4294901760
        %v1353 = vsub.f32 %v454, %v1352
        %1354 = vmatmul.mubr.f32.gmra.mxu0 %v1353
        %v1355 = vpop.f32.mrf.mxu0
        %v1356 = vadd.f32 %v1074, %v1355
        %v1357 = vpop.f32.mrf.mxu0
        %1358 = vmatprep.mubr.f32.mxu0 0.0
        %v1359 = vand.u32 %v457, 4294901760
        %v1360 = vsub.f32 %v457, %v1359
        %1361 = vmatmul.mubr.f32.gmra.mxu0 %v1360
        %v1362 = vpop.f32.mrf.mxu0
        %v1363 = vadd.f32 %v1080, %v1362
        %v1364 = vpop.f32.mrf.mxu0
        %1365 = vmatprep.mubr.f32.mxu0 0.0
        %v1366 = vand.u32 %v460, 4294901760
        %v1367 = vsub.f32 %v460, %v1366
        %1368 = vmatmul.mubr.f32.gmra.mxu0 %v1367
        %v1369 = vpop.f32.mrf.mxu0
        %v1370 = vadd.f32 %v1086, %v1369
        %v1371 = vpop.f32.mrf.mxu0
        %1372 = vmatprep.mubr.f32.mxu0 0.0
        %v1373 = vand.u32 %v463, 4294901760
        %v1374 = vsub.f32 %v463, %v1373
        %1375 = vmatmul.mubr.f32.gmra.mxu0 %v1374
        %v1376 = vpop.f32.mrf.mxu0
        %v1377 = vadd.f32 %v1092, %v1376
        %v1378 = vpop.f32.mrf.mxu0
        %1379 = vmatprep.mubr.f32.mxu0 0.0
        %v1380 = vand.u32 %v466, 4294901760
        %v1381 = vsub.f32 %v466, %v1380
        %1382 = vmatmul.mubr.f32.gmra.mxu0 %v1381
        %v1383 = vpop.f32.mrf.mxu0
        %v1384 = vadd.f32 %v1098, %v1383
        %v1385 = vpop.f32.mrf.mxu0
        %1386 = vmatprep.mubr.f32.mxu0 0.0
        %v1387 = vand.u32 %v469, 4294901760
        %v1388 = vsub.f32 %v469, %v1387
        %1389 = vmatmul.mubr.f32.gmra.mxu0 %v1388
        %v1390 = vpop.f32.mrf.mxu0
        %v1391 = vadd.f32 %v1104, %v1390
        %v1392 = vpop.f32.mrf.mxu0
        %1393 = vmatprep.mubr.f32.mxu0 0.0
        %v1394 = vand.u32 %v472, 4294901760
        %v1395 = vsub.f32 %v472, %v1394
        %1396 = vmatmul.mubr.f32.gmra.mxu0 %v1395
        %v1397 = vpop.f32.mrf.mxu0
        %v1398 = vadd.f32 %v1110, %v1397
        %v1399 = vpop.f32.mrf.mxu0
        %1400 = vmatprep.mubr.f32.mxu0 0.0
        %v1401 = vand.u32 %v475, 4294901760
        %v1402 = vsub.f32 %v475, %v1401
        %1403 = vmatmul.mubr.f32.gmra.mxu0 %v1402
        %v1404 = vpop.f32.mrf.mxu0
        %v1405 = vadd.f32 %v1116, %v1404
        %v1406 = vpop.f32.mrf.mxu0
        %1407 = vmatprep.mubr.f32.mxu0 0.0
        %v1408 = vand.u32 %v478, 4294901760
        %v1409 = vsub.f32 %v478, %v1408
        %1410 = vmatmul.mubr.f32.gmra.mxu0 %v1409
        %v1411 = vpop.f32.mrf.mxu0
        %v1412 = vadd.f32 %v1122, %v1411
        %v1413 = vpop.f32.mrf.mxu0
        %1414 = vmatprep.mubr.f32.mxu0 0.0
        %v1415 = vand.u32 %v481, 4294901760
        %v1416 = vsub.f32 %v481, %v1415
        %1417 = vmatmul.mubr.f32.gmra.mxu0 %v1416
        %v1418 = vpop.f32.mrf.mxu0
        %v1419 = vadd.f32 %v1128, %v1418
        %v1420 = vpop.f32.mrf.mxu0
        %1421 = vmatprep.mubr.f32.mxu0 0.0
        %v1422 = vand.u32 %v484, 4294901760
        %v1423 = vsub.f32 %v484, %v1422
        %1424 = vmatmul.mubr.f32.gmra.mxu0 %v1423
        %v1425 = vpop.f32.mrf.mxu0
        %v1426 = vadd.f32 %v1134, %v1425
        %v1427 = vpop.f32.mrf.mxu0
        %1428 = vmatprep.mubr.f32.mxu0 0.0
        %v1429 = vand.u32 %v487, 4294901760
        %v1430 = vsub.f32 %v487, %v1429
        %1431 = vmatmul.mubr.f32.gmra.mxu0 %v1430
        %v1432 = vpop.f32.mrf.mxu0
        %v1433 = vadd.f32 %v1140, %v1432
        %v1434 = vpop.f32.mrf.mxu0
        %1435 = vmatprep.mubr.f32.mxu0 0.0
        %v1436 = vand.u32 %v490, 4294901760
        %v1437 = vsub.f32 %v490, %v1436
        %1438 = vmatmul.mubr.f32.gmra.mxu0 %v1437
        %v1439 = vpop.f32.mrf.mxu0
        %v1440 = vadd.f32 %v1146, %v1439
        %v1441 = vpop.f32.mrf.mxu0
        %1442 = vmatprep.mubr.f32.mxu0 0.0
        %v1443 = vand.u32 %v493, 4294901760
        %v1444 = vsub.f32 %v493, %v1443
        %1445 = vmatmul.mubr.f32.gmra.mxu0 %v1444
        %v1446 = vpop.f32.mrf.mxu0
        %v1447 = vadd.f32 %v1152, %v1446
        %v1448 = vpop.f32.mrf.mxu0
        %1449 = vmatprep.mubr.f32.mxu0 0.0
        %v1450 = vand.u32 %v496, 4294901760
        %v1451 = vsub.f32 %v496, %v1450
        %1452 = vmatmul.mubr.f32.gmra.mxu0 %v1451
        %v1453 = vpop.f32.mrf.mxu0
        %v1454 = vadd.f32 %v1158, %v1453
        %v1455 = vpop.f32.mrf.mxu0
        %1456 = vmatprep.mubr.f32.mxu0 0.0
        %v1457 = vand.u32 %v499, 4294901760
        %v1458 = vsub.f32 %v499, %v1457
        %1459 = vmatmul.mubr.f32.gmra.mxu0 %v1458
        %v1460 = vpop.f32.mrf.mxu0
        %v1461 = vadd.f32 %v1164, %v1460
        %v1462 = vpop.f32.mrf.mxu0
        %1463 = vdwg.mxu0
        %1464 = vmatprep.subr.mxu0 0.0
        %1465 = vmatpush1.msra.mxu0 0.0
        %1466 = vmatprep.subr.mxu0 0.0
        %1467 = vmatpush1.msra.mxu0 0.0
        %1468 = vmatprep.subr.mxu0 0.0
        %1469 = vmatpush1.msra.mxu0 0.0
        %1470 = vmatprep.subr.mxu0 0.0
        %1471 = vmatpush1.msra.mxu0 0.0
        %1472 = vmatprep.subr.mxu0 0.0
        %1473 = vmatpush1.msra.mxu0 0.0
        %1474 = vmatprep.subr.mxu0 0.0
        %1475 = vmatpush1.msra.mxu0 0.0
        %1476 = vmatprep.subr.mxu0 0.0
        %1477 = vmatpush1.msra.mxu0 0.0
        %1478 = vmatprep.subr.mxu0 0.0
        %1479 = vmatpush1.msra.mxu0 0.0
        %1480 = vmatprep.subr.mxu0 0.0
        %1481 = vmatpush1.msra.mxu0 0.0
        %1482 = vmatprep.subr.mxu0 0.0
        %1483 = vmatpush1.msra.mxu0 0.0
        %1484 = vmatprep.subr.mxu0 0.0
        %1485 = vmatpush1.msra.mxu0 0.0
        %1486 = vmatprep.subr.mxu0 0.0
        %1487 = vmatpush1.msra.mxu0 0.0
        %1488 = vmatprep.subr.mxu0 0.0
        %v1489 = vand.u32 %v396, 4294901760
        %1490 = vmatpush1.msra.mxu0 %v1489
        %1491 = vmatprep.subr.mxu0 0.0
        %v1492 = vand.u32 %v395, 4294901760
        %1493 = vmatpush1.msra.mxu0 %v1492
        %1494 = vmatprep.subr.mxu0 0.0
        %v1495 = vand.u32 %v394, 4294901760
        %1496 = vmatpush1.msra.mxu0 %v1495
        %1497 = vmatprep.subr.mxu0 0.0
        %v1498 = vand.u32 %v393, 4294901760
        %1499 = vmatpush1.msra.mxu0 %v1498
        %1500 = vmatprep.subr.mxu0 0.0
        %1501 = vmatpush2.msra.mxu0 0.0
        %1502 = vmatprep.subr.mxu0 0.0
        %1503 = vmatpush2.msra.mxu0 0.0
        %1504 = vmatprep.subr.mxu0 0.0
        %1505 = vmatpush2.msra.mxu0 0.0
        %1506 = vmatprep.subr.mxu0 0.0
        %1507 = vmatpush2.msra.mxu0 0.0
        %1508 = vmatprep.subr.mxu0 0.0
        %1509 = vmatpush2.msra.mxu0 0.0
        %1510 = vmatprep.subr.mxu0 0.0
        %1511 = vmatpush2.msra.mxu0 0.0
        %1512 = vmatprep.subr.mxu0 0.0
        %1513 = vmatpush2.msra.mxu0 0.0
        %1514 = vmatprep.subr.mxu0 0.0
        %1515 = vmatpush2.msra.mxu0 0.0
        %1516 = vmatprep.subr.mxu0 0.0
        %1517 = vmatpush2.msra.mxu0 0.0
        %1518 = vmatprep.subr.mxu0 0.0
        %1519 = vmatpush2.msra.mxu0 0.0
        %1520 = vmatprep.subr.mxu0 0.0
        %1521 = vmatpush2.msra.mxu0 0.0
        %1522 = vmatprep.subr.mxu0 0.0
        %1523 = vmatpush2.msra.mxu0 0.0
        %1524 = vmatprep.subr.mxu0 0.0
        %1525 = vmatpush2.msra.mxu0 0.0
        %1526 = vmatprep.subr.mxu0 0.0
        %1527 = vmatpush2.msra.mxu0 0.0
        %1528 = vmatprep.subr.mxu0 0.0
        %1529 = vmatpush2.msra.mxu0 0.0
        %1530 = vmatprep.subr.mxu0 0.0
        %1531 = vmatpush2.msra.mxu0 0.0
        %1532 = vmatprep.mubr.f32.mxu0 0.0
        %v1533 = vand.u32 %v406, 4294901760
        %v1534 = vsub.f32 %v406, %v1533
        %v1535 = vand.u32 %v1534, 4294901760
        %1536 = vmatmul.mubr.f32.gmra.mxu0 %v1535
        %v1537 = vpop.f32.mrf.mxu0
        %v1538 = vadd.f32 %v1244, %v1537
        %v1539 = vpop.f32.mrf.mxu0
        %1540 = vmatprep.mubr.f32.mxu0 0.0
        %v1541 = vand.u32 %v409, 4294901760
        %v1542 = vsub.f32 %v409, %v1541
        %v1543 = vand.u32 %v1542, 4294901760
        %1544 = vmatmul.mubr.f32.gmra.mxu0 %v1543
        %v1545 = vpop.f32.mrf.mxu0
        %v1546 = vadd.f32 %v1251, %v1545
        %v1547 = vpop.f32.mrf.mxu0
        %1548 = vmatprep.mubr.f32.mxu0 0.0
        %v1549 = vand.u32 %v412, 4294901760
        %v1550 = vsub.f32 %v412, %v1549
        %v1551 = vand.u32 %v1550, 4294901760
        %1552 = vmatmul.mubr.f32.gmra.mxu0 %v1551
        %v1553 = vpop.f32.mrf.mxu0
        %v1554 = vadd.f32 %v1258, %v1553
        %v1555 = vpop.f32.mrf.mxu0
        %1556 = vmatprep.mubr.f32.mxu0 0.0
        %v1557 = vand.u32 %v415, 4294901760
        %v1558 = vsub.f32 %v415, %v1557
        %v1559 = vand.u32 %v1558, 4294901760
        %1560 = vmatmul.mubr.f32.gmra.mxu0 %v1559
        %v1561 = vpop.f32.mrf.mxu0
        %v1562 = vadd.f32 %v1265, %v1561
        %v1563 = vpop.f32.mrf.mxu0
        %1564 = vmatprep.mubr.f32.mxu0 0.0
        %v1565 = vand.u32 %v418, 4294901760
        %v1566 = vsub.f32 %v418, %v1565
        %v1567 = vand.u32 %v1566, 4294901760
        %1568 = vmatmul.mubr.f32.gmra.mxu0 %v1567
        %v1569 = vpop.f32.mrf.mxu0
        %v1570 = vadd.f32 %v1272, %v1569
        %v1571 = vpop.f32.mrf.mxu0
        %1572 = vmatprep.mubr.f32.mxu0 0.0
        %v1573 = vand.u32 %v421, 4294901760
        %v1574 = vsub.f32 %v421, %v1573
        %v1575 = vand.u32 %v1574, 4294901760
        %1576 = vmatmul.mubr.f32.gmra.mxu0 %v1575
        %v1577 = vpop.f32.mrf.mxu0
        %v1578 = vadd.f32 %v1279, %v1577
        %v1579 = vpop.f32.mrf.mxu0
        %1580 = vmatprep.mubr.f32.mxu0 0.0
        %v1581 = vand.u32 %v424, 4294901760
        %v1582 = vsub.f32 %v424, %v1581
        %v1583 = vand.u32 %v1582, 4294901760
        %1584 = vmatmul.mubr.f32.gmra.mxu0 %v1583
        %v1585 = vpop.f32.mrf.mxu0
        %v1586 = vadd.f32 %v1286, %v1585
        %v1587 = vpop.f32.mrf.mxu0
        %1588 = vmatprep.mubr.f32.mxu0 0.0
        %v1589 = vand.u32 %v427, 4294901760
        %v1590 = vsub.f32 %v427, %v1589
        %v1591 = vand.u32 %v1590, 4294901760
        %1592 = vmatmul.mubr.f32.gmra.mxu0 %v1591
        %v1593 = vpop.f32.mrf.mxu0
        %v1594 = vadd.f32 %v1293, %v1593
        %v1595 = vpop.f32.mrf.mxu0
        %1596 = vmatprep.mubr.f32.mxu0 0.0
        %v1597 = vand.u32 %v430, 4294901760
        %v1598 = vsub.f32 %v430, %v1597
        %v1599 = vand.u32 %v1598, 4294901760
        %1600 = vmatmul.mubr.f32.gmra.mxu0 %v1599
        %v1601 = vpop.f32.mrf.mxu0
        %v1602 = vadd.f32 %v1300, %v1601
        %v1603 = vpop.f32.mrf.mxu0
        %1604 = vmatprep.mubr.f32.mxu0 0.0
        %v1605 = vand.u32 %v433, 4294901760
        %v1606 = vsub.f32 %v433, %v1605
        %v1607 = vand.u32 %v1606, 4294901760
        %1608 = vmatmul.mubr.f32.gmra.mxu0 %v1607
        %v1609 = vpop.f32.mrf.mxu0
        %v1610 = vadd.f32 %v1307, %v1609
        %v1611 = vpop.f32.mrf.mxu0
        %1612 = vmatprep.mubr.f32.mxu0 0.0
        %v1613 = vand.u32 %v436, 4294901760
        %v1614 = vsub.f32 %v436, %v1613
        %v1615 = vand.u32 %v1614, 4294901760
        %1616 = vmatmul.mubr.f32.gmra.mxu0 %v1615
        %v1617 = vpop.f32.mrf.mxu0
        %v1618 = vadd.f32 %v1314, %v1617
        %v1619 = vpop.f32.mrf.mxu0
        %1620 = vmatprep.mubr.f32.mxu0 0.0
        %v1621 = vand.u32 %v439, 4294901760
        %v1622 = vsub.f32 %v439, %v1621
        %v1623 = vand.u32 %v1622, 4294901760
        %1624 = vmatmul.mubr.f32.gmra.mxu0 %v1623
        %v1625 = vpop.f32.mrf.mxu0
        %v1626 = vadd.f32 %v1321, %v1625
        %v1627 = vpop.f32.mrf.mxu0
        %1628 = vmatprep.mubr.f32.mxu0 0.0
        %v1629 = vand.u32 %v442, 4294901760
        %v1630 = vsub.f32 %v442, %v1629
        %v1631 = vand.u32 %v1630, 4294901760
        %1632 = vmatmul.mubr.f32.gmra.mxu0 %v1631
        %v1633 = vpop.f32.mrf.mxu0
        %v1634 = vadd.f32 %v1328, %v1633
        %v1635 = vpop.f32.mrf.mxu0
        %1636 = vmatprep.mubr.f32.mxu0 0.0
        %v1637 = vand.u32 %v445, 4294901760
        %v1638 = vsub.f32 %v445, %v1637
        %v1639 = vand.u32 %v1638, 4294901760
        %1640 = vmatmul.mubr.f32.gmra.mxu0 %v1639
        %v1641 = vpop.f32.mrf.mxu0
        %v1642 = vadd.f32 %v1335, %v1641
        %v1643 = vpop.f32.mrf.mxu0
        %1644 = vmatprep.mubr.f32.mxu0 0.0
        %v1645 = vand.u32 %v448, 4294901760
        %v1646 = vsub.f32 %v448, %v1645
        %v1647 = vand.u32 %v1646, 4294901760
        %1648 = vmatmul.mubr.f32.gmra.mxu0 %v1647
        %v1649 = vpop.f32.mrf.mxu0
        %v1650 = vadd.f32 %v1342, %v1649
        %v1651 = vpop.f32.mrf.mxu0
        %1652 = vmatprep.mubr.f32.mxu0 0.0
        %v1653 = vand.u32 %v451, 4294901760
        %v1654 = vsub.f32 %v451, %v1653
        %v1655 = vand.u32 %v1654, 4294901760
        %1656 = vmatmul.mubr.f32.gmra.mxu0 %v1655
        %v1657 = vpop.f32.mrf.mxu0
        %v1658 = vadd.f32 %v1349, %v1657
        %v1659 = vpop.f32.mrf.mxu0
        %1660 = vmatprep.mubr.f32.mxu0 0.0
        %v1661 = vand.u32 %v454, 4294901760
        %v1662 = vsub.f32 %v454, %v1661
        %v1663 = vand.u32 %v1662, 4294901760
        %1664 = vmatmul.mubr.f32.gmra.mxu0 %v1663
        %v1665 = vpop.f32.mrf.mxu0
        %v1666 = vadd.f32 %v1356, %v1665
        %v1667 = vpop.f32.mrf.mxu0
        %1668 = vmatprep.mubr.f32.mxu0 0.0
        %v1669 = vand.u32 %v457, 4294901760
        %v1670 = vsub.f32 %v457, %v1669
        %v1671 = vand.u32 %v1670, 4294901760
        %1672 = vmatmul.mubr.f32.gmra.mxu0 %v1671
        %v1673 = vpop.f32.mrf.mxu0
        %v1674 = vadd.f32 %v1363, %v1673
        %v1675 = vpop.f32.mrf.mxu0
        %1676 = vmatprep.mubr.f32.mxu0 0.0
        %v1677 = vand.u32 %v460, 4294901760
        %v1678 = vsub.f32 %v460, %v1677
        %v1679 = vand.u32 %v1678, 4294901760
        %1680 = vmatmul.mubr.f32.gmra.mxu0 %v1679
        %v1681 = vpop.f32.mrf.mxu0
        %v1682 = vadd.f32 %v1370, %v1681
        %v1683 = vpop.f32.mrf.mxu0
        %1684 = vmatprep.mubr.f32.mxu0 0.0
        %v1685 = vand.u32 %v463, 4294901760
        %v1686 = vsub.f32 %v463, %v1685
        %v1687 = vand.u32 %v1686, 4294901760
        %1688 = vmatmul.mubr.f32.gmra.mxu0 %v1687
        %v1689 = vpop.f32.mrf.mxu0
        %v1690 = vadd.f32 %v1377, %v1689
        %v1691 = vpop.f32.mrf.mxu0
        %1692 = vmatprep.mubr.f32.mxu0 0.0
        %v1693 = vand.u32 %v466, 4294901760
        %v1694 = vsub.f32 %v466, %v1693
        %v1695 = vand.u32 %v1694, 4294901760
        %1696 = vmatmul.mubr.f32.gmra.mxu0 %v1695
        %v1697 = vpop.f32.mrf.mxu0
        %v1698 = vadd.f32 %v1384, %v1697
        %v1699 = vpop.f32.mrf.mxu0
        %1700 = vmatprep.mubr.f32.mxu0 0.0
        %v1701 = vand.u32 %v469, 4294901760
        %v1702 = vsub.f32 %v469, %v1701
        %v1703 = vand.u32 %v1702, 4294901760
        %1704 = vmatmul.mubr.f32.gmra.mxu0 %v1703
        %v1705 = vpop.f32.mrf.mxu0
        %v1706 = vadd.f32 %v1391, %v1705
        %v1707 = vpop.f32.mrf.mxu0
        %1708 = vmatprep.mubr.f32.mxu0 0.0
        %v1709 = vand.u32 %v472, 4294901760
        %v1710 = vsub.f32 %v472, %v1709
        %v1711 = vand.u32 %v1710, 4294901760
        %1712 = vmatmul.mubr.f32.gmra.mxu0 %v1711
        %v1713 = vpop.f32.mrf.mxu0
        %v1714 = vadd.f32 %v1398, %v1713
        %v1715 = vpop.f32.mrf.mxu0
        %1716 = vmatprep.mubr.f32.mxu0 0.0
        %v1717 = vand.u32 %v475, 4294901760
        %v1718 = vsub.f32 %v475, %v1717
        %v1719 = vand.u32 %v1718, 4294901760
        %1720 = vmatmul.mubr.f32.gmra.mxu0 %v1719
        %v1721 = vpop.f32.mrf.mxu0
        %v1722 = vadd.f32 %v1405, %v1721
        %v1723 = vpop.f32.mrf.mxu0
        %1724 = vmatprep.mubr.f32.mxu0 0.0
        %v1725 = vand.u32 %v478, 4294901760
        %v1726 = vsub.f32 %v478, %v1725
        %v1727 = vand.u32 %v1726, 4294901760
        %1728 = vmatmul.mubr.f32.gmra.mxu0 %v1727
        %v1729 = vpop.f32.mrf.mxu0
        %v1730 = vadd.f32 %v1412, %v1729
        %v1731 = vpop.f32.mrf.mxu0
        %1732 = vmatprep.mubr.f32.mxu0 0.0
        %v1733 = vand.u32 %v481, 4294901760
        %v1734 = vsub.f32 %v481, %v1733
        %v1735 = vand.u32 %v1734, 4294901760
        %1736 = vmatmul.mubr.f32.gmra.mxu0 %v1735
        %v1737 = vpop.f32.mrf.mxu0
        %v1738 = vadd.f32 %v1419, %v1737
        %v1739 = vpop.f32.mrf.mxu0
        %1740 = vmatprep.mubr.f32.mxu0 0.0
        %v1741 = vand.u32 %v484, 4294901760
        %v1742 = vsub.f32 %v484, %v1741
        %v1743 = vand.u32 %v1742, 4294901760
        %1744 = vmatmul.mubr.f32.gmra.mxu0 %v1743
        %v1745 = vpop.f32.mrf.mxu0
        %v1746 = vadd.f32 %v1426, %v1745
        %v1747 = vpop.f32.mrf.mxu0
        %1748 = vmatprep.mubr.f32.mxu0 0.0
        %v1749 = vand.u32 %v487, 4294901760
        %v1750 = vsub.f32 %v487, %v1749
        %v1751 = vand.u32 %v1750, 4294901760
        %1752 = vmatmul.mubr.f32.gmra.mxu0 %v1751
        %v1753 = vpop.f32.mrf.mxu0
        %v1754 = vadd.f32 %v1433, %v1753
        %v1755 = vpop.f32.mrf.mxu0
        %1756 = vmatprep.mubr.f32.mxu0 0.0
        %v1757 = vand.u32 %v490, 4294901760
        %v1758 = vsub.f32 %v490, %v1757
        %v1759 = vand.u32 %v1758, 4294901760
        %1760 = vmatmul.mubr.f32.gmra.mxu0 %v1759
        %v1761 = vpop.f32.mrf.mxu0
        %v1762 = vadd.f32 %v1440, %v1761
        %v1763 = vpop.f32.mrf.mxu0
        %1764 = vmatprep.mubr.f32.mxu0 0.0
        %v1765 = vand.u32 %v493, 4294901760
        %v1766 = vsub.f32 %v493, %v1765
        %v1767 = vand.u32 %v1766, 4294901760
        %1768 = vmatmul.mubr.f32.gmra.mxu0 %v1767
        %v1769 = vpop.f32.mrf.mxu0
        %v1770 = vadd.f32 %v1447, %v1769
        %v1771 = vpop.f32.mrf.mxu0
        %1772 = vmatprep.mubr.f32.mxu0 0.0
        %v1773 = vand.u32 %v496, 4294901760
        %v1774 = vsub.f32 %v496, %v1773
        %v1775 = vand.u32 %v1774, 4294901760
        %1776 = vmatmul.mubr.f32.gmra.mxu0 %v1775
        %v1777 = vpop.f32.mrf.mxu0
        %v1778 = vadd.f32 %v1454, %v1777
        %v1779 = vpop.f32.mrf.mxu0
        %1780 = vmatprep.mubr.f32.mxu0 0.0
        %v1781 = vand.u32 %v499, 4294901760
        %v1782 = vsub.f32 %v499, %v1781
        %v1783 = vand.u32 %v1782, 4294901760
        %1784 = vmatmul.mubr.f32.gmra.mxu0 %v1783
        %v1785 = vpop.f32.mrf.mxu0
        %v1786 = vadd.f32 %v1461, %v1785
        %v1787 = vpop.f32.mrf.mxu0
        %1788 = vdwg.mxu0
        %1789 = vmatprep.subr.mxu0 0.0
        %1790 = vmatpush1.msra.mxu0 0.0
        %1791 = vmatprep.subr.mxu0 0.0
        %1792 = vmatpush1.msra.mxu0 0.0
        %1793 = vmatprep.subr.mxu0 0.0
        %1794 = vmatpush1.msra.mxu0 0.0
        %1795 = vmatprep.subr.mxu0 0.0
        %1796 = vmatpush1.msra.mxu0 0.0
        %1797 = vmatprep.subr.mxu0 0.0
        %1798 = vmatpush1.msra.mxu0 0.0
        %1799 = vmatprep.subr.mxu0 0.0
        %1800 = vmatpush1.msra.mxu0 0.0
        %1801 = vmatprep.subr.mxu0 0.0
        %1802 = vmatpush1.msra.mxu0 0.0
        %1803 = vmatprep.subr.mxu0 0.0
        %1804 = vmatpush1.msra.mxu0 0.0
        %1805 = vmatprep.subr.mxu0 0.0
        %1806 = vmatpush1.msra.mxu0 0.0
        %1807 = vmatprep.subr.mxu0 0.0
        %1808 = vmatpush1.msra.mxu0 0.0
        %1809 = vmatprep.subr.mxu0 0.0
        %1810 = vmatpush1.msra.mxu0 0.0
        %1811 = vmatprep.subr.mxu0 0.0
        %1812 = vmatpush1.msra.mxu0 0.0
        %1813 = vmatprep.subr.mxu0 0.0
        %v1814 = vand.u32 %v396, 4294901760
        %v1815 = vsub.f32 %v396, %v1814
        %v1816 = vand.u32 %v1815, 4294901760
        %1817 = vmatpush1.msra.mxu0 %v1816
        %1818 = vmatprep.subr.mxu0 0.0
        %v1819 = vand.u32 %v395, 4294901760
        %v1820 = vsub.f32 %v395, %v1819
        %v1821 = vand.u32 %v1820, 4294901760
        %1822 = vmatpush1.msra.mxu0 %v1821
        %1823 = vmatprep.subr.mxu0 0.0
        %v1824 = vand.u32 %v394, 4294901760
        %v1825 = vsub.f32 %v394, %v1824
        %v1826 = vand.u32 %v1825, 4294901760
        %1827 = vmatpush1.msra.mxu0 %v1826
        %1828 = vmatprep.subr.mxu0 0.0
        %v1829 = vand.u32 %v393, 4294901760
        %v1830 = vsub.f32 %v393, %v1829
        %v1831 = vand.u32 %v1830, 4294901760
        %1832 = vmatpush1.msra.mxu0 %v1831
        %1833 = vmatprep.subr.mxu0 0.0
        %1834 = vmatpush2.msra.mxu0 0.0
        %1835 = vmatprep.subr.mxu0 0.0
        %1836 = vmatpush2.msra.mxu0 0.0
        %1837 = vmatprep.subr.mxu0 0.0
        %1838 = vmatpush2.msra.mxu0 0.0
        %1839 = vmatprep.subr.mxu0 0.0
        %1840 = vmatpush2.msra.mxu0 0.0
        %1841 = vmatprep.subr.mxu0 0.0
        %1842 = vmatpush2.msra.mxu0 0.0
        %1843 = vmatprep.subr.mxu0 0.0
        %1844 = vmatpush2.msra.mxu0 0.0
        %1845 = vmatprep.subr.mxu0 0.0
        %1846 = vmatpush2.msra.mxu0 0.0
        %1847 = vmatprep.subr.mxu0 0.0
        %1848 = vmatpush2.msra.mxu0 0.0
        %1849 = vmatprep.subr.mxu0 0.0
        %1850 = vmatpush2.msra.mxu0 0.0
        %1851 = vmatprep.subr.mxu0 0.0
        %1852 = vmatpush2.msra.mxu0 0.0
        %1853 = vmatprep.subr.mxu0 0.0
        %1854 = vmatpush2.msra.mxu0 0.0
        %1855 = vmatprep.subr.mxu0 0.0
        %1856 = vmatpush2.msra.mxu0 0.0
        %1857 = vmatprep.subr.mxu0 0.0
        %1858 = vmatpush2.msra.mxu0 0.0
        %1859 = vmatprep.subr.mxu0 0.0
        %1860 = vmatpush2.msra.mxu0 0.0
        %1861 = vmatprep.subr.mxu0 0.0
        %1862 = vmatpush2.msra.mxu0 0.0
        %1863 = vmatprep.subr.mxu0 0.0
        %1864 = vmatpush2.msra.mxu0 0.0
        %1865 = vmatprep.mubr.f32.mxu0 0.0
        %v1866 = vand.u32 %v406, 4294901760
        %1867 = vmatmul.mubr.f32.gmra.mxu0 %v1866
        %v1868 = vpop.f32.mrf.mxu0
        %v1869 = vadd.f32 %v1538, %v1868
        %v1870 = vpop.f32.mrf.mxu0
        %1871 = vmatprep.mubr.f32.mxu0 0.0
        %v1872 = vand.u32 %v409, 4294901760
        %1873 = vmatmul.mubr.f32.gmra.mxu0 %v1872
        %v1874 = vpop.f32.mrf.mxu0
        %v1875 = vadd.f32 %v1546, %v1874
        %v1876 = vpop.f32.mrf.mxu0
        %1877 = vmatprep.mubr.f32.mxu0 0.0
        %v1878 = vand.u32 %v412, 4294901760
        %1879 = vmatmul.mubr.f32.gmra.mxu0 %v1878
        %v1880 = vpop.f32.mrf.mxu0
        %v1881 = vadd.f32 %v1554, %v1880
        %v1882 = vpop.f32.mrf.mxu0
        %1883 = vmatprep.mubr.f32.mxu0 0.0
        %v1884 = vand.u32 %v415, 4294901760
        %1885 = vmatmul.mubr.f32.gmra.mxu0 %v1884
        %v1886 = vpop.f32.mrf.mxu0
        %v1887 = vadd.f32 %v1562, %v1886
        %v1888 = vpop.f32.mrf.mxu0
        %1889 = vmatprep.mubr.f32.mxu0 0.0
        %v1890 = vand.u32 %v418, 4294901760
        %1891 = vmatmul.mubr.f32.gmra.mxu0 %v1890
        %v1892 = vpop.f32.mrf.mxu0
        %v1893 = vadd.f32 %v1570, %v1892
        %v1894 = vpop.f32.mrf.mxu0
        %1895 = vmatprep.mubr.f32.mxu0 0.0
        %v1896 = vand.u32 %v421, 4294901760
        %1897 = vmatmul.mubr.f32.gmra.mxu0 %v1896
        %v1898 = vpop.f32.mrf.mxu0
        %v1899 = vadd.f32 %v1578, %v1898
        %v1900 = vpop.f32.mrf.mxu0
        %1901 = vmatprep.mubr.f32.mxu0 0.0
        %v1902 = vand.u32 %v424, 4294901760
        %1903 = vmatmul.mubr.f32.gmra.mxu0 %v1902
        %v1904 = vpop.f32.mrf.mxu0
        %v1905 = vadd.f32 %v1586, %v1904
        %v1906 = vpop.f32.mrf.mxu0
        %1907 = vmatprep.mubr.f32.mxu0 0.0
        %v1908 = vand.u32 %v427, 4294901760
        %1909 = vmatmul.mubr.f32.gmra.mxu0 %v1908
        %v1910 = vpop.f32.mrf.mxu0
        %v1911 = vadd.f32 %v1594, %v1910
        %v1912 = vpop.f32.mrf.mxu0
        %1913 = vmatprep.mubr.f32.mxu0 0.0
        %v1914 = vand.u32 %v430, 4294901760
        %1915 = vmatmul.mubr.f32.gmra.mxu0 %v1914
        %v1916 = vpop.f32.mrf.mxu0
        %v1917 = vadd.f32 %v1602, %v1916
        %v1918 = vpop.f32.mrf.mxu0
        %1919 = vmatprep.mubr.f32.mxu0 0.0
        %v1920 = vand.u32 %v433, 4294901760
        %1921 = vmatmul.mubr.f32.gmra.mxu0 %v1920
        %v1922 = vpop.f32.mrf.mxu0
        %v1923 = vadd.f32 %v1610, %v1922
        %v1924 = vpop.f32.mrf.mxu0
        %1925 = vmatprep.mubr.f32.mxu0 0.0
        %v1926 = vand.u32 %v436, 4294901760
        %1927 = vmatmul.mubr.f32.gmra.mxu0 %v1926
        %v1928 = vpop.f32.mrf.mxu0
        %v1929 = vadd.f32 %v1618, %v1928
        %v1930 = vpop.f32.mrf.mxu0
        %1931 = vmatprep.mubr.f32.mxu0 0.0
        %v1932 = vand.u32 %v439, 4294901760
        %1933 = vmatmul.mubr.f32.gmra.mxu0 %v1932
        %v1934 = vpop.f32.mrf.mxu0
        %v1935 = vadd.f32 %v1626, %v1934
        %v1936 = vpop.f32.mrf.mxu0
        %1937 = vmatprep.mubr.f32.mxu0 0.0
        %v1938 = vand.u32 %v442, 4294901760
        %1939 = vmatmul.mubr.f32.gmra.mxu0 %v1938
        %v1940 = vpop.f32.mrf.mxu0
        %v1941 = vadd.f32 %v1634, %v1940
        %v1942 = vpop.f32.mrf.mxu0
        %1943 = vmatprep.mubr.f32.mxu0 0.0
        %v1944 = vand.u32 %v445, 4294901760
        %1945 = vmatmul.mubr.f32.gmra.mxu0 %v1944
        %v1946 = vpop.f32.mrf.mxu0
        %v1947 = vadd.f32 %v1642, %v1946
        %v1948 = vpop.f32.mrf.mxu0
        %1949 = vmatprep.mubr.f32.mxu0 0.0
        %v1950 = vand.u32 %v448, 4294901760
        %1951 = vmatmul.mubr.f32.gmra.mxu0 %v1950
        %v1952 = vpop.f32.mrf.mxu0
        %v1953 = vadd.f32 %v1650, %v1952
        %v1954 = vpop.f32.mrf.mxu0
        %1955 = vmatprep.mubr.f32.mxu0 0.0
        %v1956 = vand.u32 %v451, 4294901760
        %1957 = vmatmul.mubr.f32.gmra.mxu0 %v1956
        %v1958 = vpop.f32.mrf.mxu0
        %v1959 = vadd.f32 %v1658, %v1958
        %v1960 = vpop.f32.mrf.mxu0
        %1961 = vmatprep.mubr.f32.mxu0 0.0
        %v1962 = vand.u32 %v454, 4294901760
        %1963 = vmatmul.mubr.f32.gmra.mxu0 %v1962
        %v1964 = vpop.f32.mrf.mxu0
        %v1965 = vadd.f32 %v1666, %v1964
        %v1966 = vpop.f32.mrf.mxu0
        %1967 = vmatprep.mubr.f32.mxu0 0.0
        %v1968 = vand.u32 %v457, 4294901760
        %1969 = vmatmul.mubr.f32.gmra.mxu0 %v1968
        %v1970 = vpop.f32.mrf.mxu0
        %v1971 = vadd.f32 %v1674, %v1970
        %v1972 = vpop.f32.mrf.mxu0
        %1973 = vmatprep.mubr.f32.mxu0 0.0
        %v1974 = vand.u32 %v460, 4294901760
        %1975 = vmatmul.mubr.f32.gmra.mxu0 %v1974
        %v1976 = vpop.f32.mrf.mxu0
        %v1977 = vadd.f32 %v1682, %v1976
        %v1978 = vpop.f32.mrf.mxu0
        %1979 = vmatprep.mubr.f32.mxu0 0.0
        %v1980 = vand.u32 %v463, 4294901760
        %1981 = vmatmul.mubr.f32.gmra.mxu0 %v1980
        %v1982 = vpop.f32.mrf.mxu0
        %v1983 = vadd.f32 %v1690, %v1982
        %v1984 = vpop.f32.mrf.mxu0
        %1985 = vmatprep.mubr.f32.mxu0 0.0
        %v1986 = vand.u32 %v466, 4294901760
        %1987 = vmatmul.mubr.f32.gmra.mxu0 %v1986
        %v1988 = vpop.f32.mrf.mxu0
        %v1989 = vadd.f32 %v1698, %v1988
        %v1990 = vpop.f32.mrf.mxu0
        %1991 = vmatprep.mubr.f32.mxu0 0.0
        %v1992 = vand.u32 %v469, 4294901760
        %1993 = vmatmul.mubr.f32.gmra.mxu0 %v1992
        %v1994 = vpop.f32.mrf.mxu0
        %v1995 = vadd.f32 %v1706, %v1994
        %v1996 = vpop.f32.mrf.mxu0
        %1997 = vmatprep.mubr.f32.mxu0 0.0
        %v1998 = vand.u32 %v472, 4294901760
        %1999 = vmatmul.mubr.f32.gmra.mxu0 %v1998
        %v2000 = vpop.f32.mrf.mxu0
        %v2001 = vadd.f32 %v1714, %v2000
        %v2002 = vpop.f32.mrf.mxu0
        %2003 = vmatprep.mubr.f32.mxu0 0.0
        %v2004 = vand.u32 %v475, 4294901760
        %2005 = vmatmul.mubr.f32.gmra.mxu0 %v2004
        %v2006 = vpop.f32.mrf.mxu0
        %v2007 = vadd.f32 %v1722, %v2006
        %v2008 = vpop.f32.mrf.mxu0
        %2009 = vmatprep.mubr.f32.mxu0 0.0
        %v2010 = vand.u32 %v478, 4294901760
        %2011 = vmatmul.mubr.f32.gmra.mxu0 %v2010
        %v2012 = vpop.f32.mrf.mxu0
        %v2013 = vadd.f32 %v1730, %v2012
        %v2014 = vpop.f32.mrf.mxu0
        %2015 = vmatprep.mubr.f32.mxu0 0.0
        %v2016 = vand.u32 %v481, 4294901760
        %2017 = vmatmul.mubr.f32.gmra.mxu0 %v2016
        %v2018 = vpop.f32.mrf.mxu0
        %v2019 = vadd.f32 %v1738, %v2018
        %v2020 = vpop.f32.mrf.mxu0
        %2021 = vmatprep.mubr.f32.mxu0 0.0
        %v2022 = vand.u32 %v484, 4294901760
        %2023 = vmatmul.mubr.f32.gmra.mxu0 %v2022
        %v2024 = vpop.f32.mrf.mxu0
        %v2025 = vadd.f32 %v1746, %v2024
        %v2026 = vpop.f32.mrf.mxu0
        %2027 = vmatprep.mubr.f32.mxu0 0.0
        %v2028 = vand.u32 %v487, 4294901760
        %2029 = vmatmul.mubr.f32.gmra.mxu0 %v2028
        %v2030 = vpop.f32.mrf.mxu0
        %v2031 = vadd.f32 %v1754, %v2030
        %v2032 = vpop.f32.mrf.mxu0
        %2033 = vmatprep.mubr.f32.mxu0 0.0
        %v2034 = vand.u32 %v490, 4294901760
        %2035 = vmatmul.mubr.f32.gmra.mxu0 %v2034
        %v2036 = vpop.f32.mrf.mxu0
        %v2037 = vadd.f32 %v1762, %v2036
        %v2038 = vpop.f32.mrf.mxu0
        %2039 = vmatprep.mubr.f32.mxu0 0.0
        %v2040 = vand.u32 %v493, 4294901760
        %2041 = vmatmul.mubr.f32.gmra.mxu0 %v2040
        %v2042 = vpop.f32.mrf.mxu0
        %v2043 = vadd.f32 %v1770, %v2042
        %v2044 = vpop.f32.mrf.mxu0
        %2045 = vmatprep.mubr.f32.mxu0 0.0
        %v2046 = vand.u32 %v496, 4294901760
        %2047 = vmatmul.mubr.f32.gmra.mxu0 %v2046
        %v2048 = vpop.f32.mrf.mxu0
        %v2049 = vadd.f32 %v1778, %v2048
        %v2050 = vpop.f32.mrf.mxu0
        %2051 = vmatprep.mubr.f32.mxu0 0.0
        %v2052 = vand.u32 %v499, 4294901760
        %2053 = vmatmul.mubr.f32.gmra.mxu0 %v2052
        %v2054 = vpop.f32.mrf.mxu0
        %v2055 = vadd.f32 %v1786, %v2054
        %v2056 = vpop.f32.mrf.mxu0
        %2057 = vdwg.mxu0
        %2058 = vmatprep.subr.mxu0 0.0
        %2059 = vmatpush1.msra.mxu0 0.0
        %2060 = vmatprep.subr.mxu0 0.0
        %2061 = vmatpush1.msra.mxu0 0.0
        %2062 = vmatprep.subr.mxu0 0.0
        %2063 = vmatpush1.msra.mxu0 0.0
        %2064 = vmatprep.subr.mxu0 0.0
        %2065 = vmatpush1.msra.mxu0 0.0
        %2066 = vmatprep.subr.mxu0 0.0
        %2067 = vmatpush1.msra.mxu0 0.0
        %2068 = vmatprep.subr.mxu0 0.0
        %2069 = vmatpush1.msra.mxu0 0.0
        %2070 = vmatprep.subr.mxu0 0.0
        %2071 = vmatpush1.msra.mxu0 0.0
        %2072 = vmatprep.subr.mxu0 0.0
        %2073 = vmatpush1.msra.mxu0 0.0
        %2074 = vmatprep.subr.mxu0 0.0
        %2075 = vmatpush1.msra.mxu0 0.0
        %2076 = vmatprep.subr.mxu0 0.0
        %2077 = vmatpush1.msra.mxu0 0.0
        %2078 = vmatprep.subr.mxu0 0.0
        %2079 = vmatpush1.msra.mxu0 0.0
        %2080 = vmatprep.subr.mxu0 0.0
        %2081 = vmatpush1.msra.mxu0 0.0
        %2082 = vmatprep.subr.mxu0 0.0
        %v2083 = vand.u32 %v396, 4294901760
        %2084 = vmatpush1.msra.mxu0 %v2083
        %2085 = vmatprep.subr.mxu0 0.0
        %v2086 = vand.u32 %v395, 4294901760
        %2087 = vmatpush1.msra.mxu0 %v2086
        %2088 = vmatprep.subr.mxu0 0.0
        %v2089 = vand.u32 %v394, 4294901760
        %2090 = vmatpush1.msra.mxu0 %v2089
        %2091 = vmatprep.subr.mxu0 0.0
        %v2092 = vand.u32 %v393, 4294901760
        %2093 = vmatpush1.msra.mxu0 %v2092
        %2094 = vmatprep.subr.mxu0 0.0
        %2095 = vmatpush2.msra.mxu0 0.0
        %2096 = vmatprep.subr.mxu0 0.0
        %2097 = vmatpush2.msra.mxu0 0.0
        %2098 = vmatprep.subr.mxu0 0.0
        %2099 = vmatpush2.msra.mxu0 0.0
        %2100 = vmatprep.subr.mxu0 0.0
        %2101 = vmatpush2.msra.mxu0 0.0
        %2102 = vmatprep.subr.mxu0 0.0
        %2103 = vmatpush2.msra.mxu0 0.0
        %2104 = vmatprep.subr.mxu0 0.0
        %2105 = vmatpush2.msra.mxu0 0.0
        %2106 = vmatprep.subr.mxu0 0.0
        %2107 = vmatpush2.msra.mxu0 0.0
        %2108 = vmatprep.subr.mxu0 0.0
        %2109 = vmatpush2.msra.mxu0 0.0
        %2110 = vmatprep.subr.mxu0 0.0
        %2111 = vmatpush2.msra.mxu0 0.0
        %2112 = vmatprep.subr.mxu0 0.0
        %2113 = vmatpush2.msra.mxu0 0.0
        %2114 = vmatprep.subr.mxu0 0.0
        %2115 = vmatpush2.msra.mxu0 0.0
        %2116 = vmatprep.subr.mxu0 0.0
        %2117 = vmatpush2.msra.mxu0 0.0
        %2118 = vmatprep.subr.mxu0 0.0
        %2119 = vmatpush2.msra.mxu0 0.0
        %2120 = vmatprep.subr.mxu0 0.0
        %2121 = vmatpush2.msra.mxu0 0.0
        %2122 = vmatprep.subr.mxu0 0.0
        %2123 = vmatpush2.msra.mxu0 0.0
        %2124 = vmatprep.subr.mxu0 0.0
        %2125 = vmatpush2.msra.mxu0 0.0
        %2126 = vmatprep.mubr.f32.mxu0 0.0
        %v2127 = vand.u32 %v406, 4294901760
        %2128 = vmatmul.mubr.f32.gmra.mxu0 %v2127
        %v2129 = vpop.f32.mrf.mxu0
        %v2130 = vadd.f32 %v1869, %v2129
        %v2131 = vpop.f32.mrf.mxu0
        %2132 = vmatprep.mubr.f32.mxu0 0.0
        %v2133 = vand.u32 %v409, 4294901760
        %2134 = vmatmul.mubr.f32.gmra.mxu0 %v2133
        %v2135 = vpop.f32.mrf.mxu0
        %v2136 = vadd.f32 %v1875, %v2135
        %v2137 = vpop.f32.mrf.mxu0
        %2138 = vmatprep.mubr.f32.mxu0 0.0
        %v2139 = vand.u32 %v412, 4294901760
        %2140 = vmatmul.mubr.f32.gmra.mxu0 %v2139
        %v2141 = vpop.f32.mrf.mxu0
        %v2142 = vadd.f32 %v1881, %v2141
        %v2143 = vpop.f32.mrf.mxu0
        %2144 = vmatprep.mubr.f32.mxu0 0.0
        %v2145 = vand.u32 %v415, 4294901760
        %2146 = vmatmul.mubr.f32.gmra.mxu0 %v2145
        %v2147 = vpop.f32.mrf.mxu0
        %v2148 = vadd.f32 %v1887, %v2147
        %v2149 = vpop.f32.mrf.mxu0
        %2150 = vmatprep.mubr.f32.mxu0 0.0
        %v2151 = vand.u32 %v418, 4294901760
        %2152 = vmatmul.mubr.f32.gmra.mxu0 %v2151
        %v2153 = vpop.f32.mrf.mxu0
        %v2154 = vadd.f32 %v1893, %v2153
        %v2155 = vpop.f32.mrf.mxu0
        %2156 = vmatprep.mubr.f32.mxu0 0.0
        %v2157 = vand.u32 %v421, 4294901760
        %2158 = vmatmul.mubr.f32.gmra.mxu0 %v2157
        %v2159 = vpop.f32.mrf.mxu0
        %v2160 = vadd.f32 %v1899, %v2159
        %v2161 = vpop.f32.mrf.mxu0
        %2162 = vmatprep.mubr.f32.mxu0 0.0
        %v2163 = vand.u32 %v424, 4294901760
        %2164 = vmatmul.mubr.f32.gmra.mxu0 %v2163
        %v2165 = vpop.f32.mrf.mxu0
        %v2166 = vadd.f32 %v1905, %v2165
        %v2167 = vpop.f32.mrf.mxu0
        %2168 = vmatprep.mubr.f32.mxu0 0.0
        %v2169 = vand.u32 %v427, 4294901760
        %2170 = vmatmul.mubr.f32.gmra.mxu0 %v2169
        %v2171 = vpop.f32.mrf.mxu0
        %v2172 = vadd.f32 %v1911, %v2171
        %v2173 = vpop.f32.mrf.mxu0
        %2174 = vmatprep.mubr.f32.mxu0 0.0
        %v2175 = vand.u32 %v430, 4294901760
        %2176 = vmatmul.mubr.f32.gmra.mxu0 %v2175
        %v2177 = vpop.f32.mrf.mxu0
        %v2178 = vadd.f32 %v1917, %v2177
        %v2179 = vpop.f32.mrf.mxu0
        %2180 = vmatprep.mubr.f32.mxu0 0.0
        %v2181 = vand.u32 %v433, 4294901760
        %2182 = vmatmul.mubr.f32.gmra.mxu0 %v2181
        %v2183 = vpop.f32.mrf.mxu0
        %v2184 = vadd.f32 %v1923, %v2183
        %v2185 = vpop.f32.mrf.mxu0
        %2186 = vmatprep.mubr.f32.mxu0 0.0
        %v2187 = vand.u32 %v436, 4294901760
        %2188 = vmatmul.mubr.f32.gmra.mxu0 %v2187
        %v2189 = vpop.f32.mrf.mxu0
        %v2190 = vadd.f32 %v1929, %v2189
        %v2191 = vpop.f32.mrf.mxu0
        %2192 = vmatprep.mubr.f32.mxu0 0.0
        %v2193 = vand.u32 %v439, 4294901760
        %2194 = vmatmul.mubr.f32.gmra.mxu0 %v2193
        %v2195 = vpop.f32.mrf.mxu0
        %v2196 = vadd.f32 %v1935, %v2195
        %v2197 = vpop.f32.mrf.mxu0
        %2198 = vmatprep.mubr.f32.mxu0 0.0
        %v2199 = vand.u32 %v442, 4294901760
        %2200 = vmatmul.mubr.f32.gmra.mxu0 %v2199
        %v2201 = vpop.f32.mrf.mxu0
        %v2202 = vadd.f32 %v1941, %v2201
        %v2203 = vpop.f32.mrf.mxu0
        %2204 = vmatprep.mubr.f32.mxu0 0.0
        %v2205 = vand.u32 %v445, 4294901760
        %2206 = vmatmul.mubr.f32.gmra.mxu0 %v2205
        %v2207 = vpop.f32.mrf.mxu0
        %v2208 = vadd.f32 %v1947, %v2207
        %v2209 = vpop.f32.mrf.mxu0
        %2210 = vmatprep.mubr.f32.mxu0 0.0
        %v2211 = vand.u32 %v448, 4294901760
        %2212 = vmatmul.mubr.f32.gmra.mxu0 %v2211
        %v2213 = vpop.f32.mrf.mxu0
        %v2214 = vadd.f32 %v1953, %v2213
        %v2215 = vpop.f32.mrf.mxu0
        %2216 = vmatprep.mubr.f32.mxu0 0.0
        %v2217 = vand.u32 %v451, 4294901760
        %2218 = vmatmul.mubr.f32.gmra.mxu0 %v2217
        %v2219 = vpop.f32.mrf.mxu0
        %v2220 = vadd.f32 %v1959, %v2219
        %v2221 = vpop.f32.mrf.mxu0
        %2222 = vmatprep.mubr.f32.mxu0 0.0
        %v2223 = vand.u32 %v454, 4294901760
        %2224 = vmatmul.mubr.f32.gmra.mxu0 %v2223
        %v2225 = vpop.f32.mrf.mxu0
        %v2226 = vadd.f32 %v1965, %v2225
        %v2227 = vpop.f32.mrf.mxu0
        %2228 = vmatprep.mubr.f32.mxu0 0.0
        %v2229 = vand.u32 %v457, 4294901760
        %2230 = vmatmul.mubr.f32.gmra.mxu0 %v2229
        %v2231 = vpop.f32.mrf.mxu0
        %v2232 = vadd.f32 %v1971, %v2231
        %v2233 = vpop.f32.mrf.mxu0
        %2234 = vmatprep.mubr.f32.mxu0 0.0
        %v2235 = vand.u32 %v460, 4294901760
        %2236 = vmatmul.mubr.f32.gmra.mxu0 %v2235
        %v2237 = vpop.f32.mrf.mxu0
        %v2238 = vadd.f32 %v1977, %v2237
        %v2239 = vpop.f32.mrf.mxu0
        %2240 = vmatprep.mubr.f32.mxu0 0.0
        %v2241 = vand.u32 %v463, 4294901760
        %2242 = vmatmul.mubr.f32.gmra.mxu0 %v2241
        %v2243 = vpop.f32.mrf.mxu0
        %v2244 = vadd.f32 %v1983, %v2243
        %v2245 = vpop.f32.mrf.mxu0
        %2246 = vmatprep.mubr.f32.mxu0 0.0
        %v2247 = vand.u32 %v466, 4294901760
        %2248 = vmatmul.mubr.f32.gmra.mxu0 %v2247
        %v2249 = vpop.f32.mrf.mxu0
        %v2250 = vadd.f32 %v1989, %v2249
        %v2251 = vpop.f32.mrf.mxu0
        %2252 = vmatprep.mubr.f32.mxu0 0.0
        %v2253 = vand.u32 %v469, 4294901760
        %2254 = vmatmul.mubr.f32.gmra.mxu0 %v2253
        %v2255 = vpop.f32.mrf.mxu0
        %v2256 = vadd.f32 %v1995, %v2255
        %v2257 = vpop.f32.mrf.mxu0
        %2258 = vmatprep.mubr.f32.mxu0 0.0
        %v2259 = vand.u32 %v472, 4294901760
        %2260 = vmatmul.mubr.f32.gmra.mxu0 %v2259
        %v2261 = vpop.f32.mrf.mxu0
        %v2262 = vadd.f32 %v2001, %v2261
        %v2263 = vpop.f32.mrf.mxu0
        %2264 = vmatprep.mubr.f32.mxu0 0.0
        %v2265 = vand.u32 %v475, 4294901760
        %2266 = vmatmul.mubr.f32.gmra.mxu0 %v2265
        %v2267 = vpop.f32.mrf.mxu0
        %v2268 = vadd.f32 %v2007, %v2267
        %v2269 = vpop.f32.mrf.mxu0
        %2270 = vmatprep.mubr.f32.mxu0 0.0
        %v2271 = vand.u32 %v478, 4294901760
        %2272 = vmatmul.mubr.f32.gmra.mxu0 %v2271
        %v2273 = vpop.f32.mrf.mxu0
        %v2274 = vadd.f32 %v2013, %v2273
        %v2275 = vpop.f32.mrf.mxu0
        %2276 = vmatprep.mubr.f32.mxu0 0.0
        %v2277 = vand.u32 %v481, 4294901760
        %2278 = vmatmul.mubr.f32.gmra.mxu0 %v2277
        %v2279 = vpop.f32.mrf.mxu0
        %v2280 = vadd.f32 %v2019, %v2279
        %v2281 = vpop.f32.mrf.mxu0
        %2282 = vmatprep.mubr.f32.mxu0 0.0
        %v2283 = vand.u32 %v484, 4294901760
        %2284 = vmatmul.mubr.f32.gmra.mxu0 %v2283
        %v2285 = vpop.f32.mrf.mxu0
        %v2286 = vadd.f32 %v2025, %v2285
        %v2287 = vpop.f32.mrf.mxu0
        %2288 = vmatprep.mubr.f32.mxu0 0.0
        %v2289 = vand.u32 %v487, 4294901760
        %2290 = vmatmul.mubr.f32.gmra.mxu0 %v2289
        %v2291 = vpop.f32.mrf.mxu0
        %v2292 = vadd.f32 %v2031, %v2291
        %v2293 = vpop.f32.mrf.mxu0
        %2294 = vmatprep.mubr.f32.mxu0 0.0
        %v2295 = vand.u32 %v490, 4294901760
        %2296 = vmatmul.mubr.f32.gmra.mxu0 %v2295
        %v2297 = vpop.f32.mrf.mxu0
        %v2298 = vadd.f32 %v2037, %v2297
        %v2299 = vpop.f32.mrf.mxu0
        %2300 = vmatprep.mubr.f32.mxu0 0.0
        %v2301 = vand.u32 %v493, 4294901760
        %2302 = vmatmul.mubr.f32.gmra.mxu0 %v2301
        %v2303 = vpop.f32.mrf.mxu0
        %v2304 = vadd.f32 %v2043, %v2303
        %v2305 = vpop.f32.mrf.mxu0
        %2306 = vmatprep.mubr.f32.mxu0 0.0
        %v2307 = vand.u32 %v496, 4294901760
        %2308 = vmatmul.mubr.f32.gmra.mxu0 %v2307
        %v2309 = vpop.f32.mrf.mxu0
        %v2310 = vadd.f32 %v2049, %v2309
        %v2311 = vpop.f32.mrf.mxu0
        %2312 = vmatprep.mubr.f32.mxu0 0.0
        %v2313 = vand.u32 %v499, 4294901760
        %2314 = vmatmul.mubr.f32.gmra.mxu0 %v2313
        %v2315 = vpop.f32.mrf.mxu0
        %v2316 = vadd.f32 %v2055, %v2315
        %v2317 = vpop.f32.mrf.mxu0
        %2318 = vdwg.mxu0
        %v2319 = vld [vmem:[%s3] sm:$0xf]
        %v2320 = vld [vmem:[%s6] sm:$0xf]
        %2322 = vset.pattern.permute.xlu0 0
        %2323 = vperm.xlu0 %2322, %v2320
        %v2324 = vpop.permute.xlu0 %2323
        %v2327 = vsel %vm404, %v2319, 0
        %2329 = vmatprep.subr.mxu0 0.0
        %2330 = vmatpush1.msra.mxu0 0.0
        %2331 = vmatprep.subr.mxu0 0.0
        %2332 = vmatpush1.msra.mxu0 0.0
        %2333 = vmatprep.subr.mxu0 0.0
        %2334 = vmatpush1.msra.mxu0 0.0
        %2335 = vmatprep.subr.mxu0 0.0
        %2336 = vmatpush1.msra.mxu0 0.0
        %2337 = vmatprep.subr.mxu0 0.0
        %2338 = vmatpush1.msra.mxu0 0.0
        %2339 = vmatprep.subr.mxu0 0.0
        %2340 = vmatpush1.msra.mxu0 0.0
        %2341 = vmatprep.subr.mxu0 0.0
        %2342 = vmatpush1.msra.mxu0 0.0
        %2343 = vmatprep.subr.mxu0 0.0
        %2344 = vmatpush1.msra.mxu0 0.0
        %2345 = vmatprep.subr.mxu0 0.0
        %2346 = vmatpush1.msra.mxu0 0.0
        %2347 = vmatprep.subr.mxu0 0.0
        %2348 = vmatpush1.msra.mxu0 0.0
        %2349 = vmatprep.subr.mxu0 0.0
        %2350 = vmatpush1.msra.mxu0 0.0
        %2351 = vmatprep.subr.mxu0 0.0
        %2352 = vmatpush1.msra.mxu0 0.0
        %v2353 = vand.u32 %v359, 4294901760
        %2354 = vmatprep.subr.mxu0 %v2353
        %v2355 = vand.u32 %v358, 4294901760
        %2356 = vmatpush1.msra.mxu0 %v2355
        %v2357 = vand.u32 %v357, 4294901760
        %2358 = vmatprep.subr.mxu0 %v2357
        %v2359 = vand.u32 %v356, 4294901760
        %2360 = vmatpush1.msra.mxu0 %v2359
        %v2361 = vand.u32 %v355, 4294901760
        %2362 = vmatprep.subr.mxu0 %v2361
        %v2363 = vand.u32 %v354, 4294901760
        %2364 = vmatpush1.msra.mxu0 %v2363
        %v2365 = vand.u32 %v353, 4294901760
        %2366 = vmatprep.subr.mxu0 %v2365
        %v2367 = vand.u32 %v352, 4294901760
        %2368 = vmatpush1.msra.mxu0 %v2367
        %2369 = vmatprep.subr.mxu0 0.0
        %2370 = vmatpush2.msra.mxu0 0.0
        %2371 = vmatprep.subr.mxu0 0.0
        %2372 = vmatpush2.msra.mxu0 0.0
        %2373 = vmatprep.subr.mxu0 0.0
        %2374 = vmatpush2.msra.mxu0 0.0
        %2375 = vmatprep.subr.mxu0 0.0
        %2376 = vmatpush2.msra.mxu0 0.0
        %2377 = vmatprep.subr.mxu0 0.0
        %2378 = vmatpush2.msra.mxu0 0.0
        %2379 = vmatprep.subr.mxu0 0.0
        %2380 = vmatpush2.msra.mxu0 0.0
        %2381 = vmatprep.subr.mxu0 0.0
        %2382 = vmatpush2.msra.mxu0 0.0
        %2383 = vmatprep.subr.mxu0 0.0
        %2384 = vmatpush2.msra.mxu0 0.0
        %2385 = vmatprep.subr.mxu0 0.0
        %2386 = vmatpush2.msra.mxu0 0.0
        %2387 = vmatprep.subr.mxu0 0.0
        %2388 = vmatpush2.msra.mxu0 0.0
        %2389 = vmatprep.subr.mxu0 0.0
        %2390 = vmatpush2.msra.mxu0 0.0
        %2391 = vmatprep.subr.mxu0 0.0
        %2392 = vmatpush2.msra.mxu0 0.0
        %2393 = vmatprep.subr.mxu0 0.0
        %2394 = vmatpush2.msra.mxu0 0.0
        %2395 = vmatprep.subr.mxu0 0.0
        %2396 = vmatpush2.msra.mxu0 0.0
        %2397 = vmatprep.subr.mxu0 0.0
        %2398 = vmatpush2.msra.mxu0 0.0
        %2399 = vmatprep.subr.mxu0 0.0
        %2400 = vmatpush2.msra.mxu0 0.0
        %2401 = vmatprep.mubr.f32.mxu0 0.0
        %v2402 = vand.u32 %v2327, 4294901760
        %v2403 = vsub.f32 %v2327, %v2402
        %v2404 = vand.u32 %v2403, 4294901760
        %v2405 = vsub.f32 %v2403, %v2404
        %v2406 = vand.u32 %v2405, 4294901760
        %2407 = vmatmul.mubr.f32.gmra.mxu0 %v2406
        %v2408 = vpop.f32.mrf.mxu0
        %v2409 = vadd.f32 %v2324, %v2408
        %v2410 = vpop.f32.mrf.mxu0
        %v2411 = vadd.f32 %v2324, %v2410
        %2412 = vdwg.mxu0
        %2413 = vmatprep.subr.mxu0 0.0
        %2414 = vmatpush1.msra.mxu0 0.0
        %2415 = vmatprep.subr.mxu0 0.0
        %2416 = vmatpush1.msra.mxu0 0.0
        %2417 = vmatprep.subr.mxu0 0.0
        %2418 = vmatpush1.msra.mxu0 0.0
        %2419 = vmatprep.subr.mxu0 0.0
        %2420 = vmatpush1.msra.mxu0 0.0
        %2421 = vmatprep.subr.mxu0 0.0
        %2422 = vmatpush1.msra.mxu0 0.0
        %2423 = vmatprep.subr.mxu0 0.0
        %2424 = vmatpush1.msra.mxu0 0.0
        %2425 = vmatprep.subr.mxu0 0.0
        %2426 = vmatpush1.msra.mxu0 0.0
        %2427 = vmatprep.subr.mxu0 0.0
        %2428 = vmatpush1.msra.mxu0 0.0
        %2429 = vmatprep.subr.mxu0 0.0
        %2430 = vmatpush1.msra.mxu0 0.0
        %2431 = vmatprep.subr.mxu0 0.0
        %2432 = vmatpush1.msra.mxu0 0.0
        %2433 = vmatprep.subr.mxu0 0.0
        %2434 = vmatpush1.msra.mxu0 0.0
        %2435 = vmatprep.subr.mxu0 0.0
        %2436 = vmatpush1.msra.mxu0 0.0
        %v2437 = vand.u32 %v359, 4294901760
        %v2438 = vsub.f32 %v359, %v2437
        %v2439 = vand.u32 %v2438, 4294901760
        %v2440 = vsub.f32 %v2438, %v2439
        %v2441 = vand.u32 %v2440, 4294901760
        %2442 = vmatprep.subr.mxu0 %v2441
        %v2443 = vand.u32 %v358, 4294901760
        %v2444 = vsub.f32 %v358, %v2443
        %v2445 = vand.u32 %v2444, 4294901760
        %v2446 = vsub.f32 %v2444, %v2445
        %v2447 = vand.u32 %v2446, 4294901760
        %2448 = vmatpush1.msra.mxu0 %v2447
        %v2449 = vand.u32 %v357, 4294901760
        %v2450 = vsub.f32 %v357, %v2449
        %v2451 = vand.u32 %v2450, 4294901760
        %v2452 = vsub.f32 %v2450, %v2451
        %v2453 = vand.u32 %v2452, 4294901760
        %2454 = vmatprep.subr.mxu0 %v2453
        %v2455 = vand.u32 %v356, 4294901760
        %v2456 = vsub.f32 %v356, %v2455
        %v2457 = vand.u32 %v2456, 4294901760
        %v2458 = vsub.f32 %v2456, %v2457
        %v2459 = vand.u32 %v2458, 4294901760
        %2460 = vmatpush1.msra.mxu0 %v2459
        %v2461 = vand.u32 %v355, 4294901760
        %v2462 = vsub.f32 %v355, %v2461
        %v2463 = vand.u32 %v2462, 4294901760
        %v2464 = vsub.f32 %v2462, %v2463
        %v2465 = vand.u32 %v2464, 4294901760
        %2466 = vmatprep.subr.mxu0 %v2465
        %v2467 = vand.u32 %v354, 4294901760
        %v2468 = vsub.f32 %v354, %v2467
        %v2469 = vand.u32 %v2468, 4294901760
        %v2470 = vsub.f32 %v2468, %v2469
        %v2471 = vand.u32 %v2470, 4294901760
        %2472 = vmatpush1.msra.mxu0 %v2471
        %v2473 = vand.u32 %v353, 4294901760
        %v2474 = vsub.f32 %v353, %v2473
        %v2475 = vand.u32 %v2474, 4294901760
        %v2476 = vsub.f32 %v2474, %v2475
        %v2477 = vand.u32 %v2476, 4294901760
        %2478 = vmatprep.subr.mxu0 %v2477
        %v2479 = vand.u32 %v352, 4294901760
        %v2480 = vsub.f32 %v352, %v2479
        %v2481 = vand.u32 %v2480, 4294901760
        %v2482 = vsub.f32 %v2480, %v2481
        %v2483 = vand.u32 %v2482, 4294901760
        %2484 = vmatpush1.msra.mxu0 %v2483
        %2485 = vmatprep.subr.mxu0 0.0
        %2486 = vmatpush2.msra.mxu0 0.0
        %2487 = vmatprep.subr.mxu0 0.0
        %2488 = vmatpush2.msra.mxu0 0.0
        %2489 = vmatprep.subr.mxu0 0.0
        %2490 = vmatpush2.msra.mxu0 0.0
        %2491 = vmatprep.subr.mxu0 0.0
        %2492 = vmatpush2.msra.mxu0 0.0
        %2493 = vmatprep.subr.mxu0 0.0
        %2494 = vmatpush2.msra.mxu0 0.0
        %2495 = vmatprep.subr.mxu0 0.0
        %2496 = vmatpush2.msra.mxu0 0.0
        %2497 = vmatprep.subr.mxu0 0.0
        %2498 = vmatpush2.msra.mxu0 0.0
        %2499 = vmatprep.subr.mxu0 0.0
        %2500 = vmatpush2.msra.mxu0 0.0
        %2501 = vmatprep.subr.mxu0 0.0
        %2502 = vmatpush2.msra.mxu0 0.0
        %2503 = vmatprep.subr.mxu0 0.0
        %2504 = vmatpush2.msra.mxu0 0.0
        %2505 = vmatprep.subr.mxu0 0.0
        %2506 = vmatpush2.msra.mxu0 0.0
        %2507 = vmatprep.subr.mxu0 0.0
        %2508 = vmatpush2.msra.mxu0 0.0
        %2509 = vmatprep.subr.mxu0 0.0
        %2510 = vmatpush2.msra.mxu0 0.0
        %2511 = vmatprep.subr.mxu0 0.0
        %2512 = vmatpush2.msra.mxu0 0.0
        %2513 = vmatprep.subr.mxu0 0.0
        %2514 = vmatpush2.msra.mxu0 0.0
        %2515 = vmatprep.subr.mxu0 0.0
        %2516 = vmatpush2.msra.mxu0 0.0
        %2517 = vmatprep.mubr.f32.mxu0 0.0
        %v2518 = vand.u32 %v2327, 4294901760
        %2519 = vmatmul.mubr.f32.gmra.mxu0 %v2518
        %v2520 = vpop.f32.mrf.mxu0
        %v2521 = vadd.f32 %v2409, %v2520
        %v2522 = vpop.f32.mrf.mxu0
        %v2523 = vadd.f32 %v2411, %v2522
        %2524 = vdwg.mxu0
        %2525 = vmatprep.subr.mxu0 0.0
        %2526 = vmatpush1.msra.mxu0 0.0
        %2527 = vmatprep.subr.mxu0 0.0
        %2528 = vmatpush1.msra.mxu0 0.0
        %2529 = vmatprep.subr.mxu0 0.0
        %2530 = vmatpush1.msra.mxu0 0.0
        %2531 = vmatprep.subr.mxu0 0.0
        %2532 = vmatpush1.msra.mxu0 0.0
        %2533 = vmatprep.subr.mxu0 0.0
        %2534 = vmatpush1.msra.mxu0 0.0
        %2535 = vmatprep.subr.mxu0 0.0
        %2536 = vmatpush1.msra.mxu0 0.0
        %2537 = vmatprep.subr.mxu0 0.0
        %2538 = vmatpush1.msra.mxu0 0.0
        %2539 = vmatprep.subr.mxu0 0.0
        %2540 = vmatpush1.msra.mxu0 0.0
        %2541 = vmatprep.subr.mxu0 0.0
        %2542 = vmatpush1.msra.mxu0 0.0
        %2543 = vmatprep.subr.mxu0 0.0
        %2544 = vmatpush1.msra.mxu0 0.0
        %2545 = vmatprep.subr.mxu0 0.0
        %2546 = vmatpush1.msra.mxu0 0.0
        %2547 = vmatprep.subr.mxu0 0.0
        %2548 = vmatpush1.msra.mxu0 0.0
        %v2549 = vand.u32 %v359, 4294901760
        %v2550 = vsub.f32 %v359, %v2549
        %2551 = vmatprep.subr.mxu0 %v2550
        %v2552 = vand.u32 %v358, 4294901760
        %v2553 = vsub.f32 %v358, %v2552
        %2554 = vmatpush1.msra.mxu0 %v2553
        %v2555 = vand.u32 %v357, 4294901760
        %v2556 = vsub.f32 %v357, %v2555
        %2557 = vmatprep.subr.mxu0 %v2556
        %v2558 = vand.u32 %v356, 4294901760
        %v2559 = vsub.f32 %v356, %v2558
        %2560 = vmatpush1.msra.mxu0 %v2559
        %v2561 = vand.u32 %v355, 4294901760
        %v2562 = vsub.f32 %v355, %v2561
        %2563 = vmatprep.subr.mxu0 %v2562
        %v2564 = vand.u32 %v354, 4294901760
        %v2565 = vsub.f32 %v354, %v2564
        %2566 = vmatpush1.msra.mxu0 %v2565
        %v2567 = vand.u32 %v353, 4294901760
        %v2568 = vsub.f32 %v353, %v2567
        %2569 = vmatprep.subr.mxu0 %v2568
        %v2570 = vand.u32 %v352, 4294901760
        %v2571 = vsub.f32 %v352, %v2570
        %2572 = vmatpush1.msra.mxu0 %v2571
        %2573 = vmatprep.subr.mxu0 0.0
        %2574 = vmatpush2.msra.mxu0 0.0
        %2575 = vmatprep.subr.mxu0 0.0
        %2576 = vmatpush2.msra.mxu0 0.0
        %2577 = vmatprep.subr.mxu0 0.0
        %2578 = vmatpush2.msra.mxu0 0.0
        %2579 = vmatprep.subr.mxu0 0.0
        %2580 = vmatpush2.msra.mxu0 0.0
        %2581 = vmatprep.subr.mxu0 0.0
        %2582 = vmatpush2.msra.mxu0 0.0
        %2583 = vmatprep.subr.mxu0 0.0
        %2584 = vmatpush2.msra.mxu0 0.0
        %2585 = vmatprep.subr.mxu0 0.0
        %2586 = vmatpush2.msra.mxu0 0.0
        %2587 = vmatprep.subr.mxu0 0.0
        %2588 = vmatpush2.msra.mxu0 0.0
        %2589 = vmatprep.subr.mxu0 0.0
        %2590 = vmatpush2.msra.mxu0 0.0
        %2591 = vmatprep.subr.mxu0 0.0
        %2592 = vmatpush2.msra.mxu0 0.0
        %2593 = vmatprep.subr.mxu0 0.0
        %2594 = vmatpush2.msra.mxu0 0.0
        %2595 = vmatprep.subr.mxu0 0.0
        %2596 = vmatpush2.msra.mxu0 0.0
        %2597 = vmatprep.subr.mxu0 0.0
        %2598 = vmatpush2.msra.mxu0 0.0
        %2599 = vmatprep.subr.mxu0 0.0
        %2600 = vmatpush2.msra.mxu0 0.0
        %2601 = vmatprep.subr.mxu0 0.0
        %2602 = vmatpush2.msra.mxu0 0.0
        %2603 = vmatprep.subr.mxu0 0.0
        %2604 = vmatpush2.msra.mxu0 0.0
        %2605 = vmatprep.mubr.f32.mxu0 0.0
        %v2606 = vand.u32 %v2327, 4294901760
        %v2607 = vsub.f32 %v2327, %v2606
        %2608 = vmatmul.mubr.f32.gmra.mxu0 %v2607
        %v2609 = vpop.f32.mrf.mxu0
        %v2610 = vadd.f32 %v2521, %v2609
        %v2611 = vpop.f32.mrf.mxu0
        %v2612 = vadd.f32 %v2523, %v2611
        %2613 = vdwg.mxu0
        %2614 = vmatprep.subr.mxu0 0.0
        %2615 = vmatpush1.msra.mxu0 0.0
        %2616 = vmatprep.subr.mxu0 0.0
        %2617 = vmatpush1.msra.mxu0 0.0
        %2618 = vmatprep.subr.mxu0 0.0
        %2619 = vmatpush1.msra.mxu0 0.0
        %2620 = vmatprep.subr.mxu0 0.0
        %2621 = vmatpush1.msra.mxu0 0.0
        %2622 = vmatprep.subr.mxu0 0.0
        %2623 = vmatpush1.msra.mxu0 0.0
        %2624 = vmatprep.subr.mxu0 0.0
        %2625 = vmatpush1.msra.mxu0 0.0
        %2626 = vmatprep.subr.mxu0 0.0
        %2627 = vmatpush1.msra.mxu0 0.0
        %2628 = vmatprep.subr.mxu0 0.0
        %2629 = vmatpush1.msra.mxu0 0.0
        %2630 = vmatprep.subr.mxu0 0.0
        %2631 = vmatpush1.msra.mxu0 0.0
        %2632 = vmatprep.subr.mxu0 0.0
        %2633 = vmatpush1.msra.mxu0 0.0
        %2634 = vmatprep.subr.mxu0 0.0
        %2635 = vmatpush1.msra.mxu0 0.0
        %2636 = vmatprep.subr.mxu0 0.0
        %2637 = vmatpush1.msra.mxu0 0.0
        %v2638 = vand.u32 %v359, 4294901760
        %2639 = vmatprep.subr.mxu0 %v2638
        %v2640 = vand.u32 %v358, 4294901760
        %2641 = vmatpush1.msra.mxu0 %v2640
        %v2642 = vand.u32 %v357, 4294901760
        %2643 = vmatprep.subr.mxu0 %v2642
        %v2644 = vand.u32 %v356, 4294901760
        %2645 = vmatpush1.msra.mxu0 %v2644
        %v2646 = vand.u32 %v355, 4294901760
        %2647 = vmatprep.subr.mxu0 %v2646
        %v2648 = vand.u32 %v354, 4294901760
        %2649 = vmatpush1.msra.mxu0 %v2648
        %v2650 = vand.u32 %v353, 4294901760
        %2651 = vmatprep.subr.mxu0 %v2650
        %v2652 = vand.u32 %v352, 4294901760
        %2653 = vmatpush1.msra.mxu0 %v2652
        %2654 = vmatprep.subr.mxu0 0.0
        %2655 = vmatpush2.msra.mxu0 0.0
        %2656 = vmatprep.subr.mxu0 0.0
        %2657 = vmatpush2.msra.mxu0 0.0
        %2658 = vmatprep.subr.mxu0 0.0
        %2659 = vmatpush2.msra.mxu0 0.0
        %2660 = vmatprep.subr.mxu0 0.0
        %2661 = vmatpush2.msra.mxu0 0.0
        %2662 = vmatprep.subr.mxu0 0.0
        %2663 = vmatpush2.msra.mxu0 0.0
        %2664 = vmatprep.subr.mxu0 0.0
        %2665 = vmatpush2.msra.mxu0 0.0
        %2666 = vmatprep.subr.mxu0 0.0
        %2667 = vmatpush2.msra.mxu0 0.0
        %2668 = vmatprep.subr.mxu0 0.0
        %2669 = vmatpush2.msra.mxu0 0.0
        %2670 = vmatprep.subr.mxu0 0.0
        %2671 = vmatpush2.msra.mxu0 0.0
        %2672 = vmatprep.subr.mxu0 0.0
        %2673 = vmatpush2.msra.mxu0 0.0
        %2674 = vmatprep.subr.mxu0 0.0
        %2675 = vmatpush2.msra.mxu0 0.0
        %2676 = vmatprep.subr.mxu0 0.0
        %2677 = vmatpush2.msra.mxu0 0.0
        %2678 = vmatprep.subr.mxu0 0.0
        %2679 = vmatpush2.msra.mxu0 0.0
        %2680 = vmatprep.subr.mxu0 0.0
        %2681 = vmatpush2.msra.mxu0 0.0
        %2682 = vmatprep.subr.mxu0 0.0
        %2683 = vmatpush2.msra.mxu0 0.0
        %2684 = vmatprep.subr.mxu0 0.0
        %2685 = vmatpush2.msra.mxu0 0.0
        %2686 = vmatprep.mubr.f32.mxu0 0.0
        %v2687 = vand.u32 %v2327, 4294901760
        %v2688 = vsub.f32 %v2327, %v2687
        %v2689 = vand.u32 %v2688, 4294901760
        %2690 = vmatmul.mubr.f32.gmra.mxu0 %v2689
        %v2691 = vpop.f32.mrf.mxu0
        %v2692 = vadd.f32 %v2610, %v2691
        %v2693 = vpop.f32.mrf.mxu0
        %v2694 = vadd.f32 %v2612, %v2693
        %2695 = vdwg.mxu0
        %2696 = vmatprep.subr.mxu0 0.0
        %2697 = vmatpush1.msra.mxu0 0.0
        %2698 = vmatprep.subr.mxu0 0.0
        %2699 = vmatpush1.msra.mxu0 0.0
        %2700 = vmatprep.subr.mxu0 0.0
        %2701 = vmatpush1.msra.mxu0 0.0
        %2702 = vmatprep.subr.mxu0 0.0
        %2703 = vmatpush1.msra.mxu0 0.0
        %2704 = vmatprep.subr.mxu0 0.0
        %2705 = vmatpush1.msra.mxu0 0.0
        %2706 = vmatprep.subr.mxu0 0.0
        %2707 = vmatpush1.msra.mxu0 0.0
        %2708 = vmatprep.subr.mxu0 0.0
        %2709 = vmatpush1.msra.mxu0 0.0
        %2710 = vmatprep.subr.mxu0 0.0
        %2711 = vmatpush1.msra.mxu0 0.0
        %2712 = vmatprep.subr.mxu0 0.0
        %2713 = vmatpush1.msra.mxu0 0.0
        %2714 = vmatprep.subr.mxu0 0.0
        %2715 = vmatpush1.msra.mxu0 0.0
        %2716 = vmatprep.subr.mxu0 0.0
        %2717 = vmatpush1.msra.mxu0 0.0
        %2718 = vmatprep.subr.mxu0 0.0
        %2719 = vmatpush1.msra.mxu0 0.0
        %v2720 = vand.u32 %v359, 4294901760
        %v2721 = vsub.f32 %v359, %v2720
        %v2722 = vand.u32 %v2721, 4294901760
        %2723 = vmatprep.subr.mxu0 %v2722
        %v2724 = vand.u32 %v358, 4294901760
        %v2725 = vsub.f32 %v358, %v2724
        %v2726 = vand.u32 %v2725, 4294901760
        %2727 = vmatpush1.msra.mxu0 %v2726
        %v2728 = vand.u32 %v357, 4294901760
        %v2729 = vsub.f32 %v357, %v2728
        %v2730 = vand.u32 %v2729, 4294901760
        %2731 = vmatprep.subr.mxu0 %v2730
        %v2732 = vand.u32 %v356, 4294901760
        %v2733 = vsub.f32 %v356, %v2732
        %v2734 = vand.u32 %v2733, 4294901760
        %2735 = vmatpush1.msra.mxu0 %v2734
        %v2736 = vand.u32 %v355, 4294901760
        %v2737 = vsub.f32 %v355, %v2736
        %v2738 = vand.u32 %v2737, 4294901760
        %2739 = vmatprep.subr.mxu0 %v2738
        %v2740 = vand.u32 %v354, 4294901760
        %v2741 = vsub.f32 %v354, %v2740
        %v2742 = vand.u32 %v2741, 4294901760
        %2743 = vmatpush1.msra.mxu0 %v2742
        %v2744 = vand.u32 %v353, 4294901760
        %v2745 = vsub.f32 %v353, %v2744
        %v2746 = vand.u32 %v2745, 4294901760
        %2747 = vmatprep.subr.mxu0 %v2746
        %v2748 = vand.u32 %v352, 4294901760
        %v2749 = vsub.f32 %v352, %v2748
        %v2750 = vand.u32 %v2749, 4294901760
        %2751 = vmatpush1.msra.mxu0 %v2750
        %2752 = vmatprep.subr.mxu0 0.0
        %2753 = vmatpush2.msra.mxu0 0.0
        %2754 = vmatprep.subr.mxu0 0.0
        %2755 = vmatpush2.msra.mxu0 0.0
        %2756 = vmatprep.subr.mxu0 0.0
        %2757 = vmatpush2.msra.mxu0 0.0
        %2758 = vmatprep.subr.mxu0 0.0
        %2759 = vmatpush2.msra.mxu0 0.0
        %2760 = vmatprep.subr.mxu0 0.0
        %2761 = vmatpush2.msra.mxu0 0.0
        %2762 = vmatprep.subr.mxu0 0.0
        %2763 = vmatpush2.msra.mxu0 0.0
        %2764 = vmatprep.subr.mxu0 0.0
        %2765 = vmatpush2.msra.mxu0 0.0
        %2766 = vmatprep.subr.mxu0 0.0
        %2767 = vmatpush2.msra.mxu0 0.0
        %2768 = vmatprep.subr.mxu0 0.0
        %2769 = vmatpush2.msra.mxu0 0.0
        %2770 = vmatprep.subr.mxu0 0.0
        %2771 = vmatpush2.msra.mxu0 0.0
        %2772 = vmatprep.subr.mxu0 0.0
        %2773 = vmatpush2.msra.mxu0 0.0
        %2774 = vmatprep.subr.mxu0 0.0
        %2775 = vmatpush2.msra.mxu0 0.0
        %2776 = vmatprep.subr.mxu0 0.0
        %2777 = vmatpush2.msra.mxu0 0.0
        %2778 = vmatprep.subr.mxu0 0.0
        %2779 = vmatpush2.msra.mxu0 0.0
        %2780 = vmatprep.subr.mxu0 0.0
        %2781 = vmatpush2.msra.mxu0 0.0
        %2782 = vmatprep.subr.mxu0 0.0
        %2783 = vmatpush2.msra.mxu0 0.0
        %2784 = vmatprep.mubr.f32.mxu0 0.0
        %v2785 = vand.u32 %v2327, 4294901760
        %2786 = vmatmul.mubr.f32.gmra.mxu0 %v2785
        %v2787 = vpop.f32.mrf.mxu0
        %v2788 = vadd.f32 %v2692, %v2787
        %v2789 = vpop.f32.mrf.mxu0
        %v2790 = vadd.f32 %v2694, %v2789
        %2791 = vdwg.mxu0
        %2792 = vmatprep.subr.mxu0 0.0
        %2793 = vmatpush1.msra.mxu0 0.0
        %2794 = vmatprep.subr.mxu0 0.0
        %2795 = vmatpush1.msra.mxu0 0.0
        %2796 = vmatprep.subr.mxu0 0.0
        %2797 = vmatpush1.msra.mxu0 0.0
        %2798 = vmatprep.subr.mxu0 0.0
        %2799 = vmatpush1.msra.mxu0 0.0
        %2800 = vmatprep.subr.mxu0 0.0
        %2801 = vmatpush1.msra.mxu0 0.0
        %2802 = vmatprep.subr.mxu0 0.0
        %2803 = vmatpush1.msra.mxu0 0.0
        %2804 = vmatprep.subr.mxu0 0.0
        %2805 = vmatpush1.msra.mxu0 0.0
        %2806 = vmatprep.subr.mxu0 0.0
        %2807 = vmatpush1.msra.mxu0 0.0
        %2808 = vmatprep.subr.mxu0 0.0
        %2809 = vmatpush1.msra.mxu0 0.0
        %2810 = vmatprep.subr.mxu0 0.0
        %2811 = vmatpush1.msra.mxu0 0.0
        %2812 = vmatprep.subr.mxu0 0.0
        %2813 = vmatpush1.msra.mxu0 0.0
        %2814 = vmatprep.subr.mxu0 0.0
        %2815 = vmatpush1.msra.mxu0 0.0
        %v2816 = vand.u32 %v359, 4294901760
        %2817 = vmatprep.subr.mxu0 %v2816
        %v2818 = vand.u32 %v358, 4294901760
        %2819 = vmatpush1.msra.mxu0 %v2818
        %v2820 = vand.u32 %v357, 4294901760
        %2821 = vmatprep.subr.mxu0 %v2820
        %v2822 = vand.u32 %v356, 4294901760
        %2823 = vmatpush1.msra.mxu0 %v2822
        %v2824 = vand.u32 %v355, 4294901760
        %2825 = vmatprep.subr.mxu0 %v2824
        %v2826 = vand.u32 %v354, 4294901760
        %2827 = vmatpush1.msra.mxu0 %v2826
        %v2828 = vand.u32 %v353, 4294901760
        %2829 = vmatprep.subr.mxu0 %v2828
        %v2830 = vand.u32 %v352, 4294901760
        %2831 = vmatpush1.msra.mxu0 %v2830
        %2832 = vmatprep.subr.mxu0 0.0
        %2833 = vmatpush2.msra.mxu0 0.0
        %2834 = vmatprep.subr.mxu0 0.0
        %2835 = vmatpush2.msra.mxu0 0.0
        %2836 = vmatprep.subr.mxu0 0.0
        %2837 = vmatpush2.msra.mxu0 0.0
        %2838 = vmatprep.subr.mxu0 0.0
        %2839 = vmatpush2.msra.mxu0 0.0
        %2840 = vmatprep.subr.mxu0 0.0
        %2841 = vmatpush2.msra.mxu0 0.0
        %2842 = vmatprep.subr.mxu0 0.0
        %2843 = vmatpush2.msra.mxu0 0.0
        %2844 = vmatprep.subr.mxu0 0.0
        %2845 = vmatpush2.msra.mxu0 0.0
        %2846 = vmatprep.subr.mxu0 0.0
        %2847 = vmatpush2.msra.mxu0 0.0
        %2848 = vmatprep.subr.mxu0 0.0
        %2849 = vmatpush2.msra.mxu0 0.0
        %2850 = vmatprep.subr.mxu0 0.0
        %2851 = vmatpush2.msra.mxu0 0.0
        %2852 = vmatprep.subr.mxu0 0.0
        %2853 = vmatpush2.msra.mxu0 0.0
        %2854 = vmatprep.subr.mxu0 0.0
        %2855 = vmatpush2.msra.mxu0 0.0
        %2856 = vmatprep.subr.mxu0 0.0
        %2857 = vmatpush2.msra.mxu0 0.0
        %2858 = vmatprep.subr.mxu0 0.0
        %2859 = vmatpush2.msra.mxu0 0.0
        %2860 = vmatprep.subr.mxu0 0.0
        %2861 = vmatpush2.msra.mxu0 0.0
        %2862 = vmatprep.subr.mxu0 0.0
        %2863 = vmatpush2.msra.mxu0 0.0
        %2864 = vmatprep.mubr.f32.mxu0 0.0
        %v2865 = vand.u32 %v2327, 4294901760
        %2866 = vmatmul.mubr.f32.gmra.mxu0 %v2865
        %v2867 = vpop.f32.mrf.mxu0
        %v2868 = vadd.f32 %v2788, %v2867
        %v2869 = vpop.f32.mrf.mxu0
        %v2870 = vadd.f32 %v2790, %v2869
        %2871 = vdwg.mxu0
        %v2872 = vld [vmem:[%s4] sm:$0xff]
        %v2873 = vld [vmem:[%s4 + $0x8] sm:$0xff]
        %v2874 = vld [vmem:[%s4 + $0x10] sm:$0xff]
        %v2875 = vld [vmem:[%s4 + $0x18] sm:$0xff]
        %v2876 = vld [vmem:[%s7] sm:$0xff]
        %v2877 = vld [vmem:[%s7 + $0x8] sm:$0xff]
        %v2878 = vld [vmem:[%s7 + $0x10] sm:$0xff]
        %v2879 = vld [vmem:[%s7 + $0x18] sm:$0xff]
        %2881 = vset.pattern.permute.xlu0 0
        %2882 = vperm.xlu0 %2881, %v2876
        %v2883 = vpop.permute.xlu0 %2882
        %2886 = vset.pattern.permute.xlu0 0
        %2887 = vperm.xlu0 %2886, %v2877
        %v2888 = vpop.permute.xlu0 %2887
        %2891 = vset.pattern.permute.xlu0 0
        %2892 = vperm.xlu0 %2891, %v2878
        %v2893 = vpop.permute.xlu0 %2892
        %2896 = vset.pattern.permute.xlu0 0
        %2897 = vperm.xlu0 %2896, %v2879
        %v2898 = vpop.permute.xlu0 %2897
        %v2901 = vsel %vm404, %v2872, 0
        %v2904 = vsel %vm404, %v2873, 0
        %v2907 = vsel %vm404, %v2874, 0
        %v2910 = vsel %vm404, %v2875, 0
        %2912 = vmatprep.subr.mxu0 0.0
        %2913 = vmatpush1.msra.mxu0 0.0
        %2914 = vmatprep.subr.mxu0 0.0
        %2915 = vmatpush1.msra.mxu0 0.0
        %2916 = vmatprep.subr.mxu0 0.0
        %2917 = vmatpush1.msra.mxu0 0.0
        %2918 = vmatprep.subr.mxu0 0.0
        %2919 = vmatpush1.msra.mxu0 0.0
        %2920 = vmatprep.subr.mxu0 0.0
        %2921 = vmatpush1.msra.mxu0 0.0
        %2922 = vmatprep.subr.mxu0 0.0
        %2923 = vmatpush1.msra.mxu0 0.0
        %2924 = vmatprep.subr.mxu0 0.0
        %2925 = vmatpush1.msra.mxu0 0.0
        %2926 = vmatprep.subr.mxu0 0.0
        %2927 = vmatpush1.msra.mxu0 0.0
        %2928 = vmatprep.subr.mxu0 0.0
        %2929 = vmatpush1.msra.mxu0 0.0
        %2930 = vmatprep.subr.mxu0 0.0
        %2931 = vmatpush1.msra.mxu0 0.0
        %2932 = vmatprep.subr.mxu0 0.0
        %2933 = vmatpush1.msra.mxu0 0.0
        %2934 = vmatprep.subr.mxu0 0.0
        %2935 = vmatpush1.msra.mxu0 0.0
        %v2936 = vand.u32 %v359, 4294901760
        %2937 = vmatprep.subr.mxu0 %v2936
        %v2938 = vand.u32 %v358, 4294901760
        %2939 = vmatpush1.msra.mxu0 %v2938
        %v2940 = vand.u32 %v357, 4294901760
        %2941 = vmatprep.subr.mxu0 %v2940
        %v2942 = vand.u32 %v356, 4294901760
        %2943 = vmatpush1.msra.mxu0 %v2942
        %v2944 = vand.u32 %v355, 4294901760
        %2945 = vmatprep.subr.mxu0 %v2944
        %v2946 = vand.u32 %v354, 4294901760
        %2947 = vmatpush1.msra.mxu0 %v2946
        %v2948 = vand.u32 %v353, 4294901760
        %2949 = vmatprep.subr.mxu0 %v2948
        %v2950 = vand.u32 %v352, 4294901760
        %2951 = vmatpush1.msra.mxu0 %v2950
        %2952 = vmatprep.subr.mxu0 0.0
        %2953 = vmatpush2.msra.mxu0 0.0
        %2954 = vmatprep.subr.mxu0 0.0
        %2955 = vmatpush2.msra.mxu0 0.0
        %2956 = vmatprep.subr.mxu0 0.0
        %2957 = vmatpush2.msra.mxu0 0.0
        %2958 = vmatprep.subr.mxu0 0.0
        %2959 = vmatpush2.msra.mxu0 0.0
        %2960 = vmatprep.subr.mxu0 0.0
        %2961 = vmatpush2.msra.mxu0 0.0
        %2962 = vmatprep.subr.mxu0 0.0
        %2963 = vmatpush2.msra.mxu0 0.0
        %2964 = vmatprep.subr.mxu0 0.0
        %2965 = vmatpush2.msra.mxu0 0.0
        %2966 = vmatprep.subr.mxu0 0.0
        %2967 = vmatpush2.msra.mxu0 0.0
        %2968 = vmatprep.subr.mxu0 0.0
        %2969 = vmatpush2.msra.mxu0 0.0
        %2970 = vmatprep.subr.mxu0 0.0
        %2971 = vmatpush2.msra.mxu0 0.0
        %2972 = vmatprep.subr.mxu0 0.0
        %2973 = vmatpush2.msra.mxu0 0.0
        %2974 = vmatprep.subr.mxu0 0.0
        %2975 = vmatpush2.msra.mxu0 0.0
        %2976 = vmatprep.subr.mxu0 0.0
        %2977 = vmatpush2.msra.mxu0 0.0
        %2978 = vmatprep.subr.mxu0 0.0
        %2979 = vmatpush2.msra.mxu0 0.0
        %2980 = vmatprep.subr.mxu0 0.0
        %2981 = vmatpush2.msra.mxu0 0.0
        %2982 = vmatprep.subr.mxu0 0.0
        %2983 = vmatpush2.msra.mxu0 0.0
        %2984 = vmatprep.mubr.f32.mxu0 0.0
        %v2985 = vand.u32 %v2901, 4294901760
        %v2986 = vsub.f32 %v2901, %v2985
        %v2987 = vand.u32 %v2986, 4294901760
        %v2988 = vsub.f32 %v2986, %v2987
        %v2989 = vand.u32 %v2988, 4294901760
        %2990 = vmatmul.mubr.f32.gmra.mxu0 %v2989
        %v2991 = vpop.f32.mrf.mxu0
        %v2992 = vadd.f32 %v2883, %v2991
        %v2993 = vpop.f32.mrf.mxu0
        %v2994 = vadd.f32 %v2883, %v2993
        %2995 = vmatprep.mubr.f32.mxu0 0.0
        %v2996 = vand.u32 %v2904, 4294901760
        %v2997 = vsub.f32 %v2904, %v2996
        %v2998 = vand.u32 %v2997, 4294901760
        %v2999 = vsub.f32 %v2997, %v2998
        %v3000 = vand.u32 %v2999, 4294901760
        %3001 = vmatmul.mubr.f32.gmra.mxu0 %v3000
        %v3002 = vpop.f32.mrf.mxu0
        %v3003 = vadd.f32 %v2888, %v3002
        %v3004 = vpop.f32.mrf.mxu0
        %v3005 = vadd.f32 %v2888, %v3004
        %3006 = vmatprep.mubr.f32.mxu0 0.0
        %v3007 = vand.u32 %v2907, 4294901760
        %v3008 = vsub.f32 %v2907, %v3007
        %v3009 = vand.u32 %v3008, 4294901760
        %v3010 = vsub.f32 %v3008, %v3009
        %v3011 = vand.u32 %v3010, 4294901760
        %3012 = vmatmul.mubr.f32.gmra.mxu0 %v3011
        %v3013 = vpop.f32.mrf.mxu0
        %v3014 = vadd.f32 %v2893, %v3013
        %v3015 = vpop.f32.mrf.mxu0
        %v3016 = vadd.f32 %v2893, %v3015
        %3017 = vmatprep.mubr.f32.mxu0 0.0
        %v3018 = vand.u32 %v2910, 4294901760
        %v3019 = vsub.f32 %v2910, %v3018
        %v3020 = vand.u32 %v3019, 4294901760
        %v3021 = vsub.f32 %v3019, %v3020
        %v3022 = vand.u32 %v3021, 4294901760
        %3023 = vmatmul.mubr.f32.gmra.mxu0 %v3022
        %v3024 = vpop.f32.mrf.mxu0
        %v3025 = vadd.f32 %v2898, %v3024
        %v3026 = vpop.f32.mrf.mxu0
        %v3027 = vadd.f32 %v2898, %v3026
        %3028 = vdwg.mxu0
        %3029 = vmatprep.subr.mxu0 0.0
        %3030 = vmatpush1.msra.mxu0 0.0
        %3031 = vmatprep.subr.mxu0 0.0
        %3032 = vmatpush1.msra.mxu0 0.0
        %3033 = vmatprep.subr.mxu0 0.0
        %3034 = vmatpush1.msra.mxu0 0.0
        %3035 = vmatprep.subr.mxu0 0.0
        %3036 = vmatpush1.msra.mxu0 0.0
        %3037 = vmatprep.subr.mxu0 0.0
        %3038 = vmatpush1.msra.mxu0 0.0
        %3039 = vmatprep.subr.mxu0 0.0
        %3040 = vmatpush1.msra.mxu0 0.0
        %3041 = vmatprep.subr.mxu0 0.0
        %3042 = vmatpush1.msra.mxu0 0.0
        %3043 = vmatprep.subr.mxu0 0.0
        %3044 = vmatpush1.msra.mxu0 0.0
        %3045 = vmatprep.subr.mxu0 0.0
        %3046 = vmatpush1.msra.mxu0 0.0
        %3047 = vmatprep.subr.mxu0 0.0
        %3048 = vmatpush1.msra.mxu0 0.0
        %3049 = vmatprep.subr.mxu0 0.0
        %3050 = vmatpush1.msra.mxu0 0.0
        %3051 = vmatprep.subr.mxu0 0.0
        %3052 = vmatpush1.msra.mxu0 0.0
        %v3053 = vand.u32 %v359, 4294901760
        %v3054 = vsub.f32 %v359, %v3053
        %v3055 = vand.u32 %v3054, 4294901760
        %v3056 = vsub.f32 %v3054, %v3055
        %v3057 = vand.u32 %v3056, 4294901760
        %3058 = vmatprep.subr.mxu0 %v3057
        %v3059 = vand.u32 %v358, 4294901760
        %v3060 = vsub.f32 %v358, %v3059
        %v3061 = vand.u32 %v3060, 4294901760
        %v3062 = vsub.f32 %v3060, %v3061
        %v3063 = vand.u32 %v3062, 4294901760
        %3064 = vmatpush1.msra.mxu0 %v3063
        %v3065 = vand.u32 %v357, 4294901760
        %v3066 = vsub.f32 %v357, %v3065
        %v3067 = vand.u32 %v3066, 4294901760
        %v3068 = vsub.f32 %v3066, %v3067
        %v3069 = vand.u32 %v3068, 4294901760
        %3070 = vmatprep.subr.mxu0 %v3069
        %v3071 = vand.u32 %v356, 4294901760
        %v3072 = vsub.f32 %v356, %v3071
        %v3073 = vand.u32 %v3072, 4294901760
        %v3074 = vsub.f32 %v3072, %v3073
        %v3075 = vand.u32 %v3074, 4294901760
        %3076 = vmatpush1.msra.mxu0 %v3075
        %v3077 = vand.u32 %v355, 4294901760
        %v3078 = vsub.f32 %v355, %v3077
        %v3079 = vand.u32 %v3078, 4294901760
        %v3080 = vsub.f32 %v3078, %v3079
        %v3081 = vand.u32 %v3080, 4294901760
        %3082 = vmatprep.subr.mxu0 %v3081
        %v3083 = vand.u32 %v354, 4294901760
        %v3084 = vsub.f32 %v354, %v3083
        %v3085 = vand.u32 %v3084, 4294901760
        %v3086 = vsub.f32 %v3084, %v3085
        %v3087 = vand.u32 %v3086, 4294901760
        %3088 = vmatpush1.msra.mxu0 %v3087
        %v3089 = vand.u32 %v353, 4294901760
        %v3090 = vsub.f32 %v353, %v3089
        %v3091 = vand.u32 %v3090, 4294901760
        %v3092 = vsub.f32 %v3090, %v3091
        %v3093 = vand.u32 %v3092, 4294901760
        %3094 = vmatprep.subr.mxu0 %v3093
        %v3095 = vand.u32 %v352, 4294901760
        %v3096 = vsub.f32 %v352, %v3095
        %v3097 = vand.u32 %v3096, 4294901760
        %v3098 = vsub.f32 %v3096, %v3097
        %v3099 = vand.u32 %v3098, 4294901760
        %3100 = vmatpush1.msra.mxu0 %v3099
        %3101 = vmatprep.subr.mxu0 0.0
        %3102 = vmatpush2.msra.mxu0 0.0
        %3103 = vmatprep.subr.mxu0 0.0
        %3104 = vmatpush2.msra.mxu0 0.0
        %3105 = vmatprep.subr.mxu0 0.0
        %3106 = vmatpush2.msra.mxu0 0.0
        %3107 = vmatprep.subr.mxu0 0.0
        %3108 = vmatpush2.msra.mxu0 0.0
        %3109 = vmatprep.subr.mxu0 0.0
        %3110 = vmatpush2.msra.mxu0 0.0
        %3111 = vmatprep.subr.mxu0 0.0
        %3112 = vmatpush2.msra.mxu0 0.0
        %3113 = vmatprep.subr.mxu0 0.0
        %3114 = vmatpush2.msra.mxu0 0.0
        %3115 = vmatprep.subr.mxu0 0.0
        %3116 = vmatpush2.msra.mxu0 0.0
        %3117 = vmatprep.subr.mxu0 0.0
        %3118 = vmatpush2.msra.mxu0 0.0
        %3119 = vmatprep.subr.mxu0 0.0
        %3120 = vmatpush2.msra.mxu0 0.0
        %3121 = vmatprep.subr.mxu0 0.0
        %3122 = vmatpush2.msra.mxu0 0.0
        %3123 = vmatprep.subr.mxu0 0.0
        %3124 = vmatpush2.msra.mxu0 0.0
        %3125 = vmatprep.subr.mxu0 0.0
        %3126 = vmatpush2.msra.mxu0 0.0
        %3127 = vmatprep.subr.mxu0 0.0
        %3128 = vmatpush2.msra.mxu0 0.0
        %3129 = vmatprep.subr.mxu0 0.0
        %3130 = vmatpush2.msra.mxu0 0.0
        %3131 = vmatprep.subr.mxu0 0.0
        %3132 = vmatpush2.msra.mxu0 0.0
        %3133 = vmatprep.mubr.f32.mxu0 0.0
        %v3134 = vand.u32 %v2901, 4294901760
        %3135 = vmatmul.mubr.f32.gmra.mxu0 %v3134
        %v3136 = vpop.f32.mrf.mxu0
        %v3137 = vadd.f32 %v2992, %v3136
        %v3138 = vpop.f32.mrf.mxu0
        %v3139 = vadd.f32 %v2994, %v3138
        %3140 = vmatprep.mubr.f32.mxu0 0.0
        %v3141 = vand.u32 %v2904, 4294901760
        %3142 = vmatmul.mubr.f32.gmra.mxu0 %v3141
        %v3143 = vpop.f32.mrf.mxu0
        %v3144 = vadd.f32 %v3003, %v3143
        %v3145 = vpop.f32.mrf.mxu0
        %v3146 = vadd.f32 %v3005, %v3145
        %3147 = vmatprep.mubr.f32.mxu0 0.0
        %v3148 = vand.u32 %v2907, 4294901760
        %3149 = vmatmul.mubr.f32.gmra.mxu0 %v3148
        %v3150 = vpop.f32.mrf.mxu0
        %v3151 = vadd.f32 %v3014, %v3150
        %v3152 = vpop.f32.mrf.mxu0
        %v3153 = vadd.f32 %v3016, %v3152
        %3154 = vmatprep.mubr.f32.mxu0 0.0
        %v3155 = vand.u32 %v2910, 4294901760
        %3156 = vmatmul.mubr.f32.gmra.mxu0 %v3155
        %v3157 = vpop.f32.mrf.mxu0
        %v3158 = vadd.f32 %v3025, %v3157
        %v3159 = vpop.f32.mrf.mxu0
        %v3160 = vadd.f32 %v3027, %v3159
        %3161 = vdwg.mxu0
        %3162 = vmatprep.subr.mxu0 0.0
        %3163 = vmatpush1.msra.mxu0 0.0
        %3164 = vmatprep.subr.mxu0 0.0
        %3165 = vmatpush1.msra.mxu0 0.0
        %3166 = vmatprep.subr.mxu0 0.0
        %3167 = vmatpush1.msra.mxu0 0.0
        %3168 = vmatprep.subr.mxu0 0.0
        %3169 = vmatpush1.msra.mxu0 0.0
        %3170 = vmatprep.subr.mxu0 0.0
        %3171 = vmatpush1.msra.mxu0 0.0
        %3172 = vmatprep.subr.mxu0 0.0
        %3173 = vmatpush1.msra.mxu0 0.0
        %3174 = vmatprep.subr.mxu0 0.0
        %3175 = vmatpush1.msra.mxu0 0.0
        %3176 = vmatprep.subr.mxu0 0.0
        %3177 = vmatpush1.msra.mxu0 0.0
        %3178 = vmatprep.subr.mxu0 0.0
        %3179 = vmatpush1.msra.mxu0 0.0
        %3180 = vmatprep.subr.mxu0 0.0
        %3181 = vmatpush1.msra.mxu0 0.0
        %3182 = vmatprep.subr.mxu0 0.0
        %3183 = vmatpush1.msra.mxu0 0.0
        %3184 = vmatprep.subr.mxu0 0.0
        %3185 = vmatpush1.msra.mxu0 0.0
        %v3186 = vand.u32 %v359, 4294901760
        %v3187 = vsub.f32 %v359, %v3186
        %3188 = vmatprep.subr.mxu0 %v3187
        %v3189 = vand.u32 %v358, 4294901760
        %v3190 = vsub.f32 %v358, %v3189
        %3191 = vmatpush1.msra.mxu0 %v3190
        %v3192 = vand.u32 %v357, 4294901760
        %v3193 = vsub.f32 %v357, %v3192
        %3194 = vmatprep.subr.mxu0 %v3193
        %v3195 = vand.u32 %v356, 4294901760
        %v3196 = vsub.f32 %v356, %v3195
        %3197 = vmatpush1.msra.mxu0 %v3196
        %v3198 = vand.u32 %v355, 4294901760
        %v3199 = vsub.f32 %v355, %v3198
        %3200 = vmatprep.subr.mxu0 %v3199
        %v3201 = vand.u32 %v354, 4294901760
        %v3202 = vsub.f32 %v354, %v3201
        %3203 = vmatpush1.msra.mxu0 %v3202
        %v3204 = vand.u32 %v353, 4294901760
        %v3205 = vsub.f32 %v353, %v3204
        %3206 = vmatprep.subr.mxu0 %v3205
        %v3207 = vand.u32 %v352, 4294901760
        %v3208 = vsub.f32 %v352, %v3207
        %3209 = vmatpush1.msra.mxu0 %v3208
        %3210 = vmatprep.subr.mxu0 0.0
        %3211 = vmatpush2.msra.mxu0 0.0
        %3212 = vmatprep.subr.mxu0 0.0
        %3213 = vmatpush2.msra.mxu0 0.0
        %3214 = vmatprep.subr.mxu0 0.0
        %3215 = vmatpush2.msra.mxu0 0.0
        %3216 = vmatprep.subr.mxu0 0.0
        %3217 = vmatpush2.msra.mxu0 0.0
        %3218 = vmatprep.subr.mxu0 0.0
        %3219 = vmatpush2.msra.mxu0 0.0
        %3220 = vmatprep.subr.mxu0 0.0
        %3221 = vmatpush2.msra.mxu0 0.0
        %3222 = vmatprep.subr.mxu0 0.0
        %3223 = vmatpush2.msra.mxu0 0.0
        %3224 = vmatprep.subr.mxu0 0.0
        %3225 = vmatpush2.msra.mxu0 0.0
        %3226 = vmatprep.subr.mxu0 0.0
        %3227 = vmatpush2.msra.mxu0 0.0
        %3228 = vmatprep.subr.mxu0 0.0
        %3229 = vmatpush2.msra.mxu0 0.0
        %3230 = vmatprep.subr.mxu0 0.0
        %3231 = vmatpush2.msra.mxu0 0.0
        %3232 = vmatprep.subr.mxu0 0.0
        %3233 = vmatpush2.msra.mxu0 0.0
        %3234 = vmatprep.subr.mxu0 0.0
        %3235 = vmatpush2.msra.mxu0 0.0
        %3236 = vmatprep.subr.mxu0 0.0
        %3237 = vmatpush2.msra.mxu0 0.0
        %3238 = vmatprep.subr.mxu0 0.0
        %3239 = vmatpush2.msra.mxu0 0.0
        %3240 = vmatprep.subr.mxu0 0.0
        %3241 = vmatpush2.msra.mxu0 0.0
        %3242 = vmatprep.mubr.f32.mxu0 0.0
        %v3243 = vand.u32 %v2901, 4294901760
        %v3244 = vsub.f32 %v2901, %v3243
        %3245 = vmatmul.mubr.f32.gmra.mxu0 %v3244
        %v3246 = vpop.f32.mrf.mxu0
        %v3247 = vadd.f32 %v3137, %v3246
        %v3248 = vpop.f32.mrf.mxu0
        %v3249 = vadd.f32 %v3139, %v3248
        %3250 = vmatprep.mubr.f32.mxu0 0.0
        %v3251 = vand.u32 %v2904, 4294901760
        %v3252 = vsub.f32 %v2904, %v3251
        %3253 = vmatmul.mubr.f32.gmra.mxu0 %v3252
        %v3254 = vpop.f32.mrf.mxu0
        %v3255 = vadd.f32 %v3144, %v3254
        %v3256 = vpop.f32.mrf.mxu0
        %v3257 = vadd.f32 %v3146, %v3256
        %3258 = vmatprep.mubr.f32.mxu0 0.0
        %v3259 = vand.u32 %v2907, 4294901760
        %v3260 = vsub.f32 %v2907, %v3259
        %3261 = vmatmul.mubr.f32.gmra.mxu0 %v3260
        %v3262 = vpop.f32.mrf.mxu0
        %v3263 = vadd.f32 %v3151, %v3262
        %v3264 = vpop.f32.mrf.mxu0
        %v3265 = vadd.f32 %v3153, %v3264
        %3266 = vmatprep.mubr.f32.mxu0 0.0
        %v3267 = vand.u32 %v2910, 4294901760
        %v3268 = vsub.f32 %v2910, %v3267
        %3269 = vmatmul.mubr.f32.gmra.mxu0 %v3268
        %v3270 = vpop.f32.mrf.mxu0
        %v3271 = vadd.f32 %v3158, %v3270
        %v3272 = vpop.f32.mrf.mxu0
        %v3273 = vadd.f32 %v3160, %v3272
        %3274 = vdwg.mxu0
        %3275 = vmatprep.subr.mxu0 0.0
        %3276 = vmatpush1.msra.mxu0 0.0
        %3277 = vmatprep.subr.mxu0 0.0
        %3278 = vmatpush1.msra.mxu0 0.0
        %3279 = vmatprep.subr.mxu0 0.0
        %3280 = vmatpush1.msra.mxu0 0.0
        %3281 = vmatprep.subr.mxu0 0.0
        %3282 = vmatpush1.msra.mxu0 0.0
        %3283 = vmatprep.subr.mxu0 0.0
        %3284 = vmatpush1.msra.mxu0 0.0
        %3285 = vmatprep.subr.mxu0 0.0
        %3286 = vmatpush1.msra.mxu0 0.0
        %3287 = vmatprep.subr.mxu0 0.0
        %3288 = vmatpush1.msra.mxu0 0.0
        %3289 = vmatprep.subr.mxu0 0.0
        %3290 = vmatpush1.msra.mxu0 0.0
        %3291 = vmatprep.subr.mxu0 0.0
        %3292 = vmatpush1.msra.mxu0 0.0
        %3293 = vmatprep.subr.mxu0 0.0
        %3294 = vmatpush1.msra.mxu0 0.0
        %3295 = vmatprep.subr.mxu0 0.0
        %3296 = vmatpush1.msra.mxu0 0.0
        %3297 = vmatprep.subr.mxu0 0.0
        %3298 = vmatpush1.msra.mxu0 0.0
        %v3299 = vand.u32 %v359, 4294901760
        %3300 = vmatprep.subr.mxu0 %v3299
        %v3301 = vand.u32 %v358, 4294901760
        %3302 = vmatpush1.msra.mxu0 %v3301
        %v3303 = vand.u32 %v357, 4294901760
        %3304 = vmatprep.subr.mxu0 %v3303
        %v3305 = vand.u32 %v356, 4294901760
        %3306 = vmatpush1.msra.mxu0 %v3305
        %v3307 = vand.u32 %v355, 4294901760
        %3308 = vmatprep.subr.mxu0 %v3307
        %v3309 = vand.u32 %v354, 4294901760
        %3310 = vmatpush1.msra.mxu0 %v3309
        %v3311 = vand.u32 %v353, 4294901760
        %3312 = vmatprep.subr.mxu0 %v3311
        %v3313 = vand.u32 %v352, 4294901760
        %3314 = vmatpush1.msra.mxu0 %v3313
        %3315 = vmatprep.subr.mxu0 0.0
        %3316 = vmatpush2.msra.mxu0 0.0
        %3317 = vmatprep.subr.mxu0 0.0
        %3318 = vmatpush2.msra.mxu0 0.0
        %3319 = vmatprep.subr.mxu0 0.0
        %3320 = vmatpush2.msra.mxu0 0.0
        %3321 = vmatprep.subr.mxu0 0.0
        %3322 = vmatpush2.msra.mxu0 0.0
        %3323 = vmatprep.subr.mxu0 0.0
        %3324 = vmatpush2.msra.mxu0 0.0
        %3325 = vmatprep.subr.mxu0 0.0
        %3326 = vmatpush2.msra.mxu0 0.0
        %3327 = vmatprep.subr.mxu0 0.0
        %3328 = vmatpush2.msra.mxu0 0.0
        %3329 = vmatprep.subr.mxu0 0.0
        %3330 = vmatpush2.msra.mxu0 0.0
        %3331 = vmatprep.subr.mxu0 0.0
        %3332 = vmatpush2.msra.mxu0 0.0
        %3333 = vmatprep.subr.mxu0 0.0
        %3334 = vmatpush2.msra.mxu0 0.0
        %3335 = vmatprep.subr.mxu0 0.0
        %3336 = vmatpush2.msra.mxu0 0.0
        %3337 = vmatprep.subr.mxu0 0.0
        %3338 = vmatpush2.msra.mxu0 0.0
        %3339 = vmatprep.subr.mxu0 0.0
        %3340 = vmatpush2.msra.mxu0 0.0
        %3341 = vmatprep.subr.mxu0 0.0
        %3342 = vmatpush2.msra.mxu0 0.0
        %3343 = vmatprep.subr.mxu0 0.0
        %3344 = vmatpush2.msra.mxu0 0.0
        %3345 = vmatprep.subr.mxu0 0.0
        %3346 = vmatpush2.msra.mxu0 0.0
        %3347 = vmatprep.mubr.f32.mxu0 0.0
        %v3348 = vand.u32 %v2901, 4294901760
        %v3349 = vsub.f32 %v2901, %v3348
        %v3350 = vand.u32 %v3349, 4294901760
        %3351 = vmatmul.mubr.f32.gmra.mxu0 %v3350
        %v3352 = vpop.f32.mrf.mxu0
        %v3353 = vadd.f32 %v3247, %v3352
        %v3354 = vpop.f32.mrf.mxu0
        %v3355 = vadd.f32 %v3249, %v3354
        %3356 = vmatprep.mubr.f32.mxu0 0.0
        %v3357 = vand.u32 %v2904, 4294901760
        %v3358 = vsub.f32 %v2904, %v3357
        %v3359 = vand.u32 %v3358, 4294901760
        %3360 = vmatmul.mubr.f32.gmra.mxu0 %v3359
        %v3361 = vpop.f32.mrf.mxu0
        %v3362 = vadd.f32 %v3255, %v3361
        %v3363 = vpop.f32.mrf.mxu0
        %v3364 = vadd.f32 %v3257, %v3363
        %3365 = vmatprep.mubr.f32.mxu0 0.0
        %v3366 = vand.u32 %v2907, 4294901760
        %v3367 = vsub.f32 %v2907, %v3366
        %v3368 = vand.u32 %v3367, 4294901760
        %3369 = vmatmul.mubr.f32.gmra.mxu0 %v3368
        %v3370 = vpop.f32.mrf.mxu0
        %v3371 = vadd.f32 %v3263, %v3370
        %v3372 = vpop.f32.mrf.mxu0
        %v3373 = vadd.f32 %v3265, %v3372
        %3374 = vmatprep.mubr.f32.mxu0 0.0
        %v3375 = vand.u32 %v2910, 4294901760
        %v3376 = vsub.f32 %v2910, %v3375
        %v3377 = vand.u32 %v3376, 4294901760
        %3378 = vmatmul.mubr.f32.gmra.mxu0 %v3377
        %v3379 = vpop.f32.mrf.mxu0
        %v3380 = vadd.f32 %v3271, %v3379
        %v3381 = vpop.f32.mrf.mxu0
        %v3382 = vadd.f32 %v3273, %v3381
        %3383 = vdwg.mxu0
        %3384 = vmatprep.subr.mxu0 0.0
        %3385 = vmatpush1.msra.mxu0 0.0
        %3386 = vmatprep.subr.mxu0 0.0
        %3387 = vmatpush1.msra.mxu0 0.0
        %3388 = vmatprep.subr.mxu0 0.0
        %3389 = vmatpush1.msra.mxu0 0.0
        %3390 = vmatprep.subr.mxu0 0.0
        %3391 = vmatpush1.msra.mxu0 0.0
        %3392 = vmatprep.subr.mxu0 0.0
        %3393 = vmatpush1.msra.mxu0 0.0
        %3394 = vmatprep.subr.mxu0 0.0
        %3395 = vmatpush1.msra.mxu0 0.0
        %3396 = vmatprep.subr.mxu0 0.0
        %3397 = vmatpush1.msra.mxu0 0.0
        %3398 = vmatprep.subr.mxu0 0.0
        %3399 = vmatpush1.msra.mxu0 0.0
        %3400 = vmatprep.subr.mxu0 0.0
        %3401 = vmatpush1.msra.mxu0 0.0
        %3402 = vmatprep.subr.mxu0 0.0
        %3403 = vmatpush1.msra.mxu0 0.0
        %3404 = vmatprep.subr.mxu0 0.0
        %3405 = vmatpush1.msra.mxu0 0.0
        %3406 = vmatprep.subr.mxu0 0.0
        %3407 = vmatpush1.msra.mxu0 0.0
        %v3408 = vand.u32 %v359, 4294901760
        %v3409 = vsub.f32 %v359, %v3408
        %v3410 = vand.u32 %v3409, 4294901760
        %3411 = vmatprep.subr.mxu0 %v3410
        %v3412 = vand.u32 %v358, 4294901760
        %v3413 = vsub.f32 %v358, %v3412
        %v3414 = vand.u32 %v3413, 4294901760
        %3415 = vmatpush1.msra.mxu0 %v3414
        %v3416 = vand.u32 %v357, 4294901760
        %v3417 = vsub.f32 %v357, %v3416
        %v3418 = vand.u32 %v3417, 4294901760
        %3419 = vmatprep.subr.mxu0 %v3418
        %v3420 = vand.u32 %v356, 4294901760
        %v3421 = vsub.f32 %v356, %v3420
        %v3422 = vand.u32 %v3421, 4294901760
        %3423 = vmatpush1.msra.mxu0 %v3422
        %v3424 = vand.u32 %v355, 4294901760
        %v3425 = vsub.f32 %v355, %v3424
        %v3426 = vand.u32 %v3425, 4294901760
        %3427 = vmatprep.subr.mxu0 %v3426
        %v3428 = vand.u32 %v354, 4294901760
        %v3429 = vsub.f32 %v354, %v3428
        %v3430 = vand.u32 %v3429, 4294901760
        %3431 = vmatpush1.msra.mxu0 %v3430
        %v3432 = vand.u32 %v353, 4294901760
        %v3433 = vsub.f32 %v353, %v3432
        %v3434 = vand.u32 %v3433, 4294901760
        %3435 = vmatprep.subr.mxu0 %v3434
        %v3436 = vand.u32 %v352, 4294901760
        %v3437 = vsub.f32 %v352, %v3436
        %v3438 = vand.u32 %v3437, 4294901760
        %3439 = vmatpush1.msra.mxu0 %v3438
        %3440 = vmatprep.subr.mxu0 0.0
        %3441 = vmatpush2.msra.mxu0 0.0
        %3442 = vmatprep.subr.mxu0 0.0
        %3443 = vmatpush2.msra.mxu0 0.0
        %3444 = vmatprep.subr.mxu0 0.0
        %3445 = vmatpush2.msra.mxu0 0.0
        %3446 = vmatprep.subr.mxu0 0.0
        %3447 = vmatpush2.msra.mxu0 0.0
        %3448 = vmatprep.subr.mxu0 0.0
        %3449 = vmatpush2.msra.mxu0 0.0
        %3450 = vmatprep.subr.mxu0 0.0
        %3451 = vmatpush2.msra.mxu0 0.0
        %3452 = vmatprep.subr.mxu0 0.0
        %3453 = vmatpush2.msra.mxu0 0.0
        %3454 = vmatprep.subr.mxu0 0.0
        %3455 = vmatpush2.msra.mxu0 0.0
        %3456 = vmatprep.subr.mxu0 0.0
        %3457 = vmatpush2.msra.mxu0 0.0
        %3458 = vmatprep.subr.mxu0 0.0
        %3459 = vmatpush2.msra.mxu0 0.0
        %3460 = vmatprep.subr.mxu0 0.0
        %3461 = vmatpush2.msra.mxu0 0.0
        %3462 = vmatprep.subr.mxu0 0.0
        %3463 = vmatpush2.msra.mxu0 0.0
        %3464 = vmatprep.subr.mxu0 0.0
        %3465 = vmatpush2.msra.mxu0 0.0
        %3466 = vmatprep.subr.mxu0 0.0
        %3467 = vmatpush2.msra.mxu0 0.0
        %3468 = vmatprep.subr.mxu0 0.0
        %3469 = vmatpush2.msra.mxu0 0.0
        %3470 = vmatprep.subr.mxu0 0.0
        %3471 = vmatpush2.msra.mxu0 0.0
        %3472 = vmatprep.mubr.f32.mxu0 0.0
        %v3473 = vand.u32 %v2901, 4294901760
        %3474 = vmatmul.mubr.f32.gmra.mxu0 %v3473
        %v3475 = vpop.f32.mrf.mxu0
        %v3476 = vadd.f32 %v3353, %v3475
        %v3477 = vpop.f32.mrf.mxu0
        %v3478 = vadd.f32 %v3355, %v3477
        %3479 = vmatprep.mubr.f32.mxu0 0.0
        %v3480 = vand.u32 %v2904, 4294901760
        %3481 = vmatmul.mubr.f32.gmra.mxu0 %v3480
        %v3482 = vpop.f32.mrf.mxu0
        %v3483 = vadd.f32 %v3362, %v3482
        %v3484 = vpop.f32.mrf.mxu0
        %v3485 = vadd.f32 %v3364, %v3484
        %3486 = vmatprep.mubr.f32.mxu0 0.0
        %v3487 = vand.u32 %v2907, 4294901760
        %3488 = vmatmul.mubr.f32.gmra.mxu0 %v3487
        %v3489 = vpop.f32.mrf.mxu0
        %v3490 = vadd.f32 %v3371, %v3489
        %v3491 = vpop.f32.mrf.mxu0
        %v3492 = vadd.f32 %v3373, %v3491
        %3493 = vmatprep.mubr.f32.mxu0 0.0
        %v3494 = vand.u32 %v2910, 4294901760
        %3495 = vmatmul.mubr.f32.gmra.mxu0 %v3494
        %v3496 = vpop.f32.mrf.mxu0
        %v3497 = vadd.f32 %v3380, %v3496
        %v3498 = vpop.f32.mrf.mxu0
        %v3499 = vadd.f32 %v3382, %v3498
        %3500 = vdwg.mxu0
        %3501 = vmatprep.subr.mxu0 0.0
        %3502 = vmatpush1.msra.mxu0 0.0
        %3503 = vmatprep.subr.mxu0 0.0
        %3504 = vmatpush1.msra.mxu0 0.0
        %3505 = vmatprep.subr.mxu0 0.0
        %3506 = vmatpush1.msra.mxu0 0.0
        %3507 = vmatprep.subr.mxu0 0.0
        %3508 = vmatpush1.msra.mxu0 0.0
        %3509 = vmatprep.subr.mxu0 0.0
        %3510 = vmatpush1.msra.mxu0 0.0
        %3511 = vmatprep.subr.mxu0 0.0
        %3512 = vmatpush1.msra.mxu0 0.0
        %3513 = vmatprep.subr.mxu0 0.0
        %3514 = vmatpush1.msra.mxu0 0.0
        %3515 = vmatprep.subr.mxu0 0.0
        %3516 = vmatpush1.msra.mxu0 0.0
        %3517 = vmatprep.subr.mxu0 0.0
        %3518 = vmatpush1.msra.mxu0 0.0
        %3519 = vmatprep.subr.mxu0 0.0
        %3520 = vmatpush1.msra.mxu0 0.0
        %3521 = vmatprep.subr.mxu0 0.0
        %3522 = vmatpush1.msra.mxu0 0.0
        %3523 = vmatprep.subr.mxu0 0.0
        %3524 = vmatpush1.msra.mxu0 0.0
        %v3525 = vand.u32 %v359, 4294901760
        %3526 = vmatprep.subr.mxu0 %v3525
        %v3527 = vand.u32 %v358, 4294901760
        %3528 = vmatpush1.msra.mxu0 %v3527
        %v3529 = vand.u32 %v357, 4294901760
        %3530 = vmatprep.subr.mxu0 %v3529
        %v3531 = vand.u32 %v356, 4294901760
        %3532 = vmatpush1.msra.mxu0 %v3531
        %v3533 = vand.u32 %v355, 4294901760
        %3534 = vmatprep.subr.mxu0 %v3533
        %v3535 = vand.u32 %v354, 4294901760
        %3536 = vmatpush1.msra.mxu0 %v3535
        %v3537 = vand.u32 %v353, 4294901760
        %3538 = vmatprep.subr.mxu0 %v3537
        %v3539 = vand.u32 %v352, 4294901760
        %3540 = vmatpush1.msra.mxu0 %v3539
        %3541 = vmatprep.subr.mxu0 0.0
        %3542 = vmatpush2.msra.mxu0 0.0
        %3543 = vmatprep.subr.mxu0 0.0
        %3544 = vmatpush2.msra.mxu0 0.0
        %3545 = vmatprep.subr.mxu0 0.0
        %3546 = vmatpush2.msra.mxu0 0.0
        %3547 = vmatprep.subr.mxu0 0.0
        %3548 = vmatpush2.msra.mxu0 0.0
        %3549 = vmatprep.subr.mxu0 0.0
        %3550 = vmatpush2.msra.mxu0 0.0
        %3551 = vmatprep.subr.mxu0 0.0
        %3552 = vmatpush2.msra.mxu0 0.0
        %3553 = vmatprep.subr.mxu0 0.0
        %3554 = vmatpush2.msra.mxu0 0.0
        %3555 = vmatprep.subr.mxu0 0.0
        %3556 = vmatpush2.msra.mxu0 0.0
        %3557 = vmatprep.subr.mxu0 0.0
        %3558 = vmatpush2.msra.mxu0 0.0
        %3559 = vmatprep.subr.mxu0 0.0
        %3560 = vmatpush2.msra.mxu0 0.0
        %3561 = vmatprep.subr.mxu0 0.0
        %3562 = vmatpush2.msra.mxu0 0.0
        %3563 = vmatprep.subr.mxu0 0.0
        %3564 = vmatpush2.msra.mxu0 0.0
        %3565 = vmatprep.subr.mxu0 0.0
        %3566 = vmatpush2.msra.mxu0 0.0
        %3567 = vmatprep.subr.mxu0 0.0
        %3568 = vmatpush2.msra.mxu0 0.0
        %3569 = vmatprep.subr.mxu0 0.0
        %3570 = vmatpush2.msra.mxu0 0.0
        %3571 = vmatprep.subr.mxu0 0.0
        %3572 = vmatpush2.msra.mxu0 0.0
        %3573 = vmatprep.mubr.f32.mxu0 0.0
        %v3574 = vand.u32 %v2901, 4294901760
        %3575 = vmatmul.mubr.f32.gmra.mxu0 %v3574
        %v3576 = vpop.f32.mrf.mxu0
        %v3577 = vadd.f32 %v3476, %v3576
        %v3578 = vpop.f32.mrf.mxu0
        %v3579 = vadd.f32 %v3478, %v3578
        %3580 = vmatprep.mubr.f32.mxu0 0.0
        %v3581 = vand.u32 %v2904, 4294901760
        %3582 = vmatmul.mubr.f32.gmra.mxu0 %v3581
        %v3583 = vpop.f32.mrf.mxu0
        %v3584 = vadd.f32 %v3483, %v3583
        %v3585 = vpop.f32.mrf.mxu0
        %v3586 = vadd.f32 %v3485, %v3585
        %3587 = vmatprep.mubr.f32.mxu0 0.0
        %v3588 = vand.u32 %v2907, 4294901760
        %3589 = vmatmul.mubr.f32.gmra.mxu0 %v3588
        %v3590 = vpop.f32.mrf.mxu0
        %v3591 = vadd.f32 %v3490, %v3590
        %v3592 = vpop.f32.mrf.mxu0
        %v3593 = vadd.f32 %v3492, %v3592
        %3594 = vmatprep.mubr.f32.mxu0 0.0
        %v3595 = vand.u32 %v2910, 4294901760
        %3596 = vmatmul.mubr.f32.gmra.mxu0 %v3595
        %v3597 = vpop.f32.mrf.mxu0
        %v3598 = vadd.f32 %v3497, %v3597
        %v3599 = vpop.f32.mrf.mxu0
        %v3600 = vadd.f32 %v3499, %v3599
        %3601 = vdwg.mxu0
        %vm3602 = vcmask 31744
        %v3604 = vsel %vm3602, %v2130, 0
        %v3607 = vsel %vm3602, %v2136, 0
        %v3610 = vsel %vm3602, %v2142, 0
        %v3613 = vsel %vm3602, %v2148, 0
        %v3616 = vsel %vm3602, %v2154, 0
        %v3619 = vsel %vm3602, %v2160, 0
        %v3622 = vsel %vm3602, %v2166, 0
        %v3625 = vsel %vm3602, %v2172, 0
        %v3628 = vsel %vm3602, %v2178, 0
        %v3631 = vsel %vm3602, %v2184, 0
        %v3634 = vsel %vm3602, %v2190, 0
        %v3637 = vsel %vm3602, %v2196, 0
        %v3640 = vsel %vm3602, %v2202, 0
        %v3643 = vsel %vm3602, %v2208, 0
        %v3646 = vsel %vm3602, %v2214, 0
        %v3649 = vsel %vm3602, %v2220, 0
        %v3652 = vsel %vm3602, %v2226, 0
        %v3655 = vsel %vm3602, %v2232, 0
        %v3658 = vsel %vm3602, %v2238, 0
        %v3661 = vsel %vm3602, %v2244, 0
        %v3664 = vsel %vm3602, %v2250, 0
        %v3667 = vsel %vm3602, %v2256, 0
        %v3670 = vsel %vm3602, %v2262, 0
        %v3673 = vsel %vm3602, %v2268, 0
        %v3676 = vsel %vm3602, %v2274, 0
        %v3679 = vsel %vm3602, %v2280, 0
        %v3682 = vsel %vm3602, %v2286, 0
        %v3685 = vsel %vm3602, %v2292, 0
        %v3688 = vsel %vm3602, %v2298, 0
        %v3691 = vsel %vm3602, %v2304, 0
        %v3694 = vsel %vm3602, %v2310, 0
        %v3697 = vsel %vm3602, %v2316, 0
        %vm3699 = vcmask 1043456
        %v3701 = vsel %vm3699, %v2868, 0
        %v3704 = vsel %vm3699, %v2870, 0
        %3706 = vmatprep.subr.mxu0 0.0
        %3707 = vmatpush1.msra.mxu0 0.0
        %3708 = vmatprep.subr.mxu0 0.0
        %3709 = vmatpush1.msra.mxu0 0.0
        %3710 = vmatprep.subr.mxu0 0.0
        %3711 = vmatpush1.msra.mxu0 0.0
        %3712 = vmatprep.subr.mxu0 0.0
        %3713 = vmatpush1.msra.mxu0 0.0
        %3714 = vmatprep.subr.mxu0 0.0
        %3715 = vmatpush1.msra.mxu0 0.0
        %3716 = vmatprep.subr.mxu0 0.0
        %3717 = vmatpush1.msra.mxu0 0.0
        %3718 = vmatprep.subr.mxu0 0.0
        %3719 = vmatpush1.msra.mxu0 0.0
        %3720 = vmatprep.subr.mxu0 0.0
        %3721 = vmatpush1.msra.mxu0 0.0
        %3722 = vmatprep.subr.mxu0 0.0
        %3723 = vmatpush1.msra.mxu0 0.0
        %3724 = vmatprep.subr.mxu0 0.0
        %3725 = vmatpush1.msra.mxu0 0.0
        %3726 = vmatprep.subr.mxu0 0.0
        %3727 = vmatpush1.msra.mxu0 0.0
        %3728 = vmatprep.subr.mxu0 0.0
        %3729 = vmatpush1.msra.mxu0 0.0
        %3730 = vmatprep.subr.mxu0 0.0
        %3731 = vmatpush1.msra.mxu0 0.0
        %3732 = vmatprep.subr.mxu0 0.0
        %3733 = vmatpush1.msra.mxu0 0.0
        %3734 = vmatprep.subr.mxu0 0.0
        %3735 = vmatpush1.msra.mxu0 0.0
        %v3736 = vand.u32 %v3704, 4294901760
        %3737 = vmatprep.subr.mxu0 %v3736
        %v3738 = vand.u32 %v3701, 4294901760
        %3739 = vmatpush1.msra.mxu0 %v3738
        %3740 = vmatprep.subr.mxu0 0.0
        %3741 = vmatpush2.msra.mxu0 0.0
        %3742 = vmatprep.subr.mxu0 0.0
        %3743 = vmatpush2.msra.mxu0 0.0
        %3744 = vmatprep.subr.mxu0 0.0
        %3745 = vmatpush2.msra.mxu0 0.0
        %3746 = vmatprep.subr.mxu0 0.0
        %3747 = vmatpush2.msra.mxu0 0.0
        %3748 = vmatprep.subr.mxu0 0.0
        %3749 = vmatpush2.msra.mxu0 0.0
        %3750 = vmatprep.subr.mxu0 0.0
        %3751 = vmatpush2.msra.mxu0 0.0
        %3752 = vmatprep.subr.mxu0 0.0
        %3753 = vmatpush2.msra.mxu0 0.0
        %3754 = vmatprep.subr.mxu0 0.0
        %3755 = vmatpush2.msra.mxu0 0.0
        %3756 = vmatprep.subr.mxu0 0.0
        %3757 = vmatpush2.msra.mxu0 0.0
        %3758 = vmatprep.subr.mxu0 0.0
        %3759 = vmatpush2.msra.mxu0 0.0
        %3760 = vmatprep.subr.mxu0 0.0
        %3761 = vmatpush2.msra.mxu0 0.0
        %3762 = vmatprep.subr.mxu0 0.0
        %3763 = vmatpush2.msra.mxu0 0.0
        %3764 = vmatprep.subr.mxu0 0.0
        %3765 = vmatpush2.msra.mxu0 0.0
        %3766 = vmatprep.subr.mxu0 0.0
        %3767 = vmatpush2.msra.mxu0 0.0
        %3768 = vmatprep.subr.mxu0 0.0
        %3769 = vmatpush2.msra.mxu0 0.0
        %3770 = vmatprep.subr.mxu0 0.0
        %3771 = vmatpush2.msra.mxu0 0.0
        %3772 = vmatprep.mubr.f32.mxu0 0.0
        %v3773 = vand.u32 %v3604, 4294901760
        %v3774 = vsub.f32 %v3604, %v3773
        %v3775 = vand.u32 %v3774, 4294901760
        %v3776 = vsub.f32 %v3774, %v3775
        %v3777 = vand.u32 %v3776, 4294901760
        %3778 = vmatmul.mubr.f32.gmra.mxu0 %v3777
        %v3779 = vpop.f32.mrf.mxu0
        %v3780 = vadd.f32 0.0, %v3779
        %v3781 = vpop.f32.mrf.mxu0
        %v3782 = vadd.f32 0.0, %v3781
        %3783 = vmatprep.mubr.f32.mxu0 0.0
        %v3784 = vand.u32 %v3607, 4294901760
        %v3785 = vsub.f32 %v3607, %v3784
        %v3786 = vand.u32 %v3785, 4294901760
        %v3787 = vsub.f32 %v3785, %v3786
        %v3788 = vand.u32 %v3787, 4294901760
        %3789 = vmatmul.mubr.f32.gmra.mxu0 %v3788
        %v3790 = vpop.f32.mrf.mxu0
        %v3791 = vadd.f32 0.0, %v3790
        %v3792 = vpop.f32.mrf.mxu0
        %v3793 = vadd.f32 0.0, %v3792
        %3794 = vmatprep.mubr.f32.mxu0 0.0
        %v3795 = vand.u32 %v3610, 4294901760
        %v3796 = vsub.f32 %v3610, %v3795
        %v3797 = vand.u32 %v3796, 4294901760
        %v3798 = vsub.f32 %v3796, %v3797
        %v3799 = vand.u32 %v3798, 4294901760
        %3800 = vmatmul.mubr.f32.gmra.mxu0 %v3799
        %v3801 = vpop.f32.mrf.mxu0
        %v3802 = vadd.f32 0.0, %v3801
        %v3803 = vpop.f32.mrf.mxu0
        %v3804 = vadd.f32 0.0, %v3803
        %3805 = vmatprep.mubr.f32.mxu0 0.0
        %v3806 = vand.u32 %v3613, 4294901760
        %v3807 = vsub.f32 %v3613, %v3806
        %v3808 = vand.u32 %v3807, 4294901760
        %v3809 = vsub.f32 %v3807, %v3808
        %v3810 = vand.u32 %v3809, 4294901760
        %3811 = vmatmul.mubr.f32.gmra.mxu0 %v3810
        %v3812 = vpop.f32.mrf.mxu0
        %v3813 = vadd.f32 0.0, %v3812
        %v3814 = vpop.f32.mrf.mxu0
        %v3815 = vadd.f32 0.0, %v3814
        %3816 = vmatprep.mubr.f32.mxu0 0.0
        %v3817 = vand.u32 %v3616, 4294901760
        %v3818 = vsub.f32 %v3616, %v3817
        %v3819 = vand.u32 %v3818, 4294901760
        %v3820 = vsub.f32 %v3818, %v3819
        %v3821 = vand.u32 %v3820, 4294901760
        %3822 = vmatmul.mubr.f32.gmra.mxu0 %v3821
        %v3823 = vpop.f32.mrf.mxu0
        %v3824 = vadd.f32 0.0, %v3823
        %v3825 = vpop.f32.mrf.mxu0
        %v3826 = vadd.f32 0.0, %v3825
        %3827 = vmatprep.mubr.f32.mxu0 0.0
        %v3828 = vand.u32 %v3619, 4294901760
        %v3829 = vsub.f32 %v3619, %v3828
        %v3830 = vand.u32 %v3829, 4294901760
        %v3831 = vsub.f32 %v3829, %v3830
        %v3832 = vand.u32 %v3831, 4294901760
        %3833 = vmatmul.mubr.f32.gmra.mxu0 %v3832
        %v3834 = vpop.f32.mrf.mxu0
        %v3835 = vadd.f32 0.0, %v3834
        %v3836 = vpop.f32.mrf.mxu0
        %v3837 = vadd.f32 0.0, %v3836
        %3838 = vmatprep.mubr.f32.mxu0 0.0
        %v3839 = vand.u32 %v3622, 4294901760
        %v3840 = vsub.f32 %v3622, %v3839
        %v3841 = vand.u32 %v3840, 4294901760
        %v3842 = vsub.f32 %v3840, %v3841
        %v3843 = vand.u32 %v3842, 4294901760
        %3844 = vmatmul.mubr.f32.gmra.mxu0 %v3843
        %v3845 = vpop.f32.mrf.mxu0
        %v3846 = vadd.f32 0.0, %v3845
        %v3847 = vpop.f32.mrf.mxu0
        %v3848 = vadd.f32 0.0, %v3847
        %3849 = vmatprep.mubr.f32.mxu0 0.0
        %v3850 = vand.u32 %v3625, 4294901760
        %v3851 = vsub.f32 %v3625, %v3850
        %v3852 = vand.u32 %v3851, 4294901760
        %v3853 = vsub.f32 %v3851, %v3852
        %v3854 = vand.u32 %v3853, 4294901760
        %3855 = vmatmul.mubr.f32.gmra.mxu0 %v3854
        %v3856 = vpop.f32.mrf.mxu0
        %v3857 = vadd.f32 0.0, %v3856
        %v3858 = vpop.f32.mrf.mxu0
        %v3859 = vadd.f32 0.0, %v3858
        %3860 = vmatprep.mubr.f32.mxu0 0.0
        %v3861 = vand.u32 %v3628, 4294901760
        %v3862 = vsub.f32 %v3628, %v3861
        %v3863 = vand.u32 %v3862, 4294901760
        %v3864 = vsub.f32 %v3862, %v3863
        %v3865 = vand.u32 %v3864, 4294901760
        %3866 = vmatmul.mubr.f32.gmra.mxu0 %v3865
        %v3867 = vpop.f32.mrf.mxu0
        %v3868 = vadd.f32 0.0, %v3867
        %v3869 = vpop.f32.mrf.mxu0
        %v3870 = vadd.f32 0.0, %v3869
        %3871 = vmatprep.mubr.f32.mxu0 0.0
        %v3872 = vand.u32 %v3631, 4294901760
        %v3873 = vsub.f32 %v3631, %v3872
        %v3874 = vand.u32 %v3873, 4294901760
        %v3875 = vsub.f32 %v3873, %v3874
        %v3876 = vand.u32 %v3875, 4294901760
        %3877 = vmatmul.mubr.f32.gmra.mxu0 %v3876
        %v3878 = vpop.f32.mrf.mxu0
        %v3879 = vadd.f32 0.0, %v3878
        %v3880 = vpop.f32.mrf.mxu0
        %v3881 = vadd.f32 0.0, %v3880
        %3882 = vmatprep.mubr.f32.mxu0 0.0
        %v3883 = vand.u32 %v3634, 4294901760
        %v3884 = vsub.f32 %v3634, %v3883
        %v3885 = vand.u32 %v3884, 4294901760
        %v3886 = vsub.f32 %v3884, %v3885
        %v3887 = vand.u32 %v3886, 4294901760
        %3888 = vmatmul.mubr.f32.gmra.mxu0 %v3887
        %v3889 = vpop.f32.mrf.mxu0
        %v3890 = vadd.f32 0.0, %v3889
        %v3891 = vpop.f32.mrf.mxu0
        %v3892 = vadd.f32 0.0, %v3891
        %3893 = vmatprep.mubr.f32.mxu0 0.0
        %v3894 = vand.u32 %v3637, 4294901760
        %v3895 = vsub.f32 %v3637, %v3894
        %v3896 = vand.u32 %v3895, 4294901760
        %v3897 = vsub.f32 %v3895, %v3896
        %v3898 = vand.u32 %v3897, 4294901760
        %3899 = vmatmul.mubr.f32.gmra.mxu0 %v3898
        %v3900 = vpop.f32.mrf.mxu0
        %v3901 = vadd.f32 0.0, %v3900
        %v3902 = vpop.f32.mrf.mxu0
        %v3903 = vadd.f32 0.0, %v3902
        %3904 = vmatprep.mubr.f32.mxu0 0.0
        %v3905 = vand.u32 %v3640, 4294901760
        %v3906 = vsub.f32 %v3640, %v3905
        %v3907 = vand.u32 %v3906, 4294901760
        %v3908 = vsub.f32 %v3906, %v3907
        %v3909 = vand.u32 %v3908, 4294901760
        %3910 = vmatmul.mubr.f32.gmra.mxu0 %v3909
        %v3911 = vpop.f32.mrf.mxu0
        %v3912 = vadd.f32 0.0, %v3911
        %v3913 = vpop.f32.mrf.mxu0
        %v3914 = vadd.f32 0.0, %v3913
        %3915 = vmatprep.mubr.f32.mxu0 0.0
        %v3916 = vand.u32 %v3643, 4294901760
        %v3917 = vsub.f32 %v3643, %v3916
        %v3918 = vand.u32 %v3917, 4294901760
        %v3919 = vsub.f32 %v3917, %v3918
        %v3920 = vand.u32 %v3919, 4294901760
        %3921 = vmatmul.mubr.f32.gmra.mxu0 %v3920
        %v3922 = vpop.f32.mrf.mxu0
        %v3923 = vadd.f32 0.0, %v3922
        %v3924 = vpop.f32.mrf.mxu0
        %v3925 = vadd.f32 0.0, %v3924
        %3926 = vmatprep.mubr.f32.mxu0 0.0
        %v3927 = vand.u32 %v3646, 4294901760
        %v3928 = vsub.f32 %v3646, %v3927
        %v3929 = vand.u32 %v3928, 4294901760
        %v3930 = vsub.f32 %v3928, %v3929
        %v3931 = vand.u32 %v3930, 4294901760
        %3932 = vmatmul.mubr.f32.gmra.mxu0 %v3931
        %v3933 = vpop.f32.mrf.mxu0
        %v3934 = vadd.f32 0.0, %v3933
        %v3935 = vpop.f32.mrf.mxu0
        %v3936 = vadd.f32 0.0, %v3935
        %3937 = vmatprep.mubr.f32.mxu0 0.0
        %v3938 = vand.u32 %v3649, 4294901760
        %v3939 = vsub.f32 %v3649, %v3938
        %v3940 = vand.u32 %v3939, 4294901760
        %v3941 = vsub.f32 %v3939, %v3940
        %v3942 = vand.u32 %v3941, 4294901760
        %3943 = vmatmul.mubr.f32.gmra.mxu0 %v3942
        %v3944 = vpop.f32.mrf.mxu0
        %v3945 = vadd.f32 0.0, %v3944
        %v3946 = vpop.f32.mrf.mxu0
        %v3947 = vadd.f32 0.0, %v3946
        %3948 = vmatprep.mubr.f32.mxu0 0.0
        %v3949 = vand.u32 %v3652, 4294901760
        %v3950 = vsub.f32 %v3652, %v3949
        %v3951 = vand.u32 %v3950, 4294901760
        %v3952 = vsub.f32 %v3950, %v3951
        %v3953 = vand.u32 %v3952, 4294901760
        %3954 = vmatmul.mubr.f32.gmra.mxu0 %v3953
        %v3955 = vpop.f32.mrf.mxu0
        %v3956 = vadd.f32 0.0, %v3955
        %v3957 = vpop.f32.mrf.mxu0
        %v3958 = vadd.f32 0.0, %v3957
        %3959 = vmatprep.mubr.f32.mxu0 0.0
        %v3960 = vand.u32 %v3655, 4294901760
        %v3961 = vsub.f32 %v3655, %v3960
        %v3962 = vand.u32 %v3961, 4294901760
        %v3963 = vsub.f32 %v3961, %v3962
        %v3964 = vand.u32 %v3963, 4294901760
        %3965 = vmatmul.mubr.f32.gmra.mxu0 %v3964
        %v3966 = vpop.f32.mrf.mxu0
        %v3967 = vadd.f32 0.0, %v3966
        %v3968 = vpop.f32.mrf.mxu0
        %v3969 = vadd.f32 0.0, %v3968
        %3970 = vmatprep.mubr.f32.mxu0 0.0
        %v3971 = vand.u32 %v3658, 4294901760
        %v3972 = vsub.f32 %v3658, %v3971
        %v3973 = vand.u32 %v3972, 4294901760
        %v3974 = vsub.f32 %v3972, %v3973
        %v3975 = vand.u32 %v3974, 4294901760
        %3976 = vmatmul.mubr.f32.gmra.mxu0 %v3975
        %v3977 = vpop.f32.mrf.mxu0
        %v3978 = vadd.f32 0.0, %v3977
        %v3979 = vpop.f32.mrf.mxu0
        %v3980 = vadd.f32 0.0, %v3979
        %3981 = vmatprep.mubr.f32.mxu0 0.0
        %v3982 = vand.u32 %v3661, 4294901760
        %v3983 = vsub.f32 %v3661, %v3982
        %v3984 = vand.u32 %v3983, 4294901760
        %v3985 = vsub.f32 %v3983, %v3984
        %v3986 = vand.u32 %v3985, 4294901760
        %3987 = vmatmul.mubr.f32.gmra.mxu0 %v3986
        %v3988 = vpop.f32.mrf.mxu0
        %v3989 = vadd.f32 0.0, %v3988
        %v3990 = vpop.f32.mrf.mxu0
        %v3991 = vadd.f32 0.0, %v3990
        %3992 = vmatprep.mubr.f32.mxu0 0.0
        %v3993 = vand.u32 %v3664, 4294901760
        %v3994 = vsub.f32 %v3664, %v3993
        %v3995 = vand.u32 %v3994, 4294901760
        %v3996 = vsub.f32 %v3994, %v3995
        %v3997 = vand.u32 %v3996, 4294901760
        %3998 = vmatmul.mubr.f32.gmra.mxu0 %v3997
        %v3999 = vpop.f32.mrf.mxu0
        %v4000 = vadd.f32 0.0, %v3999
        %v4001 = vpop.f32.mrf.mxu0
        %v4002 = vadd.f32 0.0, %v4001
        %4003 = vmatprep.mubr.f32.mxu0 0.0
        %v4004 = vand.u32 %v3667, 4294901760
        %v4005 = vsub.f32 %v3667, %v4004
        %v4006 = vand.u32 %v4005, 4294901760
        %v4007 = vsub.f32 %v4005, %v4006
        %v4008 = vand.u32 %v4007, 4294901760
        %4009 = vmatmul.mubr.f32.gmra.mxu0 %v4008
        %v4010 = vpop.f32.mrf.mxu0
        %v4011 = vadd.f32 0.0, %v4010
        %v4012 = vpop.f32.mrf.mxu0
        %v4013 = vadd.f32 0.0, %v4012
        %4014 = vmatprep.mubr.f32.mxu0 0.0
        %v4015 = vand.u32 %v3670, 4294901760
        %v4016 = vsub.f32 %v3670, %v4015
        %v4017 = vand.u32 %v4016, 4294901760
        %v4018 = vsub.f32 %v4016, %v4017
        %v4019 = vand.u32 %v4018, 4294901760
        %4020 = vmatmul.mubr.f32.gmra.mxu0 %v4019
        %v4021 = vpop.f32.mrf.mxu0
        %v4022 = vadd.f32 0.0, %v4021
        %v4023 = vpop.f32.mrf.mxu0
        %v4024 = vadd.f32 0.0, %v4023
        %4025 = vmatprep.mubr.f32.mxu0 0.0
        %v4026 = vand.u32 %v3673, 4294901760
        %v4027 = vsub.f32 %v3673, %v4026
        %v4028 = vand.u32 %v4027, 4294901760
        %v4029 = vsub.f32 %v4027, %v4028
        %v4030 = vand.u32 %v4029, 4294901760
        %4031 = vmatmul.mubr.f32.gmra.mxu0 %v4030
        %v4032 = vpop.f32.mrf.mxu0
        %v4033 = vadd.f32 0.0, %v4032
        %v4034 = vpop.f32.mrf.mxu0
        %v4035 = vadd.f32 0.0, %v4034
        %4036 = vmatprep.mubr.f32.mxu0 0.0
        %v4037 = vand.u32 %v3676, 4294901760
        %v4038 = vsub.f32 %v3676, %v4037
        %v4039 = vand.u32 %v4038, 4294901760
        %v4040 = vsub.f32 %v4038, %v4039
        %v4041 = vand.u32 %v4040, 4294901760
        %4042 = vmatmul.mubr.f32.gmra.mxu0 %v4041
        %v4043 = vpop.f32.mrf.mxu0
        %v4044 = vadd.f32 0.0, %v4043
        %v4045 = vpop.f32.mrf.mxu0
        %v4046 = vadd.f32 0.0, %v4045
        %4047 = vmatprep.mubr.f32.mxu0 0.0
        %v4048 = vand.u32 %v3679, 4294901760
        %v4049 = vsub.f32 %v3679, %v4048
        %v4050 = vand.u32 %v4049, 4294901760
        %v4051 = vsub.f32 %v4049, %v4050
        %v4052 = vand.u32 %v4051, 4294901760
        %4053 = vmatmul.mubr.f32.gmra.mxu0 %v4052
        %v4054 = vpop.f32.mrf.mxu0
        %v4055 = vadd.f32 0.0, %v4054
        %v4056 = vpop.f32.mrf.mxu0
        %v4057 = vadd.f32 0.0, %v4056
        %4058 = vmatprep.mubr.f32.mxu0 0.0
        %v4059 = vand.u32 %v3682, 4294901760
        %v4060 = vsub.f32 %v3682, %v4059
        %v4061 = vand.u32 %v4060, 4294901760
        %v4062 = vsub.f32 %v4060, %v4061
        %v4063 = vand.u32 %v4062, 4294901760
        %4064 = vmatmul.mubr.f32.gmra.mxu0 %v4063
        %v4065 = vpop.f32.mrf.mxu0
        %v4066 = vadd.f32 0.0, %v4065
        %v4067 = vpop.f32.mrf.mxu0
        %v4068 = vadd.f32 0.0, %v4067
        %4069 = vmatprep.mubr.f32.mxu0 0.0
        %v4070 = vand.u32 %v3685, 4294901760
        %v4071 = vsub.f32 %v3685, %v4070
        %v4072 = vand.u32 %v4071, 4294901760
        %v4073 = vsub.f32 %v4071, %v4072
        %v4074 = vand.u32 %v4073, 4294901760
        %4075 = vmatmul.mubr.f32.gmra.mxu0 %v4074
        %v4076 = vpop.f32.mrf.mxu0
        %v4077 = vadd.f32 0.0, %v4076
        %v4078 = vpop.f32.mrf.mxu0
        %v4079 = vadd.f32 0.0, %v4078
        %4080 = vmatprep.mubr.f32.mxu0 0.0
        %v4081 = vand.u32 %v3688, 4294901760
        %v4082 = vsub.f32 %v3688, %v4081
        %v4083 = vand.u32 %v4082, 4294901760
        %v4084 = vsub.f32 %v4082, %v4083
        %v4085 = vand.u32 %v4084, 4294901760
        %4086 = vmatmul.mubr.f32.gmra.mxu0 %v4085
        %v4087 = vpop.f32.mrf.mxu0
        %v4088 = vadd.f32 0.0, %v4087
        %v4089 = vpop.f32.mrf.mxu0
        %v4090 = vadd.f32 0.0, %v4089
        %4091 = vmatprep.mubr.f32.mxu0 0.0
        %v4092 = vand.u32 %v3691, 4294901760
        %v4093 = vsub.f32 %v3691, %v4092
        %v4094 = vand.u32 %v4093, 4294901760
        %v4095 = vsub.f32 %v4093, %v4094
        %v4096 = vand.u32 %v4095, 4294901760
        %4097 = vmatmul.mubr.f32.gmra.mxu0 %v4096
        %v4098 = vpop.f32.mrf.mxu0
        %v4099 = vadd.f32 0.0, %v4098
        %v4100 = vpop.f32.mrf.mxu0
        %v4101 = vadd.f32 0.0, %v4100
        %4102 = vmatprep.mubr.f32.mxu0 0.0
        %v4103 = vand.u32 %v3694, 4294901760
        %v4104 = vsub.f32 %v3694, %v4103
        %v4105 = vand.u32 %v4104, 4294901760
        %v4106 = vsub.f32 %v4104, %v4105
        %v4107 = vand.u32 %v4106, 4294901760
        %4108 = vmatmul.mubr.f32.gmra.mxu0 %v4107
        %v4109 = vpop.f32.mrf.mxu0
        %v4110 = vadd.f32 0.0, %v4109
        %v4111 = vpop.f32.mrf.mxu0
        %v4112 = vadd.f32 0.0, %v4111
        %4113 = vmatprep.mubr.f32.mxu0 0.0
        %v4114 = vand.u32 %v3697, 4294901760
        %v4115 = vsub.f32 %v3697, %v4114
        %v4116 = vand.u32 %v4115, 4294901760
        %v4117 = vsub.f32 %v4115, %v4116
        %v4118 = vand.u32 %v4117, 4294901760
        %4119 = vmatmul.mubr.f32.gmra.mxu0 %v4118
        %v4120 = vpop.f32.mrf.mxu0
        %v4121 = vadd.f32 0.0, %v4120
        %v4122 = vpop.f32.mrf.mxu0
        %v4123 = vadd.f32 0.0, %v4122
        %4124 = vdwg.mxu0
        %4125 = vmatprep.subr.mxu0 0.0
        %4126 = vmatpush1.msra.mxu0 0.0
        %4127 = vmatprep.subr.mxu0 0.0
        %4128 = vmatpush1.msra.mxu0 0.0
        %4129 = vmatprep.subr.mxu0 0.0
        %4130 = vmatpush1.msra.mxu0 0.0
        %4131 = vmatprep.subr.mxu0 0.0
        %4132 = vmatpush1.msra.mxu0 0.0
        %4133 = vmatprep.subr.mxu0 0.0
        %4134 = vmatpush1.msra.mxu0 0.0
        %4135 = vmatprep.subr.mxu0 0.0
        %4136 = vmatpush1.msra.mxu0 0.0
        %4137 = vmatprep.subr.mxu0 0.0
        %4138 = vmatpush1.msra.mxu0 0.0
        %4139 = vmatprep.subr.mxu0 0.0
        %4140 = vmatpush1.msra.mxu0 0.0
        %4141 = vmatprep.subr.mxu0 0.0
        %4142 = vmatpush1.msra.mxu0 0.0
        %4143 = vmatprep.subr.mxu0 0.0
        %4144 = vmatpush1.msra.mxu0 0.0
        %4145 = vmatprep.subr.mxu0 0.0
        %4146 = vmatpush1.msra.mxu0 0.0
        %4147 = vmatprep.subr.mxu0 0.0
        %4148 = vmatpush1.msra.mxu0 0.0
        %4149 = vmatprep.subr.mxu0 0.0
        %4150 = vmatpush1.msra.mxu0 0.0
        %4151 = vmatprep.subr.mxu0 0.0
        %4152 = vmatpush1.msra.mxu0 0.0
        %4153 = vmatprep.subr.mxu0 0.0
        %4154 = vmatpush1.msra.mxu0 0.0
        %v4155 = vand.u32 %v3704, 4294901760
        %v4156 = vsub.f32 %v3704, %v4155
        %v4157 = vand.u32 %v4156, 4294901760
        %v4158 = vsub.f32 %v4156, %v4157
        %v4159 = vand.u32 %v4158, 4294901760
        %4160 = vmatprep.subr.mxu0 %v4159
        %v4161 = vand.u32 %v3701, 4294901760
        %v4162 = vsub.f32 %v3701, %v4161
        %v4163 = vand.u32 %v4162, 4294901760
        %v4164 = vsub.f32 %v4162, %v4163
        %v4165 = vand.u32 %v4164, 4294901760
        %4166 = vmatpush1.msra.mxu0 %v4165
        %4167 = vmatprep.subr.mxu0 0.0
        %4168 = vmatpush2.msra.mxu0 0.0
        %4169 = vmatprep.subr.mxu0 0.0
        %4170 = vmatpush2.msra.mxu0 0.0
        %4171 = vmatprep.subr.mxu0 0.0
        %4172 = vmatpush2.msra.mxu0 0.0
        %4173 = vmatprep.subr.mxu0 0.0
        %4174 = vmatpush2.msra.mxu0 0.0
        %4175 = vmatprep.subr.mxu0 0.0
        %4176 = vmatpush2.msra.mxu0 0.0
        %4177 = vmatprep.subr.mxu0 0.0
        %4178 = vmatpush2.msra.mxu0 0.0
        %4179 = vmatprep.subr.mxu0 0.0
        %4180 = vmatpush2.msra.mxu0 0.0
        %4181 = vmatprep.subr.mxu0 0.0
        %4182 = vmatpush2.msra.mxu0 0.0
        %4183 = vmatprep.subr.mxu0 0.0
        %4184 = vmatpush2.msra.mxu0 0.0
        %4185 = vmatprep.subr.mxu0 0.0
        %4186 = vmatpush2.msra.mxu0 0.0
        %4187 = vmatprep.subr.mxu0 0.0
        %4188 = vmatpush2.msra.mxu0 0.0
        %4189 = vmatprep.subr.mxu0 0.0
        %4190 = vmatpush2.msra.mxu0 0.0
        %4191 = vmatprep.subr.mxu0 0.0
        %4192 = vmatpush2.msra.mxu0 0.0
        %4193 = vmatprep.subr.mxu0 0.0
        %4194 = vmatpush2.msra.mxu0 0.0
        %4195 = vmatprep.subr.mxu0 0.0
        %4196 = vmatpush2.msra.mxu0 0.0
        %4197 = vmatprep.subr.mxu0 0.0
        %4198 = vmatpush2.msra.mxu0 0.0
        %4199 = vmatprep.mubr.f32.mxu0 0.0
        %v4200 = vand.u32 %v3604, 4294901760
        %4201 = vmatmul.mubr.f32.gmra.mxu0 %v4200
        %v4202 = vpop.f32.mrf.mxu0
        %v4203 = vadd.f32 %v3780, %v4202
        %v4204 = vpop.f32.mrf.mxu0
        %v4205 = vadd.f32 %v3782, %v4204
        %4206 = vmatprep.mubr.f32.mxu0 0.0
        %v4207 = vand.u32 %v3607, 4294901760
        %4208 = vmatmul.mubr.f32.gmra.mxu0 %v4207
        %v4209 = vpop.f32.mrf.mxu0
        %v4210 = vadd.f32 %v3791, %v4209
        %v4211 = vpop.f32.mrf.mxu0
        %v4212 = vadd.f32 %v3793, %v4211
        %4213 = vmatprep.mubr.f32.mxu0 0.0
        %v4214 = vand.u32 %v3610, 4294901760
        %4215 = vmatmul.mubr.f32.gmra.mxu0 %v4214
        %v4216 = vpop.f32.mrf.mxu0
        %v4217 = vadd.f32 %v3802, %v4216
        %v4218 = vpop.f32.mrf.mxu0
        %v4219 = vadd.f32 %v3804, %v4218
        %4220 = vmatprep.mubr.f32.mxu0 0.0
        %v4221 = vand.u32 %v3613, 4294901760
        %4222 = vmatmul.mubr.f32.gmra.mxu0 %v4221
        %v4223 = vpop.f32.mrf.mxu0
        %v4224 = vadd.f32 %v3813, %v4223
        %v4225 = vpop.f32.mrf.mxu0
        %v4226 = vadd.f32 %v3815, %v4225
        %4227 = vmatprep.mubr.f32.mxu0 0.0
        %v4228 = vand.u32 %v3616, 4294901760
        %4229 = vmatmul.mubr.f32.gmra.mxu0 %v4228
        %v4230 = vpop.f32.mrf.mxu0
        %v4231 = vadd.f32 %v3824, %v4230
        %v4232 = vpop.f32.mrf.mxu0
        %v4233 = vadd.f32 %v3826, %v4232
        %4234 = vmatprep.mubr.f32.mxu0 0.0
        %v4235 = vand.u32 %v3619, 4294901760
        %4236 = vmatmul.mubr.f32.gmra.mxu0 %v4235
        %v4237 = vpop.f32.mrf.mxu0
        %v4238 = vadd.f32 %v3835, %v4237
        %v4239 = vpop.f32.mrf.mxu0
        %v4240 = vadd.f32 %v3837, %v4239
        %4241 = vmatprep.mubr.f32.mxu0 0.0
        %v4242 = vand.u32 %v3622, 4294901760
        %4243 = vmatmul.mubr.f32.gmra.mxu0 %v4242
        %v4244 = vpop.f32.mrf.mxu0
        %v4245 = vadd.f32 %v3846, %v4244
        %v4246 = vpop.f32.mrf.mxu0
        %v4247 = vadd.f32 %v3848, %v4246
        %4248 = vmatprep.mubr.f32.mxu0 0.0
        %v4249 = vand.u32 %v3625, 4294901760
        %4250 = vmatmul.mubr.f32.gmra.mxu0 %v4249
        %v4251 = vpop.f32.mrf.mxu0
        %v4252 = vadd.f32 %v3857, %v4251
        %v4253 = vpop.f32.mrf.mxu0
        %v4254 = vadd.f32 %v3859, %v4253
        %4255 = vmatprep.mubr.f32.mxu0 0.0
        %v4256 = vand.u32 %v3628, 4294901760
        %4257 = vmatmul.mubr.f32.gmra.mxu0 %v4256
        %v4258 = vpop.f32.mrf.mxu0
        %v4259 = vadd.f32 %v3868, %v4258
        %v4260 = vpop.f32.mrf.mxu0
        %v4261 = vadd.f32 %v3870, %v4260
        %4262 = vmatprep.mubr.f32.mxu0 0.0
        %v4263 = vand.u32 %v3631, 4294901760
        %4264 = vmatmul.mubr.f32.gmra.mxu0 %v4263
        %v4265 = vpop.f32.mrf.mxu0
        %v4266 = vadd.f32 %v3879, %v4265
        %v4267 = vpop.f32.mrf.mxu0
        %v4268 = vadd.f32 %v3881, %v4267
        %4269 = vmatprep.mubr.f32.mxu0 0.0
        %v4270 = vand.u32 %v3634, 4294901760
        %4271 = vmatmul.mubr.f32.gmra.mxu0 %v4270
        %v4272 = vpop.f32.mrf.mxu0
        %v4273 = vadd.f32 %v3890, %v4272
        %v4274 = vpop.f32.mrf.mxu0
        %v4275 = vadd.f32 %v3892, %v4274
        %4276 = vmatprep.mubr.f32.mxu0 0.0
        %v4277 = vand.u32 %v3637, 4294901760
        %4278 = vmatmul.mubr.f32.gmra.mxu0 %v4277
        %v4279 = vpop.f32.mrf.mxu0
        %v4280 = vadd.f32 %v3901, %v4279
        %v4281 = vpop.f32.mrf.mxu0
        %v4282 = vadd.f32 %v3903, %v4281
        %4283 = vmatprep.mubr.f32.mxu0 0.0
        %v4284 = vand.u32 %v3640, 4294901760
        %4285 = vmatmul.mubr.f32.gmra.mxu0 %v4284
        %v4286 = vpop.f32.mrf.mxu0
        %v4287 = vadd.f32 %v3912, %v4286
        %v4288 = vpop.f32.mrf.mxu0
        %v4289 = vadd.f32 %v3914, %v4288
        %4290 = vmatprep.mubr.f32.mxu0 0.0
        %v4291 = vand.u32 %v3643, 4294901760
        %4292 = vmatmul.mubr.f32.gmra.mxu0 %v4291
        %v4293 = vpop.f32.mrf.mxu0
        %v4294 = vadd.f32 %v3923, %v4293
        %v4295 = vpop.f32.mrf.mxu0
        %v4296 = vadd.f32 %v3925, %v4295
        %4297 = vmatprep.mubr.f32.mxu0 0.0
        %v4298 = vand.u32 %v3646, 4294901760
        %4299 = vmatmul.mubr.f32.gmra.mxu0 %v4298
        %v4300 = vpop.f32.mrf.mxu0
        %v4301 = vadd.f32 %v3934, %v4300
        %v4302 = vpop.f32.mrf.mxu0
        %v4303 = vadd.f32 %v3936, %v4302
        %4304 = vmatprep.mubr.f32.mxu0 0.0
        %v4305 = vand.u32 %v3649, 4294901760
        %4306 = vmatmul.mubr.f32.gmra.mxu0 %v4305
        %v4307 = vpop.f32.mrf.mxu0
        %v4308 = vadd.f32 %v3945, %v4307
        %v4309 = vpop.f32.mrf.mxu0
        %v4310 = vadd.f32 %v3947, %v4309
        %4311 = vmatprep.mubr.f32.mxu0 0.0
        %v4312 = vand.u32 %v3652, 4294901760
        %4313 = vmatmul.mubr.f32.gmra.mxu0 %v4312
        %v4314 = vpop.f32.mrf.mxu0
        %v4315 = vadd.f32 %v3956, %v4314
        %v4316 = vpop.f32.mrf.mxu0
        %v4317 = vadd.f32 %v3958, %v4316
        %4318 = vmatprep.mubr.f32.mxu0 0.0
        %v4319 = vand.u32 %v3655, 4294901760
        %4320 = vmatmul.mubr.f32.gmra.mxu0 %v4319
        %v4321 = vpop.f32.mrf.mxu0
        %v4322 = vadd.f32 %v3967, %v4321
        %v4323 = vpop.f32.mrf.mxu0
        %v4324 = vadd.f32 %v3969, %v4323
        %4325 = vmatprep.mubr.f32.mxu0 0.0
        %v4326 = vand.u32 %v3658, 4294901760
        %4327 = vmatmul.mubr.f32.gmra.mxu0 %v4326
        %v4328 = vpop.f32.mrf.mxu0
        %v4329 = vadd.f32 %v3978, %v4328
        %v4330 = vpop.f32.mrf.mxu0
        %v4331 = vadd.f32 %v3980, %v4330
        %4332 = vmatprep.mubr.f32.mxu0 0.0
        %v4333 = vand.u32 %v3661, 4294901760
        %4334 = vmatmul.mubr.f32.gmra.mxu0 %v4333
        %v4335 = vpop.f32.mrf.mxu0
        %v4336 = vadd.f32 %v3989, %v4335
        %v4337 = vpop.f32.mrf.mxu0
        %v4338 = vadd.f32 %v3991, %v4337
        %4339 = vmatprep.mubr.f32.mxu0 0.0
        %v4340 = vand.u32 %v3664, 4294901760
        %4341 = vmatmul.mubr.f32.gmra.mxu0 %v4340
        %v4342 = vpop.f32.mrf.mxu0
        %v4343 = vadd.f32 %v4000, %v4342
        %v4344 = vpop.f32.mrf.mxu0
        %v4345 = vadd.f32 %v4002, %v4344
        %4346 = vmatprep.mubr.f32.mxu0 0.0
        %v4347 = vand.u32 %v3667, 4294901760
        %4348 = vmatmul.mubr.f32.gmra.mxu0 %v4347
        %v4349 = vpop.f32.mrf.mxu0
        %v4350 = vadd.f32 %v4011, %v4349
        %v4351 = vpop.f32.mrf.mxu0
        %v4352 = vadd.f32 %v4013, %v4351
        %4353 = vmatprep.mubr.f32.mxu0 0.0
        %v4354 = vand.u32 %v3670, 4294901760
        %4355 = vmatmul.mubr.f32.gmra.mxu0 %v4354
        %v4356 = vpop.f32.mrf.mxu0
        %v4357 = vadd.f32 %v4022, %v4356
        %v4358 = vpop.f32.mrf.mxu0
        %v4359 = vadd.f32 %v4024, %v4358
        %4360 = vmatprep.mubr.f32.mxu0 0.0
        %v4361 = vand.u32 %v3673, 4294901760
        %4362 = vmatmul.mubr.f32.gmra.mxu0 %v4361
        %v4363 = vpop.f32.mrf.mxu0
        %v4364 = vadd.f32 %v4033, %v4363
        %v4365 = vpop.f32.mrf.mxu0
        %v4366 = vadd.f32 %v4035, %v4365
        %4367 = vmatprep.mubr.f32.mxu0 0.0
        %v4368 = vand.u32 %v3676, 4294901760
        %4369 = vmatmul.mubr.f32.gmra.mxu0 %v4368
        %v4370 = vpop.f32.mrf.mxu0
        %v4371 = vadd.f32 %v4044, %v4370
        %v4372 = vpop.f32.mrf.mxu0
        %v4373 = vadd.f32 %v4046, %v4372
        %4374 = vmatprep.mubr.f32.mxu0 0.0
        %v4375 = vand.u32 %v3679, 4294901760
        %4376 = vmatmul.mubr.f32.gmra.mxu0 %v4375
        %v4377 = vpop.f32.mrf.mxu0
        %v4378 = vadd.f32 %v4055, %v4377
        %v4379 = vpop.f32.mrf.mxu0
        %v4380 = vadd.f32 %v4057, %v4379
        %4381 = vmatprep.mubr.f32.mxu0 0.0
        %v4382 = vand.u32 %v3682, 4294901760
        %4383 = vmatmul.mubr.f32.gmra.mxu0 %v4382
        %v4384 = vpop.f32.mrf.mxu0
        %v4385 = vadd.f32 %v4066, %v4384
        %v4386 = vpop.f32.mrf.mxu0
        %v4387 = vadd.f32 %v4068, %v4386
        %4388 = vmatprep.mubr.f32.mxu0 0.0
        %v4389 = vand.u32 %v3685, 4294901760
        %4390 = vmatmul.mubr.f32.gmra.mxu0 %v4389
        %v4391 = vpop.f32.mrf.mxu0
        %v4392 = vadd.f32 %v4077, %v4391
        %v4393 = vpop.f32.mrf.mxu0
        %v4394 = vadd.f32 %v4079, %v4393
        %4395 = vmatprep.mubr.f32.mxu0 0.0
        %v4396 = vand.u32 %v3688, 4294901760
        %4397 = vmatmul.mubr.f32.gmra.mxu0 %v4396
        %v4398 = vpop.f32.mrf.mxu0
        %v4399 = vadd.f32 %v4088, %v4398
        %v4400 = vpop.f32.mrf.mxu0
        %v4401 = vadd.f32 %v4090, %v4400
        %4402 = vmatprep.mubr.f32.mxu0 0.0
        %v4403 = vand.u32 %v3691, 4294901760
        %4404 = vmatmul.mubr.f32.gmra.mxu0 %v4403
        %v4405 = vpop.f32.mrf.mxu0
        %v4406 = vadd.f32 %v4099, %v4405
        %v4407 = vpop.f32.mrf.mxu0
        %v4408 = vadd.f32 %v4101, %v4407
        %4409 = vmatprep.mubr.f32.mxu0 0.0
        %v4410 = vand.u32 %v3694, 4294901760
        %4411 = vmatmul.mubr.f32.gmra.mxu0 %v4410
        %v4412 = vpop.f32.mrf.mxu0
        %v4413 = vadd.f32 %v4110, %v4412
        %v4414 = vpop.f32.mrf.mxu0
        %v4415 = vadd.f32 %v4112, %v4414
        %4416 = vmatprep.mubr.f32.mxu0 0.0
        %v4417 = vand.u32 %v3697, 4294901760
        %4418 = vmatmul.mubr.f32.gmra.mxu0 %v4417
        %v4419 = vpop.f32.mrf.mxu0
        %v4420 = vadd.f32 %v4121, %v4419
        %v4421 = vpop.f32.mrf.mxu0
        %v4422 = vadd.f32 %v4123, %v4421
        %4423 = vdwg.mxu0
        %4424 = vmatprep.subr.mxu0 0.0
        %4425 = vmatpush1.msra.mxu0 0.0
        %4426 = vmatprep.subr.mxu0 0.0
        %4427 = vmatpush1.msra.mxu0 0.0
        %4428 = vmatprep.subr.mxu0 0.0
        %4429 = vmatpush1.msra.mxu0 0.0
        %4430 = vmatprep.subr.mxu0 0.0
        %4431 = vmatpush1.msra.mxu0 0.0
        %4432 = vmatprep.subr.mxu0 0.0
        %4433 = vmatpush1.msra.mxu0 0.0
        %4434 = vmatprep.subr.mxu0 0.0
        %4435 = vmatpush1.msra.mxu0 0.0
        %4436 = vmatprep.subr.mxu0 0.0
        %4437 = vmatpush1.msra.mxu0 0.0
        %4438 = vmatprep.subr.mxu0 0.0
        %4439 = vmatpush1.msra.mxu0 0.0
        %4440 = vmatprep.subr.mxu0 0.0
        %4441 = vmatpush1.msra.mxu0 0.0
        %4442 = vmatprep.subr.mxu0 0.0
        %4443 = vmatpush1.msra.mxu0 0.0
        %4444 = vmatprep.subr.mxu0 0.0
        %4445 = vmatpush1.msra.mxu0 0.0
        %4446 = vmatprep.subr.mxu0 0.0
        %4447 = vmatpush1.msra.mxu0 0.0
        %4448 = vmatprep.subr.mxu0 0.0
        %4449 = vmatpush1.msra.mxu0 0.0
        %4450 = vmatprep.subr.mxu0 0.0
        %4451 = vmatpush1.msra.mxu0 0.0
        %4452 = vmatprep.subr.mxu0 0.0
        %4453 = vmatpush1.msra.mxu0 0.0
        %v4454 = vand.u32 %v3704, 4294901760
        %v4455 = vsub.f32 %v3704, %v4454
        %4456 = vmatprep.subr.mxu0 %v4455
        %v4457 = vand.u32 %v3701, 4294901760
        %v4458 = vsub.f32 %v3701, %v4457
        %4459 = vmatpush1.msra.mxu0 %v4458
        %4460 = vmatprep.subr.mxu0 0.0
        %4461 = vmatpush2.msra.mxu0 0.0
        %4462 = vmatprep.subr.mxu0 0.0
        %4463 = vmatpush2.msra.mxu0 0.0
        %4464 = vmatprep.subr.mxu0 0.0
        %4465 = vmatpush2.msra.mxu0 0.0
        %4466 = vmatprep.subr.mxu0 0.0
        %4467 = vmatpush2.msra.mxu0 0.0
        %4468 = vmatprep.subr.mxu0 0.0
        %4469 = vmatpush2.msra.mxu0 0.0
        %4470 = vmatprep.subr.mxu0 0.0
        %4471 = vmatpush2.msra.mxu0 0.0
        %4472 = vmatprep.subr.mxu0 0.0
        %4473 = vmatpush2.msra.mxu0 0.0
        %4474 = vmatprep.subr.mxu0 0.0
        %4475 = vmatpush2.msra.mxu0 0.0
        %4476 = vmatprep.subr.mxu0 0.0
        %4477 = vmatpush2.msra.mxu0 0.0
        %4478 = vmatprep.subr.mxu0 0.0
        %4479 = vmatpush2.msra.mxu0 0.0
        %4480 = vmatprep.subr.mxu0 0.0
        %4481 = vmatpush2.msra.mxu0 0.0
        %4482 = vmatprep.subr.mxu0 0.0
        %4483 = vmatpush2.msra.mxu0 0.0
        %4484 = vmatprep.subr.mxu0 0.0
        %4485 = vmatpush2.msra.mxu0 0.0
        %4486 = vmatprep.subr.mxu0 0.0
        %4487 = vmatpush2.msra.mxu0 0.0
        %4488 = vmatprep.subr.mxu0 0.0
        %4489 = vmatpush2.msra.mxu0 0.0
        %4490 = vmatprep.subr.mxu0 0.0
        %4491 = vmatpush2.msra.mxu0 0.0
        %4492 = vmatprep.mubr.f32.mxu0 0.0
        %v4493 = vand.u32 %v3604, 4294901760
        %v4494 = vsub.f32 %v3604, %v4493
        %4495 = vmatmul.mubr.f32.gmra.mxu0 %v4494
        %v4496 = vpop.f32.mrf.mxu0
        %v4497 = vadd.f32 %v4203, %v4496
        %v4498 = vpop.f32.mrf.mxu0
        %v4499 = vadd.f32 %v4205, %v4498
        %4500 = vmatprep.mubr.f32.mxu0 0.0
        %v4501 = vand.u32 %v3607, 4294901760
        %v4502 = vsub.f32 %v3607, %v4501
        %4503 = vmatmul.mubr.f32.gmra.mxu0 %v4502
        %v4504 = vpop.f32.mrf.mxu0
        %v4505 = vadd.f32 %v4210, %v4504
        %v4506 = vpop.f32.mrf.mxu0
        %v4507 = vadd.f32 %v4212, %v4506
        %4508 = vmatprep.mubr.f32.mxu0 0.0
        %v4509 = vand.u32 %v3610, 4294901760
        %v4510 = vsub.f32 %v3610, %v4509
        %4511 = vmatmul.mubr.f32.gmra.mxu0 %v4510
        %v4512 = vpop.f32.mrf.mxu0
        %v4513 = vadd.f32 %v4217, %v4512
        %v4514 = vpop.f32.mrf.mxu0
        %v4515 = vadd.f32 %v4219, %v4514
        %4516 = vmatprep.mubr.f32.mxu0 0.0
        %v4517 = vand.u32 %v3613, 4294901760
        %v4518 = vsub.f32 %v3613, %v4517
        %4519 = vmatmul.mubr.f32.gmra.mxu0 %v4518
        %v4520 = vpop.f32.mrf.mxu0
        %v4521 = vadd.f32 %v4224, %v4520
        %v4522 = vpop.f32.mrf.mxu0
        %v4523 = vadd.f32 %v4226, %v4522
        %4524 = vmatprep.mubr.f32.mxu0 0.0
        %v4525 = vand.u32 %v3616, 4294901760
        %v4526 = vsub.f32 %v3616, %v4525
        %4527 = vmatmul.mubr.f32.gmra.mxu0 %v4526
        %v4528 = vpop.f32.mrf.mxu0
        %v4529 = vadd.f32 %v4231, %v4528
        %v4530 = vpop.f32.mrf.mxu0
        %v4531 = vadd.f32 %v4233, %v4530
        %4532 = vmatprep.mubr.f32.mxu0 0.0
        %v4533 = vand.u32 %v3619, 4294901760
        %v4534 = vsub.f32 %v3619, %v4533
        %4535 = vmatmul.mubr.f32.gmra.mxu0 %v4534
        %v4536 = vpop.f32.mrf.mxu0
        %v4537 = vadd.f32 %v4238, %v4536
        %v4538 = vpop.f32.mrf.mxu0
        %v4539 = vadd.f32 %v4240, %v4538
        %4540 = vmatprep.mubr.f32.mxu0 0.0
        %v4541 = vand.u32 %v3622, 4294901760
        %v4542 = vsub.f32 %v3622, %v4541
        %4543 = vmatmul.mubr.f32.gmra.mxu0 %v4542
        %v4544 = vpop.f32.mrf.mxu0
        %v4545 = vadd.f32 %v4245, %v4544
        %v4546 = vpop.f32.mrf.mxu0
        %v4547 = vadd.f32 %v4247, %v4546
        %4548 = vmatprep.mubr.f32.mxu0 0.0
        %v4549 = vand.u32 %v3625, 4294901760
        %v4550 = vsub.f32 %v3625, %v4549
        %4551 = vmatmul.mubr.f32.gmra.mxu0 %v4550
        %v4552 = vpop.f32.mrf.mxu0
        %v4553 = vadd.f32 %v4252, %v4552
        %v4554 = vpop.f32.mrf.mxu0
        %v4555 = vadd.f32 %v4254, %v4554
        %4556 = vmatprep.mubr.f32.mxu0 0.0
        %v4557 = vand.u32 %v3628, 4294901760
        %v4558 = vsub.f32 %v3628, %v4557
        %4559 = vmatmul.mubr.f32.gmra.mxu0 %v4558
        %v4560 = vpop.f32.mrf.mxu0
        %v4561 = vadd.f32 %v4259, %v4560
        %v4562 = vpop.f32.mrf.mxu0
        %v4563 = vadd.f32 %v4261, %v4562
        %4564 = vmatprep.mubr.f32.mxu0 0.0
        %v4565 = vand.u32 %v3631, 4294901760
        %v4566 = vsub.f32 %v3631, %v4565
        %4567 = vmatmul.mubr.f32.gmra.mxu0 %v4566
        %v4568 = vpop.f32.mrf.mxu0
        %v4569 = vadd.f32 %v4266, %v4568
        %v4570 = vpop.f32.mrf.mxu0
        %v4571 = vadd.f32 %v4268, %v4570
        %4572 = vmatprep.mubr.f32.mxu0 0.0
        %v4573 = vand.u32 %v3634, 4294901760
        %v4574 = vsub.f32 %v3634, %v4573
        %4575 = vmatmul.mubr.f32.gmra.mxu0 %v4574
        %v4576 = vpop.f32.mrf.mxu0
        %v4577 = vadd.f32 %v4273, %v4576
        %v4578 = vpop.f32.mrf.mxu0
        %v4579 = vadd.f32 %v4275, %v4578
        %4580 = vmatprep.mubr.f32.mxu0 0.0
        %v4581 = vand.u32 %v3637, 4294901760
        %v4582 = vsub.f32 %v3637, %v4581
        %4583 = vmatmul.mubr.f32.gmra.mxu0 %v4582
        %v4584 = vpop.f32.mrf.mxu0
        %v4585 = vadd.f32 %v4280, %v4584
        %v4586 = vpop.f32.mrf.mxu0
        %v4587 = vadd.f32 %v4282, %v4586
        %4588 = vmatprep.mubr.f32.mxu0 0.0
        %v4589 = vand.u32 %v3640, 4294901760
        %v4590 = vsub.f32 %v3640, %v4589
        %4591 = vmatmul.mubr.f32.gmra.mxu0 %v4590
        %v4592 = vpop.f32.mrf.mxu0
        %v4593 = vadd.f32 %v4287, %v4592
        %v4594 = vpop.f32.mrf.mxu0
        %v4595 = vadd.f32 %v4289, %v4594
        %4596 = vmatprep.mubr.f32.mxu0 0.0
        %v4597 = vand.u32 %v3643, 4294901760
        %v4598 = vsub.f32 %v3643, %v4597
        %4599 = vmatmul.mubr.f32.gmra.mxu0 %v4598
        %v4600 = vpop.f32.mrf.mxu0
        %v4601 = vadd.f32 %v4294, %v4600
        %v4602 = vpop.f32.mrf.mxu0
        %v4603 = vadd.f32 %v4296, %v4602
        %4604 = vmatprep.mubr.f32.mxu0 0.0
        %v4605 = vand.u32 %v3646, 4294901760
        %v4606 = vsub.f32 %v3646, %v4605
        %4607 = vmatmul.mubr.f32.gmra.mxu0 %v4606
        %v4608 = vpop.f32.mrf.mxu0
        %v4609 = vadd.f32 %v4301, %v4608
        %v4610 = vpop.f32.mrf.mxu0
        %v4611 = vadd.f32 %v4303, %v4610
        %4612 = vmatprep.mubr.f32.mxu0 0.0
        %v4613 = vand.u32 %v3649, 4294901760
        %v4614 = vsub.f32 %v3649, %v4613
        %4615 = vmatmul.mubr.f32.gmra.mxu0 %v4614
        %v4616 = vpop.f32.mrf.mxu0
        %v4617 = vadd.f32 %v4308, %v4616
        %v4618 = vpop.f32.mrf.mxu0
        %v4619 = vadd.f32 %v4310, %v4618
        %4620 = vmatprep.mubr.f32.mxu0 0.0
        %v4621 = vand.u32 %v3652, 4294901760
        %v4622 = vsub.f32 %v3652, %v4621
        %4623 = vmatmul.mubr.f32.gmra.mxu0 %v4622
        %v4624 = vpop.f32.mrf.mxu0
        %v4625 = vadd.f32 %v4315, %v4624
        %v4626 = vpop.f32.mrf.mxu0
        %v4627 = vadd.f32 %v4317, %v4626
        %4628 = vmatprep.mubr.f32.mxu0 0.0
        %v4629 = vand.u32 %v3655, 4294901760
        %v4630 = vsub.f32 %v3655, %v4629
        %4631 = vmatmul.mubr.f32.gmra.mxu0 %v4630
        %v4632 = vpop.f32.mrf.mxu0
        %v4633 = vadd.f32 %v4322, %v4632
        %v4634 = vpop.f32.mrf.mxu0
        %v4635 = vadd.f32 %v4324, %v4634
        %4636 = vmatprep.mubr.f32.mxu0 0.0
        %v4637 = vand.u32 %v3658, 4294901760
        %v4638 = vsub.f32 %v3658, %v4637
        %4639 = vmatmul.mubr.f32.gmra.mxu0 %v4638
        %v4640 = vpop.f32.mrf.mxu0
        %v4641 = vadd.f32 %v4329, %v4640
        %v4642 = vpop.f32.mrf.mxu0
        %v4643 = vadd.f32 %v4331, %v4642
        %4644 = vmatprep.mubr.f32.mxu0 0.0
        %v4645 = vand.u32 %v3661, 4294901760
        %v4646 = vsub.f32 %v3661, %v4645
        %4647 = vmatmul.mubr.f32.gmra.mxu0 %v4646
        %v4648 = vpop.f32.mrf.mxu0
        %v4649 = vadd.f32 %v4336, %v4648
        %v4650 = vpop.f32.mrf.mxu0
        %v4651 = vadd.f32 %v4338, %v4650
        %4652 = vmatprep.mubr.f32.mxu0 0.0
        %v4653 = vand.u32 %v3664, 4294901760
        %v4654 = vsub.f32 %v3664, %v4653
        %4655 = vmatmul.mubr.f32.gmra.mxu0 %v4654
        %v4656 = vpop.f32.mrf.mxu0
        %v4657 = vadd.f32 %v4343, %v4656
        %v4658 = vpop.f32.mrf.mxu0
        %v4659 = vadd.f32 %v4345, %v4658
        %4660 = vmatprep.mubr.f32.mxu0 0.0
        %v4661 = vand.u32 %v3667, 4294901760
        %v4662 = vsub.f32 %v3667, %v4661
        %4663 = vmatmul.mubr.f32.gmra.mxu0 %v4662
        %v4664 = vpop.f32.mrf.mxu0
        %v4665 = vadd.f32 %v4350, %v4664
        %v4666 = vpop.f32.mrf.mxu0
        %v4667 = vadd.f32 %v4352, %v4666
        %4668 = vmatprep.mubr.f32.mxu0 0.0
        %v4669 = vand.u32 %v3670, 4294901760
        %v4670 = vsub.f32 %v3670, %v4669
        %4671 = vmatmul.mubr.f32.gmra.mxu0 %v4670
        %v4672 = vpop.f32.mrf.mxu0
        %v4673 = vadd.f32 %v4357, %v4672
        %v4674 = vpop.f32.mrf.mxu0
        %v4675 = vadd.f32 %v4359, %v4674
        %4676 = vmatprep.mubr.f32.mxu0 0.0
        %v4677 = vand.u32 %v3673, 4294901760
        %v4678 = vsub.f32 %v3673, %v4677
        %4679 = vmatmul.mubr.f32.gmra.mxu0 %v4678
        %v4680 = vpop.f32.mrf.mxu0
        %v4681 = vadd.f32 %v4364, %v4680
        %v4682 = vpop.f32.mrf.mxu0
        %v4683 = vadd.f32 %v4366, %v4682
        %4684 = vmatprep.mubr.f32.mxu0 0.0
        %v4685 = vand.u32 %v3676, 4294901760
        %v4686 = vsub.f32 %v3676, %v4685
        %4687 = vmatmul.mubr.f32.gmra.mxu0 %v4686
        %v4688 = vpop.f32.mrf.mxu0
        %v4689 = vadd.f32 %v4371, %v4688
        %v4690 = vpop.f32.mrf.mxu0
        %v4691 = vadd.f32 %v4373, %v4690
        %4692 = vmatprep.mubr.f32.mxu0 0.0
        %v4693 = vand.u32 %v3679, 4294901760
        %v4694 = vsub.f32 %v3679, %v4693
        %4695 = vmatmul.mubr.f32.gmra.mxu0 %v4694
        %v4696 = vpop.f32.mrf.mxu0
        %v4697 = vadd.f32 %v4378, %v4696
        %v4698 = vpop.f32.mrf.mxu0
        %v4699 = vadd.f32 %v4380, %v4698
        %4700 = vmatprep.mubr.f32.mxu0 0.0
        %v4701 = vand.u32 %v3682, 4294901760
        %v4702 = vsub.f32 %v3682, %v4701
        %4703 = vmatmul.mubr.f32.gmra.mxu0 %v4702
        %v4704 = vpop.f32.mrf.mxu0
        %v4705 = vadd.f32 %v4385, %v4704
        %v4706 = vpop.f32.mrf.mxu0
        %v4707 = vadd.f32 %v4387, %v4706
        %4708 = vmatprep.mubr.f32.mxu0 0.0
        %v4709 = vand.u32 %v3685, 4294901760
        %v4710 = vsub.f32 %v3685, %v4709
        %4711 = vmatmul.mubr.f32.gmra.mxu0 %v4710
        %v4712 = vpop.f32.mrf.mxu0
        %v4713 = vadd.f32 %v4392, %v4712
        %v4714 = vpop.f32.mrf.mxu0
        %v4715 = vadd.f32 %v4394, %v4714
        %4716 = vmatprep.mubr.f32.mxu0 0.0
        %v4717 = vand.u32 %v3688, 4294901760
        %v4718 = vsub.f32 %v3688, %v4717
        %4719 = vmatmul.mubr.f32.gmra.mxu0 %v4718
        %v4720 = vpop.f32.mrf.mxu0
        %v4721 = vadd.f32 %v4399, %v4720
        %v4722 = vpop.f32.mrf.mxu0
        %v4723 = vadd.f32 %v4401, %v4722
        %4724 = vmatprep.mubr.f32.mxu0 0.0
        %v4725 = vand.u32 %v3691, 4294901760
        %v4726 = vsub.f32 %v3691, %v4725
        %4727 = vmatmul.mubr.f32.gmra.mxu0 %v4726
        %v4728 = vpop.f32.mrf.mxu0
        %v4729 = vadd.f32 %v4406, %v4728
        %v4730 = vpop.f32.mrf.mxu0
        %v4731 = vadd.f32 %v4408, %v4730
        %4732 = vmatprep.mubr.f32.mxu0 0.0
        %v4733 = vand.u32 %v3694, 4294901760
        %v4734 = vsub.f32 %v3694, %v4733
        %4735 = vmatmul.mubr.f32.gmra.mxu0 %v4734
        %v4736 = vpop.f32.mrf.mxu0
        %v4737 = vadd.f32 %v4413, %v4736
        %v4738 = vpop.f32.mrf.mxu0
        %v4739 = vadd.f32 %v4415, %v4738
        %4740 = vmatprep.mubr.f32.mxu0 0.0
        %v4741 = vand.u32 %v3697, 4294901760
        %v4742 = vsub.f32 %v3697, %v4741
        %4743 = vmatmul.mubr.f32.gmra.mxu0 %v4742
        %v4744 = vpop.f32.mrf.mxu0
        %v4745 = vadd.f32 %v4420, %v4744
        %v4746 = vpop.f32.mrf.mxu0
        %v4747 = vadd.f32 %v4422, %v4746
        %4748 = vdwg.mxu0
        %4749 = vmatprep.subr.mxu0 0.0
        %4750 = vmatpush1.msra.mxu0 0.0
        %4751 = vmatprep.subr.mxu0 0.0
        %4752 = vmatpush1.msra.mxu0 0.0
        %4753 = vmatprep.subr.mxu0 0.0
        %4754 = vmatpush1.msra.mxu0 0.0
        %4755 = vmatprep.subr.mxu0 0.0
        %4756 = vmatpush1.msra.mxu0 0.0
        %4757 = vmatprep.subr.mxu0 0.0
        %4758 = vmatpush1.msra.mxu0 0.0
        %4759 = vmatprep.subr.mxu0 0.0
        %4760 = vmatpush1.msra.mxu0 0.0
        %4761 = vmatprep.subr.mxu0 0.0
        %4762 = vmatpush1.msra.mxu0 0.0
        %4763 = vmatprep.subr.mxu0 0.0
        %4764 = vmatpush1.msra.mxu0 0.0
        %4765 = vmatprep.subr.mxu0 0.0
        %4766 = vmatpush1.msra.mxu0 0.0
        %4767 = vmatprep.subr.mxu0 0.0
        %4768 = vmatpush1.msra.mxu0 0.0
        %4769 = vmatprep.subr.mxu0 0.0
        %4770 = vmatpush1.msra.mxu0 0.0
        %4771 = vmatprep.subr.mxu0 0.0
        %4772 = vmatpush1.msra.mxu0 0.0
        %4773 = vmatprep.subr.mxu0 0.0
        %4774 = vmatpush1.msra.mxu0 0.0
        %4775 = vmatprep.subr.mxu0 0.0
        %4776 = vmatpush1.msra.mxu0 0.0
        %4777 = vmatprep.subr.mxu0 0.0
        %4778 = vmatpush1.msra.mxu0 0.0
        %v4779 = vand.u32 %v3704, 4294901760
        %4780 = vmatprep.subr.mxu0 %v4779
        %v4781 = vand.u32 %v3701, 4294901760
        %4782 = vmatpush1.msra.mxu0 %v4781
        %4783 = vmatprep.subr.mxu0 0.0
        %4784 = vmatpush2.msra.mxu0 0.0
        %4785 = vmatprep.subr.mxu0 0.0
        %4786 = vmatpush2.msra.mxu0 0.0
        %4787 = vmatprep.subr.mxu0 0.0
        %4788 = vmatpush2.msra.mxu0 0.0
        %4789 = vmatprep.subr.mxu0 0.0
        %4790 = vmatpush2.msra.mxu0 0.0
        %4791 = vmatprep.subr.mxu0 0.0
        %4792 = vmatpush2.msra.mxu0 0.0
        %4793 = vmatprep.subr.mxu0 0.0
        %4794 = vmatpush2.msra.mxu0 0.0
        %4795 = vmatprep.subr.mxu0 0.0
        %4796 = vmatpush2.msra.mxu0 0.0
        %4797 = vmatprep.subr.mxu0 0.0
        %4798 = vmatpush2.msra.mxu0 0.0
        %4799 = vmatprep.subr.mxu0 0.0
        %4800 = vmatpush2.msra.mxu0 0.0
        %4801 = vmatprep.subr.mxu0 0.0
        %4802 = vmatpush2.msra.mxu0 0.0
        %4803 = vmatprep.subr.mxu0 0.0
        %4804 = vmatpush2.msra.mxu0 0.0
        %4805 = vmatprep.subr.mxu0 0.0
        %4806 = vmatpush2.msra.mxu0 0.0
        %4807 = vmatprep.subr.mxu0 0.0
        %4808 = vmatpush2.msra.mxu0 0.0
        %4809 = vmatprep.subr.mxu0 0.0
        %4810 = vmatpush2.msra.mxu0 0.0
        %4811 = vmatprep.subr.mxu0 0.0
        %4812 = vmatpush2.msra.mxu0 0.0
        %4813 = vmatprep.subr.mxu0 0.0
        %4814 = vmatpush2.msra.mxu0 0.0
        %4815 = vmatprep.mubr.f32.mxu0 0.0
        %v4816 = vand.u32 %v3604, 4294901760
        %v4817 = vsub.f32 %v3604, %v4816
        %v4818 = vand.u32 %v4817, 4294901760
        %4819 = vmatmul.mubr.f32.gmra.mxu0 %v4818
        %v4820 = vpop.f32.mrf.mxu0
        %v4821 = vadd.f32 %v4497, %v4820
        %v4822 = vpop.f32.mrf.mxu0
        %v4823 = vadd.f32 %v4499, %v4822
        %4824 = vmatprep.mubr.f32.mxu0 0.0
        %v4825 = vand.u32 %v3607, 4294901760
        %v4826 = vsub.f32 %v3607, %v4825
        %v4827 = vand.u32 %v4826, 4294901760
        %4828 = vmatmul.mubr.f32.gmra.mxu0 %v4827
        %v4829 = vpop.f32.mrf.mxu0
        %v4830 = vadd.f32 %v4505, %v4829
        %v4831 = vpop.f32.mrf.mxu0
        %v4832 = vadd.f32 %v4507, %v4831
        %4833 = vmatprep.mubr.f32.mxu0 0.0
        %v4834 = vand.u32 %v3610, 4294901760
        %v4835 = vsub.f32 %v3610, %v4834
        %v4836 = vand.u32 %v4835, 4294901760
        %4837 = vmatmul.mubr.f32.gmra.mxu0 %v4836
        %v4838 = vpop.f32.mrf.mxu0
        %v4839 = vadd.f32 %v4513, %v4838
        %v4840 = vpop.f32.mrf.mxu0
        %v4841 = vadd.f32 %v4515, %v4840
        %4842 = vmatprep.mubr.f32.mxu0 0.0
        %v4843 = vand.u32 %v3613, 4294901760
        %v4844 = vsub.f32 %v3613, %v4843
        %v4845 = vand.u32 %v4844, 4294901760
        %4846 = vmatmul.mubr.f32.gmra.mxu0 %v4845
        %v4847 = vpop.f32.mrf.mxu0
        %v4848 = vadd.f32 %v4521, %v4847
        %v4849 = vpop.f32.mrf.mxu0
        %v4850 = vadd.f32 %v4523, %v4849
        %4851 = vmatprep.mubr.f32.mxu0 0.0
        %v4852 = vand.u32 %v3616, 4294901760
        %v4853 = vsub.f32 %v3616, %v4852
        %v4854 = vand.u32 %v4853, 4294901760
        %4855 = vmatmul.mubr.f32.gmra.mxu0 %v4854
        %v4856 = vpop.f32.mrf.mxu0
        %v4857 = vadd.f32 %v4529, %v4856
        %v4858 = vpop.f32.mrf.mxu0
        %v4859 = vadd.f32 %v4531, %v4858
        %4860 = vmatprep.mubr.f32.mxu0 0.0
        %v4861 = vand.u32 %v3619, 4294901760
        %v4862 = vsub.f32 %v3619, %v4861
        %v4863 = vand.u32 %v4862, 4294901760
        %4864 = vmatmul.mubr.f32.gmra.mxu0 %v4863
        %v4865 = vpop.f32.mrf.mxu0
        %v4866 = vadd.f32 %v4537, %v4865
        %v4867 = vpop.f32.mrf.mxu0
        %v4868 = vadd.f32 %v4539, %v4867
        %4869 = vmatprep.mubr.f32.mxu0 0.0
        %v4870 = vand.u32 %v3622, 4294901760
        %v4871 = vsub.f32 %v3622, %v4870
        %v4872 = vand.u32 %v4871, 4294901760
        %4873 = vmatmul.mubr.f32.gmra.mxu0 %v4872
        %v4874 = vpop.f32.mrf.mxu0
        %v4875 = vadd.f32 %v4545, %v4874
        %v4876 = vpop.f32.mrf.mxu0
        %v4877 = vadd.f32 %v4547, %v4876
        %4878 = vmatprep.mubr.f32.mxu0 0.0
        %v4879 = vand.u32 %v3625, 4294901760
        %v4880 = vsub.f32 %v3625, %v4879
        %v4881 = vand.u32 %v4880, 4294901760
        %4882 = vmatmul.mubr.f32.gmra.mxu0 %v4881
        %v4883 = vpop.f32.mrf.mxu0
        %v4884 = vadd.f32 %v4553, %v4883
        %v4885 = vpop.f32.mrf.mxu0
        %v4886 = vadd.f32 %v4555, %v4885
        %4887 = vmatprep.mubr.f32.mxu0 0.0
        %v4888 = vand.u32 %v3628, 4294901760
        %v4889 = vsub.f32 %v3628, %v4888
        %v4890 = vand.u32 %v4889, 4294901760
        %4891 = vmatmul.mubr.f32.gmra.mxu0 %v4890
        %v4892 = vpop.f32.mrf.mxu0
        %v4893 = vadd.f32 %v4561, %v4892
        %v4894 = vpop.f32.mrf.mxu0
        %v4895 = vadd.f32 %v4563, %v4894
        %4896 = vmatprep.mubr.f32.mxu0 0.0
        %v4897 = vand.u32 %v3631, 4294901760
        %v4898 = vsub.f32 %v3631, %v4897
        %v4899 = vand.u32 %v4898, 4294901760
        %4900 = vmatmul.mubr.f32.gmra.mxu0 %v4899
        %v4901 = vpop.f32.mrf.mxu0
        %v4902 = vadd.f32 %v4569, %v4901
        %v4903 = vpop.f32.mrf.mxu0
        %v4904 = vadd.f32 %v4571, %v4903
        %4905 = vmatprep.mubr.f32.mxu0 0.0
        %v4906 = vand.u32 %v3634, 4294901760
        %v4907 = vsub.f32 %v3634, %v4906
        %v4908 = vand.u32 %v4907, 4294901760
        %4909 = vmatmul.mubr.f32.gmra.mxu0 %v4908
        %v4910 = vpop.f32.mrf.mxu0
        %v4911 = vadd.f32 %v4577, %v4910
        %v4912 = vpop.f32.mrf.mxu0
        %v4913 = vadd.f32 %v4579, %v4912
        %4914 = vmatprep.mubr.f32.mxu0 0.0
        %v4915 = vand.u32 %v3637, 4294901760
        %v4916 = vsub.f32 %v3637, %v4915
        %v4917 = vand.u32 %v4916, 4294901760
        %4918 = vmatmul.mubr.f32.gmra.mxu0 %v4917
        %v4919 = vpop.f32.mrf.mxu0
        %v4920 = vadd.f32 %v4585, %v4919
        %v4921 = vpop.f32.mrf.mxu0
        %v4922 = vadd.f32 %v4587, %v4921
        %4923 = vmatprep.mubr.f32.mxu0 0.0
        %v4924 = vand.u32 %v3640, 4294901760
        %v4925 = vsub.f32 %v3640, %v4924
        %v4926 = vand.u32 %v4925, 4294901760
        %4927 = vmatmul.mubr.f32.gmra.mxu0 %v4926
        %v4928 = vpop.f32.mrf.mxu0
        %v4929 = vadd.f32 %v4593, %v4928
        %v4930 = vpop.f32.mrf.mxu0
        %v4931 = vadd.f32 %v4595, %v4930
        %4932 = vmatprep.mubr.f32.mxu0 0.0
        %v4933 = vand.u32 %v3643, 4294901760
        %v4934 = vsub.f32 %v3643, %v4933
        %v4935 = vand.u32 %v4934, 4294901760
        %4936 = vmatmul.mubr.f32.gmra.mxu0 %v4935
        %v4937 = vpop.f32.mrf.mxu0
        %v4938 = vadd.f32 %v4601, %v4937
        %v4939 = vpop.f32.mrf.mxu0
        %v4940 = vadd.f32 %v4603, %v4939
        %4941 = vmatprep.mubr.f32.mxu0 0.0
        %v4942 = vand.u32 %v3646, 4294901760
        %v4943 = vsub.f32 %v3646, %v4942
        %v4944 = vand.u32 %v4943, 4294901760
        %4945 = vmatmul.mubr.f32.gmra.mxu0 %v4944
        %v4946 = vpop.f32.mrf.mxu0
        %v4947 = vadd.f32 %v4609, %v4946
        %v4948 = vpop.f32.mrf.mxu0
        %v4949 = vadd.f32 %v4611, %v4948
        %4950 = vmatprep.mubr.f32.mxu0 0.0
        %v4951 = vand.u32 %v3649, 4294901760
        %v4952 = vsub.f32 %v3649, %v4951
        %v4953 = vand.u32 %v4952, 4294901760
        %4954 = vmatmul.mubr.f32.gmra.mxu0 %v4953
        %v4955 = vpop.f32.mrf.mxu0
        %v4956 = vadd.f32 %v4617, %v4955
        %v4957 = vpop.f32.mrf.mxu0
        %v4958 = vadd.f32 %v4619, %v4957
        %4959 = vmatprep.mubr.f32.mxu0 0.0
        %v4960 = vand.u32 %v3652, 4294901760
        %v4961 = vsub.f32 %v3652, %v4960
        %v4962 = vand.u32 %v4961, 4294901760
        %4963 = vmatmul.mubr.f32.gmra.mxu0 %v4962
        %v4964 = vpop.f32.mrf.mxu0
        %v4965 = vadd.f32 %v4625, %v4964
        %v4966 = vpop.f32.mrf.mxu0
        %v4967 = vadd.f32 %v4627, %v4966
        %4968 = vmatprep.mubr.f32.mxu0 0.0
        %v4969 = vand.u32 %v3655, 4294901760
        %v4970 = vsub.f32 %v3655, %v4969
        %v4971 = vand.u32 %v4970, 4294901760
        %4972 = vmatmul.mubr.f32.gmra.mxu0 %v4971
        %v4973 = vpop.f32.mrf.mxu0
        %v4974 = vadd.f32 %v4633, %v4973
        %v4975 = vpop.f32.mrf.mxu0
        %v4976 = vadd.f32 %v4635, %v4975
        %4977 = vmatprep.mubr.f32.mxu0 0.0
        %v4978 = vand.u32 %v3658, 4294901760
        %v4979 = vsub.f32 %v3658, %v4978
        %v4980 = vand.u32 %v4979, 4294901760
        %4981 = vmatmul.mubr.f32.gmra.mxu0 %v4980
        %v4982 = vpop.f32.mrf.mxu0
        %v4983 = vadd.f32 %v4641, %v4982
        %v4984 = vpop.f32.mrf.mxu0
        %v4985 = vadd.f32 %v4643, %v4984
        %4986 = vmatprep.mubr.f32.mxu0 0.0
        %v4987 = vand.u32 %v3661, 4294901760
        %v4988 = vsub.f32 %v3661, %v4987
        %v4989 = vand.u32 %v4988, 4294901760
        %4990 = vmatmul.mubr.f32.gmra.mxu0 %v4989
        %v4991 = vpop.f32.mrf.mxu0
        %v4992 = vadd.f32 %v4649, %v4991
        %v4993 = vpop.f32.mrf.mxu0
        %v4994 = vadd.f32 %v4651, %v4993
        %4995 = vmatprep.mubr.f32.mxu0 0.0
        %v4996 = vand.u32 %v3664, 4294901760
        %v4997 = vsub.f32 %v3664, %v4996
        %v4998 = vand.u32 %v4997, 4294901760
        %4999 = vmatmul.mubr.f32.gmra.mxu0 %v4998
        %v5000 = vpop.f32.mrf.mxu0
        %v5001 = vadd.f32 %v4657, %v5000
        %v5002 = vpop.f32.mrf.mxu0
        %v5003 = vadd.f32 %v4659, %v5002
        %5004 = vmatprep.mubr.f32.mxu0 0.0
        %v5005 = vand.u32 %v3667, 4294901760
        %v5006 = vsub.f32 %v3667, %v5005
        %v5007 = vand.u32 %v5006, 4294901760
        %5008 = vmatmul.mubr.f32.gmra.mxu0 %v5007
        %v5009 = vpop.f32.mrf.mxu0
        %v5010 = vadd.f32 %v4665, %v5009
        %v5011 = vpop.f32.mrf.mxu0
        %v5012 = vadd.f32 %v4667, %v5011
        %5013 = vmatprep.mubr.f32.mxu0 0.0
        %v5014 = vand.u32 %v3670, 4294901760
        %v5015 = vsub.f32 %v3670, %v5014
        %v5016 = vand.u32 %v5015, 4294901760
        %5017 = vmatmul.mubr.f32.gmra.mxu0 %v5016
        %v5018 = vpop.f32.mrf.mxu0
        %v5019 = vadd.f32 %v4673, %v5018
        %v5020 = vpop.f32.mrf.mxu0
        %v5021 = vadd.f32 %v4675, %v5020
        %5022 = vmatprep.mubr.f32.mxu0 0.0
        %v5023 = vand.u32 %v3673, 4294901760
        %v5024 = vsub.f32 %v3673, %v5023
        %v5025 = vand.u32 %v5024, 4294901760
        %5026 = vmatmul.mubr.f32.gmra.mxu0 %v5025
        %v5027 = vpop.f32.mrf.mxu0
        %v5028 = vadd.f32 %v4681, %v5027
        %v5029 = vpop.f32.mrf.mxu0
        %v5030 = vadd.f32 %v4683, %v5029
        %5031 = vmatprep.mubr.f32.mxu0 0.0
        %v5032 = vand.u32 %v3676, 4294901760
        %v5033 = vsub.f32 %v3676, %v5032
        %v5034 = vand.u32 %v5033, 4294901760
        %5035 = vmatmul.mubr.f32.gmra.mxu0 %v5034
        %v5036 = vpop.f32.mrf.mxu0
        %v5037 = vadd.f32 %v4689, %v5036
        %v5038 = vpop.f32.mrf.mxu0
        %v5039 = vadd.f32 %v4691, %v5038
        %5040 = vmatprep.mubr.f32.mxu0 0.0
        %v5041 = vand.u32 %v3679, 4294901760
        %v5042 = vsub.f32 %v3679, %v5041
        %v5043 = vand.u32 %v5042, 4294901760
        %5044 = vmatmul.mubr.f32.gmra.mxu0 %v5043
        %v5045 = vpop.f32.mrf.mxu0
        %v5046 = vadd.f32 %v4697, %v5045
        %v5047 = vpop.f32.mrf.mxu0
        %v5048 = vadd.f32 %v4699, %v5047
        %5049 = vmatprep.mubr.f32.mxu0 0.0
        %v5050 = vand.u32 %v3682, 4294901760
        %v5051 = vsub.f32 %v3682, %v5050
        %v5052 = vand.u32 %v5051, 4294901760
        %5053 = vmatmul.mubr.f32.gmra.mxu0 %v5052
        %v5054 = vpop.f32.mrf.mxu0
        %v5055 = vadd.f32 %v4705, %v5054
        %v5056 = vpop.f32.mrf.mxu0
        %v5057 = vadd.f32 %v4707, %v5056
        %5058 = vmatprep.mubr.f32.mxu0 0.0
        %v5059 = vand.u32 %v3685, 4294901760
        %v5060 = vsub.f32 %v3685, %v5059
        %v5061 = vand.u32 %v5060, 4294901760
        %5062 = vmatmul.mubr.f32.gmra.mxu0 %v5061
        %v5063 = vpop.f32.mrf.mxu0
        %v5064 = vadd.f32 %v4713, %v5063
        %v5065 = vpop.f32.mrf.mxu0
        %v5066 = vadd.f32 %v4715, %v5065
        %5067 = vmatprep.mubr.f32.mxu0 0.0
        %v5068 = vand.u32 %v3688, 4294901760
        %v5069 = vsub.f32 %v3688, %v5068
        %v5070 = vand.u32 %v5069, 4294901760
        %5071 = vmatmul.mubr.f32.gmra.mxu0 %v5070
        %v5072 = vpop.f32.mrf.mxu0
        %v5073 = vadd.f32 %v4721, %v5072
        %v5074 = vpop.f32.mrf.mxu0
        %v5075 = vadd.f32 %v4723, %v5074
        %5076 = vmatprep.mubr.f32.mxu0 0.0
        %v5077 = vand.u32 %v3691, 4294901760
        %v5078 = vsub.f32 %v3691, %v5077
        %v5079 = vand.u32 %v5078, 4294901760
        %5080 = vmatmul.mubr.f32.gmra.mxu0 %v5079
        %v5081 = vpop.f32.mrf.mxu0
        %v5082 = vadd.f32 %v4729, %v5081
        %v5083 = vpop.f32.mrf.mxu0
        %v5084 = vadd.f32 %v4731, %v5083
        %5085 = vmatprep.mubr.f32.mxu0 0.0
        %v5086 = vand.u32 %v3694, 4294901760
        %v5087 = vsub.f32 %v3694, %v5086
        %v5088 = vand.u32 %v5087, 4294901760
        %5089 = vmatmul.mubr.f32.gmra.mxu0 %v5088
        %v5090 = vpop.f32.mrf.mxu0
        %v5091 = vadd.f32 %v4737, %v5090
        %v5092 = vpop.f32.mrf.mxu0
        %v5093 = vadd.f32 %v4739, %v5092
        %5094 = vmatprep.mubr.f32.mxu0 0.0
        %v5095 = vand.u32 %v3697, 4294901760
        %v5096 = vsub.f32 %v3697, %v5095
        %v5097 = vand.u32 %v5096, 4294901760
        %5098 = vmatmul.mubr.f32.gmra.mxu0 %v5097
        %v5099 = vpop.f32.mrf.mxu0
        %v5100 = vadd.f32 %v4745, %v5099
        %v5101 = vpop.f32.mrf.mxu0
        %v5102 = vadd.f32 %v4747, %v5101
        %5103 = vdwg.mxu0
        %5104 = vmatprep.subr.mxu0 0.0
        %5105 = vmatpush1.msra.mxu0 0.0
        %5106 = vmatprep.subr.mxu0 0.0
        %5107 = vmatpush1.msra.mxu0 0.0
        %5108 = vmatprep.subr.mxu0 0.0
        %5109 = vmatpush1.msra.mxu0 0.0
        %5110 = vmatprep.subr.mxu0 0.0
        %5111 = vmatpush1.msra.mxu0 0.0
        %5112 = vmatprep.subr.mxu0 0.0
        %5113 = vmatpush1.msra.mxu0 0.0
        %5114 = vmatprep.subr.mxu0 0.0
        %5115 = vmatpush1.msra.mxu0 0.0
        %5116 = vmatprep.subr.mxu0 0.0
        %5117 = vmatpush1.msra.mxu0 0.0
        %5118 = vmatprep.subr.mxu0 0.0
        %5119 = vmatpush1.msra.mxu0 0.0
        %5120 = vmatprep.subr.mxu0 0.0
        %5121 = vmatpush1.msra.mxu0 0.0
        %5122 = vmatprep.subr.mxu0 0.0
        %5123 = vmatpush1.msra.mxu0 0.0
        %5124 = vmatprep.subr.mxu0 0.0
        %5125 = vmatpush1.msra.mxu0 0.0
        %5126 = vmatprep.subr.mxu0 0.0
        %5127 = vmatpush1.msra.mxu0 0.0
        %5128 = vmatprep.subr.mxu0 0.0
        %5129 = vmatpush1.msra.mxu0 0.0
        %5130 = vmatprep.subr.mxu0 0.0
        %5131 = vmatpush1.msra.mxu0 0.0
        %5132 = vmatprep.subr.mxu0 0.0
        %5133 = vmatpush1.msra.mxu0 0.0
        %v5134 = vand.u32 %v3704, 4294901760
        %v5135 = vsub.f32 %v3704, %v5134
        %v5136 = vand.u32 %v5135, 4294901760
        %5137 = vmatprep.subr.mxu0 %v5136
        %v5138 = vand.u32 %v3701, 4294901760
        %v5139 = vsub.f32 %v3701, %v5138
        %v5140 = vand.u32 %v5139, 4294901760
        %5141 = vmatpush1.msra.mxu0 %v5140
        %5142 = vmatprep.subr.mxu0 0.0
        %5143 = vmatpush2.msra.mxu0 0.0
        %5144 = vmatprep.subr.mxu0 0.0
        %5145 = vmatpush2.msra.mxu0 0.0
        %5146 = vmatprep.subr.mxu0 0.0
        %5147 = vmatpush2.msra.mxu0 0.0
        %5148 = vmatprep.subr.mxu0 0.0
        %5149 = vmatpush2.msra.mxu0 0.0
        %5150 = vmatprep.subr.mxu0 0.0
        %5151 = vmatpush2.msra.mxu0 0.0
        %5152 = vmatprep.subr.mxu0 0.0
        %5153 = vmatpush2.msra.mxu0 0.0
        %5154 = vmatprep.subr.mxu0 0.0
        %5155 = vmatpush2.msra.mxu0 0.0
        %5156 = vmatprep.subr.mxu0 0.0
        %5157 = vmatpush2.msra.mxu0 0.0
        %5158 = vmatprep.subr.mxu0 0.0
        %5159 = vmatpush2.msra.mxu0 0.0
        %5160 = vmatprep.subr.mxu0 0.0
        %5161 = vmatpush2.msra.mxu0 0.0
        %5162 = vmatprep.subr.mxu0 0.0
        %5163 = vmatpush2.msra.mxu0 0.0
        %5164 = vmatprep.subr.mxu0 0.0
        %5165 = vmatpush2.msra.mxu0 0.0
        %5166 = vmatprep.subr.mxu0 0.0
        %5167 = vmatpush2.msra.mxu0 0.0
        %5168 = vmatprep.subr.mxu0 0.0
        %5169 = vmatpush2.msra.mxu0 0.0
        %5170 = vmatprep.subr.mxu0 0.0
        %5171 = vmatpush2.msra.mxu0 0.0
        %5172 = vmatprep.subr.mxu0 0.0
        %5173 = vmatpush2.msra.mxu0 0.0
        %5174 = vmatprep.mubr.f32.mxu0 0.0
        %v5175 = vand.u32 %v3604, 4294901760
        %5176 = vmatmul.mubr.f32.gmra.mxu0 %v5175
        %v5177 = vpop.f32.mrf.mxu0
        %v5178 = vadd.f32 %v4821, %v5177
        %v5179 = vpop.f32.mrf.mxu0
        %v5180 = vadd.f32 %v4823, %v5179
        %5181 = vmatprep.mubr.f32.mxu0 0.0
        %v5182 = vand.u32 %v3607, 4294901760
        %5183 = vmatmul.mubr.f32.gmra.mxu0 %v5182
        %v5184 = vpop.f32.mrf.mxu0
        %v5185 = vadd.f32 %v4830, %v5184
        %v5186 = vpop.f32.mrf.mxu0
        %v5187 = vadd.f32 %v4832, %v5186
        %5188 = vmatprep.mubr.f32.mxu0 0.0
        %v5189 = vand.u32 %v3610, 4294901760
        %5190 = vmatmul.mubr.f32.gmra.mxu0 %v5189
        %v5191 = vpop.f32.mrf.mxu0
        %v5192 = vadd.f32 %v4839, %v5191
        %v5193 = vpop.f32.mrf.mxu0
        %v5194 = vadd.f32 %v4841, %v5193
        %5195 = vmatprep.mubr.f32.mxu0 0.0
        %v5196 = vand.u32 %v3613, 4294901760
        %5197 = vmatmul.mubr.f32.gmra.mxu0 %v5196
        %v5198 = vpop.f32.mrf.mxu0
        %v5199 = vadd.f32 %v4848, %v5198
        %v5200 = vpop.f32.mrf.mxu0
        %v5201 = vadd.f32 %v4850, %v5200
        %5202 = vmatprep.mubr.f32.mxu0 0.0
        %v5203 = vand.u32 %v3616, 4294901760
        %5204 = vmatmul.mubr.f32.gmra.mxu0 %v5203
        %v5205 = vpop.f32.mrf.mxu0
        %v5206 = vadd.f32 %v4857, %v5205
        %v5207 = vpop.f32.mrf.mxu0
        %v5208 = vadd.f32 %v4859, %v5207
        %5209 = vmatprep.mubr.f32.mxu0 0.0
        %v5210 = vand.u32 %v3619, 4294901760
        %5211 = vmatmul.mubr.f32.gmra.mxu0 %v5210
        %v5212 = vpop.f32.mrf.mxu0
        %v5213 = vadd.f32 %v4866, %v5212
        %v5214 = vpop.f32.mrf.mxu0
        %v5215 = vadd.f32 %v4868, %v5214
        %5216 = vmatprep.mubr.f32.mxu0 0.0
        %v5217 = vand.u32 %v3622, 4294901760
        %5218 = vmatmul.mubr.f32.gmra.mxu0 %v5217
        %v5219 = vpop.f32.mrf.mxu0
        %v5220 = vadd.f32 %v4875, %v5219
        %v5221 = vpop.f32.mrf.mxu0
        %v5222 = vadd.f32 %v4877, %v5221
        %5223 = vmatprep.mubr.f32.mxu0 0.0
        %v5224 = vand.u32 %v3625, 4294901760
        %5225 = vmatmul.mubr.f32.gmra.mxu0 %v5224
        %v5226 = vpop.f32.mrf.mxu0
        %v5227 = vadd.f32 %v4884, %v5226
        %v5228 = vpop.f32.mrf.mxu0
        %v5229 = vadd.f32 %v4886, %v5228
        %5230 = vmatprep.mubr.f32.mxu0 0.0
        %v5231 = vand.u32 %v3628, 4294901760
        %5232 = vmatmul.mubr.f32.gmra.mxu0 %v5231
        %v5233 = vpop.f32.mrf.mxu0
        %v5234 = vadd.f32 %v4893, %v5233
        %v5235 = vpop.f32.mrf.mxu0
        %v5236 = vadd.f32 %v4895, %v5235
        %5237 = vmatprep.mubr.f32.mxu0 0.0
        %v5238 = vand.u32 %v3631, 4294901760
        %5239 = vmatmul.mubr.f32.gmra.mxu0 %v5238
        %v5240 = vpop.f32.mrf.mxu0
        %v5241 = vadd.f32 %v4902, %v5240
        %v5242 = vpop.f32.mrf.mxu0
        %v5243 = vadd.f32 %v4904, %v5242
        %5244 = vmatprep.mubr.f32.mxu0 0.0
        %v5245 = vand.u32 %v3634, 4294901760
        %5246 = vmatmul.mubr.f32.gmra.mxu0 %v5245
        %v5247 = vpop.f32.mrf.mxu0
        %v5248 = vadd.f32 %v4911, %v5247
        %v5249 = vpop.f32.mrf.mxu0
        %v5250 = vadd.f32 %v4913, %v5249
        %5251 = vmatprep.mubr.f32.mxu0 0.0
        %v5252 = vand.u32 %v3637, 4294901760
        %5253 = vmatmul.mubr.f32.gmra.mxu0 %v5252
        %v5254 = vpop.f32.mrf.mxu0
        %v5255 = vadd.f32 %v4920, %v5254
        %v5256 = vpop.f32.mrf.mxu0
        %v5257 = vadd.f32 %v4922, %v5256
        %5258 = vmatprep.mubr.f32.mxu0 0.0
        %v5259 = vand.u32 %v3640, 4294901760
        %5260 = vmatmul.mubr.f32.gmra.mxu0 %v5259
        %v5261 = vpop.f32.mrf.mxu0
        %v5262 = vadd.f32 %v4929, %v5261
        %v5263 = vpop.f32.mrf.mxu0
        %v5264 = vadd.f32 %v4931, %v5263
        %5265 = vmatprep.mubr.f32.mxu0 0.0
        %v5266 = vand.u32 %v3643, 4294901760
        %5267 = vmatmul.mubr.f32.gmra.mxu0 %v5266
        %v5268 = vpop.f32.mrf.mxu0
        %v5269 = vadd.f32 %v4938, %v5268
        %v5270 = vpop.f32.mrf.mxu0
        %v5271 = vadd.f32 %v4940, %v5270
        %5272 = vmatprep.mubr.f32.mxu0 0.0
        %v5273 = vand.u32 %v3646, 4294901760
        %5274 = vmatmul.mubr.f32.gmra.mxu0 %v5273
        %v5275 = vpop.f32.mrf.mxu0
        %v5276 = vadd.f32 %v4947, %v5275
        %v5277 = vpop.f32.mrf.mxu0
        %v5278 = vadd.f32 %v4949, %v5277
        %5279 = vmatprep.mubr.f32.mxu0 0.0
        %v5280 = vand.u32 %v3649, 4294901760
        %5281 = vmatmul.mubr.f32.gmra.mxu0 %v5280
        %v5282 = vpop.f32.mrf.mxu0
        %v5283 = vadd.f32 %v4956, %v5282
        %v5284 = vpop.f32.mrf.mxu0
        %v5285 = vadd.f32 %v4958, %v5284
        %5286 = vmatprep.mubr.f32.mxu0 0.0
        %v5287 = vand.u32 %v3652, 4294901760
        %5288 = vmatmul.mubr.f32.gmra.mxu0 %v5287
        %v5289 = vpop.f32.mrf.mxu0
        %v5290 = vadd.f32 %v4965, %v5289
        %v5291 = vpop.f32.mrf.mxu0
        %v5292 = vadd.f32 %v4967, %v5291
        %5293 = vmatprep.mubr.f32.mxu0 0.0
        %v5294 = vand.u32 %v3655, 4294901760
        %5295 = vmatmul.mubr.f32.gmra.mxu0 %v5294
        %v5296 = vpop.f32.mrf.mxu0
        %v5297 = vadd.f32 %v4974, %v5296
        %v5298 = vpop.f32.mrf.mxu0
        %v5299 = vadd.f32 %v4976, %v5298
        %5300 = vmatprep.mubr.f32.mxu0 0.0
        %v5301 = vand.u32 %v3658, 4294901760
        %5302 = vmatmul.mubr.f32.gmra.mxu0 %v5301
        %v5303 = vpop.f32.mrf.mxu0
        %v5304 = vadd.f32 %v4983, %v5303
        %v5305 = vpop.f32.mrf.mxu0
        %v5306 = vadd.f32 %v4985, %v5305
        %5307 = vmatprep.mubr.f32.mxu0 0.0
        %v5308 = vand.u32 %v3661, 4294901760
        %5309 = vmatmul.mubr.f32.gmra.mxu0 %v5308
        %v5310 = vpop.f32.mrf.mxu0
        %v5311 = vadd.f32 %v4992, %v5310
        %v5312 = vpop.f32.mrf.mxu0
        %v5313 = vadd.f32 %v4994, %v5312
        %5314 = vmatprep.mubr.f32.mxu0 0.0
        %v5315 = vand.u32 %v3664, 4294901760
        %5316 = vmatmul.mubr.f32.gmra.mxu0 %v5315
        %v5317 = vpop.f32.mrf.mxu0
        %v5318 = vadd.f32 %v5001, %v5317
        %v5319 = vpop.f32.mrf.mxu0
        %v5320 = vadd.f32 %v5003, %v5319
        %5321 = vmatprep.mubr.f32.mxu0 0.0
        %v5322 = vand.u32 %v3667, 4294901760
        %5323 = vmatmul.mubr.f32.gmra.mxu0 %v5322
        %v5324 = vpop.f32.mrf.mxu0
        %v5325 = vadd.f32 %v5010, %v5324
        %v5326 = vpop.f32.mrf.mxu0
        %v5327 = vadd.f32 %v5012, %v5326
        %5328 = vmatprep.mubr.f32.mxu0 0.0
        %v5329 = vand.u32 %v3670, 4294901760
        %5330 = vmatmul.mubr.f32.gmra.mxu0 %v5329
        %v5331 = vpop.f32.mrf.mxu0
        %v5332 = vadd.f32 %v5019, %v5331
        %v5333 = vpop.f32.mrf.mxu0
        %v5334 = vadd.f32 %v5021, %v5333
        %5335 = vmatprep.mubr.f32.mxu0 0.0
        %v5336 = vand.u32 %v3673, 4294901760
        %5337 = vmatmul.mubr.f32.gmra.mxu0 %v5336
        %v5338 = vpop.f32.mrf.mxu0
        %v5339 = vadd.f32 %v5028, %v5338
        %v5340 = vpop.f32.mrf.mxu0
        %v5341 = vadd.f32 %v5030, %v5340
        %5342 = vmatprep.mubr.f32.mxu0 0.0
        %v5343 = vand.u32 %v3676, 4294901760
        %5344 = vmatmul.mubr.f32.gmra.mxu0 %v5343
        %v5345 = vpop.f32.mrf.mxu0
        %v5346 = vadd.f32 %v5037, %v5345
        %v5347 = vpop.f32.mrf.mxu0
        %v5348 = vadd.f32 %v5039, %v5347
        %5349 = vmatprep.mubr.f32.mxu0 0.0
        %v5350 = vand.u32 %v3679, 4294901760
        %5351 = vmatmul.mubr.f32.gmra.mxu0 %v5350
        %v5352 = vpop.f32.mrf.mxu0
        %v5353 = vadd.f32 %v5046, %v5352
        %v5354 = vpop.f32.mrf.mxu0
        %v5355 = vadd.f32 %v5048, %v5354
        %5356 = vmatprep.mubr.f32.mxu0 0.0
        %v5357 = vand.u32 %v3682, 4294901760
        %5358 = vmatmul.mubr.f32.gmra.mxu0 %v5357
        %v5359 = vpop.f32.mrf.mxu0
        %v5360 = vadd.f32 %v5055, %v5359
        %v5361 = vpop.f32.mrf.mxu0
        %v5362 = vadd.f32 %v5057, %v5361
        %5363 = vmatprep.mubr.f32.mxu0 0.0
        %v5364 = vand.u32 %v3685, 4294901760
        %5365 = vmatmul.mubr.f32.gmra.mxu0 %v5364
        %v5366 = vpop.f32.mrf.mxu0
        %v5367 = vadd.f32 %v5064, %v5366
        %v5368 = vpop.f32.mrf.mxu0
        %v5369 = vadd.f32 %v5066, %v5368
        %5370 = vmatprep.mubr.f32.mxu0 0.0
        %v5371 = vand.u32 %v3688, 4294901760
        %5372 = vmatmul.mubr.f32.gmra.mxu0 %v5371
        %v5373 = vpop.f32.mrf.mxu0
        %v5374 = vadd.f32 %v5073, %v5373
        %v5375 = vpop.f32.mrf.mxu0
        %v5376 = vadd.f32 %v5075, %v5375
        %5377 = vmatprep.mubr.f32.mxu0 0.0
        %v5378 = vand.u32 %v3691, 4294901760
        %5379 = vmatmul.mubr.f32.gmra.mxu0 %v5378
        %v5380 = vpop.f32.mrf.mxu0
        %v5381 = vadd.f32 %v5082, %v5380
        %v5382 = vpop.f32.mrf.mxu0
        %v5383 = vadd.f32 %v5084, %v5382
        %5384 = vmatprep.mubr.f32.mxu0 0.0
        %v5385 = vand.u32 %v3694, 4294901760
        %5386 = vmatmul.mubr.f32.gmra.mxu0 %v5385
        %v5387 = vpop.f32.mrf.mxu0
        %v5388 = vadd.f32 %v5091, %v5387
        %v5389 = vpop.f32.mrf.mxu0
        %v5390 = vadd.f32 %v5093, %v5389
        %5391 = vmatprep.mubr.f32.mxu0 0.0
        %v5392 = vand.u32 %v3697, 4294901760
        %5393 = vmatmul.mubr.f32.gmra.mxu0 %v5392
        %v5394 = vpop.f32.mrf.mxu0
        %v5395 = vadd.f32 %v5100, %v5394
        %v5396 = vpop.f32.mrf.mxu0
        %v5397 = vadd.f32 %v5102, %v5396
        %5398 = vdwg.mxu0
        %5399 = vmatprep.subr.mxu0 0.0
        %5400 = vmatpush1.msra.mxu0 0.0
        %5401 = vmatprep.subr.mxu0 0.0
        %5402 = vmatpush1.msra.mxu0 0.0
        %5403 = vmatprep.subr.mxu0 0.0
        %5404 = vmatpush1.msra.mxu0 0.0
        %5405 = vmatprep.subr.mxu0 0.0
        %5406 = vmatpush1.msra.mxu0 0.0
        %5407 = vmatprep.subr.mxu0 0.0
        %5408 = vmatpush1.msra.mxu0 0.0
        %5409 = vmatprep.subr.mxu0 0.0
        %5410 = vmatpush1.msra.mxu0 0.0
        %5411 = vmatprep.subr.mxu0 0.0
        %5412 = vmatpush1.msra.mxu0 0.0
        %5413 = vmatprep.subr.mxu0 0.0
        %5414 = vmatpush1.msra.mxu0 0.0
        %5415 = vmatprep.subr.mxu0 0.0
        %5416 = vmatpush1.msra.mxu0 0.0
        %5417 = vmatprep.subr.mxu0 0.0
        %5418 = vmatpush1.msra.mxu0 0.0
        %5419 = vmatprep.subr.mxu0 0.0
        %5420 = vmatpush1.msra.mxu0 0.0
        %5421 = vmatprep.subr.mxu0 0.0
        %5422 = vmatpush1.msra.mxu0 0.0
        %5423 = vmatprep.subr.mxu0 0.0
        %5424 = vmatpush1.msra.mxu0 0.0
        %5425 = vmatprep.subr.mxu0 0.0
        %5426 = vmatpush1.msra.mxu0 0.0
        %5427 = vmatprep.subr.mxu0 0.0
        %5428 = vmatpush1.msra.mxu0 0.0
        %v5429 = vand.u32 %v3704, 4294901760
        %5430 = vmatprep.subr.mxu0 %v5429
        %v5431 = vand.u32 %v3701, 4294901760
        %5432 = vmatpush1.msra.mxu0 %v5431
        %5433 = vmatprep.subr.mxu0 0.0
        %5434 = vmatpush2.msra.mxu0 0.0
        %5435 = vmatprep.subr.mxu0 0.0
        %5436 = vmatpush2.msra.mxu0 0.0
        %5437 = vmatprep.subr.mxu0 0.0
        %5438 = vmatpush2.msra.mxu0 0.0
        %5439 = vmatprep.subr.mxu0 0.0
        %5440 = vmatpush2.msra.mxu0 0.0
        %5441 = vmatprep.subr.mxu0 0.0
        %5442 = vmatpush2.msra.mxu0 0.0
        %5443 = vmatprep.subr.mxu0 0.0
        %5444 = vmatpush2.msra.mxu0 0.0
        %5445 = vmatprep.subr.mxu0 0.0
        %5446 = vmatpush2.msra.mxu0 0.0
        %5447 = vmatprep.subr.mxu0 0.0
        %5448 = vmatpush2.msra.mxu0 0.0
        %5449 = vmatprep.subr.mxu0 0.0
        %5450 = vmatpush2.msra.mxu0 0.0
        %5451 = vmatprep.subr.mxu0 0.0
        %5452 = vmatpush2.msra.mxu0 0.0
        %5453 = vmatprep.subr.mxu0 0.0
        %5454 = vmatpush2.msra.mxu0 0.0
        %5455 = vmatprep.subr.mxu0 0.0
        %5456 = vmatpush2.msra.mxu0 0.0
        %5457 = vmatprep.subr.mxu0 0.0
        %5458 = vmatpush2.msra.mxu0 0.0
        %5459 = vmatprep.subr.mxu0 0.0
        %5460 = vmatpush2.msra.mxu0 0.0
        %5461 = vmatprep.subr.mxu0 0.0
        %5462 = vmatpush2.msra.mxu0 0.0
        %5463 = vmatprep.subr.mxu0 0.0
        %5464 = vmatpush2.msra.mxu0 0.0
        %5465 = vmatprep.mubr.f32.mxu0 0.0
        %v5466 = vand.u32 %v3604, 4294901760
        %5467 = vmatmul.mubr.f32.gmra.mxu0 %v5466
        %v5468 = vpop.f32.mrf.mxu0
        %v5469 = vadd.f32 %v5178, %v5468
        %v5470 = vpop.f32.mrf.mxu0
        %v5471 = vadd.f32 %v5180, %v5470
        %5472 = vmatprep.mubr.f32.mxu0 0.0
        %v5473 = vand.u32 %v3607, 4294901760
        %5474 = vmatmul.mubr.f32.gmra.mxu0 %v5473
        %v5475 = vpop.f32.mrf.mxu0
        %v5476 = vadd.f32 %v5185, %v5475
        %v5477 = vpop.f32.mrf.mxu0
        %v5478 = vadd.f32 %v5187, %v5477
        %5479 = vmatprep.mubr.f32.mxu0 0.0
        %v5480 = vand.u32 %v3610, 4294901760
        %5481 = vmatmul.mubr.f32.gmra.mxu0 %v5480
        %v5482 = vpop.f32.mrf.mxu0
        %v5483 = vadd.f32 %v5192, %v5482
        %v5484 = vpop.f32.mrf.mxu0
        %v5485 = vadd.f32 %v5194, %v5484
        %5486 = vmatprep.mubr.f32.mxu0 0.0
        %v5487 = vand.u32 %v3613, 4294901760
        %5488 = vmatmul.mubr.f32.gmra.mxu0 %v5487
        %v5489 = vpop.f32.mrf.mxu0
        %v5490 = vadd.f32 %v5199, %v5489
        %v5491 = vpop.f32.mrf.mxu0
        %v5492 = vadd.f32 %v5201, %v5491
        %5493 = vmatprep.mubr.f32.mxu0 0.0
        %v5494 = vand.u32 %v3616, 4294901760
        %5495 = vmatmul.mubr.f32.gmra.mxu0 %v5494
        %v5496 = vpop.f32.mrf.mxu0
        %v5497 = vadd.f32 %v5206, %v5496
        %v5498 = vpop.f32.mrf.mxu0
        %v5499 = vadd.f32 %v5208, %v5498
        %5500 = vmatprep.mubr.f32.mxu0 0.0
        %v5501 = vand.u32 %v3619, 4294901760
        %5502 = vmatmul.mubr.f32.gmra.mxu0 %v5501
        %v5503 = vpop.f32.mrf.mxu0
        %v5504 = vadd.f32 %v5213, %v5503
        %v5505 = vpop.f32.mrf.mxu0
        %v5506 = vadd.f32 %v5215, %v5505
        %5507 = vmatprep.mubr.f32.mxu0 0.0
        %v5508 = vand.u32 %v3622, 4294901760
        %5509 = vmatmul.mubr.f32.gmra.mxu0 %v5508
        %v5510 = vpop.f32.mrf.mxu0
        %v5511 = vadd.f32 %v5220, %v5510
        %v5512 = vpop.f32.mrf.mxu0
        %v5513 = vadd.f32 %v5222, %v5512
        %5514 = vmatprep.mubr.f32.mxu0 0.0
        %v5515 = vand.u32 %v3625, 4294901760
        %5516 = vmatmul.mubr.f32.gmra.mxu0 %v5515
        %v5517 = vpop.f32.mrf.mxu0
        %v5518 = vadd.f32 %v5227, %v5517
        %v5519 = vpop.f32.mrf.mxu0
        %v5520 = vadd.f32 %v5229, %v5519
        %5521 = vmatprep.mubr.f32.mxu0 0.0
        %v5522 = vand.u32 %v3628, 4294901760
        %5523 = vmatmul.mubr.f32.gmra.mxu0 %v5522
        %v5524 = vpop.f32.mrf.mxu0
        %v5525 = vadd.f32 %v5234, %v5524
        %v5526 = vpop.f32.mrf.mxu0
        %v5527 = vadd.f32 %v5236, %v5526
        %5528 = vmatprep.mubr.f32.mxu0 0.0
        %v5529 = vand.u32 %v3631, 4294901760
        %5530 = vmatmul.mubr.f32.gmra.mxu0 %v5529
        %v5531 = vpop.f32.mrf.mxu0
        %v5532 = vadd.f32 %v5241, %v5531
        %v5533 = vpop.f32.mrf.mxu0
        %v5534 = vadd.f32 %v5243, %v5533
        %5535 = vmatprep.mubr.f32.mxu0 0.0
        %v5536 = vand.u32 %v3634, 4294901760
        %5537 = vmatmul.mubr.f32.gmra.mxu0 %v5536
        %v5538 = vpop.f32.mrf.mxu0
        %v5539 = vadd.f32 %v5248, %v5538
        %v5540 = vpop.f32.mrf.mxu0
        %v5541 = vadd.f32 %v5250, %v5540
        %5542 = vmatprep.mubr.f32.mxu0 0.0
        %v5543 = vand.u32 %v3637, 4294901760
        %5544 = vmatmul.mubr.f32.gmra.mxu0 %v5543
        %v5545 = vpop.f32.mrf.mxu0
        %v5546 = vadd.f32 %v5255, %v5545
        %v5547 = vpop.f32.mrf.mxu0
        %v5548 = vadd.f32 %v5257, %v5547
        %5549 = vmatprep.mubr.f32.mxu0 0.0
        %v5550 = vand.u32 %v3640, 4294901760
        %5551 = vmatmul.mubr.f32.gmra.mxu0 %v5550
        %v5552 = vpop.f32.mrf.mxu0
        %v5553 = vadd.f32 %v5262, %v5552
        %v5554 = vpop.f32.mrf.mxu0
        %v5555 = vadd.f32 %v5264, %v5554
        %5556 = vmatprep.mubr.f32.mxu0 0.0
        %v5557 = vand.u32 %v3643, 4294901760
        %5558 = vmatmul.mubr.f32.gmra.mxu0 %v5557
        %v5559 = vpop.f32.mrf.mxu0
        %v5560 = vadd.f32 %v5269, %v5559
        %v5561 = vpop.f32.mrf.mxu0
        %v5562 = vadd.f32 %v5271, %v5561
        %5563 = vmatprep.mubr.f32.mxu0 0.0
        %v5564 = vand.u32 %v3646, 4294901760
        %5565 = vmatmul.mubr.f32.gmra.mxu0 %v5564
        %v5566 = vpop.f32.mrf.mxu0
        %v5567 = vadd.f32 %v5276, %v5566
        %v5568 = vpop.f32.mrf.mxu0
        %v5569 = vadd.f32 %v5278, %v5568
        %5570 = vmatprep.mubr.f32.mxu0 0.0
        %v5571 = vand.u32 %v3649, 4294901760
        %5572 = vmatmul.mubr.f32.gmra.mxu0 %v5571
        %v5573 = vpop.f32.mrf.mxu0
        %v5574 = vadd.f32 %v5283, %v5573
        %v5575 = vpop.f32.mrf.mxu0
        %v5576 = vadd.f32 %v5285, %v5575
        %5577 = vmatprep.mubr.f32.mxu0 0.0
        %v5578 = vand.u32 %v3652, 4294901760
        %5579 = vmatmul.mubr.f32.gmra.mxu0 %v5578
        %v5580 = vpop.f32.mrf.mxu0
        %v5581 = vadd.f32 %v5290, %v5580
        %v5582 = vpop.f32.mrf.mxu0
        %v5583 = vadd.f32 %v5292, %v5582
        %5584 = vmatprep.mubr.f32.mxu0 0.0
        %v5585 = vand.u32 %v3655, 4294901760
        %5586 = vmatmul.mubr.f32.gmra.mxu0 %v5585
        %v5587 = vpop.f32.mrf.mxu0
        %v5588 = vadd.f32 %v5297, %v5587
        %v5589 = vpop.f32.mrf.mxu0
        %v5590 = vadd.f32 %v5299, %v5589
        %5591 = vmatprep.mubr.f32.mxu0 0.0
        %v5592 = vand.u32 %v3658, 4294901760
        %5593 = vmatmul.mubr.f32.gmra.mxu0 %v5592
        %v5594 = vpop.f32.mrf.mxu0
        %v5595 = vadd.f32 %v5304, %v5594
        %v5596 = vpop.f32.mrf.mxu0
        %v5597 = vadd.f32 %v5306, %v5596
        %5598 = vmatprep.mubr.f32.mxu0 0.0
        %v5599 = vand.u32 %v3661, 4294901760
        %5600 = vmatmul.mubr.f32.gmra.mxu0 %v5599
        %v5601 = vpop.f32.mrf.mxu0
        %v5602 = vadd.f32 %v5311, %v5601
        %v5603 = vpop.f32.mrf.mxu0
        %v5604 = vadd.f32 %v5313, %v5603
        %5605 = vmatprep.mubr.f32.mxu0 0.0
        %v5606 = vand.u32 %v3664, 4294901760
        %5607 = vmatmul.mubr.f32.gmra.mxu0 %v5606
        %v5608 = vpop.f32.mrf.mxu0
        %v5609 = vadd.f32 %v5318, %v5608
        %v5610 = vpop.f32.mrf.mxu0
        %v5611 = vadd.f32 %v5320, %v5610
        %5612 = vmatprep.mubr.f32.mxu0 0.0
        %v5613 = vand.u32 %v3667, 4294901760
        %5614 = vmatmul.mubr.f32.gmra.mxu0 %v5613
        %v5615 = vpop.f32.mrf.mxu0
        %v5616 = vadd.f32 %v5325, %v5615
        %v5617 = vpop.f32.mrf.mxu0
        %v5618 = vadd.f32 %v5327, %v5617
        %5619 = vmatprep.mubr.f32.mxu0 0.0
        %v5620 = vand.u32 %v3670, 4294901760
        %5621 = vmatmul.mubr.f32.gmra.mxu0 %v5620
        %v5622 = vpop.f32.mrf.mxu0
        %v5623 = vadd.f32 %v5332, %v5622
        %v5624 = vpop.f32.mrf.mxu0
        %v5625 = vadd.f32 %v5334, %v5624
        %5626 = vmatprep.mubr.f32.mxu0 0.0
        %v5627 = vand.u32 %v3673, 4294901760
        %5628 = vmatmul.mubr.f32.gmra.mxu0 %v5627
        %v5629 = vpop.f32.mrf.mxu0
        %v5630 = vadd.f32 %v5339, %v5629
        %v5631 = vpop.f32.mrf.mxu0
        %v5632 = vadd.f32 %v5341, %v5631
        %5633 = vmatprep.mubr.f32.mxu0 0.0
        %v5634 = vand.u32 %v3676, 4294901760
        %5635 = vmatmul.mubr.f32.gmra.mxu0 %v5634
        %v5636 = vpop.f32.mrf.mxu0
        %v5637 = vadd.f32 %v5346, %v5636
        %v5638 = vpop.f32.mrf.mxu0
        %v5639 = vadd.f32 %v5348, %v5638
        %5640 = vmatprep.mubr.f32.mxu0 0.0
        %v5641 = vand.u32 %v3679, 4294901760
        %5642 = vmatmul.mubr.f32.gmra.mxu0 %v5641
        %v5643 = vpop.f32.mrf.mxu0
        %v5644 = vadd.f32 %v5353, %v5643
        %v5645 = vpop.f32.mrf.mxu0
        %v5646 = vadd.f32 %v5355, %v5645
        %5647 = vmatprep.mubr.f32.mxu0 0.0
        %v5648 = vand.u32 %v3682, 4294901760
        %5649 = vmatmul.mubr.f32.gmra.mxu0 %v5648
        %v5650 = vpop.f32.mrf.mxu0
        %v5651 = vadd.f32 %v5360, %v5650
        %v5652 = vpop.f32.mrf.mxu0
        %v5653 = vadd.f32 %v5362, %v5652
        %5654 = vmatprep.mubr.f32.mxu0 0.0
        %v5655 = vand.u32 %v3685, 4294901760
        %5656 = vmatmul.mubr.f32.gmra.mxu0 %v5655
        %v5657 = vpop.f32.mrf.mxu0
        %v5658 = vadd.f32 %v5367, %v5657
        %v5659 = vpop.f32.mrf.mxu0
        %v5660 = vadd.f32 %v5369, %v5659
        %5661 = vmatprep.mubr.f32.mxu0 0.0
        %v5662 = vand.u32 %v3688, 4294901760
        %5663 = vmatmul.mubr.f32.gmra.mxu0 %v5662
        %v5664 = vpop.f32.mrf.mxu0
        %v5665 = vadd.f32 %v5374, %v5664
        %v5666 = vpop.f32.mrf.mxu0
        %v5667 = vadd.f32 %v5376, %v5666
        %5668 = vmatprep.mubr.f32.mxu0 0.0
        %v5669 = vand.u32 %v3691, 4294901760
        %5670 = vmatmul.mubr.f32.gmra.mxu0 %v5669
        %v5671 = vpop.f32.mrf.mxu0
        %v5672 = vadd.f32 %v5381, %v5671
        %v5673 = vpop.f32.mrf.mxu0
        %v5674 = vadd.f32 %v5383, %v5673
        %5675 = vmatprep.mubr.f32.mxu0 0.0
        %v5676 = vand.u32 %v3694, 4294901760
        %5677 = vmatmul.mubr.f32.gmra.mxu0 %v5676
        %v5678 = vpop.f32.mrf.mxu0
        %v5679 = vadd.f32 %v5388, %v5678
        %v5680 = vpop.f32.mrf.mxu0
        %v5681 = vadd.f32 %v5390, %v5680
        %5682 = vmatprep.mubr.f32.mxu0 0.0
        %v5683 = vand.u32 %v3697, 4294901760
        %5684 = vmatmul.mubr.f32.gmra.mxu0 %v5683
        %v5685 = vpop.f32.mrf.mxu0
        %v5686 = vadd.f32 %v5395, %v5685
        %v5687 = vpop.f32.mrf.mxu0
        %v5688 = vadd.f32 %v5397, %v5687
        %5689 = vdwg.mxu0
        %v5690 = vmax.f32 %v5469, %v5483
        %v5691 = vmax.f32 %v5476, %v5490
        %v5692 = vmax.f32 %v5690, %v5497
        %v5693 = vmax.f32 %v5691, %v5504
        %v5694 = vmax.f32 %v5692, %v5511
        %v5695 = vmax.f32 %v5693, %v5518
        %v5696 = vmax.f32 %v5694, %v5525
        %v5697 = vmax.f32 %v5695, %v5532
        %v5698 = vmax.f32 %v5696, %v5539
        %v5699 = vmax.f32 %v5697, %v5546
        %v5700 = vmax.f32 %v5698, %v5553
        %v5701 = vmax.f32 %v5699, %v5560
        %v5702 = vmax.f32 %v5700, %v5567
        %v5703 = vmax.f32 %v5701, %v5574
        %v5704 = vmax.f32 %v5702, %v5581
        %v5705 = vmax.f32 %v5703, %v5588
        %v5706 = vmax.f32 %v5704, %v5595
        %v5707 = vmax.f32 %v5705, %v5602
        %v5708 = vmax.f32 %v5706, %v5609
        %v5709 = vmax.f32 %v5707, %v5616
        %v5710 = vmax.f32 %v5708, %v5623
        %v5711 = vmax.f32 %v5709, %v5630
        %v5712 = vmax.f32 %v5710, %v5637
        %v5713 = vmax.f32 %v5711, %v5644
        %v5714 = vmax.f32 %v5712, %v5651
        %v5715 = vmax.f32 %v5713, %v5658
        %v5716 = vmax.f32 %v5714, %v5665
        %v5717 = vmax.f32 %v5715, %v5672
        %v5718 = vmax.f32 %v5716, %v5679
        %v5719 = vmax.f32 %v5717, %v5686
        %v5720 = vmax.f32 %v5718, %v5719
        %v5721 = vrot.slane %v5720, 4
        %v5722 = vmax.f32 %v5720, %v5721
        %v5723 = vrot.slane %v5722, 2
        %v5724 = vmax.f32 %v5722, %v5723
        %v5725 = vrot.slane %v5724, 1
        %v5726 = vmax.f32 %v5724, %v5725
        %v5727 = vmax.f32 %v5471, %v5485
        %v5728 = vmax.f32 %v5478, %v5492
        %v5729 = vmax.f32 %v5727, %v5499
        %v5730 = vmax.f32 %v5728, %v5506
        %v5731 = vmax.f32 %v5729, %v5513
        %v5732 = vmax.f32 %v5730, %v5520
        %v5733 = vmax.f32 %v5731, %v5527
        %v5734 = vmax.f32 %v5732, %v5534
        %v5735 = vmax.f32 %v5733, %v5541
        %v5736 = vmax.f32 %v5734, %v5548
        %v5737 = vmax.f32 %v5735, %v5555
        %v5738 = vmax.f32 %v5736, %v5562
        %v5739 = vmax.f32 %v5737, %v5569
        %v5740 = vmax.f32 %v5738, %v5576
        %v5741 = vmax.f32 %v5739, %v5583
        %v5742 = vmax.f32 %v5740, %v5590
        %v5743 = vmax.f32 %v5741, %v5597
        %v5744 = vmax.f32 %v5742, %v5604
        %v5745 = vmax.f32 %v5743, %v5611
        %v5746 = vmax.f32 %v5744, %v5618
        %v5747 = vmax.f32 %v5745, %v5625
        %v5748 = vmax.f32 %v5746, %v5632
        %v5749 = vmax.f32 %v5747, %v5639
        %v5750 = vmax.f32 %v5748, %v5646
        %v5751 = vmax.f32 %v5749, %v5653
        %v5752 = vmax.f32 %v5750, %v5660
        %v5753 = vmax.f32 %v5751, %v5667
        %v5754 = vmax.f32 %v5752, %v5674
        %v5755 = vmax.f32 %v5753, %v5681
        %v5756 = vmax.f32 %v5754, %v5688
        %v5757 = vmax.f32 %v5755, %v5756
        %v5758 = vrot.slane %v5757, 4
        %v5759 = vmax.f32 %v5757, %v5758
        %v5760 = vrot.slane %v5759, 2
        %v5761 = vmax.f32 %v5759, %v5760
        %v5762 = vrot.slane %v5761, 1
        %v5763 = vmax.f32 %v5761, %v5762
        %v5764 = vsub.f32 %v5469, %v5726
        %v5765 = vsub.f32 %v5471, %v5763
        %v5766 = vsub.f32 %v5476, %v5726
        %v5767 = vsub.f32 %v5478, %v5763
        %v5768 = vsub.f32 %v5483, %v5726
        %v5769 = vsub.f32 %v5485, %v5763
        %v5770 = vsub.f32 %v5490, %v5726
        %v5771 = vsub.f32 %v5492, %v5763
        %v5772 = vsub.f32 %v5497, %v5726
        %v5773 = vsub.f32 %v5499, %v5763
        %v5774 = vsub.f32 %v5504, %v5726
        %v5775 = vsub.f32 %v5506, %v5763
        %v5776 = vsub.f32 %v5511, %v5726
        %v5777 = vsub.f32 %v5513, %v5763
        %v5778 = vsub.f32 %v5518, %v5726
        %v5779 = vsub.f32 %v5520, %v5763
        %v5780 = vsub.f32 %v5525, %v5726
        %v5781 = vsub.f32 %v5527, %v5763
        %v5782 = vsub.f32 %v5532, %v5726
        %v5783 = vsub.f32 %v5534, %v5763
        %v5784 = vsub.f32 %v5539, %v5726
        %v5785 = vsub.f32 %v5541, %v5763
        %v5786 = vsub.f32 %v5546, %v5726
        %v5787 = vsub.f32 %v5548, %v5763
        %v5788 = vsub.f32 %v5553, %v5726
        %v5789 = vsub.f32 %v5555, %v5763
        %v5790 = vsub.f32 %v5560, %v5726
        %v5791 = vsub.f32 %v5562, %v5763
        %v5792 = vsub.f32 %v5567, %v5726
        %v5793 = vsub.f32 %v5569, %v5763
        %v5794 = vsub.f32 %v5574, %v5726
        %v5795 = vsub.f32 %v5576, %v5763
        %v5796 = vsub.f32 %v5581, %v5726
        %v5797 = vsub.f32 %v5583, %v5763
        %v5798 = vsub.f32 %v5588, %v5726
        %v5799 = vsub.f32 %v5590, %v5763
        %v5800 = vsub.f32 %v5595, %v5726
        %v5801 = vsub.f32 %v5597, %v5763
        %v5802 = vsub.f32 %v5602, %v5726
        %v5803 = vsub.f32 %v5604, %v5763
        %v5804 = vsub.f32 %v5609, %v5726
        %v5805 = vsub.f32 %v5611, %v5763
        %v5806 = vsub.f32 %v5616, %v5726
        %v5807 = vsub.f32 %v5618, %v5763
        %v5808 = vsub.f32 %v5623, %v5726
        %v5809 = vsub.f32 %v5625, %v5763
        %v5810 = vsub.f32 %v5630, %v5726
        %v5811 = vsub.f32 %v5632, %v5763
        %v5812 = vsub.f32 %v5637, %v5726
        %v5813 = vsub.f32 %v5639, %v5763
        %v5814 = vsub.f32 %v5644, %v5726
        %v5815 = vsub.f32 %v5646, %v5763
        %v5816 = vsub.f32 %v5651, %v5726
        %v5817 = vsub.f32 %v5653, %v5763
        %v5818 = vsub.f32 %v5658, %v5726
        %v5819 = vsub.f32 %v5660, %v5763
        %v5820 = vsub.f32 %v5665, %v5726
        %v5821 = vsub.f32 %v5667, %v5763
        %v5822 = vsub.f32 %v5672, %v5726
        %v5823 = vsub.f32 %v5674, %v5763
        %v5824 = vsub.f32 %v5679, %v5726
        %v5825 = vsub.f32 %v5681, %v5763
        %v5826 = vsub.f32 %v5686, %v5726
        %v5827 = vsub.f32 %v5688, %v5763
        %v5828 = vmul.f32 %v5764, 1.442695
        %v5829 = vpow.pop %v5828
        %v5830 = vmul.f32 %v5765, 1.442695
        %v5831 = vpow.pop %v5830
        %v5832 = vmul.f32 %v5766, 1.442695
        %v5833 = vpow.pop %v5832
        %v5834 = vmul.f32 %v5767, 1.442695
        %v5835 = vpow.pop %v5834
        %v5836 = vmul.f32 %v5768, 1.442695
        %v5837 = vpow.pop %v5836
        %v5838 = vmul.f32 %v5769, 1.442695
        %v5839 = vpow.pop %v5838
        %v5840 = vmul.f32 %v5770, 1.442695
        %v5841 = vpow.pop %v5840
        %v5842 = vmul.f32 %v5771, 1.442695
        %v5843 = vpow.pop %v5842
        %v5844 = vmul.f32 %v5772, 1.442695
        %v5845 = vpow.pop %v5844
        %v5846 = vmul.f32 %v5773, 1.442695
        %v5847 = vpow.pop %v5846
        %v5848 = vmul.f32 %v5774, 1.442695
        %v5849 = vpow.pop %v5848
        %v5850 = vmul.f32 %v5775, 1.442695
        %v5851 = vpow.pop %v5850
        %v5852 = vmul.f32 %v5776, 1.442695
        %v5853 = vpow.pop %v5852
        %v5854 = vmul.f32 %v5777, 1.442695
        %v5855 = vpow.pop %v5854
        %v5856 = vmul.f32 %v5778, 1.442695
        %v5857 = vpow.pop %v5856
        %v5858 = vmul.f32 %v5779, 1.442695
        %v5859 = vpow.pop %v5858
        %v5860 = vmul.f32 %v5780, 1.442695
        %v5861 = vpow.pop %v5860
        %v5862 = vmul.f32 %v5781, 1.442695
        %v5863 = vpow.pop %v5862
        %v5864 = vmul.f32 %v5782, 1.442695
        %v5865 = vpow.pop %v5864
        %v5866 = vmul.f32 %v5783, 1.442695
        %v5867 = vpow.pop %v5866
        %v5868 = vmul.f32 %v5784, 1.442695
        %v5869 = vpow.pop %v5868
        %v5870 = vmul.f32 %v5785, 1.442695
        %v5871 = vpow.pop %v5870
        %v5872 = vmul.f32 %v5786, 1.442695
        %v5873 = vpow.pop %v5872
        %v5874 = vmul.f32 %v5787, 1.442695
        %v5875 = vpow.pop %v5874
        %v5876 = vmul.f32 %v5788, 1.442695
        %v5877 = vpow.pop %v5876
        %v5878 = vmul.f32 %v5789, 1.442695
        %v5879 = vpow.pop %v5878
        %v5880 = vmul.f32 %v5790, 1.442695
        %v5881 = vpow.pop %v5880
        %v5882 = vmul.f32 %v5791, 1.442695
        %v5883 = vpow.pop %v5882
        %v5884 = vmul.f32 %v5792, 1.442695
        %v5885 = vpow.pop %v5884
        %v5886 = vmul.f32 %v5793, 1.442695
        %v5887 = vpow.pop %v5886
        %v5888 = vmul.f32 %v5794, 1.442695
        %v5889 = vpow.pop %v5888
        %v5890 = vmul.f32 %v5795, 1.442695
        %v5891 = vpow.pop %v5890
        %v5892 = vmul.f32 %v5796, 1.442695
        %v5893 = vpow.pop %v5892
        %v5894 = vmul.f32 %v5797, 1.442695
        %v5895 = vpow.pop %v5894
        %v5896 = vmul.f32 %v5798, 1.442695
        %v5897 = vpow.pop %v5896
        %v5898 = vmul.f32 %v5799, 1.442695
        %v5899 = vpow.pop %v5898
        %v5900 = vmul.f32 %v5800, 1.442695
        %v5901 = vpow.pop %v5900
        %v5902 = vmul.f32 %v5801, 1.442695
        %v5903 = vpow.pop %v5902
        %v5904 = vmul.f32 %v5802, 1.442695
        %v5905 = vpow.pop %v5904
        %v5906 = vmul.f32 %v5803, 1.442695
        %v5907 = vpow.pop %v5906
        %v5908 = vmul.f32 %v5804, 1.442695
        %v5909 = vpow.pop %v5908
        %v5910 = vmul.f32 %v5805, 1.442695
        %v5911 = vpow.pop %v5910
        %v5912 = vmul.f32 %v5806, 1.442695
        %v5913 = vpow.pop %v5912
        %v5914 = vmul.f32 %v5807, 1.442695
        %v5915 = vpow.pop %v5914
        %v5916 = vmul.f32 %v5808, 1.442695
        %v5917 = vpow.pop %v5916
        %v5918 = vmul.f32 %v5809, 1.442695
        %v5919 = vpow.pop %v5918
        %v5920 = vmul.f32 %v5810, 1.442695
        %v5921 = vpow.pop %v5920
        %v5922 = vmul.f32 %v5811, 1.442695
        %v5923 = vpow.pop %v5922
        %v5924 = vmul.f32 %v5812, 1.442695
        %v5925 = vpow.pop %v5924
        %v5926 = vmul.f32 %v5813, 1.442695
        %v5927 = vpow.pop %v5926
        %v5928 = vmul.f32 %v5814, 1.442695
        %v5929 = vpow.pop %v5928
        %v5930 = vmul.f32 %v5815, 1.442695
        %v5931 = vpow.pop %v5930
        %v5932 = vmul.f32 %v5816, 1.442695
        %v5933 = vpow.pop %v5932
        %v5934 = vmul.f32 %v5817, 1.442695
        %v5935 = vpow.pop %v5934
        %v5936 = vmul.f32 %v5818, 1.442695
        %v5937 = vpow.pop %v5936
        %v5938 = vmul.f32 %v5819, 1.442695
        %v5939 = vpow.pop %v5938
        %v5940 = vmul.f32 %v5820, 1.442695
        %v5941 = vpow.pop %v5940
        %v5942 = vmul.f32 %v5821, 1.442695
        %v5943 = vpow.pop %v5942
        %v5944 = vmul.f32 %v5822, 1.442695
        %v5945 = vpow.pop %v5944
        %v5946 = vmul.f32 %v5823, 1.442695
        %v5947 = vpow.pop %v5946
        %v5948 = vmul.f32 %v5824, 1.442695
        %v5949 = vpow.pop %v5948
        %v5950 = vmul.f32 %v5825, 1.442695
        %v5951 = vpow.pop %v5950
        %v5952 = vmul.f32 %v5826, 1.442695
        %v5953 = vpow.pop %v5952
        %v5954 = vmul.f32 %v5827, 1.442695
        %v5955 = vpow.pop %v5954
        %v5956 = vadd.f32 %v5829, %v5833
        %v5957 = vadd.f32 %v5956, %v5837
        %v5958 = vadd.f32 %v5957, %v5841
        %v5959 = vadd.f32 %v5958, %v5845
        %v5960 = vadd.f32 %v5959, %v5849
        %v5961 = vadd.f32 %v5960, %v5853
        %v5962 = vadd.f32 %v5961, %v5857
        %v5963 = vadd.f32 %v5962, %v5861
        %v5964 = vadd.f32 %v5963, %v5865
        %v5965 = vadd.f32 %v5964, %v5869
        %v5966 = vadd.f32 %v5965, %v5873
        %v5967 = vadd.f32 %v5966, %v5877
        %v5968 = vadd.f32 %v5967, %v5881
        %v5969 = vadd.f32 %v5968, %v5885
        %v5970 = vadd.f32 %v5969, %v5889
        %v5971 = vadd.f32 %v5970, %v5893
        %v5972 = vadd.f32 %v5971, %v5897
        %v5973 = vadd.f32 %v5972, %v5901
        %v5974 = vadd.f32 %v5973, %v5905
        %v5975 = vadd.f32 %v5974, %v5909
        %v5976 = vadd.f32 %v5975, %v5913
        %v5977 = vadd.f32 %v5976, %v5917
        %v5978 = vadd.f32 %v5977, %v5921
        %v5979 = vadd.f32 %v5978, %v5925
        %v5980 = vadd.f32 %v5979, %v5929
        %v5981 = vadd.f32 %v5980, %v5933
        %v5982 = vadd.f32 %v5981, %v5937
        %v5983 = vadd.f32 %v5982, %v5941
        %v5984 = vadd.f32 %v5983, %v5945
        %v5985 = vadd.f32 %v5984, %v5949
        %v5986 = vadd.f32 %v5985, %v5953
        %v5987 = vrot.slane %v5986, 4
        %v5988 = vadd.f32 %v5986, %v5987
        %v5989 = vrot.slane %v5988, 2
        %v5990 = vadd.f32 %v5988, %v5989
        %v5991 = vrot.slane %v5990, 1
        %v5992 = vadd.f32 %v5990, %v5991
        %v5993 = vadd.f32 %v5831, %v5835
        %v5994 = vadd.f32 %v5993, %v5839
        %v5995 = vadd.f32 %v5994, %v5843
        %v5996 = vadd.f32 %v5995, %v5847
        %v5997 = vadd.f32 %v5996, %v5851
        %v5998 = vadd.f32 %v5997, %v5855
        %v5999 = vadd.f32 %v5998, %v5859
        %v6000 = vadd.f32 %v5999, %v5863
        %v6001 = vadd.f32 %v6000, %v5867
        %v6002 = vadd.f32 %v6001, %v5871
        %v6003 = vadd.f32 %v6002, %v5875
        %v6004 = vadd.f32 %v6003, %v5879
        %v6005 = vadd.f32 %v6004, %v5883
        %v6006 = vadd.f32 %v6005, %v5887
        %v6007 = vadd.f32 %v6006, %v5891
        %v6008 = vadd.f32 %v6007, %v5895
        %v6009 = vadd.f32 %v6008, %v5899
        %v6010 = vadd.f32 %v6009, %v5903
        %v6011 = vadd.f32 %v6010, %v5907
        %v6012 = vadd.f32 %v6011, %v5911
        %v6013 = vadd.f32 %v6012, %v5915
        %v6014 = vadd.f32 %v6013, %v5919
        %v6015 = vadd.f32 %v6014, %v5923
        %v6016 = vadd.f32 %v6015, %v5927
        %v6017 = vadd.f32 %v6016, %v5931
        %v6018 = vadd.f32 %v6017, %v5935
        %v6019 = vadd.f32 %v6018, %v5939
        %v6020 = vadd.f32 %v6019, %v5943
        %v6021 = vadd.f32 %v6020, %v5947
        %v6022 = vadd.f32 %v6021, %v5951
        %v6023 = vadd.f32 %v6022, %v5955
        %v6024 = vrot.slane %v6023, 4
        %v6025 = vadd.f32 %v6023, %v6024
        %v6026 = vrot.slane %v6025, 2
        %v6027 = vadd.f32 %v6025, %v6026
        %v6028 = vrot.slane %v6027, 1
        %v6029 = vadd.f32 %v6027, %v6028
        %v6030 = vrcp.pop %v5992
        %v6031 = vmul.f32 %v5829, %v6030
        %v6032 = vrcp.pop %v6029
        %v6033 = vmul.f32 %v5831, %v6032
        %v6034 = vmul.f32 %v5833, %v6030
        %v6035 = vmul.f32 %v5835, %v6032
        %v6036 = vmul.f32 %v5837, %v6030
        %v6037 = vmul.f32 %v5839, %v6032
        %v6038 = vmul.f32 %v5841, %v6030
        %v6039 = vmul.f32 %v5843, %v6032
        %v6040 = vmul.f32 %v5845, %v6030
        %v6041 = vmul.f32 %v5847, %v6032
        %v6042 = vmul.f32 %v5849, %v6030
        %v6043 = vmul.f32 %v5851, %v6032
        %v6044 = vmul.f32 %v5853, %v6030
        %v6045 = vmul.f32 %v5855, %v6032
        %v6046 = vmul.f32 %v5857, %v6030
        %v6047 = vmul.f32 %v5859, %v6032
        %v6048 = vmul.f32 %v5861, %v6030
        %v6049 = vmul.f32 %v5863, %v6032
        %v6050 = vmul.f32 %v5865, %v6030
        %v6051 = vmul.f32 %v5867, %v6032
        %v6052 = vmul.f32 %v5869, %v6030
        %v6053 = vmul.f32 %v5871, %v6032
        %v6054 = vmul.f32 %v5873, %v6030
        %v6055 = vmul.f32 %v5875, %v6032
        %v6056 = vmul.f32 %v5877, %v6030
        %v6057 = vmul.f32 %v5879, %v6032
        %v6058 = vmul.f32 %v5881, %v6030
        %v6059 = vmul.f32 %v5883, %v6032
        %v6060 = vmul.f32 %v5885, %v6030
        %v6061 = vmul.f32 %v5887, %v6032
        %v6062 = vmul.f32 %v5889, %v6030
        %v6063 = vmul.f32 %v5891, %v6032
        %v6064 = vmul.f32 %v5893, %v6030
        %v6065 = vmul.f32 %v5895, %v6032
        %v6066 = vmul.f32 %v5897, %v6030
        %v6067 = vmul.f32 %v5899, %v6032
        %v6068 = vmul.f32 %v5901, %v6030
        %v6069 = vmul.f32 %v5903, %v6032
        %v6070 = vmul.f32 %v5905, %v6030
        %v6071 = vmul.f32 %v5907, %v6032
        %v6072 = vmul.f32 %v5909, %v6030
        %v6073 = vmul.f32 %v5911, %v6032
        %v6074 = vmul.f32 %v5913, %v6030
        %v6075 = vmul.f32 %v5915, %v6032
        %v6076 = vmul.f32 %v5917, %v6030
        %v6077 = vmul.f32 %v5919, %v6032
        %v6078 = vmul.f32 %v5921, %v6030
        %v6079 = vmul.f32 %v5923, %v6032
        %v6080 = vmul.f32 %v5925, %v6030
        %v6081 = vmul.f32 %v5927, %v6032
        %v6082 = vmul.f32 %v5929, %v6030
        %v6083 = vmul.f32 %v5931, %v6032
        %v6084 = vmul.f32 %v5933, %v6030
        %v6085 = vmul.f32 %v5935, %v6032
        %v6086 = vmul.f32 %v5937, %v6030
        %v6087 = vmul.f32 %v5939, %v6032
        %v6088 = vmul.f32 %v5941, %v6030
        %v6089 = vmul.f32 %v5943, %v6032
        %v6090 = vmul.f32 %v5945, %v6030
        %v6091 = vmul.f32 %v5947, %v6032
        %v6092 = vmul.f32 %v5949, %v6030
        %v6093 = vmul.f32 %v5951, %v6032
        %v6094 = vmul.f32 %v5953, %v6030
        %v6095 = vmul.f32 %v5955, %v6032
        %v6096 = vand.u32 %v6063, 4294901760
        %6097 = vmatprep.subr.mxu0 %v6096
        %v6098 = vand.u32 %v6062, 4294901760
        %6099 = vmatpush1.msra.mxu0 %v6098
        %v6100 = vand.u32 %v6061, 4294901760
        %6101 = vmatprep.subr.mxu0 %v6100
        %v6102 = vand.u32 %v6060, 4294901760
        %6103 = vmatpush1.msra.mxu0 %v6102
        %v6104 = vand.u32 %v6059, 4294901760
        %6105 = vmatprep.subr.mxu0 %v6104
        %v6106 = vand.u32 %v6058, 4294901760
        %6107 = vmatpush1.msra.mxu0 %v6106
        %v6108 = vand.u32 %v6057, 4294901760
        %6109 = vmatprep.subr.mxu0 %v6108
        %v6110 = vand.u32 %v6056, 4294901760
        %6111 = vmatpush1.msra.mxu0 %v6110
        %v6112 = vand.u32 %v6055, 4294901760
        %6113 = vmatprep.subr.mxu0 %v6112
        %v6114 = vand.u32 %v6054, 4294901760
        %6115 = vmatpush1.msra.mxu0 %v6114
        %v6116 = vand.u32 %v6053, 4294901760
        %6117 = vmatprep.subr.mxu0 %v6116
        %v6118 = vand.u32 %v6052, 4294901760
        %6119 = vmatpush1.msra.mxu0 %v6118
        %v6120 = vand.u32 %v6051, 4294901760
        %6121 = vmatprep.subr.mxu0 %v6120
        %v6122 = vand.u32 %v6050, 4294901760
        %6123 = vmatpush1.msra.mxu0 %v6122
        %v6124 = vand.u32 %v6049, 4294901760
        %6125 = vmatprep.subr.mxu0 %v6124
        %v6126 = vand.u32 %v6048, 4294901760
        %6127 = vmatpush1.msra.mxu0 %v6126
        %v6128 = vand.u32 %v6047, 4294901760
        %6129 = vmatprep.subr.mxu0 %v6128
        %v6130 = vand.u32 %v6046, 4294901760
        %6131 = vmatpush1.msra.mxu0 %v6130
        %v6132 = vand.u32 %v6045, 4294901760
        %6133 = vmatprep.subr.mxu0 %v6132
        %v6134 = vand.u32 %v6044, 4294901760
        %6135 = vmatpush1.msra.mxu0 %v6134
        %v6136 = vand.u32 %v6043, 4294901760
        %6137 = vmatprep.subr.mxu0 %v6136
        %v6138 = vand.u32 %v6042, 4294901760
        %6139 = vmatpush1.msra.mxu0 %v6138
        %v6140 = vand.u32 %v6041, 4294901760
        %6141 = vmatprep.subr.mxu0 %v6140
        %v6142 = vand.u32 %v6040, 4294901760
        %6143 = vmatpush1.msra.mxu0 %v6142
        %v6144 = vand.u32 %v6039, 4294901760
        %6145 = vmatprep.subr.mxu0 %v6144
        %v6146 = vand.u32 %v6038, 4294901760
        %6147 = vmatpush1.msra.mxu0 %v6146
        %v6148 = vand.u32 %v6037, 4294901760
        %6149 = vmatprep.subr.mxu0 %v6148
        %v6150 = vand.u32 %v6036, 4294901760
        %6151 = vmatpush1.msra.mxu0 %v6150
        %v6152 = vand.u32 %v6035, 4294901760
        %6153 = vmatprep.subr.mxu0 %v6152
        %v6154 = vand.u32 %v6034, 4294901760
        %6155 = vmatpush1.msra.mxu0 %v6154
        %v6156 = vand.u32 %v6033, 4294901760
        %6157 = vmatprep.subr.mxu0 %v6156
        %v6158 = vand.u32 %v6031, 4294901760
        %6159 = vmatpush1.msra.mxu0 %v6158
        %v6160 = vand.u32 %v6095, 4294901760
        %6161 = vmatprep.subr.mxu0 %v6160
        %v6162 = vand.u32 %v6094, 4294901760
        %6163 = vmatpush2.msra.mxu0 %v6162
        %v6164 = vand.u32 %v6093, 4294901760
        %6165 = vmatprep.subr.mxu0 %v6164
        %v6166 = vand.u32 %v6092, 4294901760
        %6167 = vmatpush2.msra.mxu0 %v6166
        %v6168 = vand.u32 %v6091, 4294901760
        %6169 = vmatprep.subr.mxu0 %v6168
        %v6170 = vand.u32 %v6090, 4294901760
        %6171 = vmatpush2.msra.mxu0 %v6170
        %v6172 = vand.u32 %v6089, 4294901760
        %6173 = vmatprep.subr.mxu0 %v6172
        %v6174 = vand.u32 %v6088, 4294901760
        %6175 = vmatpush2.msra.mxu0 %v6174
        %v6176 = vand.u32 %v6087, 4294901760
        %6177 = vmatprep.subr.mxu0 %v6176
        %v6178 = vand.u32 %v6086, 4294901760
        %6179 = vmatpush2.msra.mxu0 %v6178
        %v6180 = vand.u32 %v6085, 4294901760
        %6181 = vmatprep.subr.mxu0 %v6180
        %v6182 = vand.u32 %v6084, 4294901760
        %6183 = vmatpush2.msra.mxu0 %v6182
        %v6184 = vand.u32 %v6083, 4294901760
        %6185 = vmatprep.subr.mxu0 %v6184
        %v6186 = vand.u32 %v6082, 4294901760
        %6187 = vmatpush2.msra.mxu0 %v6186
        %v6188 = vand.u32 %v6081, 4294901760
        %6189 = vmatprep.subr.mxu0 %v6188
        %v6190 = vand.u32 %v6080, 4294901760
        %6191 = vmatpush2.msra.mxu0 %v6190
        %v6192 = vand.u32 %v6079, 4294901760
        %6193 = vmatprep.subr.mxu0 %v6192
        %v6194 = vand.u32 %v6078, 4294901760
        %6195 = vmatpush2.msra.mxu0 %v6194
        %v6196 = vand.u32 %v6077, 4294901760
        %6197 = vmatprep.subr.mxu0 %v6196
        %v6198 = vand.u32 %v6076, 4294901760
        %6199 = vmatpush2.msra.mxu0 %v6198
        %v6200 = vand.u32 %v6075, 4294901760
        %6201 = vmatprep.subr.mxu0 %v6200
        %v6202 = vand.u32 %v6074, 4294901760
        %6203 = vmatpush2.msra.mxu0 %v6202
        %v6204 = vand.u32 %v6073, 4294901760
        %6205 = vmatprep.subr.mxu0 %v6204
        %v6206 = vand.u32 %v6072, 4294901760
        %6207 = vmatpush2.msra.mxu0 %v6206
        %v6208 = vand.u32 %v6071, 4294901760
        %6209 = vmatprep.subr.mxu0 %v6208
        %v6210 = vand.u32 %v6070, 4294901760
        %6211 = vmatpush2.msra.mxu0 %v6210
        %v6212 = vand.u32 %v6069, 4294901760
        %6213 = vmatprep.subr.mxu0 %v6212
        %v6214 = vand.u32 %v6068, 4294901760
        %6215 = vmatpush2.msra.mxu0 %v6214
        %v6216 = vand.u32 %v6067, 4294901760
        %6217 = vmatprep.subr.mxu0 %v6216
        %v6218 = vand.u32 %v6066, 4294901760
        %6219 = vmatpush2.msra.mxu0 %v6218
        %v6220 = vand.u32 %v6065, 4294901760
        %6221 = vmatprep.subr.mxu0 %v6220
        %v6222 = vand.u32 %v6064, 4294901760
        %6223 = vmatpush2.msra.mxu0 %v6222
        %v6224 = vand.u32 %v3579, 4294901760
        %v6225 = vsub.f32 %v3579, %v6224
        %v6226 = vand.u32 %v6225, 4294901760
        %v6227 = vsub.f32 %v6225, %v6226
        %v6228 = vand.u32 %v6227, 4294901760
        %6229 = vmatprep.mubr.f32.mxu0 %v6228
        %v6230 = vand.u32 %v3577, 4294901760
        %v6231 = vsub.f32 %v3577, %v6230
        %v6232 = vand.u32 %v6231, 4294901760
        %v6233 = vsub.f32 %v6231, %v6232
        %v6234 = vand.u32 %v6233, 4294901760
        %6235 = vmatmul.mubr.f32.gmra.mxu0 %v6234
        %v6236 = vpop.f32.mrf.mxu0
        %v6237 = vadd.f32 0.0, %v6236
        %v6238 = vpop.f32.mrf.mxu0
        %v6239 = vadd.f32 0.0, %v6238
        %v6240 = vand.u32 %v3586, 4294901760
        %v6241 = vsub.f32 %v3586, %v6240
        %v6242 = vand.u32 %v6241, 4294901760
        %v6243 = vsub.f32 %v6241, %v6242
        %v6244 = vand.u32 %v6243, 4294901760
        %6245 = vmatprep.mubr.f32.mxu0 %v6244
        %v6246 = vand.u32 %v3584, 4294901760
        %v6247 = vsub.f32 %v3584, %v6246
        %v6248 = vand.u32 %v6247, 4294901760
        %v6249 = vsub.f32 %v6247, %v6248
        %v6250 = vand.u32 %v6249, 4294901760
        %6251 = vmatmul.mubr.f32.gmra.mxu0 %v6250
        %v6252 = vpop.f32.mrf.mxu0
        %v6253 = vadd.f32 0.0, %v6252
        %v6254 = vpop.f32.mrf.mxu0
        %v6255 = vadd.f32 0.0, %v6254
        %v6256 = vand.u32 %v3593, 4294901760
        %v6257 = vsub.f32 %v3593, %v6256
        %v6258 = vand.u32 %v6257, 4294901760
        %v6259 = vsub.f32 %v6257, %v6258
        %v6260 = vand.u32 %v6259, 4294901760
        %6261 = vmatprep.mubr.f32.mxu0 %v6260
        %v6262 = vand.u32 %v3591, 4294901760
        %v6263 = vsub.f32 %v3591, %v6262
        %v6264 = vand.u32 %v6263, 4294901760
        %v6265 = vsub.f32 %v6263, %v6264
        %v6266 = vand.u32 %v6265, 4294901760
        %6267 = vmatmul.mubr.f32.gmra.mxu0 %v6266
        %v6268 = vpop.f32.mrf.mxu0
        %v6269 = vadd.f32 0.0, %v6268
        %v6270 = vpop.f32.mrf.mxu0
        %v6271 = vadd.f32 0.0, %v6270
        %v6272 = vand.u32 %v3600, 4294901760
        %v6273 = vsub.f32 %v3600, %v6272
        %v6274 = vand.u32 %v6273, 4294901760
        %v6275 = vsub.f32 %v6273, %v6274
        %v6276 = vand.u32 %v6275, 4294901760
        %6277 = vmatprep.mubr.f32.mxu0 %v6276
        %v6278 = vand.u32 %v3598, 4294901760
        %v6279 = vsub.f32 %v3598, %v6278
        %v6280 = vand.u32 %v6279, 4294901760
        %v6281 = vsub.f32 %v6279, %v6280
        %v6282 = vand.u32 %v6281, 4294901760
        %6283 = vmatmul.mubr.f32.gmra.mxu0 %v6282
        %v6284 = vpop.f32.mrf.mxu0
        %v6285 = vadd.f32 0.0, %v6284
        %v6286 = vpop.f32.mrf.mxu0
        %v6287 = vadd.f32 0.0, %v6286
        %6288 = vdwg.mxu0
        %v6289 = vand.u32 %v6063, 4294901760
        %v6290 = vsub.f32 %v6063, %v6289
        %v6291 = vand.u32 %v6290, 4294901760
        %v6292 = vsub.f32 %v6290, %v6291
        %v6293 = vand.u32 %v6292, 4294901760
        %6294 = vmatprep.subr.mxu0 %v6293
        %v6295 = vand.u32 %v6062, 4294901760
        %v6296 = vsub.f32 %v6062, %v6295
        %v6297 = vand.u32 %v6296, 4294901760
        %v6298 = vsub.f32 %v6296, %v6297
        %v6299 = vand.u32 %v6298, 4294901760
        %6300 = vmatpush1.msra.mxu0 %v6299
        %v6301 = vand.u32 %v6061, 4294901760
        %v6302 = vsub.f32 %v6061, %v6301
        %v6303 = vand.u32 %v6302, 4294901760
        %v6304 = vsub.f32 %v6302, %v6303
        %v6305 = vand.u32 %v6304, 4294901760
        %6306 = vmatprep.subr.mxu0 %v6305
        %v6307 = vand.u32 %v6060, 4294901760
        %v6308 = vsub.f32 %v6060, %v6307
        %v6309 = vand.u32 %v6308, 4294901760
        %v6310 = vsub.f32 %v6308, %v6309
        %v6311 = vand.u32 %v6310, 4294901760
        %6312 = vmatpush1.msra.mxu0 %v6311
        %v6313 = vand.u32 %v6059, 4294901760
        %v6314 = vsub.f32 %v6059, %v6313
        %v6315 = vand.u32 %v6314, 4294901760
        %v6316 = vsub.f32 %v6314, %v6315
        %v6317 = vand.u32 %v6316, 4294901760
        %6318 = vmatprep.subr.mxu0 %v6317
        %v6319 = vand.u32 %v6058, 4294901760
        %v6320 = vsub.f32 %v6058, %v6319
        %v6321 = vand.u32 %v6320, 4294901760
        %v6322 = vsub.f32 %v6320, %v6321
        %v6323 = vand.u32 %v6322, 4294901760
        %6324 = vmatpush1.msra.mxu0 %v6323
        %v6325 = vand.u32 %v6057, 4294901760
        %v6326 = vsub.f32 %v6057, %v6325
        %v6327 = vand.u32 %v6326, 4294901760
        %v6328 = vsub.f32 %v6326, %v6327
        %v6329 = vand.u32 %v6328, 4294901760
        %6330 = vmatprep.subr.mxu0 %v6329
        %v6331 = vand.u32 %v6056, 4294901760
        %v6332 = vsub.f32 %v6056, %v6331
        %v6333 = vand.u32 %v6332, 4294901760
        %v6334 = vsub.f32 %v6332, %v6333
        %v6335 = vand.u32 %v6334, 4294901760
        %6336 = vmatpush1.msra.mxu0 %v6335
        %v6337 = vand.u32 %v6055, 4294901760
        %v6338 = vsub.f32 %v6055, %v6337
        %v6339 = vand.u32 %v6338, 4294901760
        %v6340 = vsub.f32 %v6338, %v6339
        %v6341 = vand.u32 %v6340, 4294901760
        %6342 = vmatprep.subr.mxu0 %v6341
        %v6343 = vand.u32 %v6054, 4294901760
        %v6344 = vsub.f32 %v6054, %v6343
        %v6345 = vand.u32 %v6344, 4294901760
        %v6346 = vsub.f32 %v6344, %v6345
        %v6347 = vand.u32 %v6346, 4294901760
        %6348 = vmatpush1.msra.mxu0 %v6347
        %v6349 = vand.u32 %v6053, 4294901760
        %v6350 = vsub.f32 %v6053, %v6349
        %v6351 = vand.u32 %v6350, 4294901760
        %v6352 = vsub.f32 %v6350, %v6351
        %v6353 = vand.u32 %v6352, 4294901760
        %6354 = vmatprep.subr.mxu0 %v6353
        %v6355 = vand.u32 %v6052, 4294901760
        %v6356 = vsub.f32 %v6052, %v6355
        %v6357 = vand.u32 %v6356, 4294901760
        %v6358 = vsub.f32 %v6356, %v6357
        %v6359 = vand.u32 %v6358, 4294901760
        %6360 = vmatpush1.msra.mxu0 %v6359
        %v6361 = vand.u32 %v6051, 4294901760
        %v6362 = vsub.f32 %v6051, %v6361
        %v6363 = vand.u32 %v6362, 4294901760
        %v6364 = vsub.f32 %v6362, %v6363
        %v6365 = vand.u32 %v6364, 4294901760
        %6366 = vmatprep.subr.mxu0 %v6365
        %v6367 = vand.u32 %v6050, 4294901760
        %v6368 = vsub.f32 %v6050, %v6367
        %v6369 = vand.u32 %v6368, 4294901760
        %v6370 = vsub.f32 %v6368, %v6369
        %v6371 = vand.u32 %v6370, 4294901760
        %6372 = vmatpush1.msra.mxu0 %v6371
        %v6373 = vand.u32 %v6049, 4294901760
        %v6374 = vsub.f32 %v6049, %v6373
        %v6375 = vand.u32 %v6374, 4294901760
        %v6376 = vsub.f32 %v6374, %v6375
        %v6377 = vand.u32 %v6376, 4294901760
        %6378 = vmatprep.subr.mxu0 %v6377
        %v6379 = vand.u32 %v6048, 4294901760
        %v6380 = vsub.f32 %v6048, %v6379
        %v6381 = vand.u32 %v6380, 4294901760
        %v6382 = vsub.f32 %v6380, %v6381
        %v6383 = vand.u32 %v6382, 4294901760
        %6384 = vmatpush1.msra.mxu0 %v6383
        %v6385 = vand.u32 %v6047, 4294901760
        %v6386 = vsub.f32 %v6047, %v6385
        %v6387 = vand.u32 %v6386, 4294901760
        %v6388 = vsub.f32 %v6386, %v6387
        %v6389 = vand.u32 %v6388, 4294901760
        %6390 = vmatprep.subr.mxu0 %v6389
        %v6391 = vand.u32 %v6046, 4294901760
        %v6392 = vsub.f32 %v6046, %v6391
        %v6393 = vand.u32 %v6392, 4294901760
        %v6394 = vsub.f32 %v6392, %v6393
        %v6395 = vand.u32 %v6394, 4294901760
        %6396 = vmatpush1.msra.mxu0 %v6395
        %v6397 = vand.u32 %v6045, 4294901760
        %v6398 = vsub.f32 %v6045, %v6397
        %v6399 = vand.u32 %v6398, 4294901760
        %v6400 = vsub.f32 %v6398, %v6399
        %v6401 = vand.u32 %v6400, 4294901760
        %6402 = vmatprep.subr.mxu0 %v6401
        %v6403 = vand.u32 %v6044, 4294901760
        %v6404 = vsub.f32 %v6044, %v6403
        %v6405 = vand.u32 %v6404, 4294901760
        %v6406 = vsub.f32 %v6404, %v6405
        %v6407 = vand.u32 %v6406, 4294901760
        %6408 = vmatpush1.msra.mxu0 %v6407
        %v6409 = vand.u32 %v6043, 4294901760
        %v6410 = vsub.f32 %v6043, %v6409
        %v6411 = vand.u32 %v6410, 4294901760
        %v6412 = vsub.f32 %v6410, %v6411
        %v6413 = vand.u32 %v6412, 4294901760
        %6414 = vmatprep.subr.mxu0 %v6413
        %v6415 = vand.u32 %v6042, 4294901760
        %v6416 = vsub.f32 %v6042, %v6415
        %v6417 = vand.u32 %v6416, 4294901760
        %v6418 = vsub.f32 %v6416, %v6417
        %v6419 = vand.u32 %v6418, 4294901760
        %6420 = vmatpush1.msra.mxu0 %v6419
        %v6421 = vand.u32 %v6041, 4294901760
        %v6422 = vsub.f32 %v6041, %v6421
        %v6423 = vand.u32 %v6422, 4294901760
        %v6424 = vsub.f32 %v6422, %v6423
        %v6425 = vand.u32 %v6424, 4294901760
        %6426 = vmatprep.subr.mxu0 %v6425
        %v6427 = vand.u32 %v6040, 4294901760
        %v6428 = vsub.f32 %v6040, %v6427
        %v6429 = vand.u32 %v6428, 4294901760
        %v6430 = vsub.f32 %v6428, %v6429
        %v6431 = vand.u32 %v6430, 4294901760
        %6432 = vmatpush1.msra.mxu0 %v6431
        %v6433 = vand.u32 %v6039, 4294901760
        %v6434 = vsub.f32 %v6039, %v6433
        %v6435 = vand.u32 %v6434, 4294901760
        %v6436 = vsub.f32 %v6434, %v6435
        %v6437 = vand.u32 %v6436, 4294901760
        %6438 = vmatprep.subr.mxu0 %v6437
        %v6439 = vand.u32 %v6038, 4294901760
        %v6440 = vsub.f32 %v6038, %v6439
        %v6441 = vand.u32 %v6440, 4294901760
        %v6442 = vsub.f32 %v6440, %v6441
        %v6443 = vand.u32 %v6442, 4294901760
        %6444 = vmatpush1.msra.mxu0 %v6443
        %v6445 = vand.u32 %v6037, 4294901760
        %v6446 = vsub.f32 %v6037, %v6445
        %v6447 = vand.u32 %v6446, 4294901760
        %v6448 = vsub.f32 %v6446, %v6447
        %v6449 = vand.u32 %v6448, 4294901760
        %6450 = vmatprep.subr.mxu0 %v6449
        %v6451 = vand.u32 %v6036, 4294901760
        %v6452 = vsub.f32 %v6036, %v6451
        %v6453 = vand.u32 %v6452, 4294901760
        %v6454 = vsub.f32 %v6452, %v6453
        %v6455 = vand.u32 %v6454, 4294901760
        %6456 = vmatpush1.msra.mxu0 %v6455
        %v6457 = vand.u32 %v6035, 4294901760
        %v6458 = vsub.f32 %v6035, %v6457
        %v6459 = vand.u32 %v6458, 4294901760
        %v6460 = vsub.f32 %v6458, %v6459
        %v6461 = vand.u32 %v6460, 4294901760
        %6462 = vmatprep.subr.mxu0 %v6461
        %v6463 = vand.u32 %v6034, 4294901760
        %v6464 = vsub.f32 %v6034, %v6463
        %v6465 = vand.u32 %v6464, 4294901760
        %v6466 = vsub.f32 %v6464, %v6465
        %v6467 = vand.u32 %v6466, 4294901760
        %6468 = vmatpush1.msra.mxu0 %v6467
        %v6469 = vand.u32 %v6033, 4294901760
        %v6470 = vsub.f32 %v6033, %v6469
        %v6471 = vand.u32 %v6470, 4294901760
        %v6472 = vsub.f32 %v6470, %v6471
        %v6473 = vand.u32 %v6472, 4294901760
        %6474 = vmatprep.subr.mxu0 %v6473
        %v6475 = vand.u32 %v6031, 4294901760
        %v6476 = vsub.f32 %v6031, %v6475
        %v6477 = vand.u32 %v6476, 4294901760
        %v6478 = vsub.f32 %v6476, %v6477
        %v6479 = vand.u32 %v6478, 4294901760
        %6480 = vmatpush1.msra.mxu0 %v6479
        %v6481 = vand.u32 %v6095, 4294901760
        %v6482 = vsub.f32 %v6095, %v6481
        %v6483 = vand.u32 %v6482, 4294901760
        %v6484 = vsub.f32 %v6482, %v6483
        %v6485 = vand.u32 %v6484, 4294901760
        %6486 = vmatprep.subr.mxu0 %v6485
        %v6487 = vand.u32 %v6094, 4294901760
        %v6488 = vsub.f32 %v6094, %v6487
        %v6489 = vand.u32 %v6488, 4294901760
        %v6490 = vsub.f32 %v6488, %v6489
        %v6491 = vand.u32 %v6490, 4294901760
        %6492 = vmatpush2.msra.mxu0 %v6491
        %v6493 = vand.u32 %v6093, 4294901760
        %v6494 = vsub.f32 %v6093, %v6493
        %v6495 = vand.u32 %v6494, 4294901760
        %v6496 = vsub.f32 %v6494, %v6495
        %v6497 = vand.u32 %v6496, 4294901760
        %6498 = vmatprep.subr.mxu0 %v6497
        %v6499 = vand.u32 %v6092, 4294901760
        %v6500 = vsub.f32 %v6092, %v6499
        %v6501 = vand.u32 %v6500, 4294901760
        %v6502 = vsub.f32 %v6500, %v6501
        %v6503 = vand.u32 %v6502, 4294901760
        %6504 = vmatpush2.msra.mxu0 %v6503
        %v6505 = vand.u32 %v6091, 4294901760
        %v6506 = vsub.f32 %v6091, %v6505
        %v6507 = vand.u32 %v6506, 4294901760
        %v6508 = vsub.f32 %v6506, %v6507
        %v6509 = vand.u32 %v6508, 4294901760
        %6510 = vmatprep.subr.mxu0 %v6509
        %v6511 = vand.u32 %v6090, 4294901760
        %v6512 = vsub.f32 %v6090, %v6511
        %v6513 = vand.u32 %v6512, 4294901760
        %v6514 = vsub.f32 %v6512, %v6513
        %v6515 = vand.u32 %v6514, 4294901760
        %6516 = vmatpush2.msra.mxu0 %v6515
        %v6517 = vand.u32 %v6089, 4294901760
        %v6518 = vsub.f32 %v6089, %v6517
        %v6519 = vand.u32 %v6518, 4294901760
        %v6520 = vsub.f32 %v6518, %v6519
        %v6521 = vand.u32 %v6520, 4294901760
        %6522 = vmatprep.subr.mxu0 %v6521
        %v6523 = vand.u32 %v6088, 4294901760
        %v6524 = vsub.f32 %v6088, %v6523
        %v6525 = vand.u32 %v6524, 4294901760
        %v6526 = vsub.f32 %v6524, %v6525
        %v6527 = vand.u32 %v6526, 4294901760
        %6528 = vmatpush2.msra.mxu0 %v6527
        %v6529 = vand.u32 %v6087, 4294901760
        %v6530 = vsub.f32 %v6087, %v6529
        %v6531 = vand.u32 %v6530, 4294901760
        %v6532 = vsub.f32 %v6530, %v6531
        %v6533 = vand.u32 %v6532, 4294901760
        %6534 = vmatprep.subr.mxu0 %v6533
        %v6535 = vand.u32 %v6086, 4294901760
        %v6536 = vsub.f32 %v6086, %v6535
        %v6537 = vand.u32 %v6536, 4294901760
        %v6538 = vsub.f32 %v6536, %v6537
        %v6539 = vand.u32 %v6538, 4294901760
        %6540 = vmatpush2.msra.mxu0 %v6539
        %v6541 = vand.u32 %v6085, 4294901760
        %v6542 = vsub.f32 %v6085, %v6541
        %v6543 = vand.u32 %v6542, 4294901760
        %v6544 = vsub.f32 %v6542, %v6543
        %v6545 = vand.u32 %v6544, 4294901760
        %6546 = vmatprep.subr.mxu0 %v6545
        %v6547 = vand.u32 %v6084, 4294901760
        %v6548 = vsub.f32 %v6084, %v6547
        %v6549 = vand.u32 %v6548, 4294901760
        %v6550 = vsub.f32 %v6548, %v6549
        %v6551 = vand.u32 %v6550, 4294901760
        %6552 = vmatpush2.msra.mxu0 %v6551
        %v6553 = vand.u32 %v6083, 4294901760
        %v6554 = vsub.f32 %v6083, %v6553
        %v6555 = vand.u32 %v6554, 4294901760
        %v6556 = vsub.f32 %v6554, %v6555
        %v6557 = vand.u32 %v6556, 4294901760
        %6558 = vmatprep.subr.mxu0 %v6557
        %v6559 = vand.u32 %v6082, 4294901760
        %v6560 = vsub.f32 %v6082, %v6559
        %v6561 = vand.u32 %v6560, 4294901760
        %v6562 = vsub.f32 %v6560, %v6561
        %v6563 = vand.u32 %v6562, 4294901760
        %6564 = vmatpush2.msra.mxu0 %v6563
        %v6565 = vand.u32 %v6081, 4294901760
        %v6566 = vsub.f32 %v6081, %v6565
        %v6567 = vand.u32 %v6566, 4294901760
        %v6568 = vsub.f32 %v6566, %v6567
        %v6569 = vand.u32 %v6568, 4294901760
        %6570 = vmatprep.subr.mxu0 %v6569
        %v6571 = vand.u32 %v6080, 4294901760
        %v6572 = vsub.f32 %v6080, %v6571
        %v6573 = vand.u32 %v6572, 4294901760
        %v6574 = vsub.f32 %v6572, %v6573
        %v6575 = vand.u32 %v6574, 4294901760
        %6576 = vmatpush2.msra.mxu0 %v6575
        %v6577 = vand.u32 %v6079, 4294901760
        %v6578 = vsub.f32 %v6079, %v6577
        %v6579 = vand.u32 %v6578, 4294901760
        %v6580 = vsub.f32 %v6578, %v6579
        %v6581 = vand.u32 %v6580, 4294901760
        %6582 = vmatprep.subr.mxu0 %v6581
        %v6583 = vand.u32 %v6078, 4294901760
        %v6584 = vsub.f32 %v6078, %v6583
        %v6585 = vand.u32 %v6584, 4294901760
        %v6586 = vsub.f32 %v6584, %v6585
        %v6587 = vand.u32 %v6586, 4294901760
        %6588 = vmatpush2.msra.mxu0 %v6587
        %v6589 = vand.u32 %v6077, 4294901760
        %v6590 = vsub.f32 %v6077, %v6589
        %v6591 = vand.u32 %v6590, 4294901760
        %v6592 = vsub.f32 %v6590, %v6591
        %v6593 = vand.u32 %v6592, 4294901760
        %6594 = vmatprep.subr.mxu0 %v6593
        %v6595 = vand.u32 %v6076, 4294901760
        %v6596 = vsub.f32 %v6076, %v6595
        %v6597 = vand.u32 %v6596, 4294901760
        %v6598 = vsub.f32 %v6596, %v6597
        %v6599 = vand.u32 %v6598, 4294901760
        %6600 = vmatpush2.msra.mxu0 %v6599
        %v6601 = vand.u32 %v6075, 4294901760
        %v6602 = vsub.f32 %v6075, %v6601
        %v6603 = vand.u32 %v6602, 4294901760
        %v6604 = vsub.f32 %v6602, %v6603
        %v6605 = vand.u32 %v6604, 4294901760
        %6606 = vmatprep.subr.mxu0 %v6605
        %v6607 = vand.u32 %v6074, 4294901760
        %v6608 = vsub.f32 %v6074, %v6607
        %v6609 = vand.u32 %v6608, 4294901760
        %v6610 = vsub.f32 %v6608, %v6609
        %v6611 = vand.u32 %v6610, 4294901760
        %6612 = vmatpush2.msra.mxu0 %v6611
        %v6613 = vand.u32 %v6073, 4294901760
        %v6614 = vsub.f32 %v6073, %v6613
        %v6615 = vand.u32 %v6614, 4294901760
        %v6616 = vsub.f32 %v6614, %v6615
        %v6617 = vand.u32 %v6616, 4294901760
        %6618 = vmatprep.subr.mxu0 %v6617
        %v6619 = vand.u32 %v6072, 4294901760
        %v6620 = vsub.f32 %v6072, %v6619
        %v6621 = vand.u32 %v6620, 4294901760
        %v6622 = vsub.f32 %v6620, %v6621
        %v6623 = vand.u32 %v6622, 4294901760
        %6624 = vmatpush2.msra.mxu0 %v6623
        %v6625 = vand.u32 %v6071, 4294901760
        %v6626 = vsub.f32 %v6071, %v6625
        %v6627 = vand.u32 %v6626, 4294901760
        %v6628 = vsub.f32 %v6626, %v6627
        %v6629 = vand.u32 %v6628, 4294901760
        %6630 = vmatprep.subr.mxu0 %v6629
        %v6631 = vand.u32 %v6070, 4294901760
        %v6632 = vsub.f32 %v6070, %v6631
        %v6633 = vand.u32 %v6632, 4294901760
        %v6634 = vsub.f32 %v6632, %v6633
        %v6635 = vand.u32 %v6634, 4294901760
        %6636 = vmatpush2.msra.mxu0 %v6635
        %v6637 = vand.u32 %v6069, 4294901760
        %v6638 = vsub.f32 %v6069, %v6637
        %v6639 = vand.u32 %v6638, 4294901760
        %v6640 = vsub.f32 %v6638, %v6639
        %v6641 = vand.u32 %v6640, 4294901760
        %6642 = vmatprep.subr.mxu0 %v6641
        %v6643 = vand.u32 %v6068, 4294901760
        %v6644 = vsub.f32 %v6068, %v6643
        %v6645 = vand.u32 %v6644, 4294901760
        %v6646 = vsub.f32 %v6644, %v6645
        %v6647 = vand.u32 %v6646, 4294901760
        %6648 = vmatpush2.msra.mxu0 %v6647
        %v6649 = vand.u32 %v6067, 4294901760
        %v6650 = vsub.f32 %v6067, %v6649
        %v6651 = vand.u32 %v6650, 4294901760
        %v6652 = vsub.f32 %v6650, %v6651
        %v6653 = vand.u32 %v6652, 4294901760
        %6654 = vmatprep.subr.mxu0 %v6653
        %v6655 = vand.u32 %v6066, 4294901760
        %v6656 = vsub.f32 %v6066, %v6655
        %v6657 = vand.u32 %v6656, 4294901760
        %v6658 = vsub.f32 %v6656, %v6657
        %v6659 = vand.u32 %v6658, 4294901760
        %6660 = vmatpush2.msra.mxu0 %v6659
        %v6661 = vand.u32 %v6065, 4294901760
        %v6662 = vsub.f32 %v6065, %v6661
        %v6663 = vand.u32 %v6662, 4294901760
        %v6664 = vsub.f32 %v6662, %v6663
        %v6665 = vand.u32 %v6664, 4294901760
        %6666 = vmatprep.subr.mxu0 %v6665
        %v6667 = vand.u32 %v6064, 4294901760
        %v6668 = vsub.f32 %v6064, %v6667
        %v6669 = vand.u32 %v6668, 4294901760
        %v6670 = vsub.f32 %v6668, %v6669
        %v6671 = vand.u32 %v6670, 4294901760
        %6672 = vmatpush2.msra.mxu0 %v6671
        %v6673 = vand.u32 %v3579, 4294901760
        %6674 = vmatprep.mubr.f32.mxu0 %v6673
        %v6675 = vand.u32 %v3577, 4294901760
        %6676 = vmatmul.mubr.f32.gmra.mxu0 %v6675
        %v6677 = vpop.f32.mrf.mxu0
        %v6678 = vadd.f32 %v6237, %v6677
        %v6679 = vpop.f32.mrf.mxu0
        %v6680 = vadd.f32 %v6239, %v6679
        %v6681 = vand.u32 %v3586, 4294901760
        %6682 = vmatprep.mubr.f32.mxu0 %v6681
        %v6683 = vand.u32 %v3584, 4294901760
        %6684 = vmatmul.mubr.f32.gmra.mxu0 %v6683
        %v6685 = vpop.f32.mrf.mxu0
        %v6686 = vadd.f32 %v6253, %v6685
        %v6687 = vpop.f32.mrf.mxu0
        %v6688 = vadd.f32 %v6255, %v6687
        %v6689 = vand.u32 %v3593, 4294901760
        %6690 = vmatprep.mubr.f32.mxu0 %v6689
        %v6691 = vand.u32 %v3591, 4294901760
        %6692 = vmatmul.mubr.f32.gmra.mxu0 %v6691
        %v6693 = vpop.f32.mrf.mxu0
        %v6694 = vadd.f32 %v6269, %v6693
        %v6695 = vpop.f32.mrf.mxu0
        %v6696 = vadd.f32 %v6271, %v6695
        %v6697 = vand.u32 %v3600, 4294901760
        %6698 = vmatprep.mubr.f32.mxu0 %v6697
        %v6699 = vand.u32 %v3598, 4294901760
        %6700 = vmatmul.mubr.f32.gmra.mxu0 %v6699
        %v6701 = vpop.f32.mrf.mxu0
        %v6702 = vadd.f32 %v6285, %v6701
        %v6703 = vpop.f32.mrf.mxu0
        %v6704 = vadd.f32 %v6287, %v6703
        %6705 = vdwg.mxu0
        %v6706 = vand.u32 %v6063, 4294901760
        %v6707 = vsub.f32 %v6063, %v6706
        %6708 = vmatprep.subr.mxu0 %v6707
        %v6709 = vand.u32 %v6062, 4294901760
        %v6710 = vsub.f32 %v6062, %v6709
        %6711 = vmatpush1.msra.mxu0 %v6710
        %v6712 = vand.u32 %v6061, 4294901760
        %v6713 = vsub.f32 %v6061, %v6712
        %6714 = vmatprep.subr.mxu0 %v6713
        %v6715 = vand.u32 %v6060, 4294901760
        %v6716 = vsub.f32 %v6060, %v6715
        %6717 = vmatpush1.msra.mxu0 %v6716
        %v6718 = vand.u32 %v6059, 4294901760
        %v6719 = vsub.f32 %v6059, %v6718
        %6720 = vmatprep.subr.mxu0 %v6719
        %v6721 = vand.u32 %v6058, 4294901760
        %v6722 = vsub.f32 %v6058, %v6721
        %6723 = vmatpush1.msra.mxu0 %v6722
        %v6724 = vand.u32 %v6057, 4294901760
        %v6725 = vsub.f32 %v6057, %v6724
        %6726 = vmatprep.subr.mxu0 %v6725
        %v6727 = vand.u32 %v6056, 4294901760
        %v6728 = vsub.f32 %v6056, %v6727
        %6729 = vmatpush1.msra.mxu0 %v6728
        %v6730 = vand.u32 %v6055, 4294901760
        %v6731 = vsub.f32 %v6055, %v6730
        %6732 = vmatprep.subr.mxu0 %v6731
        %v6733 = vand.u32 %v6054, 4294901760
        %v6734 = vsub.f32 %v6054, %v6733
        %6735 = vmatpush1.msra.mxu0 %v6734
        %v6736 = vand.u32 %v6053, 4294901760
        %v6737 = vsub.f32 %v6053, %v6736
        %6738 = vmatprep.subr.mxu0 %v6737
        %v6739 = vand.u32 %v6052, 4294901760
        %v6740 = vsub.f32 %v6052, %v6739
        %6741 = vmatpush1.msra.mxu0 %v6740
        %v6742 = vand.u32 %v6051, 4294901760
        %v6743 = vsub.f32 %v6051, %v6742
        %6744 = vmatprep.subr.mxu0 %v6743
        %v6745 = vand.u32 %v6050, 4294901760
        %v6746 = vsub.f32 %v6050, %v6745
        %6747 = vmatpush1.msra.mxu0 %v6746
        %v6748 = vand.u32 %v6049, 4294901760
        %v6749 = vsub.f32 %v6049, %v6748
        %6750 = vmatprep.subr.mxu0 %v6749
        %v6751 = vand.u32 %v6048, 4294901760
        %v6752 = vsub.f32 %v6048, %v6751
        %6753 = vmatpush1.msra.mxu0 %v6752
        %v6754 = vand.u32 %v6047, 4294901760
        %v6755 = vsub.f32 %v6047, %v6754
        %6756 = vmatprep.subr.mxu0 %v6755
        %v6757 = vand.u32 %v6046, 4294901760
        %v6758 = vsub.f32 %v6046, %v6757
        %6759 = vmatpush1.msra.mxu0 %v6758
        %v6760 = vand.u32 %v6045, 4294901760
        %v6761 = vsub.f32 %v6045, %v6760
        %6762 = vmatprep.subr.mxu0 %v6761
        %v6763 = vand.u32 %v6044, 4294901760
        %v6764 = vsub.f32 %v6044, %v6763
        %6765 = vmatpush1.msra.mxu0 %v6764
        %v6766 = vand.u32 %v6043, 4294901760
        %v6767 = vsub.f32 %v6043, %v6766
        %6768 = vmatprep.subr.mxu0 %v6767
        %v6769 = vand.u32 %v6042, 4294901760
        %v6770 = vsub.f32 %v6042, %v6769
        %6771 = vmatpush1.msra.mxu0 %v6770
        %v6772 = vand.u32 %v6041, 4294901760
        %v6773 = vsub.f32 %v6041, %v6772
        %6774 = vmatprep.subr.mxu0 %v6773
        %v6775 = vand.u32 %v6040, 4294901760
        %v6776 = vsub.f32 %v6040, %v6775
        %6777 = vmatpush1.msra.mxu0 %v6776
        %v6778 = vand.u32 %v6039, 4294901760
        %v6779 = vsub.f32 %v6039, %v6778
        %6780 = vmatprep.subr.mxu0 %v6779
        %v6781 = vand.u32 %v6038, 4294901760
        %v6782 = vsub.f32 %v6038, %v6781
        %6783 = vmatpush1.msra.mxu0 %v6782
        %v6784 = vand.u32 %v6037, 4294901760
        %v6785 = vsub.f32 %v6037, %v6784
        %6786 = vmatprep.subr.mxu0 %v6785
        %v6787 = vand.u32 %v6036, 4294901760
        %v6788 = vsub.f32 %v6036, %v6787
        %6789 = vmatpush1.msra.mxu0 %v6788
        %v6790 = vand.u32 %v6035, 4294901760
        %v6791 = vsub.f32 %v6035, %v6790
        %6792 = vmatprep.subr.mxu0 %v6791
        %v6793 = vand.u32 %v6034, 4294901760
        %v6794 = vsub.f32 %v6034, %v6793
        %6795 = vmatpush1.msra.mxu0 %v6794
        %v6796 = vand.u32 %v6033, 4294901760
        %v6797 = vsub.f32 %v6033, %v6796
        %6798 = vmatprep.subr.mxu0 %v6797
        %v6799 = vand.u32 %v6031, 4294901760
        %v6800 = vsub.f32 %v6031, %v6799
        %6801 = vmatpush1.msra.mxu0 %v6800
        %v6802 = vand.u32 %v6095, 4294901760
        %v6803 = vsub.f32 %v6095, %v6802
        %6804 = vmatprep.subr.mxu0 %v6803
        %v6805 = vand.u32 %v6094, 4294901760
        %v6806 = vsub.f32 %v6094, %v6805
        %6807 = vmatpush2.msra.mxu0 %v6806
        %v6808 = vand.u32 %v6093, 4294901760
        %v6809 = vsub.f32 %v6093, %v6808
        %6810 = vmatprep.subr.mxu0 %v6809
        %v6811 = vand.u32 %v6092, 4294901760
        %v6812 = vsub.f32 %v6092, %v6811
        %6813 = vmatpush2.msra.mxu0 %v6812
        %v6814 = vand.u32 %v6091, 4294901760
        %v6815 = vsub.f32 %v6091, %v6814
        %6816 = vmatprep.subr.mxu0 %v6815
        %v6817 = vand.u32 %v6090, 4294901760
        %v6818 = vsub.f32 %v6090, %v6817
        %6819 = vmatpush2.msra.mxu0 %v6818
        %v6820 = vand.u32 %v6089, 4294901760
        %v6821 = vsub.f32 %v6089, %v6820
        %6822 = vmatprep.subr.mxu0 %v6821
        %v6823 = vand.u32 %v6088, 4294901760
        %v6824 = vsub.f32 %v6088, %v6823
        %6825 = vmatpush2.msra.mxu0 %v6824
        %v6826 = vand.u32 %v6087, 4294901760
        %v6827 = vsub.f32 %v6087, %v6826
        %6828 = vmatprep.subr.mxu0 %v6827
        %v6829 = vand.u32 %v6086, 4294901760
        %v6830 = vsub.f32 %v6086, %v6829
        %6831 = vmatpush2.msra.mxu0 %v6830
        %v6832 = vand.u32 %v6085, 4294901760
        %v6833 = vsub.f32 %v6085, %v6832
        %6834 = vmatprep.subr.mxu0 %v6833
        %v6835 = vand.u32 %v6084, 4294901760
        %v6836 = vsub.f32 %v6084, %v6835
        %6837 = vmatpush2.msra.mxu0 %v6836
        %v6838 = vand.u32 %v6083, 4294901760
        %v6839 = vsub.f32 %v6083, %v6838
        %6840 = vmatprep.subr.mxu0 %v6839
        %v6841 = vand.u32 %v6082, 4294901760
        %v6842 = vsub.f32 %v6082, %v6841
        %6843 = vmatpush2.msra.mxu0 %v6842
        %v6844 = vand.u32 %v6081, 4294901760
        %v6845 = vsub.f32 %v6081, %v6844
        %6846 = vmatprep.subr.mxu0 %v6845
        %v6847 = vand.u32 %v6080, 4294901760
        %v6848 = vsub.f32 %v6080, %v6847
        %6849 = vmatpush2.msra.mxu0 %v6848
        %v6850 = vand.u32 %v6079, 4294901760
        %v6851 = vsub.f32 %v6079, %v6850
        %6852 = vmatprep.subr.mxu0 %v6851
        %v6853 = vand.u32 %v6078, 4294901760
        %v6854 = vsub.f32 %v6078, %v6853
        %6855 = vmatpush2.msra.mxu0 %v6854
        %v6856 = vand.u32 %v6077, 4294901760
        %v6857 = vsub.f32 %v6077, %v6856
        %6858 = vmatprep.subr.mxu0 %v6857
        %v6859 = vand.u32 %v6076, 4294901760
        %v6860 = vsub.f32 %v6076, %v6859
        %6861 = vmatpush2.msra.mxu0 %v6860
        %v6862 = vand.u32 %v6075, 4294901760
        %v6863 = vsub.f32 %v6075, %v6862
        %6864 = vmatprep.subr.mxu0 %v6863
        %v6865 = vand.u32 %v6074, 4294901760
        %v6866 = vsub.f32 %v6074, %v6865
        %6867 = vmatpush2.msra.mxu0 %v6866
        %v6868 = vand.u32 %v6073, 4294901760
        %v6869 = vsub.f32 %v6073, %v6868
        %6870 = vmatprep.subr.mxu0 %v6869
        %v6871 = vand.u32 %v6072, 4294901760
        %v6872 = vsub.f32 %v6072, %v6871
        %6873 = vmatpush2.msra.mxu0 %v6872
        %v6874 = vand.u32 %v6071, 4294901760
        %v6875 = vsub.f32 %v6071, %v6874
        %6876 = vmatprep.subr.mxu0 %v6875
        %v6877 = vand.u32 %v6070, 4294901760
        %v6878 = vsub.f32 %v6070, %v6877
        %6879 = vmatpush2.msra.mxu0 %v6878
        %v6880 = vand.u32 %v6069, 4294901760
        %v6881 = vsub.f32 %v6069, %v6880
        %6882 = vmatprep.subr.mxu0 %v6881
        %v6883 = vand.u32 %v6068, 4294901760
        %v6884 = vsub.f32 %v6068, %v6883
        %6885 = vmatpush2.msra.mxu0 %v6884
        %v6886 = vand.u32 %v6067, 4294901760
        %v6887 = vsub.f32 %v6067, %v6886
        %6888 = vmatprep.subr.mxu0 %v6887
        %v6889 = vand.u32 %v6066, 4294901760
        %v6890 = vsub.f32 %v6066, %v6889
        %6891 = vmatpush2.msra.mxu0 %v6890
        %v6892 = vand.u32 %v6065, 4294901760
        %v6893 = vsub.f32 %v6065, %v6892
        %6894 = vmatprep.subr.mxu0 %v6893
        %v6895 = vand.u32 %v6064, 4294901760
        %v6896 = vsub.f32 %v6064, %v6895
        %6897 = vmatpush2.msra.mxu0 %v6896
        %v6898 = vand.u32 %v3579, 4294901760
        %v6899 = vsub.f32 %v3579, %v6898
        %6900 = vmatprep.mubr.f32.mxu0 %v6899
        %v6901 = vand.u32 %v3577, 4294901760
        %v6902 = vsub.f32 %v3577, %v6901
        %6903 = vmatmul.mubr.f32.gmra.mxu0 %v6902
        %v6904 = vpop.f32.mrf.mxu0
        %v6905 = vadd.f32 %v6678, %v6904
        %v6906 = vpop.f32.mrf.mxu0
        %v6907 = vadd.f32 %v6680, %v6906
        %v6908 = vand.u32 %v3586, 4294901760
        %v6909 = vsub.f32 %v3586, %v6908
        %6910 = vmatprep.mubr.f32.mxu0 %v6909
        %v6911 = vand.u32 %v3584, 4294901760
        %v6912 = vsub.f32 %v3584, %v6911
        %6913 = vmatmul.mubr.f32.gmra.mxu0 %v6912
        %v6914 = vpop.f32.mrf.mxu0
        %v6915 = vadd.f32 %v6686, %v6914
        %v6916 = vpop.f32.mrf.mxu0
        %v6917 = vadd.f32 %v6688, %v6916
        %v6918 = vand.u32 %v3593, 4294901760
        %v6919 = vsub.f32 %v3593, %v6918
        %6920 = vmatprep.mubr.f32.mxu0 %v6919
        %v6921 = vand.u32 %v3591, 4294901760
        %v6922 = vsub.f32 %v3591, %v6921
        %6923 = vmatmul.mubr.f32.gmra.mxu0 %v6922
        %v6924 = vpop.f32.mrf.mxu0
        %v6925 = vadd.f32 %v6694, %v6924
        %v6926 = vpop.f32.mrf.mxu0
        %v6927 = vadd.f32 %v6696, %v6926
        %v6928 = vand.u32 %v3600, 4294901760
        %v6929 = vsub.f32 %v3600, %v6928
        %6930 = vmatprep.mubr.f32.mxu0 %v6929
        %v6931 = vand.u32 %v3598, 4294901760
        %v6932 = vsub.f32 %v3598, %v6931
        %6933 = vmatmul.mubr.f32.gmra.mxu0 %v6932
        %v6934 = vpop.f32.mrf.mxu0
        %v6935 = vadd.f32 %v6702, %v6934
        %v6936 = vpop.f32.mrf.mxu0
        %v6937 = vadd.f32 %v6704, %v6936
        %6938 = vdwg.mxu0
        %v6939 = vand.u32 %v6063, 4294901760
        %6940 = vmatprep.subr.mxu0 %v6939
        %v6941 = vand.u32 %v6062, 4294901760
        %6942 = vmatpush1.msra.mxu0 %v6941
        %v6943 = vand.u32 %v6061, 4294901760
        %6944 = vmatprep.subr.mxu0 %v6943
        %v6945 = vand.u32 %v6060, 4294901760
        %6946 = vmatpush1.msra.mxu0 %v6945
        %v6947 = vand.u32 %v6059, 4294901760
        %6948 = vmatprep.subr.mxu0 %v6947
        %v6949 = vand.u32 %v6058, 4294901760
        %6950 = vmatpush1.msra.mxu0 %v6949
        %v6951 = vand.u32 %v6057, 4294901760
        %6952 = vmatprep.subr.mxu0 %v6951
        %v6953 = vand.u32 %v6056, 4294901760
        %6954 = vmatpush1.msra.mxu0 %v6953
        %v6955 = vand.u32 %v6055, 4294901760
        %6956 = vmatprep.subr.mxu0 %v6955
        %v6957 = vand.u32 %v6054, 4294901760
        %6958 = vmatpush1.msra.mxu0 %v6957
        %v6959 = vand.u32 %v6053, 4294901760
        %6960 = vmatprep.subr.mxu0 %v6959
        %v6961 = vand.u32 %v6052, 4294901760
        %6962 = vmatpush1.msra.mxu0 %v6961
        %v6963 = vand.u32 %v6051, 4294901760
        %6964 = vmatprep.subr.mxu0 %v6963
        %v6965 = vand.u32 %v6050, 4294901760
        %6966 = vmatpush1.msra.mxu0 %v6965
        %v6967 = vand.u32 %v6049, 4294901760
        %6968 = vmatprep.subr.mxu0 %v6967
        %v6969 = vand.u32 %v6048, 4294901760
        %6970 = vmatpush1.msra.mxu0 %v6969
        %v6971 = vand.u32 %v6047, 4294901760
        %6972 = vmatprep.subr.mxu0 %v6971
        %v6973 = vand.u32 %v6046, 4294901760
        %6974 = vmatpush1.msra.mxu0 %v6973
        %v6975 = vand.u32 %v6045, 4294901760
        %6976 = vmatprep.subr.mxu0 %v6975
        %v6977 = vand.u32 %v6044, 4294901760
        %6978 = vmatpush1.msra.mxu0 %v6977
        %v6979 = vand.u32 %v6043, 4294901760
        %6980 = vmatprep.subr.mxu0 %v6979
        %v6981 = vand.u32 %v6042, 4294901760
        %6982 = vmatpush1.msra.mxu0 %v6981
        %v6983 = vand.u32 %v6041, 4294901760
        %6984 = vmatprep.subr.mxu0 %v6983
        %v6985 = vand.u32 %v6040, 4294901760
        %6986 = vmatpush1.msra.mxu0 %v6985
        %v6987 = vand.u32 %v6039, 4294901760
        %6988 = vmatprep.subr.mxu0 %v6987
        %v6989 = vand.u32 %v6038, 4294901760
        %6990 = vmatpush1.msra.mxu0 %v6989
        %v6991 = vand.u32 %v6037, 4294901760
        %6992 = vmatprep.subr.mxu0 %v6991
        %v6993 = vand.u32 %v6036, 4294901760
        %6994 = vmatpush1.msra.mxu0 %v6993
        %v6995 = vand.u32 %v6035, 4294901760
        %6996 = vmatprep.subr.mxu0 %v6995
        %v6997 = vand.u32 %v6034, 4294901760
        %6998 = vmatpush1.msra.mxu0 %v6997
        %v6999 = vand.u32 %v6033, 4294901760
        %7000 = vmatprep.subr.mxu0 %v6999
        %v7001 = vand.u32 %v6031, 4294901760
        %7002 = vmatpush1.msra.mxu0 %v7001
        %v7003 = vand.u32 %v6095, 4294901760
        %7004 = vmatprep.subr.mxu0 %v7003
        %v7005 = vand.u32 %v6094, 4294901760
        %7006 = vmatpush2.msra.mxu0 %v7005
        %v7007 = vand.u32 %v6093, 4294901760
        %7008 = vmatprep.subr.mxu0 %v7007
        %v7009 = vand.u32 %v6092, 4294901760
        %7010 = vmatpush2.msra.mxu0 %v7009
        %v7011 = vand.u32 %v6091, 4294901760
        %7012 = vmatprep.subr.mxu0 %v7011
        %v7013 = vand.u32 %v6090, 4294901760
        %7014 = vmatpush2.msra.mxu0 %v7013
        %v7015 = vand.u32 %v6089, 4294901760
        %7016 = vmatprep.subr.mxu0 %v7015
        %v7017 = vand.u32 %v6088, 4294901760
        %7018 = vmatpush2.msra.mxu0 %v7017
        %v7019 = vand.u32 %v6087, 4294901760
        %7020 = vmatprep.subr.mxu0 %v7019
        %v7021 = vand.u32 %v6086, 4294901760
        %7022 = vmatpush2.msra.mxu0 %v7021
        %v7023 = vand.u32 %v6085, 4294901760
        %7024 = vmatprep.subr.mxu0 %v7023
        %v7025 = vand.u32 %v6084, 4294901760
        %7026 = vmatpush2.msra.mxu0 %v7025
        %v7027 = vand.u32 %v6083, 4294901760
        %7028 = vmatprep.subr.mxu0 %v7027
        %v7029 = vand.u32 %v6082, 4294901760
        %7030 = vmatpush2.msra.mxu0 %v7029
        %v7031 = vand.u32 %v6081, 4294901760
        %7032 = vmatprep.subr.mxu0 %v7031
        %v7033 = vand.u32 %v6080, 4294901760
        %7034 = vmatpush2.msra.mxu0 %v7033
        %v7035 = vand.u32 %v6079, 4294901760
        %7036 = vmatprep.subr.mxu0 %v7035
        %v7037 = vand.u32 %v6078, 4294901760
        %7038 = vmatpush2.msra.mxu0 %v7037
        %v7039 = vand.u32 %v6077, 4294901760
        %7040 = vmatprep.subr.mxu0 %v7039
        %v7041 = vand.u32 %v6076, 4294901760
        %7042 = vmatpush2.msra.mxu0 %v7041
        %v7043 = vand.u32 %v6075, 4294901760
        %7044 = vmatprep.subr.mxu0 %v7043
        %v7045 = vand.u32 %v6074, 4294901760
        %7046 = vmatpush2.msra.mxu0 %v7045
        %v7047 = vand.u32 %v6073, 4294901760
        %7048 = vmatprep.subr.mxu0 %v7047
        %v7049 = vand.u32 %v6072, 4294901760
        %7050 = vmatpush2.msra.mxu0 %v7049
        %v7051 = vand.u32 %v6071, 4294901760
        %7052 = vmatprep.subr.mxu0 %v7051
        %v7053 = vand.u32 %v6070, 4294901760
        %7054 = vmatpush2.msra.mxu0 %v7053
        %v7055 = vand.u32 %v6069, 4294901760
        %7056 = vmatprep.subr.mxu0 %v7055
        %v7057 = vand.u32 %v6068, 4294901760
        %7058 = vmatpush2.msra.mxu0 %v7057
        %v7059 = vand.u32 %v6067, 4294901760
        %7060 = vmatprep.subr.mxu0 %v7059
        %v7061 = vand.u32 %v6066, 4294901760
        %7062 = vmatpush2.msra.mxu0 %v7061
        %v7063 = vand.u32 %v6065, 4294901760
        %7064 = vmatprep.subr.mxu0 %v7063
        %v7065 = vand.u32 %v6064, 4294901760
        %7066 = vmatpush2.msra.mxu0 %v7065
        %v7067 = vand.u32 %v3579, 4294901760
        %v7068 = vsub.f32 %v3579, %v7067
        %v7069 = vand.u32 %v7068, 4294901760
        %7070 = vmatprep.mubr.f32.mxu0 %v7069
        %v7071 = vand.u32 %v3577, 4294901760
        %v7072 = vsub.f32 %v3577, %v7071
        %v7073 = vand.u32 %v7072, 4294901760
        %7074 = vmatmul.mubr.f32.gmra.mxu0 %v7073
        %v7075 = vpop.f32.mrf.mxu0
        %v7076 = vadd.f32 %v6905, %v7075
        %v7077 = vpop.f32.mrf.mxu0
        %v7078 = vadd.f32 %v6907, %v7077
        %v7079 = vand.u32 %v3586, 4294901760
        %v7080 = vsub.f32 %v3586, %v7079
        %v7081 = vand.u32 %v7080, 4294901760
        %7082 = vmatprep.mubr.f32.mxu0 %v7081
        %v7083 = vand.u32 %v3584, 4294901760
        %v7084 = vsub.f32 %v3584, %v7083
        %v7085 = vand.u32 %v7084, 4294901760
        %7086 = vmatmul.mubr.f32.gmra.mxu0 %v7085
        %v7087 = vpop.f32.mrf.mxu0
        %v7088 = vadd.f32 %v6915, %v7087
        %v7089 = vpop.f32.mrf.mxu0
        %v7090 = vadd.f32 %v6917, %v7089
        %v7091 = vand.u32 %v3593, 4294901760
        %v7092 = vsub.f32 %v3593, %v7091
        %v7093 = vand.u32 %v7092, 4294901760
        %7094 = vmatprep.mubr.f32.mxu0 %v7093
        %v7095 = vand.u32 %v3591, 4294901760
        %v7096 = vsub.f32 %v3591, %v7095
        %v7097 = vand.u32 %v7096, 4294901760
        %7098 = vmatmul.mubr.f32.gmra.mxu0 %v7097
        %v7099 = vpop.f32.mrf.mxu0
        %v7100 = vadd.f32 %v6925, %v7099
        %v7101 = vpop.f32.mrf.mxu0
        %v7102 = vadd.f32 %v6927, %v7101
        %v7103 = vand.u32 %v3600, 4294901760
        %v7104 = vsub.f32 %v3600, %v7103
        %v7105 = vand.u32 %v7104, 4294901760
        %7106 = vmatprep.mubr.f32.mxu0 %v7105
        %v7107 = vand.u32 %v3598, 4294901760
        %v7108 = vsub.f32 %v3598, %v7107
        %v7109 = vand.u32 %v7108, 4294901760
        %7110 = vmatmul.mubr.f32.gmra.mxu0 %v7109
        %v7111 = vpop.f32.mrf.mxu0
        %v7112 = vadd.f32 %v6935, %v7111
        %v7113 = vpop.f32.mrf.mxu0
        %v7114 = vadd.f32 %v6937, %v7113
        %7115 = vdwg.mxu0
        %v7116 = vand.u32 %v6063, 4294901760
        %v7117 = vsub.f32 %v6063, %v7116
        %v7118 = vand.u32 %v7117, 4294901760
        %7119 = vmatprep.subr.mxu0 %v7118
        %v7120 = vand.u32 %v6062, 4294901760
        %v7121 = vsub.f32 %v6062, %v7120
        %v7122 = vand.u32 %v7121, 4294901760
        %7123 = vmatpush1.msra.mxu0 %v7122
        %v7124 = vand.u32 %v6061, 4294901760
        %v7125 = vsub.f32 %v6061, %v7124
        %v7126 = vand.u32 %v7125, 4294901760
        %7127 = vmatprep.subr.mxu0 %v7126
        %v7128 = vand.u32 %v6060, 4294901760
        %v7129 = vsub.f32 %v6060, %v7128
        %v7130 = vand.u32 %v7129, 4294901760
        %7131 = vmatpush1.msra.mxu0 %v7130
        %v7132 = vand.u32 %v6059, 4294901760
        %v7133 = vsub.f32 %v6059, %v7132
        %v7134 = vand.u32 %v7133, 4294901760
        %7135 = vmatprep.subr.mxu0 %v7134
        %v7136 = vand.u32 %v6058, 4294901760
        %v7137 = vsub.f32 %v6058, %v7136
        %v7138 = vand.u32 %v7137, 4294901760
        %7139 = vmatpush1.msra.mxu0 %v7138
        %v7140 = vand.u32 %v6057, 4294901760
        %v7141 = vsub.f32 %v6057, %v7140
        %v7142 = vand.u32 %v7141, 4294901760
        %7143 = vmatprep.subr.mxu0 %v7142
        %v7144 = vand.u32 %v6056, 4294901760
        %v7145 = vsub.f32 %v6056, %v7144
        %v7146 = vand.u32 %v7145, 4294901760
        %7147 = vmatpush1.msra.mxu0 %v7146
        %v7148 = vand.u32 %v6055, 4294901760
        %v7149 = vsub.f32 %v6055, %v7148
        %v7150 = vand.u32 %v7149, 4294901760
        %7151 = vmatprep.subr.mxu0 %v7150
        %v7152 = vand.u32 %v6054, 4294901760
        %v7153 = vsub.f32 %v6054, %v7152
        %v7154 = vand.u32 %v7153, 4294901760
        %7155 = vmatpush1.msra.mxu0 %v7154
        %v7156 = vand.u32 %v6053, 4294901760
        %v7157 = vsub.f32 %v6053, %v7156
        %v7158 = vand.u32 %v7157, 4294901760
        %7159 = vmatprep.subr.mxu0 %v7158
        %v7160 = vand.u32 %v6052, 4294901760
        %v7161 = vsub.f32 %v6052, %v7160
        %v7162 = vand.u32 %v7161, 4294901760
        %7163 = vmatpush1.msra.mxu0 %v7162
        %v7164 = vand.u32 %v6051, 4294901760
        %v7165 = vsub.f32 %v6051, %v7164
        %v7166 = vand.u32 %v7165, 4294901760
        %7167 = vmatprep.subr.mxu0 %v7166
        %v7168 = vand.u32 %v6050, 4294901760
        %v7169 = vsub.f32 %v6050, %v7168
        %v7170 = vand.u32 %v7169, 4294901760
        %7171 = vmatpush1.msra.mxu0 %v7170
        %v7172 = vand.u32 %v6049, 4294901760
        %v7173 = vsub.f32 %v6049, %v7172
        %v7174 = vand.u32 %v7173, 4294901760
        %7175 = vmatprep.subr.mxu0 %v7174
        %v7176 = vand.u32 %v6048, 4294901760
        %v7177 = vsub.f32 %v6048, %v7176
        %v7178 = vand.u32 %v7177, 4294901760
        %7179 = vmatpush1.msra.mxu0 %v7178
        %v7180 = vand.u32 %v6047, 4294901760
        %v7181 = vsub.f32 %v6047, %v7180
        %v7182 = vand.u32 %v7181, 4294901760
        %7183 = vmatprep.subr.mxu0 %v7182
        %v7184 = vand.u32 %v6046, 4294901760
        %v7185 = vsub.f32 %v6046, %v7184
        %v7186 = vand.u32 %v7185, 4294901760
        %7187 = vmatpush1.msra.mxu0 %v7186
        %v7188 = vand.u32 %v6045, 4294901760
        %v7189 = vsub.f32 %v6045, %v7188
        %v7190 = vand.u32 %v7189, 4294901760
        %7191 = vmatprep.subr.mxu0 %v7190
        %v7192 = vand.u32 %v6044, 4294901760
        %v7193 = vsub.f32 %v6044, %v7192
        %v7194 = vand.u32 %v7193, 4294901760
        %7195 = vmatpush1.msra.mxu0 %v7194
        %v7196 = vand.u32 %v6043, 4294901760
        %v7197 = vsub.f32 %v6043, %v7196
        %v7198 = vand.u32 %v7197, 4294901760
        %7199 = vmatprep.subr.mxu0 %v7198
        %v7200 = vand.u32 %v6042, 4294901760
        %v7201 = vsub.f32 %v6042, %v7200
        %v7202 = vand.u32 %v7201, 4294901760
        %7203 = vmatpush1.msra.mxu0 %v7202
        %v7204 = vand.u32 %v6041, 4294901760
        %v7205 = vsub.f32 %v6041, %v7204
        %v7206 = vand.u32 %v7205, 4294901760
        %7207 = vmatprep.subr.mxu0 %v7206
        %v7208 = vand.u32 %v6040, 4294901760
        %v7209 = vsub.f32 %v6040, %v7208
        %v7210 = vand.u32 %v7209, 4294901760
        %7211 = vmatpush1.msra.mxu0 %v7210
        %v7212 = vand.u32 %v6039, 4294901760
        %v7213 = vsub.f32 %v6039, %v7212
        %v7214 = vand.u32 %v7213, 4294901760
        %7215 = vmatprep.subr.mxu0 %v7214
        %v7216 = vand.u32 %v6038, 4294901760
        %v7217 = vsub.f32 %v6038, %v7216
        %v7218 = vand.u32 %v7217, 4294901760
        %7219 = vmatpush1.msra.mxu0 %v7218
        %v7220 = vand.u32 %v6037, 4294901760
        %v7221 = vsub.f32 %v6037, %v7220
        %v7222 = vand.u32 %v7221, 4294901760
        %7223 = vmatprep.subr.mxu0 %v7222
        %v7224 = vand.u32 %v6036, 4294901760
        %v7225 = vsub.f32 %v6036, %v7224
        %v7226 = vand.u32 %v7225, 4294901760
        %7227 = vmatpush1.msra.mxu0 %v7226
        %v7228 = vand.u32 %v6035, 4294901760
        %v7229 = vsub.f32 %v6035, %v7228
        %v7230 = vand.u32 %v7229, 4294901760
        %7231 = vmatprep.subr.mxu0 %v7230
        %v7232 = vand.u32 %v6034, 4294901760
        %v7233 = vsub.f32 %v6034, %v7232
        %v7234 = vand.u32 %v7233, 4294901760
        %7235 = vmatpush1.msra.mxu0 %v7234
        %v7236 = vand.u32 %v6033, 4294901760
        %v7237 = vsub.f32 %v6033, %v7236
        %v7238 = vand.u32 %v7237, 4294901760
        %7239 = vmatprep.subr.mxu0 %v7238
        %v7240 = vand.u32 %v6031, 4294901760
        %v7241 = vsub.f32 %v6031, %v7240
        %v7242 = vand.u32 %v7241, 4294901760
        %7243 = vmatpush1.msra.mxu0 %v7242
        %v7244 = vand.u32 %v6095, 4294901760
        %v7245 = vsub.f32 %v6095, %v7244
        %v7246 = vand.u32 %v7245, 4294901760
        %7247 = vmatprep.subr.mxu0 %v7246
        %v7248 = vand.u32 %v6094, 4294901760
        %v7249 = vsub.f32 %v6094, %v7248
        %v7250 = vand.u32 %v7249, 4294901760
        %7251 = vmatpush2.msra.mxu0 %v7250
        %v7252 = vand.u32 %v6093, 4294901760
        %v7253 = vsub.f32 %v6093, %v7252
        %v7254 = vand.u32 %v7253, 4294901760
        %7255 = vmatprep.subr.mxu0 %v7254
        %v7256 = vand.u32 %v6092, 4294901760
        %v7257 = vsub.f32 %v6092, %v7256
        %v7258 = vand.u32 %v7257, 4294901760
        %7259 = vmatpush2.msra.mxu0 %v7258
        %v7260 = vand.u32 %v6091, 4294901760
        %v7261 = vsub.f32 %v6091, %v7260
        %v7262 = vand.u32 %v7261, 4294901760
        %7263 = vmatprep.subr.mxu0 %v7262
        %v7264 = vand.u32 %v6090, 4294901760
        %v7265 = vsub.f32 %v6090, %v7264
        %v7266 = vand.u32 %v7265, 4294901760
        %7267 = vmatpush2.msra.mxu0 %v7266
        %v7268 = vand.u32 %v6089, 4294901760
        %v7269 = vsub.f32 %v6089, %v7268
        %v7270 = vand.u32 %v7269, 4294901760
        %7271 = vmatprep.subr.mxu0 %v7270
        %v7272 = vand.u32 %v6088, 4294901760
        %v7273 = vsub.f32 %v6088, %v7272
        %v7274 = vand.u32 %v7273, 4294901760
        %7275 = vmatpush2.msra.mxu0 %v7274
        %v7276 = vand.u32 %v6087, 4294901760
        %v7277 = vsub.f32 %v6087, %v7276
        %v7278 = vand.u32 %v7277, 4294901760
        %7279 = vmatprep.subr.mxu0 %v7278
        %v7280 = vand.u32 %v6086, 4294901760
        %v7281 = vsub.f32 %v6086, %v7280
        %v7282 = vand.u32 %v7281, 4294901760
        %7283 = vmatpush2.msra.mxu0 %v7282
        %v7284 = vand.u32 %v6085, 4294901760
        %v7285 = vsub.f32 %v6085, %v7284
        %v7286 = vand.u32 %v7285, 4294901760
        %7287 = vmatprep.subr.mxu0 %v7286
        %v7288 = vand.u32 %v6084, 4294901760
        %v7289 = vsub.f32 %v6084, %v7288
        %v7290 = vand.u32 %v7289, 4294901760
        %7291 = vmatpush2.msra.mxu0 %v7290
        %v7292 = vand.u32 %v6083, 4294901760
        %v7293 = vsub.f32 %v6083, %v7292
        %v7294 = vand.u32 %v7293, 4294901760
        %7295 = vmatprep.subr.mxu0 %v7294
        %v7296 = vand.u32 %v6082, 4294901760
        %v7297 = vsub.f32 %v6082, %v7296
        %v7298 = vand.u32 %v7297, 4294901760
        %7299 = vmatpush2.msra.mxu0 %v7298
        %v7300 = vand.u32 %v6081, 4294901760
        %v7301 = vsub.f32 %v6081, %v7300
        %v7302 = vand.u32 %v7301, 4294901760
        %7303 = vmatprep.subr.mxu0 %v7302
        %v7304 = vand.u32 %v6080, 4294901760
        %v7305 = vsub.f32 %v6080, %v7304
        %v7306 = vand.u32 %v7305, 4294901760
        %7307 = vmatpush2.msra.mxu0 %v7306
        %v7308 = vand.u32 %v6079, 4294901760
        %v7309 = vsub.f32 %v6079, %v7308
        %v7310 = vand.u32 %v7309, 4294901760
        %7311 = vmatprep.subr.mxu0 %v7310
        %v7312 = vand.u32 %v6078, 4294901760
        %v7313 = vsub.f32 %v6078, %v7312
        %v7314 = vand.u32 %v7313, 4294901760
        %7315 = vmatpush2.msra.mxu0 %v7314
        %v7316 = vand.u32 %v6077, 4294901760
        %v7317 = vsub.f32 %v6077, %v7316
        %v7318 = vand.u32 %v7317, 4294901760
        %7319 = vmatprep.subr.mxu0 %v7318
        %v7320 = vand.u32 %v6076, 4294901760
        %v7321 = vsub.f32 %v6076, %v7320
        %v7322 = vand.u32 %v7321, 4294901760
        %7323 = vmatpush2.msra.mxu0 %v7322
        %v7324 = vand.u32 %v6075, 4294901760
        %v7325 = vsub.f32 %v6075, %v7324
        %v7326 = vand.u32 %v7325, 4294901760
        %7327 = vmatprep.subr.mxu0 %v7326
        %v7328 = vand.u32 %v6074, 4294901760
        %v7329 = vsub.f32 %v6074, %v7328
        %v7330 = vand.u32 %v7329, 4294901760
        %7331 = vmatpush2.msra.mxu0 %v7330
        %v7332 = vand.u32 %v6073, 4294901760
        %v7333 = vsub.f32 %v6073, %v7332
        %v7334 = vand.u32 %v7333, 4294901760
        %7335 = vmatprep.subr.mxu0 %v7334
        %v7336 = vand.u32 %v6072, 4294901760
        %v7337 = vsub.f32 %v6072, %v7336
        %v7338 = vand.u32 %v7337, 4294901760
        %7339 = vmatpush2.msra.mxu0 %v7338
        %v7340 = vand.u32 %v6071, 4294901760
        %v7341 = vsub.f32 %v6071, %v7340
        %v7342 = vand.u32 %v7341, 4294901760
        %7343 = vmatprep.subr.mxu0 %v7342
        %v7344 = vand.u32 %v6070, 4294901760
        %v7345 = vsub.f32 %v6070, %v7344
        %v7346 = vand.u32 %v7345, 4294901760
        %7347 = vmatpush2.msra.mxu0 %v7346
        %v7348 = vand.u32 %v6069, 4294901760
        %v7349 = vsub.f32 %v6069, %v7348
        %v7350 = vand.u32 %v7349, 4294901760
        %7351 = vmatprep.subr.mxu0 %v7350
        %v7352 = vand.u32 %v6068, 4294901760
        %v7353 = vsub.f32 %v6068, %v7352
        %v7354 = vand.u32 %v7353, 4294901760
        %7355 = vmatpush2.msra.mxu0 %v7354
        %v7356 = vand.u32 %v6067, 4294901760
        %v7357 = vsub.f32 %v6067, %v7356
        %v7358 = vand.u32 %v7357, 4294901760
        %7359 = vmatprep.subr.mxu0 %v7358
        %v7360 = vand.u32 %v6066, 4294901760
        %v7361 = vsub.f32 %v6066, %v7360
        %v7362 = vand.u32 %v7361, 4294901760
        %7363 = vmatpush2.msra.mxu0 %v7362
        %v7364 = vand.u32 %v6065, 4294901760
        %v7365 = vsub.f32 %v6065, %v7364
        %v7366 = vand.u32 %v7365, 4294901760
        %7367 = vmatprep.subr.mxu0 %v7366
        %v7368 = vand.u32 %v6064, 4294901760
        %v7369 = vsub.f32 %v6064, %v7368
        %v7370 = vand.u32 %v7369, 4294901760
        %7371 = vmatpush2.msra.mxu0 %v7370
        %v7372 = vand.u32 %v3579, 4294901760
        %7373 = vmatprep.mubr.f32.mxu0 %v7372
        %v7374 = vand.u32 %v3577, 4294901760
        %7375 = vmatmul.mubr.f32.gmra.mxu0 %v7374
        %v7376 = vpop.f32.mrf.mxu0
        %v7377 = vadd.f32 %v7076, %v7376
        %v7378 = vpop.f32.mrf.mxu0
        %v7379 = vadd.f32 %v7078, %v7378
        %v7380 = vand.u32 %v3586, 4294901760
        %7381 = vmatprep.mubr.f32.mxu0 %v7380
        %v7382 = vand.u32 %v3584, 4294901760
        %7383 = vmatmul.mubr.f32.gmra.mxu0 %v7382
        %v7384 = vpop.f32.mrf.mxu0
        %v7385 = vadd.f32 %v7088, %v7384
        %v7386 = vpop.f32.mrf.mxu0
        %v7387 = vadd.f32 %v7090, %v7386
        %v7388 = vand.u32 %v3593, 4294901760
        %7389 = vmatprep.mubr.f32.mxu0 %v7388
        %v7390 = vand.u32 %v3591, 4294901760
        %7391 = vmatmul.mubr.f32.gmra.mxu0 %v7390
        %v7392 = vpop.f32.mrf.mxu0
        %v7393 = vadd.f32 %v7100, %v7392
        %v7394 = vpop.f32.mrf.mxu0
        %v7395 = vadd.f32 %v7102, %v7394
        %v7396 = vand.u32 %v3600, 4294901760
        %7397 = vmatprep.mubr.f32.mxu0 %v7396
        %v7398 = vand.u32 %v3598, 4294901760
        %7399 = vmatmul.mubr.f32.gmra.mxu0 %v7398
        %v7400 = vpop.f32.mrf.mxu0
        %v7401 = vadd.f32 %v7112, %v7400
        %v7402 = vpop.f32.mrf.mxu0
        %v7403 = vadd.f32 %v7114, %v7402
        %7404 = vdwg.mxu0
        %v7405 = vand.u32 %v6063, 4294901760
        %7406 = vmatprep.subr.mxu0 %v7405
        %v7407 = vand.u32 %v6062, 4294901760
        %7408 = vmatpush1.msra.mxu0 %v7407
        %v7409 = vand.u32 %v6061, 4294901760
        %7410 = vmatprep.subr.mxu0 %v7409
        %v7411 = vand.u32 %v6060, 4294901760
        %7412 = vmatpush1.msra.mxu0 %v7411
        %v7413 = vand.u32 %v6059, 4294901760
        %7414 = vmatprep.subr.mxu0 %v7413
        %v7415 = vand.u32 %v6058, 4294901760
        %7416 = vmatpush1.msra.mxu0 %v7415
        %v7417 = vand.u32 %v6057, 4294901760
        %7418 = vmatprep.subr.mxu0 %v7417
        %v7419 = vand.u32 %v6056, 4294901760
        %7420 = vmatpush1.msra.mxu0 %v7419
        %v7421 = vand.u32 %v6055, 4294901760
        %7422 = vmatprep.subr.mxu0 %v7421
        %v7423 = vand.u32 %v6054, 4294901760
        %7424 = vmatpush1.msra.mxu0 %v7423
        %v7425 = vand.u32 %v6053, 4294901760
        %7426 = vmatprep.subr.mxu0 %v7425
        %v7427 = vand.u32 %v6052, 4294901760
        %7428 = vmatpush1.msra.mxu0 %v7427
        %v7429 = vand.u32 %v6051, 4294901760
        %7430 = vmatprep.subr.mxu0 %v7429
        %v7431 = vand.u32 %v6050, 4294901760
        %7432 = vmatpush1.msra.mxu0 %v7431
        %v7433 = vand.u32 %v6049, 4294901760
        %7434 = vmatprep.subr.mxu0 %v7433
        %v7435 = vand.u32 %v6048, 4294901760
        %7436 = vmatpush1.msra.mxu0 %v7435
        %v7437 = vand.u32 %v6047, 4294901760
        %7438 = vmatprep.subr.mxu0 %v7437
        %v7439 = vand.u32 %v6046, 4294901760
        %7440 = vmatpush1.msra.mxu0 %v7439
        %v7441 = vand.u32 %v6045, 4294901760
        %7442 = vmatprep.subr.mxu0 %v7441
        %v7443 = vand.u32 %v6044, 4294901760
        %7444 = vmatpush1.msra.mxu0 %v7443
        %v7445 = vand.u32 %v6043, 4294901760
        %7446 = vmatprep.subr.mxu0 %v7445
        %v7447 = vand.u32 %v6042, 4294901760
        %7448 = vmatpush1.msra.mxu0 %v7447
        %v7449 = vand.u32 %v6041, 4294901760
        %7450 = vmatprep.subr.mxu0 %v7449
        %v7451 = vand.u32 %v6040, 4294901760
        %7452 = vmatpush1.msra.mxu0 %v7451
        %v7453 = vand.u32 %v6039, 4294901760
        %7454 = vmatprep.subr.mxu0 %v7453
        %v7455 = vand.u32 %v6038, 4294901760
        %7456 = vmatpush1.msra.mxu0 %v7455
        %v7457 = vand.u32 %v6037, 4294901760
        %7458 = vmatprep.subr.mxu0 %v7457
        %v7459 = vand.u32 %v6036, 4294901760
        %7460 = vmatpush1.msra.mxu0 %v7459
        %v7461 = vand.u32 %v6035, 4294901760
        %7462 = vmatprep.subr.mxu0 %v7461
        %v7463 = vand.u32 %v6034, 4294901760
        %7464 = vmatpush1.msra.mxu0 %v7463
        %v7465 = vand.u32 %v6033, 4294901760
        %7466 = vmatprep.subr.mxu0 %v7465
        %v7467 = vand.u32 %v6031, 4294901760
        %7468 = vmatpush1.msra.mxu0 %v7467
        %v7469 = vand.u32 %v6095, 4294901760
        %7470 = vmatprep.subr.mxu0 %v7469
        %v7471 = vand.u32 %v6094, 4294901760
        %7472 = vmatpush2.msra.mxu0 %v7471
        %v7473 = vand.u32 %v6093, 4294901760
        %7474 = vmatprep.subr.mxu0 %v7473
        %v7475 = vand.u32 %v6092, 4294901760
        %7476 = vmatpush2.msra.mxu0 %v7475
        %v7477 = vand.u32 %v6091, 4294901760
        %7478 = vmatprep.subr.mxu0 %v7477
        %v7479 = vand.u32 %v6090, 4294901760
        %7480 = vmatpush2.msra.mxu0 %v7479
        %v7481 = vand.u32 %v6089, 4294901760
        %7482 = vmatprep.subr.mxu0 %v7481
        %v7483 = vand.u32 %v6088, 4294901760
        %7484 = vmatpush2.msra.mxu0 %v7483
        %v7485 = vand.u32 %v6087, 4294901760
        %7486 = vmatprep.subr.mxu0 %v7485
        %v7487 = vand.u32 %v6086, 4294901760
        %7488 = vmatpush2.msra.mxu0 %v7487
        %v7489 = vand.u32 %v6085, 4294901760
        %7490 = vmatprep.subr.mxu0 %v7489
        %v7491 = vand.u32 %v6084, 4294901760
        %7492 = vmatpush2.msra.mxu0 %v7491
        %v7493 = vand.u32 %v6083, 4294901760
        %7494 = vmatprep.subr.mxu0 %v7493
        %v7495 = vand.u32 %v6082, 4294901760
        %7496 = vmatpush2.msra.mxu0 %v7495
        %v7497 = vand.u32 %v6081, 4294901760
        %7498 = vmatprep.subr.mxu0 %v7497
        %v7499 = vand.u32 %v6080, 4294901760
        %7500 = vmatpush2.msra.mxu0 %v7499
        %v7501 = vand.u32 %v6079, 4294901760
        %7502 = vmatprep.subr.mxu0 %v7501
        %v7503 = vand.u32 %v6078, 4294901760
        %7504 = vmatpush2.msra.mxu0 %v7503
        %v7505 = vand.u32 %v6077, 4294901760
        %7506 = vmatprep.subr.mxu0 %v7505
        %v7507 = vand.u32 %v6076, 4294901760
        %7508 = vmatpush2.msra.mxu0 %v7507
        %v7509 = vand.u32 %v6075, 4294901760
        %7510 = vmatprep.subr.mxu0 %v7509
        %v7511 = vand.u32 %v6074, 4294901760
        %7512 = vmatpush2.msra.mxu0 %v7511
        %v7513 = vand.u32 %v6073, 4294901760
        %7514 = vmatprep.subr.mxu0 %v7513
        %v7515 = vand.u32 %v6072, 4294901760
        %7516 = vmatpush2.msra.mxu0 %v7515
        %v7517 = vand.u32 %v6071, 4294901760
        %7518 = vmatprep.subr.mxu0 %v7517
        %v7519 = vand.u32 %v6070, 4294901760
        %7520 = vmatpush2.msra.mxu0 %v7519
        %v7521 = vand.u32 %v6069, 4294901760
        %7522 = vmatprep.subr.mxu0 %v7521
        %v7523 = vand.u32 %v6068, 4294901760
        %7524 = vmatpush2.msra.mxu0 %v7523
        %v7525 = vand.u32 %v6067, 4294901760
        %7526 = vmatprep.subr.mxu0 %v7525
        %v7527 = vand.u32 %v6066, 4294901760
        %7528 = vmatpush2.msra.mxu0 %v7527
        %v7529 = vand.u32 %v6065, 4294901760
        %7530 = vmatprep.subr.mxu0 %v7529
        %v7531 = vand.u32 %v6064, 4294901760
        %7532 = vmatpush2.msra.mxu0 %v7531
        %v7533 = vand.u32 %v3579, 4294901760
        %7534 = vmatprep.mubr.f32.mxu0 %v7533
        %v7535 = vand.u32 %v3577, 4294901760
        %7536 = vmatmul.mubr.f32.gmra.mxu0 %v7535
        %v7537 = vpop.f32.mrf.mxu0
        %v7538 = vadd.f32 %v7377, %v7537
        %v7539 = vpop.f32.mrf.mxu0
        %v7540 = vadd.f32 %v7379, %v7539
        %v7541 = vand.u32 %v3586, 4294901760
        %7542 = vmatprep.mubr.f32.mxu0 %v7541
        %v7543 = vand.u32 %v3584, 4294901760
        %7544 = vmatmul.mubr.f32.gmra.mxu0 %v7543
        %v7545 = vpop.f32.mrf.mxu0
        %v7546 = vadd.f32 %v7385, %v7545
        %v7547 = vpop.f32.mrf.mxu0
        %v7548 = vadd.f32 %v7387, %v7547
        %v7549 = vand.u32 %v3593, 4294901760
        %7550 = vmatprep.mubr.f32.mxu0 %v7549
        %v7551 = vand.u32 %v3591, 4294901760
        %7552 = vmatmul.mubr.f32.gmra.mxu0 %v7551
        %v7553 = vpop.f32.mrf.mxu0
        %v7554 = vadd.f32 %v7393, %v7553
        %v7555 = vpop.f32.mrf.mxu0
        %v7556 = vadd.f32 %v7395, %v7555
        %v7557 = vand.u32 %v3600, 4294901760
        %7558 = vmatprep.mubr.f32.mxu0 %v7557
        %v7559 = vand.u32 %v3598, 4294901760
        %7560 = vmatmul.mubr.f32.gmra.mxu0 %v7559
        %v7561 = vpop.f32.mrf.mxu0
        %v7562 = vadd.f32 %v7401, %v7561
        %v7563 = vpop.f32.mrf.mxu0
        %v7564 = vadd.f32 %v7403, %v7563
        %7565 = vdwg.mxu0
        %v7566 = vstv %s392
        %v7567 = vmul.f32 %v7566, %v7538
        %v7568 = vmul.f32 %v7566, %v7540
        %v7569 = vmul.f32 %v7566, %v7546
        %v7570 = vmul.f32 %v7566, %v7548
        %v7571 = vmul.f32 %v7566, %v7554
        %v7572 = vmul.f32 %v7566, %v7556
        %v7573 = vmul.f32 %v7566, %v7562
        %v7574 = vmul.f32 %v7566, %v7564
        %v7575 = vadd.f32 %v7567, %v352
        %v7576 = vadd.f32 %v7568, %v353
        %v7577 = vadd.f32 %v7569, %v354
        %v7578 = vadd.f32 %v7570, %v355
        %v7579 = vadd.f32 %v7571, %v356
        %v7580 = vadd.f32 %v7572, %v357
        %v7581 = vadd.f32 %v7573, %v358
        %v7582 = vadd.f32 %v7574, %v359
        %7583 = vst [vmem:[%s341] sm:$0xff] %v7575
        %7584 = vst [vmem:[%s341 + $0x8] sm:$0xff] %v7576
        %7585 = vst [vmem:[%s341 + $0x10] sm:$0xff] %v7577
        %7586 = vst [vmem:[%s341 + $0x18] sm:$0xff] %v7578
        %7587 = vst [vmem:[%s341 + $0x20] sm:$0xff] %v7579
        %7588 = vst [vmem:[%s341 + $0x28] sm:$0xff] %v7580
        %7589 = vst [vmem:[%s341 + $0x30] sm:$0xff] %v7581
        %7590 = vst [vmem:[%s341 + $0x38] sm:$0xff] %v7582
        %s7591 = sand.u32 %s231, 1
        %s7592 = scalar_lea.sflag [#allocation4], %s7591
        %s7593 = sand.u32 %s231, 1
        %s7594 = smul.addr %s7593, 64
        %s7595 = scalar_lea.vmem [#allocation3], %s7594
        // Predicated region
        $region57: #{tpu_custom_call.1} parent=55 // pred_check
          %p7596 = pneg %p241
        $region58: #{tpu_custom_call.1} parent=55 // pred_check_branch
          %7598 = sbr.rel (%p7596) target = $region60
        $region59: #{tpu_custom_call.1} parent=55 // pred_region
          %s7600 = ssub.s32 1024, 1024
          %7601 = vsyncadd %s7592, %s7600
          %s7602 = smul.addr %s24, 8
          %s7603 = smul.addr %s7602, 128
          %s7604 = scalar_lea.hbm %s9, %s7603
          %s7605 = sshll.u32 %s7595, 4
          %s7606 = int_to_ptr.vmem [resolvable:$true] %s7605
          %7611 = dma.vmem_to_hbm [thread:$0]  %s7606, 1024, %s7604, %s7592, 256, 256, 16
        $region60: #{tpu_custom_call.1} parent=55 // pred_fallthru
          _
      $region56: #{tpu_custom_call.1} parent=5 // pred_fallthru
        _
      %p7612 = scmp.le.s32.totalorder 2, %s19
      // Predicated region
      $region61: #{tpu_custom_call.1} parent=5 // pred_check
        %p7613 = pneg %p7612
      $region62: #{tpu_custom_call.1} parent=5 // pred_check_branch
        %7615 = sbr.rel (%p7613) target = $region64
      $region63: #{tpu_custom_call.1} parent=5 // pred_region
        %s7616 = ssub.s32 %s19, 2
        // Predicated region
        $region65: #{tpu_custom_call.1} parent=63 // pred_check
          %p7617 = pneg %p247
        $region66: #{tpu_custom_call.1} parent=63 // pred_check_branch
          %7619 = sbr.rel (%p7617) target = $region68
        $region67: #{tpu_custom_call.1} parent=63 // pred_region
          %s7620 = sand.u32 %s232, 1
          %s7621 = scalar_lea.sflag [#allocation4], %s7620
          %s7622 = sand.u32 %s232, 1
          %s7623 = smul.addr %s7622, 64
          %s7624 = scalar_lea.vmem [#allocation3], %s7623
          %7625 = dma.done %s7621, 1024
        $region68: #{tpu_custom_call.1} parent=63 // pred_fallthru
          _
      $region64: #{tpu_custom_call.1} parent=5 // pred_fallthru
        _
    $region6: #{tpu_custom_call.1} parent=1 // loop_footer
      %s23 = sadd.s32 1, %s19
    $region7: #{tpu_custom_call.1} parent=1 // loop_footer_branch
      %18 = sbr.rel target = $region3
    $region8: #{tpu_custom_call.1} parent=1 // loop_exit
      _
    %7626 = vsyncpa [#allocation4], 1
    %s7627 = scalar_lea.sflag [#allocation4], 1
    %7628 = vsyncpa %s7627, 1

</llo_original>
